<compile_context>
chip_gen: v7x
topology: tpu7x:2x2x1
jax: 0.10.0
libtpu: 0.0.40
codegen_flags: <defaults>
</compile_context>

<pallas_src>
import math

import jax
import jax.numpy as jnp
import numpy as np
from jax import lax
from jax.experimental import pallas as pl
from jax.experimental.pallas import tpu as pltpu

EPS = 1e-6
NEG_INF = -1e9


def _recip(x):
    # EUP approx reciprocal + one Newton-Raphson step (~1e-7 relative error).
    r = pl.reciprocal(x, approx=True)
    return r * (2.0 - x * r)


def _make_kernel(B, S, D, H, dk, F):
    HD = H * dk
    scale = 1.0 / math.sqrt(dk)
    HIGH = lax.Precision.HIGHEST          # exact-f32 MXU passes for 1e-4 check

    def kernel(x_ref, mb_ref, ln_ref,
               wqkv_ref, bqkv_ref, wo_ref, bo_ref,
               w1_ref, b1_ref, w2_ref, b2_ref,
               out_ref, ctx_ref):
        xs = x_ref[...]                                        # (B*S, D) slab

        # ---- fused QKV projection: one (B*S, D) @ (D, 3*H*dk) GEMM ----
        qkv = jnp.dot(xs, wqkv_ref[...], precision=HIGH,
                      preferred_element_type=jnp.float32) + bqkv_ref[...]

        mb = mb_ref[...]                                       # (B, 1, S) additive bias

        # ---- attention core: per (batch, head), contexts written to scratch ----
        for b in range(B):                                     # static, tiny B
            r0, r1 = b * S, (b + 1) * S
            bias_b = mb[b]                                     # (1, S)
            for h in range(H):                                 # static head loop
                c0, c1 = h * dk, (h + 1) * dk
                qh = qkv[r0:r1, c0:c1]
                kh = qkv[r0:r1, HD + c0:HD + c1]
                vh = qkv[r0:r1, 2 * HD + c0:2 * HD + c1]
                scores = lax.dot_general(qh, kh, (((1,), (1,)), ((), ())),
                                         precision=HIGH,
                                         preferred_element_type=jnp.float32)
                scores = scores * scale + bias_b               # additive mask
                m = jnp.max(scores, axis=-1, keepdims=True)
                p = jnp.exp(scores - m)
                denom = jnp.sum(p, axis=-1, keepdims=True)
                ctx_h = jnp.dot(p, vh, precision=HIGH,
                                preferred_element_type=jnp.float32)
                # deferred softmax normalization: scale the (S, dk) result
                ctx_ref[r0:r1, c0:c1] = ctx_h * _recip(denom)

        # ---- fused output projection: (B*S, H*dk) @ (H*dk, D) ----
        attn = jnp.dot(ctx_ref[...], wo_ref[...], precision=HIGH,
                       preferred_element_type=jnp.float32) + bo_ref[...]

        # LayerNorm scalars from SMEM: [alpha1, bias1, alpha2, bias2]
        a1 = ln_ref[0]
        c1s = ln_ref[1]
        a2 = ln_ref[2]
        c2s = ln_ref[3]

        # ---- residual 0: x + LayerNorm(attn)  (unbiased std, eps + std) ----
        mean1 = jnp.mean(attn, axis=-1, keepdims=True)
        d1 = attn - mean1
        std1 = jnp.sqrt(jnp.sum(d1 * d1, axis=-1, keepdims=True)
                        * (1.0 / (D - 1)))
        h1 = xs + (a1 * d1 * _recip(EPS + std1) + c1s)

        # ---- feed forward: relu(h1 @ W1 + b1) @ W2 + b2 ----
        f = jnp.dot(h1, w1_ref[...], precision=HIGH,
                    preferred_element_type=jnp.float32) + b1_ref[...]
        f = jnp.maximum(f, 0.0)
        ff = jnp.dot(f, w2_ref[...], precision=HIGH,
                     preferred_element_type=jnp.float32) + b2_ref[...]

        # ---- residual 1: h1 + LayerNorm(ffn(h1)) ----
        mean2 = jnp.mean(ff, axis=-1, keepdims=True)
        d2 = ff - mean2
        std2 = jnp.sqrt(jnp.sum(d2 * d2, axis=-1, keepdims=True)
                        * (1.0 / (D - 1)))
        out_ref[...] = h1 + (a2 * d2 * _recip(EPS + std2) + c2s)

    return kernel


def encoder_block(x, mask, p):
    B, S, D = x.shape
    H, _, dk = p["wq"].shape
    HD = H * dk
    F = p["w1"].shape[1]

    # ---- host-side weight fusion (pure layout plumbing, outside kernel) ----
    def heads_to_cols(w):   # (H, D, dk) -> (D, H*dk); column block h == w[h]
        return jnp.transpose(w, (1, 0, 2)).reshape(w.shape[1], HD)

    def bias_to_cols(b):    # (H, 1, dk) -> (1, H*dk)
        return jnp.transpose(b, (1, 0, 2)).reshape(1, HD)

    wqkv = jnp.concatenate([heads_to_cols(p["wq"]),
                            heads_to_cols(p["wk"]),
                            heads_to_cols(p["wv"])], axis=1)    # (D, 3*H*dk)
    bqkv = jnp.concatenate([bias_to_cols(p["bq"]),
                            bias_to_cols(p["bk"]),
                            bias_to_cols(p["bv"])], axis=1)     # (1, 3*H*dk)
    wo = p["wo"].reshape(HD, D)                                 # (H*dk, D)

    # wrapper-side layout plumbing: flat activation slab + additive mask bias
    xs = x.reshape(B * S, D)
    mask_bias = jnp.where(mask == 0.0, NEG_INF, 0.0).astype(jnp.float32)

    kernel = _make_kernel(B, S, D, H, dk, F)

    def full(shape):
        return pl.BlockSpec(shape, lambda i: (0,) * len(shape))

    grid_spec = pltpu.PrefetchScalarGridSpec(
        num_scalar_prefetch=0,
        grid=(1,),                              # batch collapsed into the block
        in_specs=[
            full((B * S, D)),                                   # x slab
            full((B, 1, S)),                                    # mask bias
            pl.BlockSpec(memory_space=pltpu.MemorySpace.SMEM),  # ln scalars (4,)
            full((D, 3 * HD)), full((1, 3 * HD)),               # wqkv, bqkv
            full((HD, D)), full((1, D)),                        # wo, bo
            full((D, F)), full((1, F)),                         # w1, b1
            full((F, D)), full((1, D)),                         # w2, b2
        ],
        out_specs=pl.BlockSpec((B * S, D), lambda i: (0, 0)),
        scratch_shapes=[pltpu.VMEM((B * S, HD), jnp.float32)],  # head contexts
    )

    flops = (2 * B * S * D * 3 * HD        # QKV projection
             + 4 * B * H * S * S * dk      # scores + PV
             + 2 * B * S * HD * D          # output projection
             + 4 * B * S * D * F)          # FFN
    transcendentals = B * H * S * S + B * H * S + 2 * B * S
    bytes_accessed = 4 * (2 * B * S * D + B * S
                          + D * 3 * HD + 3 * HD + HD * D + D
                          + D * F + F + F * D + D + 4)

    out = pl.pallas_call(
        kernel,
        out_shape=jax.ShapeDtypeStruct((B * S, D), jnp.float32),
        grid_spec=grid_spec,
        compiler_params=pltpu.CompilerParams(
            dimension_semantics=("arbitrary",)),
        cost_estimate=pl.CostEstimate(flops=flops,
                                      transcendentals=transcendentals,
                                      bytes_accessed=bytes_accessed),
    )(xs, mask_bias, p["ln"], wqkv, bqkv, wo, p["bo"],
      p["w1"], p["b1"], p["w2"], p["b2"])
    return out.reshape(B, S, D)


# ---------------- pure-JAX reference (mirrors the PyTorch module) ----------------
def _layernorm_ref(x, alpha, bias, eps=EPS):
    mean = jnp.mean(x, axis=-1, keepdims=True)
    std = jnp.std(x, axis=-1, keepdims=True, ddof=1)     # torch.std unbiased
    return alpha * (x - mean) / (eps + std) + bias


def _mha_ref(x, mask, p):
    H, _, dk = p["wq"].shape
    out = 0.0
    for h in range(H):
        q = x @ p["wq"][h] + p["bq"][h]
        k = x @ p["wk"][h] + p["bk"][h]
        v = x @ p["wv"][h] + p["bv"][h]
        s = (q @ jnp.swapaxes(k, -1, -2)) / math.sqrt(dk)
        s = jnp.where(mask == 0.0, -1e9, s)
        a = jax.nn.softmax(s, axis=-1)
        out = out + (a @ v) @ p["wo"][h]
    return out + p["bo"]


def _encoder_ref(x, mask, p):
    a1, c1, a2, c2 = p["ln"][0], p["ln"][1], p["ln"][2], p["ln"][3]
    attn = _mha_ref(x, mask, p)
    h1 = x + _layernorm_ref(attn, a1, c1)
    ff = jnp.maximum(h1 @ p["w1"] + p["b1"], 0.0) @ p["w2"] + p["b2"]
    return h1 + _layernorm_ref(ff, a2, c2)


if __name__ == "__main__":
    # Reference in true f32 (kernel dots are pinned to HIGHEST precision).
    jax.config.update("jax_default_matmul_precision", "highest")

    B, S, D, H, F = 2, 8, 32, 4, 64
    dk = D // H

    key = jax.random.PRNGKey(0)
    ks = jax.random.split(key, 16)

    def uni(k, shape, fan_in):
        bound = 1.0 / math.sqrt(fan_in)
        return jax.random.uniform(k, shape, jnp.float32, -bound, bound)

    params = {
        "wq": uni(ks[0], (H, D, dk), D), "bq": uni(ks[1], (H, 1, dk), D),
        "wk": uni(ks[2], (H, D, dk), D), "bk": uni(ks[3], (H, 1, dk), D),
        "wv": uni(ks[4], (H, D, dk), D), "bv": uni(ks[5], (H, 1, dk), D),
        "wo": uni(ks[6], (H, dk, D), D), "bo": uni(ks[7], (1, D), D),
        "w1": uni(ks[8], (D, F), D),     "b1": uni(ks[9], (1, F), D),
        "w2": uni(ks[10], (F, D), F),    "b2": uni(ks[11], (1, D), F),
        # LayerNorm params: [alpha1, bias1, alpha2, bias2] (alpha=1, bias=0)
        "ln": jnp.array([1.0, 0.0, 1.0, 0.0], jnp.float32),
    }

    x = jax.random.normal(ks[12], (B, S, D), jnp.float32)
    mask = jnp.ones((B, 1, S), jnp.float32).at[1, 0, 6:].set(0.0)  # pad batch 1

    out = jax.block_until_ready(encoder_block(x, mask, params))

    ref = _encoder_ref(x, mask, params)
    np.testing.assert_allclose(np.asarray(out), np.asarray(ref),
                               rtol=1e-4, atol=1e-4)

    print("KERNEL_OK")
</pallas_src>

<mosaic_0001>
module attributes {stable_mosaic.version = 11 : i64} {
  func.func @kernel(%arg0: i32, %arg1: memref<16x32xf32, #tpu.memory_space<vmem>>, %arg2: memref<2x1x8xf32, #tpu.memory_space<vmem>>, %arg3: memref<4xf32, #tpu.memory_space<smem>>, %arg4: memref<32x96xf32, #tpu.memory_space<vmem>>, %arg5: memref<1x96xf32, #tpu.memory_space<vmem>>, %arg6: memref<32x32xf32, #tpu.memory_space<vmem>>, %arg7: memref<1x32xf32, #tpu.memory_space<vmem>>, %arg8: memref<32x64xf32, #tpu.memory_space<vmem>>, %arg9: memref<1x64xf32, #tpu.memory_space<vmem>>, %arg10: memref<64x32xf32, #tpu.memory_space<vmem>>, %arg11: memref<1x32xf32, #tpu.memory_space<vmem>>, %arg12: memref<16x32xf32, #tpu.memory_space<vmem>>, %arg13: memref<16x32xf32, #tpu.memory_space<vmem>>) attributes {dimension_semantics = [#tpu.dimension_semantics<arbitrary>], iteration_bounds = array<i64: 1>, scalar_prefetch = 0 : i64, scratch_operands = 1 : i64, tpu.core_type = #tpu.core_type<tc>, window_params = [{pipeline_mode = #tpu.pipeline_mode<synchronous>, transform_indices = @transform_0, window_bounds = array<i64: 16, 32>}, {pipeline_mode = #tpu.pipeline_mode<synchronous>, transform_indices = @transform_1, window_bounds = array<i64: 2, 1, 8>}, {transform_indices = @transform_2, window_bounds = array<i64: 4>}, {pipeline_mode = #tpu.pipeline_mode<synchronous>, transform_indices = @transform_3, window_bounds = array<i64: 32, 96>}, {pipeline_mode = #tpu.pipeline_mode<synchronous>, transform_indices = @transform_4, window_bounds = array<i64: 1, 96>}, {pipeline_mode = #tpu.pipeline_mode<synchronous>, transform_indices = @transform_5, window_bounds = array<i64: 32, 32>}, {pipeline_mode = #tpu.pipeline_mode<synchronous>, transform_indices = @transform_6, window_bounds = array<i64: 1, 32>}, {pipeline_mode = #tpu.pipeline_mode<synchronous>, transform_indices = @transform_7, window_bounds = array<i64: 32, 64>}, {pipeline_mode = #tpu.pipeline_mode<synchronous>, transform_indices = @transform_8, window_bounds = array<i64: 1, 64>}, {pipeline_mode = #tpu.pipeline_mode<synchronous>, transform_indices = @transform_9, window_bounds = array<i64: 64, 32>}, {pipeline_mode = #tpu.pipeline_mode<synchronous>, transform_indices = @transform_10, window_bounds = array<i64: 1, 32>}, {pipeline_mode = #tpu.pipeline_mode<synchronous>, transform_indices = @transform_11, window_bounds = array<i64: 16, 32>}]} {
    %c0 = arith.constant 0 : index
    %c0_0 = arith.constant 0 : index
    %0 = vector.load %arg1[%c0, %c0_0] : memref<16x32xf32, #tpu.memory_space<vmem>>, vector<16x32xf32>
    %c0_1 = arith.constant 0 : index
    %c0_2 = arith.constant 0 : index
    %1 = vector.load %arg4[%c0_1, %c0_2] : memref<32x96xf32, #tpu.memory_space<vmem>>, vector<32x96xf32>
    %cst = arith.constant dense<0.000000e+00> : vector<16x96xf32>
    %2 = tpu.matmul %0, %1, %cst {dimension_numbers = #tpu.dot_dimension_numbers<[1], [0], [0], [1], [0, 0, 1, 1], [], []>, precision = #tpu.contract_precision<fp32>} : vector<16x32xf32>, vector<32x96xf32>, vector<16x96xf32> -> vector<16x96xf32>
    %c0_3 = arith.constant 0 : index
    %c0_4 = arith.constant 0 : index
    %3 = vector.load %arg5[%c0_3, %c0_4] : memref<1x96xf32, #tpu.memory_space<vmem>>, vector<1x96xf32>
    %4 = vector.broadcast %3 : vector<1x96xf32> to vector<16x96xf32>
    %5 = arith.addf %2, %4 : vector<16x96xf32>
    %c0_5 = arith.constant 0 : index
    %c0_6 = arith.constant 0 : index
    %c0_7 = arith.constant 0 : index
    %6 = vector.load %arg2[%c0_5, %c0_6, %c0_7] : memref<2x1x8xf32, #tpu.memory_space<vmem>>, vector<2x1x8xf32>
    %7 = vector.extract_strided_slice %6 {offsets = [0, 0, 0], sizes = [1, 1, 8], strides = [1, 1, 1]} : vector<2x1x8xf32> to vector<1x1x8xf32>
    %8 = vector.shape_cast %7 : vector<1x1x8xf32> to vector<1x8xf32>
    %9 = vector.extract_strided_slice %5 {offsets = [0, 0], sizes = [8, 8], strides = [1, 1]} : vector<16x96xf32> to vector<8x8xf32>
    %10 = vector.extract_strided_slice %5 {offsets = [0, 32], sizes = [8, 8], strides = [1, 1]} : vector<16x96xf32> to vector<8x8xf32>
    %11 = vector.extract_strided_slice %5 {offsets = [0, 64], sizes = [8, 8], strides = [1, 1]} : vector<16x96xf32> to vector<8x8xf32>
    %cst_8 = arith.constant dense<0.000000e+00> : vector<8x8xf32>
    %12 = tpu.matmul %9, %10, %cst_8 {dimension_numbers = #tpu.dot_dimension_numbers<[1], [1], [0], [0], [0, 0, 1, 0], [], []>, precision = #tpu.contract_precision<fp32>} : vector<8x8xf32>, vector<8x8xf32>, vector<8x8xf32> -> vector<8x8xf32>
    %cst_9 = arith.constant 0.353553385 : f32
    %13 = vector.broadcast %cst_9 : f32 to vector<8x8xf32>
    %14 = arith.mulf %12, %13 : vector<8x8xf32>
    %15 = vector.broadcast %8 : vector<1x8xf32> to vector<8x8xf32>
    %16 = arith.addf %14, %15 : vector<8x8xf32>
    %cst_10 = arith.constant dense<0xFF800000> : vector<8xf32>
    %17 = vector.multi_reduction <maximumf>, %16, %cst_10 [1] : vector<8x8xf32> to vector<8xf32>
    %18 = vector.shape_cast %17 : vector<8xf32> to vector<8x1xf32>
    %19 = vector.broadcast %18 : vector<8x1xf32> to vector<8x8xf32>
    %20 = arith.subf %16, %19 : vector<8x8xf32>
    %21 = math.exp %20 : vector<8x8xf32>
    %cst_11 = arith.constant dense<0.000000e+00> : vector<8xf32>
    %22 = vector.multi_reduction <add>, %21, %cst_11 [1] : vector<8x8xf32> to vector<8xf32>
    %23 = vector.shape_cast %22 : vector<8xf32> to vector<8x1xf32>
    %cst_12 = arith.constant dense<0.000000e+00> : vector<8x8xf32>
    %24 = tpu.matmul %21, %11, %cst_12 {dimension_numbers = #tpu.dot_dimension_numbers<[1], [0], [0], [1], [0, 0, 1, 1], [], []>, precision = #tpu.contract_precision<fp32>} : vector<8x8xf32>, vector<8x8xf32>, vector<8x8xf32> -> vector<8x8xf32>
    %25 = tpu.reciprocal %23 {approx = true} : vector<8x1xf32> -> vector<8x1xf32>
    %26 = arith.mulf %23, %25 : vector<8x1xf32>
    %cst_13 = arith.constant 2.000000e+00 : f32
    %27 = vector.broadcast %cst_13 : f32 to vector<8x1xf32>
    %28 = arith.subf %27, %26 : vector<8x1xf32>
    %29 = arith.mulf %25, %28 : vector<8x1xf32>
    %30 = vector.broadcast %29 : vector<8x1xf32> to vector<8x8xf32>
    %31 = arith.mulf %24, %30 : vector<8x8xf32>
    %c0_14 = arith.constant 0 : index
    %c0_15 = arith.constant 0 : index
    %32 = vector.load %arg13[%c0_14, %c0_15] : memref<16x32xf32, #tpu.memory_space<vmem>>, vector<8x8xf32>
    tpu.vector_store %arg13[%c0_14, %c0_15], %31 {strides = array<i32>} : memref<16x32xf32, #tpu.memory_space<vmem>>, vector<8x8xf32>,
    %33 = vector.extract_strided_slice %5 {offsets = [0, 8], sizes = [8, 8], strides = [1, 1]} : vector<16x96xf32> to vector<8x8xf32>
    %34 = vector.extract_strided_slice %5 {offsets = [0, 40], sizes = [8, 8], strides = [1, 1]} : vector<16x96xf32> to vector<8x8xf32>
    %35 = vector.extract_strided_slice %5 {offsets = [0, 72], sizes = [8, 8], strides = [1, 1]} : vector<16x96xf32> to vector<8x8xf32>
    %cst_16 = arith.constant dense<0.000000e+00> : vector<8x8xf32>
    %36 = tpu.matmul %33, %34, %cst_16 {dimension_numbers = #tpu.dot_dimension_numbers<[1], [1], [0], [0], [0, 0, 1, 0], [], []>, precision = #tpu.contract_precision<fp32>} : vector<8x8xf32>, vector<8x8xf32>, vector<8x8xf32> -> vector<8x8xf32>
    %cst_17 = arith.constant 0.353553385 : f32
    %37 = vector.broadcast %cst_17 : f32 to vector<8x8xf32>
    %38 = arith.mulf %36, %37 : vector<8x8xf32>
    %39 = vector.broadcast %8 : vector<1x8xf32> to vector<8x8xf32>
    %40 = arith.addf %38, %39 : vector<8x8xf32>
    %cst_18 = arith.constant dense<0xFF800000> : vector<8xf32>
    %41 = vector.multi_reduction <maximumf>, %40, %cst_18 [1] : vector<8x8xf32> to vector<8xf32>
    %42 = vector.shape_cast %41 : vector<8xf32> to vector<8x1xf32>
    %43 = vector.broadcast %42 : vector<8x1xf32> to vector<8x8xf32>
    %44 = arith.subf %40, %43 : vector<8x8xf32>
    %45 = math.exp %44 : vector<8x8xf32>
    %cst_19 = arith.constant dense<0.000000e+00> : vector<8xf32>
    %46 = vector.multi_reduction <add>, %45, %cst_19 [1] : vector<8x8xf32> to vector<8xf32>
    %47 = vector.shape_cast %46 : vector<8xf32> to vector<8x1xf32>
    %cst_20 = arith.constant dense<0.000000e+00> : vector<8x8xf32>
    %48 = tpu.matmul %45, %35, %cst_20 {dimension_numbers = #tpu.dot_dimension_numbers<[1], [0], [0], [1], [0, 0, 1, 1], [], []>, precision = #tpu.contract_precision<fp32>} : vector<8x8xf32>, vector<8x8xf32>, vector<8x8xf32> -> vector<8x8xf32>
    %49 = tpu.reciprocal %47 {approx = true} : vector<8x1xf32> -> vector<8x1xf32>
    %50 = arith.mulf %47, %49 : vector<8x1xf32>
    %cst_21 = arith.constant 2.000000e+00 : f32
    %51 = vector.broadcast %cst_21 : f32 to vector<8x1xf32>
    %52 = arith.subf %51, %50 : vector<8x1xf32>
    %53 = arith.mulf %49, %52 : vector<8x1xf32>
    %54 = vector.broadcast %53 : vector<8x1xf32> to vector<8x8xf32>
    %55 = arith.mulf %48, %54 : vector<8x8xf32>
    %c0_22 = arith.constant 0 : index
    %c8 = arith.constant 8 : index
    %56 = vector.load %arg13[%c0_22, %c8] : memref<16x32xf32, #tpu.memory_space<vmem>>, vector<8x8xf32>
    tpu.vector_store %arg13[%c0_22, %c8], %55 {strides = array<i32>} : memref<16x32xf32, #tpu.memory_space<vmem>>, vector<8x8xf32>,
    %57 = vector.extract_strided_slice %5 {offsets = [0, 16], sizes = [8, 8], strides = [1, 1]} : vector<16x96xf32> to vector<8x8xf32>
    %58 = vector.extract_strided_slice %5 {offsets = [0, 48], sizes = [8, 8], strides = [1, 1]} : vector<16x96xf32> to vector<8x8xf32>
    %59 = vector.extract_strided_slice %5 {offsets = [0, 80], sizes = [8, 8], strides = [1, 1]} : vector<16x96xf32> to vector<8x8xf32>
    %cst_23 = arith.constant dense<0.000000e+00> : vector<8x8xf32>
    %60 = tpu.matmul %57, %58, %cst_23 {dimension_numbers = #tpu.dot_dimension_numbers<[1], [1], [0], [0], [0, 0, 1, 0], [], []>, precision = #tpu.contract_precision<fp32>} : vector<8x8xf32>, vector<8x8xf32>, vector<8x8xf32> -> vector<8x8xf32>
    %cst_24 = arith.constant 0.353553385 : f32
    %61 = vector.broadcast %cst_24 : f32 to vector<8x8xf32>
    %62 = arith.mulf %60, %61 : vector<8x8xf32>
    %63 = vector.broadcast %8 : vector<1x8xf32> to vector<8x8xf32>
    %64 = arith.addf %62, %63 : vector<8x8xf32>
    %cst_25 = arith.constant dense<0xFF800000> : vector<8xf32>
    %65 = vector.multi_reduction <maximumf>, %64, %cst_25 [1] : vector<8x8xf32> to vector<8xf32>
    %66 = vector.shape_cast %65 : vector<8xf32> to vector<8x1xf32>
    %67 = vector.broadcast %66 : vector<8x1xf32> to vector<8x8xf32>
    %68 = arith.subf %64, %67 : vector<8x8xf32>
    %69 = math.exp %68 : vector<8x8xf32>
    %cst_26 = arith.constant dense<0.000000e+00> : vector<8xf32>
    %70 = vector.multi_reduction <add>, %69, %cst_26 [1] : vector<8x8xf32> to vector<8xf32>
    %71 = vector.shape_cast %70 : vector<8xf32> to vector<8x1xf32>
    %cst_27 = arith.constant dense<0.000000e+00> : vector<8x8xf32>
    %72 = tpu.matmul %69, %59, %cst_27 {dimension_numbers = #tpu.dot_dimension_numbers<[1], [0], [0], [1], [0, 0, 1, 1], [], []>, precision = #tpu.contract_precision<fp32>} : vector<8x8xf32>, vector<8x8xf32>, vector<8x8xf32> -> vector<8x8xf32>
    %73 = tpu.reciprocal %71 {approx = true} : vector<8x1xf32> -> vector<8x1xf32>
    %74 = arith.mulf %71, %73 : vector<8x1xf32>
    %cst_28 = arith.constant 2.000000e+00 : f32
    %75 = vector.broadcast %cst_28 : f32 to vector<8x1xf32>
    %76 = arith.subf %75, %74 : vector<8x1xf32>
    %77 = arith.mulf %73, %76 : vector<8x1xf32>
    %78 = vector.broadcast %77 : vector<8x1xf32> to vector<8x8xf32>
    %79 = arith.mulf %72, %78 : vector<8x8xf32>
    %c0_29 = arith.constant 0 : index
    %c16 = arith.constant 16 : index
    %80 = vector.load %arg13[%c0_29, %c16] : memref<16x32xf32, #tpu.memory_space<vmem>>, vector<8x8xf32>
    tpu.vector_store %arg13[%c0_29, %c16], %79 {strides = array<i32>} : memref<16x32xf32, #tpu.memory_space<vmem>>, vector<8x8xf32>,
    %81 = vector.extract_strided_slice %5 {offsets = [0, 24], sizes = [8, 8], strides = [1, 1]} : vector<16x96xf32> to vector<8x8xf32>
    %82 = vector.extract_strided_slice %5 {offsets = [0, 56], sizes = [8, 8], strides = [1, 1]} : vector<16x96xf32> to vector<8x8xf32>
    %83 = vector.extract_strided_slice %5 {offsets = [0, 88], sizes = [8, 8], strides = [1, 1]} : vector<16x96xf32> to vector<8x8xf32>
    %cst_30 = arith.constant dense<0.000000e+00> : vector<8x8xf32>
    %84 = tpu.matmul %81, %82, %cst_30 {dimension_numbers = #tpu.dot_dimension_numbers<[1], [1], [0], [0], [0, 0, 1, 0], [], []>, precision = #tpu.contract_precision<fp32>} : vector<8x8xf32>, vector<8x8xf32>, vector<8x8xf32> -> vector<8x8xf32>
    %cst_31 = arith.constant 0.353553385 : f32
    %85 = vector.broadcast %cst_31 : f32 to vector<8x8xf32>
    %86 = arith.mulf %84, %85 : vector<8x8xf32>
    %87 = vector.broadcast %8 : vector<1x8xf32> to vector<8x8xf32>
    %88 = arith.addf %86, %87 : vector<8x8xf32>
    %cst_32 = arith.constant dense<0xFF800000> : vector<8xf32>
    %89 = vector.multi_reduction <maximumf>, %88, %cst_32 [1] : vector<8x8xf32> to vector<8xf32>
    %90 = vector.shape_cast %89 : vector<8xf32> to vector<8x1xf32>
    %91 = vector.broadcast %90 : vector<8x1xf32> to vector<8x8xf32>
    %92 = arith.subf %88, %91 : vector<8x8xf32>
    %93 = math.exp %92 : vector<8x8xf32>
    %cst_33 = arith.constant dense<0.000000e+00> : vector<8xf32>
    %94 = vector.multi_reduction <add>, %93, %cst_33 [1] : vector<8x8xf32> to vector<8xf32>
    %95 = vector.shape_cast %94 : vector<8xf32> to vector<8x1xf32>
    %cst_34 = arith.constant dense<0.000000e+00> : vector<8x8xf32>
    %96 = tpu.matmul %93, %83, %cst_34 {dimension_numbers = #tpu.dot_dimension_numbers<[1], [0], [0], [1], [0, 0, 1, 1], [], []>, precision = #tpu.contract_precision<fp32>} : vector<8x8xf32>, vector<8x8xf32>, vector<8x8xf32> -> vector<8x8xf32>
    %97 = tpu.reciprocal %95 {approx = true} : vector<8x1xf32> -> vector<8x1xf32>
    %98 = arith.mulf %95, %97 : vector<8x1xf32>
    %cst_35 = arith.constant 2.000000e+00 : f32
    %99 = vector.broadcast %cst_35 : f32 to vector<8x1xf32>
    %100 = arith.subf %99, %98 : vector<8x1xf32>
    %101 = arith.mulf %97, %100 : vector<8x1xf32>
    %102 = vector.broadcast %101 : vector<8x1xf32> to vector<8x8xf32>
    %103 = arith.mulf %96, %102 : vector<8x8xf32>
    %c0_36 = arith.constant 0 : index
    %c24 = arith.constant 24 : index
    %104 = vector.load %arg13[%c0_36, %c24] : memref<16x32xf32, #tpu.memory_space<vmem>>, vector<8x8xf32>
    tpu.vector_store %arg13[%c0_36, %c24], %103 {strides = array<i32>} : memref<16x32xf32, #tpu.memory_space<vmem>>, vector<8x8xf32>,
    %105 = vector.extract_strided_slice %6 {offsets = [1, 0, 0], sizes = [1, 1, 8], strides = [1, 1, 1]} : vector<2x1x8xf32> to vector<1x1x8xf32>
    %106 = vector.shape_cast %105 : vector<1x1x8xf32> to vector<1x8xf32>
    %107 = vector.extract_strided_slice %5 {offsets = [8, 0], sizes = [8, 8], strides = [1, 1]} : vector<16x96xf32> to vector<8x8xf32>
    %108 = vector.extract_strided_slice %5 {offsets = [8, 32], sizes = [8, 8], strides = [1, 1]} : vector<16x96xf32> to vector<8x8xf32>
    %109 = vector.extract_strided_slice %5 {offsets = [8, 64], sizes = [8, 8], strides = [1, 1]} : vector<16x96xf32> to vector<8x8xf32>
    %cst_37 = arith.constant dense<0.000000e+00> : vector<8x8xf32>
    %110 = tpu.matmul %107, %108, %cst_37 {dimension_numbers = #tpu.dot_dimension_numbers<[1], [1], [0], [0], [0, 0, 1, 0], [], []>, precision = #tpu.contract_precision<fp32>} : vector<8x8xf32>, vector<8x8xf32>, vector<8x8xf32> -> vector<8x8xf32>
    %cst_38 = arith.constant 0.353553385 : f32
    %111 = vector.broadcast %cst_38 : f32 to vector<8x8xf32>
    %112 = arith.mulf %110, %111 : vector<8x8xf32>
    %113 = vector.broadcast %106 : vector<1x8xf32> to vector<8x8xf32>
    %114 = arith.addf %112, %113 : vector<8x8xf32>
    %cst_39 = arith.constant dense<0xFF800000> : vector<8xf32>
    %115 = vector.multi_reduction <maximumf>, %114, %cst_39 [1] : vector<8x8xf32> to vector<8xf32>
    %116 = vector.shape_cast %115 : vector<8xf32> to vector<8x1xf32>
    %117 = vector.broadcast %116 : vector<8x1xf32> to vector<8x8xf32>
    %118 = arith.subf %114, %117 : vector<8x8xf32>
    %119 = math.exp %118 : vector<8x8xf32>
    %cst_40 = arith.constant dense<0.000000e+00> : vector<8xf32>
    %120 = vector.multi_reduction <add>, %119, %cst_40 [1] : vector<8x8xf32> to vector<8xf32>
    %121 = vector.shape_cast %120 : vector<8xf32> to vector<8x1xf32>
    %cst_41 = arith.constant dense<0.000000e+00> : vector<8x8xf32>
    %122 = tpu.matmul %119, %109, %cst_41 {dimension_numbers = #tpu.dot_dimension_numbers<[1], [0], [0], [1], [0, 0, 1, 1], [], []>, precision = #tpu.contract_precision<fp32>} : vector<8x8xf32>, vector<8x8xf32>, vector<8x8xf32> -> vector<8x8xf32>
    %123 = tpu.reciprocal %121 {approx = true} : vector<8x1xf32> -> vector<8x1xf32>
    %124 = arith.mulf %121, %123 : vector<8x1xf32>
    %cst_42 = arith.constant 2.000000e+00 : f32
    %125 = vector.broadcast %cst_42 : f32 to vector<8x1xf32>
    %126 = arith.subf %125, %124 : vector<8x1xf32>
    %127 = arith.mulf %123, %126 : vector<8x1xf32>
    %128 = vector.broadcast %127 : vector<8x1xf32> to vector<8x8xf32>
    %129 = arith.mulf %122, %128 : vector<8x8xf32>
    %c8_43 = arith.constant 8 : index
    %c0_44 = arith.constant 0 : index
    %130 = vector.load %arg13[%c8_43, %c0_44] : memref<16x32xf32, #tpu.memory_space<vmem>>, vector<8x8xf32>
    tpu.vector_store %arg13[%c8_43, %c0_44], %129 {strides = array<i32>} : memref<16x32xf32, #tpu.memory_space<vmem>>, vector<8x8xf32>,
    %131 = vector.extract_strided_slice %5 {offsets = [8, 8], sizes = [8, 8], strides = [1, 1]} : vector<16x96xf32> to vector<8x8xf32>
    %132 = vector.extract_strided_slice %5 {offsets = [8, 40], sizes = [8, 8], strides = [1, 1]} : vector<16x96xf32> to vector<8x8xf32>
    %133 = vector.extract_strided_slice %5 {offsets = [8, 72], sizes = [8, 8], strides = [1, 1]} : vector<16x96xf32> to vector<8x8xf32>
    %cst_45 = arith.constant dense<0.000000e+00> : vector<8x8xf32>
    %134 = tpu.matmul %131, %132, %cst_45 {dimension_numbers = #tpu.dot_dimension_numbers<[1], [1], [0], [0], [0, 0, 1, 0], [], []>, precision = #tpu.contract_precision<fp32>} : vector<8x8xf32>, vector<8x8xf32>, vector<8x8xf32> -> vector<8x8xf32>
    %cst_46 = arith.constant 0.353553385 : f32
    %135 = vector.broadcast %cst_46 : f32 to vector<8x8xf32>
    %136 = arith.mulf %134, %135 : vector<8x8xf32>
    %137 = vector.broadcast %106 : vector<1x8xf32> to vector<8x8xf32>
    %138 = arith.addf %136, %137 : vector<8x8xf32>
    %cst_47 = arith.constant dense<0xFF800000> : vector<8xf32>
    %139 = vector.multi_reduction <maximumf>, %138, %cst_47 [1] : vector<8x8xf32> to vector<8xf32>
    %140 = vector.shape_cast %139 : vector<8xf32> to vector<8x1xf32>
    %141 = vector.broadcast %140 : vector<8x1xf32> to vector<8x8xf32>
    %142 = arith.subf %138, %141 : vector<8x8xf32>
    %143 = math.exp %142 : vector<8x8xf32>
    %cst_48 = arith.constant dense<0.000000e+00> : vector<8xf32>
    %144 = vector.multi_reduction <add>, %143, %cst_48 [1] : vector<8x8xf32> to vector<8xf32>
    %145 = vector.shape_cast %144 : vector<8xf32> to vector<8x1xf32>
    %cst_49 = arith.constant dense<0.000000e+00> : vector<8x8xf32>
    %146 = tpu.matmul %143, %133, %cst_49 {dimension_numbers = #tpu.dot_dimension_numbers<[1], [0], [0], [1], [0, 0, 1, 1], [], []>, precision = #tpu.contract_precision<fp32>} : vector<8x8xf32>, vector<8x8xf32>, vector<8x8xf32> -> vector<8x8xf32>
    %147 = tpu.reciprocal %145 {approx = true} : vector<8x1xf32> -> vector<8x1xf32>
    %148 = arith.mulf %145, %147 : vector<8x1xf32>
    %cst_50 = arith.constant 2.000000e+00 : f32
    %149 = vector.broadcast %cst_50 : f32 to vector<8x1xf32>
    %150 = arith.subf %149, %148 : vector<8x1xf32>
    %151 = arith.mulf %147, %150 : vector<8x1xf32>
    %152 = vector.broadcast %151 : vector<8x1xf32> to vector<8x8xf32>
    %153 = arith.mulf %146, %152 : vector<8x8xf32>
    %c8_51 = arith.constant 8 : index
    %c8_52 = arith.constant 8 : index
    %154 = vector.load %arg13[%c8_51, %c8_52] : memref<16x32xf32, #tpu.memory_space<vmem>>, vector<8x8xf32>
    tpu.vector_store %arg13[%c8_51, %c8_52], %153 {strides = array<i32>} : memref<16x32xf32, #tpu.memory_space<vmem>>, vector<8x8xf32>,
    %155 = vector.extract_strided_slice %5 {offsets = [8, 16], sizes = [8, 8], strides = [1, 1]} : vector<16x96xf32> to vector<8x8xf32>
    %156 = vector.extract_strided_slice %5 {offsets = [8, 48], sizes = [8, 8], strides = [1, 1]} : vector<16x96xf32> to vector<8x8xf32>
    %157 = vector.extract_strided_slice %5 {offsets = [8, 80], sizes = [8, 8], strides = [1, 1]} : vector<16x96xf32> to vector<8x8xf32>
    %cst_53 = arith.constant dense<0.000000e+00> : vector<8x8xf32>
    %158 = tpu.matmul %155, %156, %cst_53 {dimension_numbers = #tpu.dot_dimension_numbers<[1], [1], [0], [0], [0, 0, 1, 0], [], []>, precision = #tpu.contract_precision<fp32>} : vector<8x8xf32>, vector<8x8xf32>, vector<8x8xf32> -> vector<8x8xf32>
    %cst_54 = arith.constant 0.353553385 : f32
    %159 = vector.broadcast %cst_54 : f32 to vector<8x8xf32>
    %160 = arith.mulf %158, %159 : vector<8x8xf32>
    %161 = vector.broadcast %106 : vector<1x8xf32> to vector<8x8xf32>
    %162 = arith.addf %160, %161 : vector<8x8xf32>
    %cst_55 = arith.constant dense<0xFF800000> : vector<8xf32>
    %163 = vector.multi_reduction <maximumf>, %162, %cst_55 [1] : vector<8x8xf32> to vector<8xf32>
    %164 = vector.shape_cast %163 : vector<8xf32> to vector<8x1xf32>
    %165 = vector.broadcast %164 : vector<8x1xf32> to vector<8x8xf32>
    %166 = arith.subf %162, %165 : vector<8x8xf32>
    %167 = math.exp %166 : vector<8x8xf32>
    %cst_56 = arith.constant dense<0.000000e+00> : vector<8xf32>
    %168 = vector.multi_reduction <add>, %167, %cst_56 [1] : vector<8x8xf32> to vector<8xf32>
    %169 = vector.shape_cast %168 : vector<8xf32> to vector<8x1xf32>
    %cst_57 = arith.constant dense<0.000000e+00> : vector<8x8xf32>
    %170 = tpu.matmul %167, %157, %cst_57 {dimension_numbers = #tpu.dot_dimension_numbers<[1], [0], [0], [1], [0, 0, 1, 1], [], []>, precision = #tpu.contract_precision<fp32>} : vector<8x8xf32>, vector<8x8xf32>, vector<8x8xf32> -> vector<8x8xf32>
    %171 = tpu.reciprocal %169 {approx = true} : vector<8x1xf32> -> vector<8x1xf32>
    %172 = arith.mulf %169, %171 : vector<8x1xf32>
    %cst_58 = arith.constant 2.000000e+00 : f32
    %173 = vector.broadcast %cst_58 : f32 to vector<8x1xf32>
    %174 = arith.subf %173, %172 : vector<8x1xf32>
    %175 = arith.mulf %171, %174 : vector<8x1xf32>
    %176 = vector.broadcast %175 : vector<8x1xf32> to vector<8x8xf32>
    %177 = arith.mulf %170, %176 : vector<8x8xf32>
    %c8_59 = arith.constant 8 : index
    %c16_60 = arith.constant 16 : index
    %178 = vector.load %arg13[%c8_59, %c16_60] : memref<16x32xf32, #tpu.memory_space<vmem>>, vector<8x8xf32>
    tpu.vector_store %arg13[%c8_59, %c16_60], %177 {strides = array<i32>} : memref<16x32xf32, #tpu.memory_space<vmem>>, vector<8x8xf32>,
    %179 = vector.extract_strided_slice %5 {offsets = [8, 24], sizes = [8, 8], strides = [1, 1]} : vector<16x96xf32> to vector<8x8xf32>
    %180 = vector.extract_strided_slice %5 {offsets = [8, 56], sizes = [8, 8], strides = [1, 1]} : vector<16x96xf32> to vector<8x8xf32>
    %181 = vector.extract_strided_slice %5 {offsets = [8, 88], sizes = [8, 8], strides = [1, 1]} : vector<16x96xf32> to vector<8x8xf32>
    %cst_61 = arith.constant dense<0.000000e+00> : vector<8x8xf32>
    %182 = tpu.matmul %179, %180, %cst_61 {dimension_numbers = #tpu.dot_dimension_numbers<[1], [1], [0], [0], [0, 0, 1, 0], [], []>, precision = #tpu.contract_precision<fp32>} : vector<8x8xf32>, vector<8x8xf32>, vector<8x8xf32> -> vector<8x8xf32>
    %cst_62 = arith.constant 0.353553385 : f32
    %183 = vector.broadcast %cst_62 : f32 to vector<8x8xf32>
    %184 = arith.mulf %182, %183 : vector<8x8xf32>
    %185 = vector.broadcast %106 : vector<1x8xf32> to vector<8x8xf32>
    %186 = arith.addf %184, %185 : vector<8x8xf32>
    %cst_63 = arith.constant dense<0xFF800000> : vector<8xf32>
    %187 = vector.multi_reduction <maximumf>, %186, %cst_63 [1] : vector<8x8xf32> to vector<8xf32>
    %188 = vector.shape_cast %187 : vector<8xf32> to vector<8x1xf32>
    %189 = vector.broadcast %188 : vector<8x1xf32> to vector<8x8xf32>
    %190 = arith.subf %186, %189 : vector<8x8xf32>
    %191 = math.exp %190 : vector<8x8xf32>
    %cst_64 = arith.constant dense<0.000000e+00> : vector<8xf32>
    %192 = vector.multi_reduction <add>, %191, %cst_64 [1] : vector<8x8xf32> to vector<8xf32>
    %193 = vector.shape_cast %192 : vector<8xf32> to vector<8x1xf32>
    %cst_65 = arith.constant dense<0.000000e+00> : vector<8x8xf32>
    %194 = tpu.matmul %191, %181, %cst_65 {dimension_numbers = #tpu.dot_dimension_numbers<[1], [0], [0], [1], [0, 0, 1, 1], [], []>, precision = #tpu.contract_precision<fp32>} : vector<8x8xf32>, vector<8x8xf32>, vector<8x8xf32> -> vector<8x8xf32>
    %195 = tpu.reciprocal %193 {approx = true} : vector<8x1xf32> -> vector<8x1xf32>
    %196 = arith.mulf %193, %195 : vector<8x1xf32>
    %cst_66 = arith.constant 2.000000e+00 : f32
    %197 = vector.broadcast %cst_66 : f32 to vector<8x1xf32>
    %198 = arith.subf %197, %196 : vector<8x1xf32>
    %199 = arith.mulf %195, %198 : vector<8x1xf32>
    %200 = vector.broadcast %199 : vector<8x1xf32> to vector<8x8xf32>
    %201 = arith.mulf %194, %200 : vector<8x8xf32>
    %c8_67 = arith.constant 8 : index
    %c24_68 = arith.constant 24 : index
    %202 = vector.load %arg13[%c8_67, %c24_68] : memref<16x32xf32, #tpu.memory_space<vmem>>, vector<8x8xf32>
    tpu.vector_store %arg13[%c8_67, %c24_68], %201 {strides = array<i32>} : memref<16x32xf32, #tpu.memory_space<vmem>>, vector<8x8xf32>,
    %c0_69 = arith.constant 0 : index
    %c0_70 = arith.constant 0 : index
    %203 = vector.load %arg13[%c0_69, %c0_70] : memref<16x32xf32, #tpu.memory_space<vmem>>, vector<16x32xf32>
    %c0_71 = arith.constant 0 : index
    %c0_72 = arith.constant 0 : index
    %204 = vector.load %arg6[%c0_71, %c0_72] : memref<32x32xf32, #tpu.memory_space<vmem>>, vector<32x32xf32>
    %cst_73 = arith.constant dense<0.000000e+00> : vector<16x32xf32>
    %205 = tpu.matmul %203, %204, %cst_73 {dimension_numbers = #tpu.dot_dimension_numbers<[1], [0], [0], [1], [0, 0, 1, 1], [], []>, precision = #tpu.contract_precision<fp32>} : vector<16x32xf32>, vector<32x32xf32>, vector<16x32xf32> -> vector<16x32xf32>
    %c0_74 = arith.constant 0 : index
    %c0_75 = arith.constant 0 : index
    %206 = vector.load %arg7[%c0_74, %c0_75] : memref<1x32xf32, #tpu.memory_space<vmem>>, vector<1x32xf32>
    %207 = vector.broadcast %206 : vector<1x32xf32> to vector<16x32xf32>
    %208 = arith.addf %205, %207 : vector<16x32xf32>
    %c0_76 = arith.constant 0 : index
    %209 = memref.load %arg3[%c0_76] : memref<4xf32, #tpu.memory_space<smem>>
    %c1 = arith.constant 1 : index
    %210 = memref.load %arg3[%c1] : memref<4xf32, #tpu.memory_space<smem>>
    %c2 = arith.constant 2 : index
    %211 = memref.load %arg3[%c2] : memref<4xf32, #tpu.memory_space<smem>>
    %c3 = arith.constant 3 : index
    %212 = memref.load %arg3[%c3] : memref<4xf32, #tpu.memory_space<smem>>
    %cst_77 = arith.constant dense<0.000000e+00> : vector<16xf32>
    %213 = vector.multi_reduction <add>, %208, %cst_77 [1] : vector<16x32xf32> to vector<16xf32>
    %214 = vector.shape_cast %213 : vector<16xf32> to vector<16x1xf32>
    %cst_78 = arith.constant 3.200000e+01 : f32
    %215 = vector.broadcast %cst_78 : f32 to vector<16x1xf32>
    %216 = arith.divf %214, %215 : vector<16x1xf32>
    %217 = vector.broadcast %216 : vector<16x1xf32> to vector<16x32xf32>
    %218 = arith.subf %208, %217 : vector<16x32xf32>
    %219 = arith.mulf %218, %218 : vector<16x32xf32>
    %cst_79 = arith.constant dense<0.000000e+00> : vector<16xf32>
    %220 = vector.multi_reduction <add>, %219, %cst_79 [1] : vector<16x32xf32> to vector<16xf32>
    %221 = vector.shape_cast %220 : vector<16xf32> to vector<16x1xf32>
    %cst_80 = arith.constant 0.0322580636 : f32
    %222 = vector.broadcast %cst_80 : f32 to vector<16x1xf32>
    %223 = arith.mulf %221, %222 : vector<16x1xf32>
    %224 = math.sqrt %223 : vector<16x1xf32>
    %225 = vector.broadcast %209 : f32 to vector<16x32xf32>
    %226 = arith.mulf %225, %218 : vector<16x32xf32>
    %cst_81 = arith.constant 9.99999997E-7 : f32
    %227 = vector.broadcast %cst_81 : f32 to vector<16x1xf32>
    %228 = arith.addf %227, %224 : vector<16x1xf32>
    %229 = tpu.reciprocal %228 {approx = true} : vector<16x1xf32> -> vector<16x1xf32>
    %230 = arith.mulf %228, %229 : vector<16x1xf32>
    %cst_82 = arith.constant 2.000000e+00 : f32
    %231 = vector.broadcast %cst_82 : f32 to vector<16x1xf32>
    %232 = arith.subf %231, %230 : vector<16x1xf32>
    %233 = arith.mulf %229, %232 : vector<16x1xf32>
    %234 = vector.broadcast %233 : vector<16x1xf32> to vector<16x32xf32>
    %235 = arith.mulf %226, %234 : vector<16x32xf32>
    %236 = vector.broadcast %210 : f32 to vector<16x32xf32>
    %237 = arith.addf %235, %236 : vector<16x32xf32>
    %238 = arith.addf %0, %237 : vector<16x32xf32>
    %c0_83 = arith.constant 0 : index
    %c0_84 = arith.constant 0 : index
    %239 = vector.load %arg8[%c0_83, %c0_84] : memref<32x64xf32, #tpu.memory_space<vmem>>, vector<32x64xf32>
    %cst_85 = arith.constant dense<0.000000e+00> : vector<16x64xf32>
    %240 = tpu.matmul %238, %239, %cst_85 {dimension_numbers = #tpu.dot_dimension_numbers<[1], [0], [0], [1], [0, 0, 1, 1], [], []>, precision = #tpu.contract_precision<fp32>} : vector<16x32xf32>, vector<32x64xf32>, vector<16x64xf32> -> vector<16x64xf32>
    %c0_86 = arith.constant 0 : index
    %c0_87 = arith.constant 0 : index
    %241 = vector.load %arg9[%c0_86, %c0_87] : memref<1x64xf32, #tpu.memory_space<vmem>>, vector<1x64xf32>
    %242 = vector.broadcast %241 : vector<1x64xf32> to vector<16x64xf32>
    %243 = arith.addf %240, %242 : vector<16x64xf32>
    %cst_88 = arith.constant 0.000000e+00 : f32
    %244 = vector.broadcast %cst_88 : f32 to vector<16x64xf32>
    %245 = arith.maximumf %243, %244 : vector<16x64xf32>
    %c0_89 = arith.constant 0 : index
    %c0_90 = arith.constant 0 : index
    %246 = vector.load %arg10[%c0_89, %c0_90] : memref<64x32xf32, #tpu.memory_space<vmem>>, vector<64x32xf32>
    %cst_91 = arith.constant dense<0.000000e+00> : vector<16x32xf32>
    %247 = tpu.matmul %245, %246, %cst_91 {dimension_numbers = #tpu.dot_dimension_numbers<[1], [0], [0], [1], [0, 0, 1, 1], [], []>, precision = #tpu.contract_precision<fp32>} : vector<16x64xf32>, vector<64x32xf32>, vector<16x32xf32> -> vector<16x32xf32>
    %c0_92 = arith.constant 0 : index
    %c0_93 = arith.constant 0 : index
    %248 = vector.load %arg11[%c0_92, %c0_93] : memref<1x32xf32, #tpu.memory_space<vmem>>, vector<1x32xf32>
    %249 = vector.broadcast %248 : vector<1x32xf32> to vector<16x32xf32>
    %250 = arith.addf %247, %249 : vector<16x32xf32>
    %cst_94 = arith.constant dense<0.000000e+00> : vector<16xf32>
    %251 = vector.multi_reduction <add>, %250, %cst_94 [1] : vector<16x32xf32> to vector<16xf32>
    %252 = vector.shape_cast %251 : vector<16xf32> to vector<16x1xf32>
    %cst_95 = arith.constant 3.200000e+01 : f32
    %253 = vector.broadcast %cst_95 : f32 to vector<16x1xf32>
    %254 = arith.divf %252, %253 : vector<16x1xf32>
    %255 = vector.broadcast %254 : vector<16x1xf32> to vector<16x32xf32>
    %256 = arith.subf %250, %255 : vector<16x32xf32>
    %257 = arith.mulf %256, %256 : vector<16x32xf32>
    %cst_96 = arith.constant dense<0.000000e+00> : vector<16xf32>
    %258 = vector.multi_reduction <add>, %257, %cst_96 [1] : vector<16x32xf32> to vector<16xf32>
    %259 = vector.shape_cast %258 : vector<16xf32> to vector<16x1xf32>
    %cst_97 = arith.constant 0.0322580636 : f32
    %260 = vector.broadcast %cst_97 : f32 to vector<16x1xf32>
    %261 = arith.mulf %259, %260 : vector<16x1xf32>
    %262 = math.sqrt %261 : vector<16x1xf32>
    %263 = vector.broadcast %211 : f32 to vector<16x32xf32>
    %264 = arith.mulf %263, %256 : vector<16x32xf32>
    %cst_98 = arith.constant 9.99999997E-7 : f32
    %265 = vector.broadcast %cst_98 : f32 to vector<16x1xf32>
    %266 = arith.addf %265, %262 : vector<16x1xf32>
    %267 = tpu.reciprocal %266 {approx = true} : vector<16x1xf32> -> vector<16x1xf32>
    %268 = arith.mulf %266, %267 : vector<16x1xf32>
    %cst_99 = arith.constant 2.000000e+00 : f32
    %269 = vector.broadcast %cst_99 : f32 to vector<16x1xf32>
    %270 = arith.subf %269, %268 : vector<16x1xf32>
    %271 = arith.mulf %267, %270 : vector<16x1xf32>
    %272 = vector.broadcast %271 : vector<16x1xf32> to vector<16x32xf32>
    %273 = arith.mulf %264, %272 : vector<16x32xf32>
    %274 = vector.broadcast %212 : f32 to vector<16x32xf32>
    %275 = arith.addf %273, %274 : vector<16x32xf32>
    %276 = arith.addf %238, %275 : vector<16x32xf32>
    %c0_100 = arith.constant 0 : index
    %c0_101 = arith.constant 0 : index
    %277 = vector.load %arg12[%c0_100, %c0_101] : memref<16x32xf32, #tpu.memory_space<vmem>>, vector<16x32xf32>
    tpu.vector_store %arg12[%c0_100, %c0_101], %276 {strides = array<i32>} : memref<16x32xf32, #tpu.memory_space<vmem>>, vector<16x32xf32>,
    return
  }
  func.func @transform_0(%arg0: i32) -> (i32, i32) {
    %c0_i32 = arith.constant 0 : i32
    %c0_i32_0 = arith.constant 0 : i32
    %c0_i32_1 = arith.constant 0 : i32
    return %c0_i32, %c0_i32_0 : i32, i32
  }
  func.func @transform_1(%arg0: i32) -> (i32, i32, i32) {
    %c0_i32 = arith.constant 0 : i32
    %c0_i32_0 = arith.constant 0 : i32
    %c0_i32_1 = arith.constant 0 : i32
    %c0_i32_2 = arith.constant 0 : i32
    return %c0_i32, %c0_i32_0, %c0_i32_1 : i32, i32, i32
  }
  func.func @transform_2(%arg0: i32) -> i32 {
    %c0_i32 = arith.constant 0 : i32
    %c0_i32_0 = arith.constant 0 : i32
    return %c0_i32 : i32
  }
  func.func @transform_3(%arg0: i32) -> (i32, i32) {
    %c0_i32 = arith.constant 0 : i32
    %c0_i32_0 = arith.constant 0 : i32
    %c0_i32_1 = arith.constant 0 : i32
    return %c0_i32, %c0_i32_0 : i32, i32
  }
  func.func @transform_4(%arg0: i32) -> (i32, i32) {
    %c0_i32 = arith.constant 0 : i32
    %c0_i32_0 = arith.constant 0 : i32
    %c0_i32_1 = arith.constant 0 : i32
    return %c0_i32, %c0_i32_0 : i32, i32
  }
  func.func @transform_5(%arg0: i32) -> (i32, i32) {
    %c0_i32 = arith.constant 0 : i32
    %c0_i32_0 = arith.constant 0 : i32
    %c0_i32_1 = arith.constant 0 : i32
    return %c0_i32, %c0_i32_0 : i32, i32
  }
  func.func @transform_6(%arg0: i32) -> (i32, i32) {
    %c0_i32 = arith.constant 0 : i32
    %c0_i32_0 = arith.constant 0 : i32
    %c0_i32_1 = arith.constant 0 : i32
    return %c0_i32, %c0_i32_0 : i32, i32
  }
  func.func @transform_7(%arg0: i32) -> (i32, i32) {
    %c0_i32 = arith.constant 0 : i32
    %c0_i32_0 = arith.constant 0 : i32
    %c0_i32_1 = arith.constant 0 : i32
    return %c0_i32, %c0_i32_0 : i32, i32
  }
  func.func @transform_8(%arg0: i32) -> (i32, i32) {
    %c0_i32 = arith.constant 0 : i32
    %c0_i32_0 = arith.constant 0 : i32
    %c0_i32_1 = arith.constant 0 : i32
    return %c0_i32, %c0_i32_0 : i32, i32
  }
  func.func @transform_9(%arg0: i32) -> (i32, i32) {
    %c0_i32 = arith.constant 0 : i32
    %c0_i32_0 = arith.constant 0 : i32
    %c0_i32_1 = arith.constant 0 : i32
    return %c0_i32, %c0_i32_0 : i32, i32
  }
  func.func @transform_10(%arg0: i32) -> (i32, i32) {
    %c0_i32 = arith.constant 0 : i32
    %c0_i32_0 = arith.constant 0 : i32
    %c0_i32_1 = arith.constant 0 : i32
    return %c0_i32, %c0_i32_0 : i32, i32
  }
  func.func @transform_11(%arg0: i32) -> (i32, i32) {
    %c0_i32 = arith.constant 0 : i32
    %c0_i32_0 = arith.constant 0 : i32
    %c0_i32_1 = arith.constant 0 : i32
    return %c0_i32, %c0_i32_0 : i32, i32
  }
}

</mosaic_0001>

<llo_original>
// kernel: tpu_custom_call.1
$region0: #{tpu_custom_call.1}
  #allocation0 [shape = 'u32[]', space=smem, size = 0x4, offset = 0x4, fixed_abs, tag = 'smem constant byte address 0x4 - core index']
  #allocation1 [shape = 'u32[144,128]{1,0:T(1,128)}', space=vmem, size = 0x12000, scoped, tag = 'internal scratch']
  #allocation2 [shape = 'f32[16,32]{1,0:T(8,128)}', space=vmem, size = 0x2000, scoped, tag = 'scratch operand']
  %s0 = inlined_call_operand.hbm [shape: f32[16,32], index: 0, kind: input, shape index: {}]
  %s1 = inlined_call_operand.vmem [shape: f32[2,1,8], index: 1, kind: input, shape index: {}]
  %s2 = inlined_call_operand.hbm [shape: f32[4], index: 2, kind: input, shape index: {}]
  %s3 = inlined_call_operand.vmem [shape: f32[32,96], index: 3, kind: input, shape index: {}]
  %s4 = inlined_call_operand.hbm [shape: f32[1,96], index: 4, kind: input, shape index: {}]
  %s5 = inlined_call_operand.vmem [shape: f32[32,32], index: 5, kind: input, shape index: {}]
  %s6 = inlined_call_operand.hbm [shape: f32[1,32], index: 6, kind: input, shape index: {}]
  %s7 = inlined_call_operand.vmem [shape: f32[32,64], index: 7, kind: input, shape index: {}]
  %s8 = inlined_call_operand.hbm [shape: f32[1,64], index: 8, kind: input, shape index: {}]
  %s9 = inlined_call_operand.vmem [shape: f32[64,32], index: 9, kind: input, shape index: {}]
  %s10 = inlined_call_operand.vmem [shape: f32[1,32], index: 10, kind: input, shape index: {}]
  %s11 = inlined_call_operand.hbm [shape: f32[16,32], index: 11, kind: output, shape index: {}]
  %s12 = sld [smem:[#allocation0]]
  $region74: #{tpu_custom_call.1} parent=0
    _
  %s14 = ssub.s32 1, %s12
  %s15 = scalar_select 0, %s14, %s12
  $region1: #{tpu_custom_call.1} parent=0
    #allocation3 [shape = 'u8[8192]{0}', space=vmem, size = 0x2000, scoped, tag = 'input window, operand 0, single buffered']
    #allocation4 [shape = 's32[1]{0}', space=sflag, size = 0x4, scoped, tag = 'scoped memory for tpu_custom_call.1']
    #allocation5 [shape = 's32[1]{0}', space=sflag, size = 0x4, scoped, tag = 'scoped memory for tpu_custom_call.1']
    #allocation6 [shape = 's32[1]{0}', space=sflag, size = 0x4, scoped, tag = 'scoped memory for tpu_custom_call.1']
    #allocation7 [shape = 'u8[512]{0}', space=smem, size = 0x200, scoped, tag = 'input window, operand 2, single buffered']
    #allocation8 [shape = 'u8[512]{0}', space=vmem, size = 0x400, scoped, tag = 'input window, operand 4, single buffered']
    #allocation9 [shape = 's32[1]{0}', space=sflag, size = 0x4, scoped, tag = 'scoped memory for tpu_custom_call.1']
    #allocation10 [shape = 'u8[512]{0}', space=vmem, size = 0x400, scoped, tag = 'input window, operand 6, single buffered']
    #allocation11 [shape = 'u8[512]{0}', space=vmem, size = 0x400, scoped, tag = 'input window, operand 8, single buffered']
    #allocation12 [shape = 's32[1]{0}', space=sflag, size = 0x4, scoped, tag = 'scoped memory for tpu_custom_call.1']
    #allocation13 [shape = 'u8[8192]{0}', space=vmem, size = 0x2000, scoped, tag = 'output window, operand 0, single buffered']
    %16 = vsyncpa [#allocation4], 0
    %17 = vsyncpa [#allocation6], 0
    %18 = vsyncpa [#allocation9], 0
    %19 = vsyncpa [#allocation12], 0
    %20 = vsyncpa [#allocation5], 0
    // Predicated region
    $region2: #{tpu_custom_call.1} parent=1 // pred_check
      _
    $region3: #{tpu_custom_call.1} parent=1 // pred_check_branch
      %22 = sbr.rel (0) target = $region5
    $region4: #{tpu_custom_call.1} parent=1 // pred_region
      %s24 = ssub.s32 256, 256
      %25 = vsyncadd [#allocation4], %s24
      %s26 = sshll.u32 [#allocation3], 4
      %s27 = int_to_ptr.vmem [resolvable:$true] %s26
      %32 = dma.hbm_to_vmem [thread:$0]  %s0, 256, %s27, [#allocation4], 128, 128, 8
    $region5: #{tpu_custom_call.1} parent=1 // pred_fallthru
      _
    // Predicated region
    $region6: #{tpu_custom_call.1} parent=1 // pred_check
      _
    $region7: #{tpu_custom_call.1} parent=1 // pred_check_branch
      %34 = sbr.rel (0) target = $region9
    $region8: #{tpu_custom_call.1} parent=1 // pred_region
      _
    $region9: #{tpu_custom_call.1} parent=1 // pred_fallthru
      _
    // Predicated region
    $region10: #{tpu_custom_call.1} parent=1 // pred_check
      _
    $region11: #{tpu_custom_call.1} parent=1 // pred_check_branch
      %36 = sbr.rel (0) target = $region13
    $region12: #{tpu_custom_call.1} parent=1 // pred_region
      %s38 = ssub.s32 16, 16
      %39 = vsyncadd [#allocation6], %s38
      %42 = dma.hbm_to_smem %s2, 16, [#allocation7], [#allocation6]
    $region13: #{tpu_custom_call.1} parent=1 // pred_fallthru
      _
    // Predicated region
    $region14: #{tpu_custom_call.1} parent=1 // pred_check
      _
    $region15: #{tpu_custom_call.1} parent=1 // pred_check_branch
      %44 = sbr.rel (0) target = $region17
    $region16: #{tpu_custom_call.1} parent=1 // pred_region
      _
    $region17: #{tpu_custom_call.1} parent=1 // pred_fallthru
      _
    // Predicated region
    $region18: #{tpu_custom_call.1} parent=1 // pred_check
      _
    $region19: #{tpu_custom_call.1} parent=1 // pred_check_branch
      %46 = sbr.rel (0) target = $region21
    $region20: #{tpu_custom_call.1} parent=1 // pred_region
      %s48 = ssub.s32 16, 16
      %49 = vsyncadd [#allocation9], %s48
      %s51 = sshll.u32 [#allocation8], 4
      %s52 = int_to_ptr.vmem [resolvable:$true] %s51
      %54 = dma.hbm_to_vmem [thread:$0]  %s4, 16, %s52, [#allocation9]
    $region21: #{tpu_custom_call.1} parent=1 // pred_fallthru
      _
    // Predicated region
    $region22: #{tpu_custom_call.1} parent=1 // pred_check
      _
    $region23: #{tpu_custom_call.1} parent=1 // pred_check_branch
      %56 = sbr.rel (0) target = $region25
    $region24: #{tpu_custom_call.1} parent=1 // pred_region
      _
    $region25: #{tpu_custom_call.1} parent=1 // pred_fallthru
      _
    // Predicated region
    $region26: #{tpu_custom_call.1} parent=1 // pred_check
      _
    $region27: #{tpu_custom_call.1} parent=1 // pred_check_branch
      %58 = sbr.rel (0) target = $region29
    $region28: #{tpu_custom_call.1} parent=1 // pred_region
      %s60 = ssub.s32 16, 16
      %61 = vsyncadd [#allocation9], %s60
      %s63 = sshll.u32 [#allocation10], 4
      %s64 = int_to_ptr.vmem [resolvable:$true] %s63
      %66 = dma.hbm_to_vmem [thread:$0]  %s6, 16, %s64, [#allocation9]
    $region29: #{tpu_custom_call.1} parent=1 // pred_fallthru
      _
    // Predicated region
    $region30: #{tpu_custom_call.1} parent=1 // pred_check
      _
    $region31: #{tpu_custom_call.1} parent=1 // pred_check_branch
      %68 = sbr.rel (0) target = $region33
    $region32: #{tpu_custom_call.1} parent=1 // pred_region
      _
    $region33: #{tpu_custom_call.1} parent=1 // pred_fallthru
      _
    // Predicated region
    $region34: #{tpu_custom_call.1} parent=1 // pred_check
      _
    $region35: #{tpu_custom_call.1} parent=1 // pred_check_branch
      %70 = sbr.rel (0) target = $region37
    $region36: #{tpu_custom_call.1} parent=1 // pred_region
      %s72 = ssub.s32 16, 16
      %73 = vsyncadd [#allocation12], %s72
      %s75 = sshll.u32 [#allocation11], 4
      %s76 = int_to_ptr.vmem [resolvable:$true] %s75
      %78 = dma.hbm_to_vmem [thread:$0]  %s8, 16, %s76, [#allocation12]
    $region37: #{tpu_custom_call.1} parent=1 // pred_fallthru
      _
    // Predicated region
    $region38: #{tpu_custom_call.1} parent=1 // pred_check
      _
    $region39: #{tpu_custom_call.1} parent=1 // pred_check_branch
      %80 = sbr.rel (0) target = $region41
    $region40: #{tpu_custom_call.1} parent=1 // pred_region
      _
    $region41: #{tpu_custom_call.1} parent=1 // pred_fallthru
      _
    // Predicated region
    $region42: #{tpu_custom_call.1} parent=1 // pred_check
      _
    $region43: #{tpu_custom_call.1} parent=1 // pred_check_branch
      %82 = sbr.rel (0) target = $region45
    $region44: #{tpu_custom_call.1} parent=1 // pred_region
      _
    $region45: #{tpu_custom_call.1} parent=1 // pred_fallthru
      _
    // Predicated region
    $region46: #{tpu_custom_call.1} parent=1 // pred_check
      _
    $region47: #{tpu_custom_call.1} parent=1 // pred_check_branch
      %84 = sbr.rel (0) target = $region49
    $region48: #{tpu_custom_call.1} parent=1 // pred_region
      %85 = dma.done [#allocation4], 256
    $region49: #{tpu_custom_call.1} parent=1 // pred_fallthru
      _
    // Predicated region
    $region50: #{tpu_custom_call.1} parent=1 // pred_check
      _
    $region51: #{tpu_custom_call.1} parent=1 // pred_check_branch
      %87 = sbr.rel (0) target = $region53
    $region52: #{tpu_custom_call.1} parent=1 // pred_region
      %88 = dma.done [#allocation6], 16
    $region53: #{tpu_custom_call.1} parent=1 // pred_fallthru
      _
    // Predicated region
    $region54: #{tpu_custom_call.1} parent=1 // pred_check
      _
    $region55: #{tpu_custom_call.1} parent=1 // pred_check_branch
      %90 = sbr.rel (0) target = $region57
    $region56: #{tpu_custom_call.1} parent=1 // pred_region
      %91 = dma.done [#allocation9], 16
    $region57: #{tpu_custom_call.1} parent=1 // pred_fallthru
      _
    // Predicated region
    $region58: #{tpu_custom_call.1} parent=1 // pred_check
      _
    $region59: #{tpu_custom_call.1} parent=1 // pred_check_branch
      %93 = sbr.rel (0) target = $region61
    $region60: #{tpu_custom_call.1} parent=1 // pred_region
      %94 = dma.done [#allocation9], 16
    $region61: #{tpu_custom_call.1} parent=1 // pred_fallthru
      _
    // Predicated region
    $region62: #{tpu_custom_call.1} parent=1 // pred_check
      _
    $region63: #{tpu_custom_call.1} parent=1 // pred_check_branch
      %96 = sbr.rel (0) target = $region65
    $region64: #{tpu_custom_call.1} parent=1 // pred_region
      %97 = dma.done [#allocation12], 16
    $region65: #{tpu_custom_call.1} parent=1 // pred_fallthru
      _
    %98 = sfence
    %v99 = vld [vmem:[#allocation3] sm:$0xff]
    %v100 = vld [vmem:[#allocation3 + $0x8] sm:$0xff]
    %v101 = vld [vmem:[%s3] sm:$0xff]
    %v102 = vld [vmem:[%s3 + $0x8] sm:$0xff]
    %v103 = vld [vmem:[%s3 + $0x10] sm:$0xff]
    %v104 = vld [vmem:[%s3 + $0x18] sm:$0xff]
    %v105 = vld [vmem:[#allocation8] sm:$0x1]
    %v107 = vlaneseq
    %v108 = vshrl.u32 %v107, 7
    %v109 = vsub.s32 0, %v108
    %v110 = vrot.slane %v105, %v109
    %vm112 = vcmask 261120
    %v114 = vsel %vm112, %v99, 0
    %v117 = vsel %vm112, %v100, 0
    %119 = vmatprep.subr.mxu0 0.0
    %v120 = vand.u32 %v101, 4294901760
    %121 = vmatpush1.msra.mxu0 %v120
    %122 = vmatprep.subr.mxu0 0.0
    %v123 = vand.u32 %v102, 4294901760
    %124 = vmatpush1.msra.mxu0 %v123
    %125 = vmatprep.subr.mxu0 0.0
    %v126 = vand.u32 %v103, 4294901760
    %127 = vmatpush1.msra.mxu0 %v126
    %128 = vmatprep.subr.mxu0 0.0
    %v129 = vand.u32 %v104, 4294901760
    %130 = vmatpush1.msra.mxu0 %v129
    %131 = vmatprep.subr.mxu0 0.0
    %132 = vmatpush1.msra.mxu0 0.0
    %133 = vmatprep.subr.mxu0 0.0
    %134 = vmatpush1.msra.mxu0 0.0
    %135 = vmatprep.subr.mxu0 0.0
    %136 = vmatpush1.msra.mxu0 0.0
    %137 = vmatprep.subr.mxu0 0.0
    %138 = vmatpush1.msra.mxu0 0.0
    %139 = vmatprep.subr.mxu0 0.0
    %140 = vmatpush1.msra.mxu0 0.0
    %141 = vmatprep.subr.mxu0 0.0
    %142 = vmatpush1.msra.mxu0 0.0
    %143 = vmatprep.subr.mxu0 0.0
    %144 = vmatpush1.msra.mxu0 0.0
    %145 = vmatprep.subr.mxu0 0.0
    %146 = vmatpush1.msra.mxu0 0.0
    %147 = vmatprep.subr.mxu0 0.0
    %148 = vmatpush1.msra.mxu0 0.0
    %149 = vmatprep.subr.mxu0 0.0
    %150 = vmatpush1.msra.mxu0 0.0
    %151 = vmatprep.subr.mxu0 0.0
    %152 = vmatpush1.msra.mxu0 0.0
    %153 = vmatprep.subr.mxu0 0.0
    %154 = vmatpush1.msra.mxu0 0.0
    %155 = vmatprep.subr.mxu0 0.0
    %156 = vmatpush1.msra.mxu0 0.0
    %157 = vmatprep.subr.mxu0 0.0
    %158 = vmatpush1.msra.mxu0 0.0
    %159 = vmatprep.subr.mxu0 0.0
    %160 = vmatpush1.msra.mxu0 0.0
    %161 = vmatprep.subr.mxu0 0.0
    %162 = vmatpush1.msra.mxu0 0.0
    %163 = vmatprep.subr.mxu0 0.0
    %164 = vmatpush1.msra.mxu0 0.0
    %165 = vmatprep.subr.mxu0 0.0
    %166 = vmatpush1.msra.mxu0 0.0
    %167 = vmatprep.subr.mxu0 0.0
    %168 = vmatpush1.msra.mxu0 0.0
    %169 = vmatprep.subr.mxu0 0.0
    %170 = vmatpush1.msra.mxu0 0.0
    %171 = vmatprep.subr.mxu0 0.0
    %172 = vmatpush1.msra.mxu0 0.0
    %173 = vmatprep.subr.mxu0 0.0
    %174 = vmatpush1.msra.mxu0 0.0
    %175 = vmatprep.subr.mxu0 0.0
    %176 = vmatpush1.msra.mxu0 0.0
    %177 = vmatprep.subr.mxu0 0.0
    %178 = vmatpush1.msra.mxu0 0.0
    %179 = vmatprep.subr.mxu0 0.0
    %180 = vmatpush1.msra.mxu0 0.0
    %181 = vmatprep.subr.mxu0 0.0
    %182 = vmatpush1.msra.mxu0 0.0
    %183 = vmatprep.subr.mxu0 0.0
    %184 = vmatpush1.msra.mxu0 0.0
    %185 = vmatprep.subr.mxu0 0.0
    %186 = vmatpush1.msra.mxu0 0.0
    %187 = vmatprep.mubr.f32.mxu0 0.0
    %v188 = vand.u32 %v114, 4294901760
    %v189 = vsub.f32 %v114, %v188
    %v190 = vand.u32 %v189, 4294901760
    %v191 = vsub.f32 %v189, %v190
    %v192 = vand.u32 %v191, 4294901760
    %193 = vmatmul.mubr.f32.gmra.mrb[0].mxu0 %v192
    %v194 = vpop.f32.mrb[0].mxu0
    %v195 = vadd.f32 %v110, %v194
    %v196 = vpop.f32.mrb[0].mxu0
    %197 = vmatprep.mubr.f32.mxu0 0.0
    %v198 = vand.u32 %v117, 4294901760
    %v199 = vsub.f32 %v117, %v198
    %v200 = vand.u32 %v199, 4294901760
    %v201 = vsub.f32 %v199, %v200
    %v202 = vand.u32 %v201, 4294901760
    %203 = vmatmul.mubr.f32.gmra.mrb[0].mxu0 %v202
    %v204 = vpop.f32.mrb[0].mxu0
    %v205 = vadd.f32 %v110, %v204
    %v206 = vpop.f32.mrb[0].mxu0
    %207 = vdwg.mxu0
    %208 = vmatprep.subr.mxu0 0.0
    %v209 = vand.u32 %v101, 4294901760
    %v210 = vsub.f32 %v101, %v209
    %v211 = vand.u32 %v210, 4294901760
    %v212 = vsub.f32 %v210, %v211
    %v213 = vand.u32 %v212, 4294901760
    %214 = vmatpush1.msra.mxu0 %v213
    %215 = vmatprep.subr.mxu0 0.0
    %v216 = vand.u32 %v102, 4294901760
    %v217 = vsub.f32 %v102, %v216
    %v218 = vand.u32 %v217, 4294901760
    %v219 = vsub.f32 %v217, %v218
    %v220 = vand.u32 %v219, 4294901760
    %221 = vmatpush1.msra.mxu0 %v220
    %222 = vmatprep.subr.mxu0 0.0
    %v223 = vand.u32 %v103, 4294901760
    %v224 = vsub.f32 %v103, %v223
    %v225 = vand.u32 %v224, 4294901760
    %v226 = vsub.f32 %v224, %v225
    %v227 = vand.u32 %v226, 4294901760
    %228 = vmatpush1.msra.mxu0 %v227
    %229 = vmatprep.subr.mxu0 0.0
    %v230 = vand.u32 %v104, 4294901760
    %v231 = vsub.f32 %v104, %v230
    %v232 = vand.u32 %v231, 4294901760
    %v233 = vsub.f32 %v231, %v232
    %v234 = vand.u32 %v233, 4294901760
    %235 = vmatpush1.msra.mxu0 %v234
    %236 = vmatprep.subr.mxu0 0.0
    %237 = vmatpush1.msra.mxu0 0.0
    %238 = vmatprep.subr.mxu0 0.0
    %239 = vmatpush1.msra.mxu0 0.0
    %240 = vmatprep.subr.mxu0 0.0
    %241 = vmatpush1.msra.mxu0 0.0
    %242 = vmatprep.subr.mxu0 0.0
    %243 = vmatpush1.msra.mxu0 0.0
    %244 = vmatprep.subr.mxu0 0.0
    %245 = vmatpush1.msra.mxu0 0.0
    %246 = vmatprep.subr.mxu0 0.0
    %247 = vmatpush1.msra.mxu0 0.0
    %248 = vmatprep.subr.mxu0 0.0
    %249 = vmatpush1.msra.mxu0 0.0
    %250 = vmatprep.subr.mxu0 0.0
    %251 = vmatpush1.msra.mxu0 0.0
    %252 = vmatprep.subr.mxu0 0.0
    %253 = vmatpush1.msra.mxu0 0.0
    %254 = vmatprep.subr.mxu0 0.0
    %255 = vmatpush1.msra.mxu0 0.0
    %256 = vmatprep.subr.mxu0 0.0
    %257 = vmatpush1.msra.mxu0 0.0
    %258 = vmatprep.subr.mxu0 0.0
    %259 = vmatpush1.msra.mxu0 0.0
    %260 = vmatprep.subr.mxu0 0.0
    %261 = vmatpush1.msra.mxu0 0.0
    %262 = vmatprep.subr.mxu0 0.0
    %263 = vmatpush1.msra.mxu0 0.0
    %264 = vmatprep.subr.mxu0 0.0
    %265 = vmatpush1.msra.mxu0 0.0
    %266 = vmatprep.subr.mxu0 0.0
    %267 = vmatpush1.msra.mxu0 0.0
    %268 = vmatprep.subr.mxu0 0.0
    %269 = vmatpush1.msra.mxu0 0.0
    %270 = vmatprep.subr.mxu0 0.0
    %271 = vmatpush1.msra.mxu0 0.0
    %272 = vmatprep.subr.mxu0 0.0
    %273 = vmatpush1.msra.mxu0 0.0
    %274 = vmatprep.subr.mxu0 0.0
    %275 = vmatpush1.msra.mxu0 0.0
    %276 = vmatprep.subr.mxu0 0.0
    %277 = vmatpush1.msra.mxu0 0.0
    %278 = vmatprep.subr.mxu0 0.0
    %279 = vmatpush1.msra.mxu0 0.0
    %280 = vmatprep.subr.mxu0 0.0
    %281 = vmatpush1.msra.mxu0 0.0
    %282 = vmatprep.subr.mxu0 0.0
    %283 = vmatpush1.msra.mxu0 0.0
    %284 = vmatprep.subr.mxu0 0.0
    %285 = vmatpush1.msra.mxu0 0.0
    %286 = vmatprep.subr.mxu0 0.0
    %287 = vmatpush1.msra.mxu0 0.0
    %288 = vmatprep.subr.mxu0 0.0
    %289 = vmatpush1.msra.mxu0 0.0
    %290 = vmatprep.subr.mxu0 0.0
    %291 = vmatpush1.msra.mxu0 0.0
    %292 = vmatprep.mubr.f32.mxu0 0.0
    %v293 = vand.u32 %v114, 4294901760
    %294 = vmatmul.mubr.f32.gmra.mrb[0].mxu0 %v293
    %v295 = vpop.f32.mrb[0].mxu0
    %v296 = vadd.f32 %v195, %v295
    %v297 = vpop.f32.mrb[0].mxu0
    %298 = vmatprep.mubr.f32.mxu0 0.0
    %v299 = vand.u32 %v117, 4294901760
    %300 = vmatmul.mubr.f32.gmra.mrb[0].mxu0 %v299
    %v301 = vpop.f32.mrb[0].mxu0
    %v302 = vadd.f32 %v205, %v301
    %v303 = vpop.f32.mrb[0].mxu0
    %304 = vdwg.mxu0
    %305 = vmatprep.subr.mxu0 0.0
    %v306 = vand.u32 %v101, 4294901760
    %v307 = vsub.f32 %v101, %v306
    %308 = vmatpush1.msra.mxu0 %v307
    %309 = vmatprep.subr.mxu0 0.0
    %v310 = vand.u32 %v102, 4294901760
    %v311 = vsub.f32 %v102, %v310
    %312 = vmatpush1.msra.mxu0 %v311
    %313 = vmatprep.subr.mxu0 0.0
    %v314 = vand.u32 %v103, 4294901760
    %v315 = vsub.f32 %v103, %v314
    %316 = vmatpush1.msra.mxu0 %v315
    %317 = vmatprep.subr.mxu0 0.0
    %v318 = vand.u32 %v104, 4294901760
    %v319 = vsub.f32 %v104, %v318
    %320 = vmatpush1.msra.mxu0 %v319
    %321 = vmatprep.subr.mxu0 0.0
    %322 = vmatpush1.msra.mxu0 0.0
    %323 = vmatprep.subr.mxu0 0.0
    %324 = vmatpush1.msra.mxu0 0.0
    %325 = vmatprep.subr.mxu0 0.0
    %326 = vmatpush1.msra.mxu0 0.0
    %327 = vmatprep.subr.mxu0 0.0
    %328 = vmatpush1.msra.mxu0 0.0
    %329 = vmatprep.subr.mxu0 0.0
    %330 = vmatpush1.msra.mxu0 0.0
    %331 = vmatprep.subr.mxu0 0.0
    %332 = vmatpush1.msra.mxu0 0.0
    %333 = vmatprep.subr.mxu0 0.0
    %334 = vmatpush1.msra.mxu0 0.0
    %335 = vmatprep.subr.mxu0 0.0
    %336 = vmatpush1.msra.mxu0 0.0
    %337 = vmatprep.subr.mxu0 0.0
    %338 = vmatpush1.msra.mxu0 0.0
    %339 = vmatprep.subr.mxu0 0.0
    %340 = vmatpush1.msra.mxu0 0.0
    %341 = vmatprep.subr.mxu0 0.0
    %342 = vmatpush1.msra.mxu0 0.0
    %343 = vmatprep.subr.mxu0 0.0
    %344 = vmatpush1.msra.mxu0 0.0
    %345 = vmatprep.subr.mxu0 0.0
    %346 = vmatpush1.msra.mxu0 0.0
    %347 = vmatprep.subr.mxu0 0.0
    %348 = vmatpush1.msra.mxu0 0.0
    %349 = vmatprep.subr.mxu0 0.0
    %350 = vmatpush1.msra.mxu0 0.0
    %351 = vmatprep.subr.mxu0 0.0
    %352 = vmatpush1.msra.mxu0 0.0
    %353 = vmatprep.subr.mxu0 0.0
    %354 = vmatpush1.msra.mxu0 0.0
    %355 = vmatprep.subr.mxu0 0.0
    %356 = vmatpush1.msra.mxu0 0.0
    %357 = vmatprep.subr.mxu0 0.0
    %358 = vmatpush1.msra.mxu0 0.0
    %359 = vmatprep.subr.mxu0 0.0
    %360 = vmatpush1.msra.mxu0 0.0
    %361 = vmatprep.subr.mxu0 0.0
    %362 = vmatpush1.msra.mxu0 0.0
    %363 = vmatprep.subr.mxu0 0.0
    %364 = vmatpush1.msra.mxu0 0.0
    %365 = vmatprep.subr.mxu0 0.0
    %366 = vmatpush1.msra.mxu0 0.0
    %367 = vmatprep.subr.mxu0 0.0
    %368 = vmatpush1.msra.mxu0 0.0
    %369 = vmatprep.subr.mxu0 0.0
    %370 = vmatpush1.msra.mxu0 0.0
    %371 = vmatprep.subr.mxu0 0.0
    %372 = vmatpush1.msra.mxu0 0.0
    %373 = vmatprep.subr.mxu0 0.0
    %374 = vmatpush1.msra.mxu0 0.0
    %375 = vmatprep.subr.mxu0 0.0
    %376 = vmatpush1.msra.mxu0 0.0
    %377 = vmatprep.mubr.f32.mxu0 0.0
    %v378 = vand.u32 %v114, 4294901760
    %v379 = vsub.f32 %v114, %v378
    %380 = vmatmul.mubr.f32.gmra.mrb[0].mxu0 %v379
    %v381 = vpop.f32.mrb[0].mxu0
    %v382 = vadd.f32 %v296, %v381
    %v383 = vpop.f32.mrb[0].mxu0
    %384 = vmatprep.mubr.f32.mxu0 0.0
    %v385 = vand.u32 %v117, 4294901760
    %v386 = vsub.f32 %v117, %v385
    %387 = vmatmul.mubr.f32.gmra.mrb[0].mxu0 %v386
    %v388 = vpop.f32.mrb[0].mxu0
    %v389 = vadd.f32 %v302, %v388
    %v390 = vpop.f32.mrb[0].mxu0
    %391 = vdwg.mxu0
    %392 = vmatprep.subr.mxu0 0.0
    %v393 = vand.u32 %v101, 4294901760
    %394 = vmatpush1.msra.mxu0 %v393
    %395 = vmatprep.subr.mxu0 0.0
    %v396 = vand.u32 %v102, 4294901760
    %397 = vmatpush1.msra.mxu0 %v396
    %398 = vmatprep.subr.mxu0 0.0
    %v399 = vand.u32 %v103, 4294901760
    %400 = vmatpush1.msra.mxu0 %v399
    %401 = vmatprep.subr.mxu0 0.0
    %v402 = vand.u32 %v104, 4294901760
    %403 = vmatpush1.msra.mxu0 %v402
    %404 = vmatprep.subr.mxu0 0.0
    %405 = vmatpush1.msra.mxu0 0.0
    %406 = vmatprep.subr.mxu0 0.0
    %407 = vmatpush1.msra.mxu0 0.0
    %408 = vmatprep.subr.mxu0 0.0
    %409 = vmatpush1.msra.mxu0 0.0
    %410 = vmatprep.subr.mxu0 0.0
    %411 = vmatpush1.msra.mxu0 0.0
    %412 = vmatprep.subr.mxu0 0.0
    %413 = vmatpush1.msra.mxu0 0.0
    %414 = vmatprep.subr.mxu0 0.0
    %415 = vmatpush1.msra.mxu0 0.0
    %416 = vmatprep.subr.mxu0 0.0
    %417 = vmatpush1.msra.mxu0 0.0
    %418 = vmatprep.subr.mxu0 0.0
    %419 = vmatpush1.msra.mxu0 0.0
    %420 = vmatprep.subr.mxu0 0.0
    %421 = vmatpush1.msra.mxu0 0.0
    %422 = vmatprep.subr.mxu0 0.0
    %423 = vmatpush1.msra.mxu0 0.0
    %424 = vmatprep.subr.mxu0 0.0
    %425 = vmatpush1.msra.mxu0 0.0
    %426 = vmatprep.subr.mxu0 0.0
    %427 = vmatpush1.msra.mxu0 0.0
    %428 = vmatprep.subr.mxu0 0.0
    %429 = vmatpush1.msra.mxu0 0.0
    %430 = vmatprep.subr.mxu0 0.0
    %431 = vmatpush1.msra.mxu0 0.0
    %432 = vmatprep.subr.mxu0 0.0
    %433 = vmatpush1.msra.mxu0 0.0
    %434 = vmatprep.subr.mxu0 0.0
    %435 = vmatpush1.msra.mxu0 0.0
    %436 = vmatprep.subr.mxu0 0.0
    %437 = vmatpush1.msra.mxu0 0.0
    %438 = vmatprep.subr.mxu0 0.0
    %439 = vmatpush1.msra.mxu0 0.0
    %440 = vmatprep.subr.mxu0 0.0
    %441 = vmatpush1.msra.mxu0 0.0
    %442 = vmatprep.subr.mxu0 0.0
    %443 = vmatpush1.msra.mxu0 0.0
    %444 = vmatprep.subr.mxu0 0.0
    %445 = vmatpush1.msra.mxu0 0.0
    %446 = vmatprep.subr.mxu0 0.0
    %447 = vmatpush1.msra.mxu0 0.0
    %448 = vmatprep.subr.mxu0 0.0
    %449 = vmatpush1.msra.mxu0 0.0
    %450 = vmatprep.subr.mxu0 0.0
    %451 = vmatpush1.msra.mxu0 0.0
    %452 = vmatprep.subr.mxu0 0.0
    %453 = vmatpush1.msra.mxu0 0.0
    %454 = vmatprep.subr.mxu0 0.0
    %455 = vmatpush1.msra.mxu0 0.0
    %456 = vmatprep.subr.mxu0 0.0
    %457 = vmatpush1.msra.mxu0 0.0
    %458 = vmatprep.subr.mxu0 0.0
    %459 = vmatpush1.msra.mxu0 0.0
    %460 = vmatprep.mubr.f32.mxu0 0.0
    %v461 = vand.u32 %v114, 4294901760
    %v462 = vsub.f32 %v114, %v461
    %v463 = vand.u32 %v462, 4294901760
    %464 = vmatmul.mubr.f32.gmra.mrb[0].mxu0 %v463
    %v465 = vpop.f32.mrb[0].mxu0
    %v466 = vadd.f32 %v382, %v465
    %v467 = vpop.f32.mrb[0].mxu0
    %468 = vmatprep.mubr.f32.mxu0 0.0
    %v469 = vand.u32 %v117, 4294901760
    %v470 = vsub.f32 %v117, %v469
    %v471 = vand.u32 %v470, 4294901760
    %472 = vmatmul.mubr.f32.gmra.mrb[0].mxu0 %v471
    %v473 = vpop.f32.mrb[0].mxu0
    %v474 = vadd.f32 %v389, %v473
    %v475 = vpop.f32.mrb[0].mxu0
    %476 = vdwg.mxu0
    %477 = vmatprep.subr.mxu0 0.0
    %v478 = vand.u32 %v101, 4294901760
    %v479 = vsub.f32 %v101, %v478
    %v480 = vand.u32 %v479, 4294901760
    %481 = vmatpush1.msra.mxu0 %v480
    %482 = vmatprep.subr.mxu0 0.0
    %v483 = vand.u32 %v102, 4294901760
    %v484 = vsub.f32 %v102, %v483
    %v485 = vand.u32 %v484, 4294901760
    %486 = vmatpush1.msra.mxu0 %v485
    %487 = vmatprep.subr.mxu0 0.0
    %v488 = vand.u32 %v103, 4294901760
    %v489 = vsub.f32 %v103, %v488
    %v490 = vand.u32 %v489, 4294901760
    %491 = vmatpush1.msra.mxu0 %v490
    %492 = vmatprep.subr.mxu0 0.0
    %v493 = vand.u32 %v104, 4294901760
    %v494 = vsub.f32 %v104, %v493
    %v495 = vand.u32 %v494, 4294901760
    %496 = vmatpush1.msra.mxu0 %v495
    %497 = vmatprep.subr.mxu0 0.0
    %498 = vmatpush1.msra.mxu0 0.0
    %499 = vmatprep.subr.mxu0 0.0
    %500 = vmatpush1.msra.mxu0 0.0
    %501 = vmatprep.subr.mxu0 0.0
    %502 = vmatpush1.msra.mxu0 0.0
    %503 = vmatprep.subr.mxu0 0.0
    %504 = vmatpush1.msra.mxu0 0.0
    %505 = vmatprep.subr.mxu0 0.0
    %506 = vmatpush1.msra.mxu0 0.0
    %507 = vmatprep.subr.mxu0 0.0
    %508 = vmatpush1.msra.mxu0 0.0
    %509 = vmatprep.subr.mxu0 0.0
    %510 = vmatpush1.msra.mxu0 0.0
    %511 = vmatprep.subr.mxu0 0.0
    %512 = vmatpush1.msra.mxu0 0.0
    %513 = vmatprep.subr.mxu0 0.0
    %514 = vmatpush1.msra.mxu0 0.0
    %515 = vmatprep.subr.mxu0 0.0
    %516 = vmatpush1.msra.mxu0 0.0
    %517 = vmatprep.subr.mxu0 0.0
    %518 = vmatpush1.msra.mxu0 0.0
    %519 = vmatprep.subr.mxu0 0.0
    %520 = vmatpush1.msra.mxu0 0.0
    %521 = vmatprep.subr.mxu0 0.0
    %522 = vmatpush1.msra.mxu0 0.0
    %523 = vmatprep.subr.mxu0 0.0
    %524 = vmatpush1.msra.mxu0 0.0
    %525 = vmatprep.subr.mxu0 0.0
    %526 = vmatpush1.msra.mxu0 0.0
    %527 = vmatprep.subr.mxu0 0.0
    %528 = vmatpush1.msra.mxu0 0.0
    %529 = vmatprep.subr.mxu0 0.0
    %530 = vmatpush1.msra.mxu0 0.0
    %531 = vmatprep.subr.mxu0 0.0
    %532 = vmatpush1.msra.mxu0 0.0
    %533 = vmatprep.subr.mxu0 0.0
    %534 = vmatpush1.msra.mxu0 0.0
    %535 = vmatprep.subr.mxu0 0.0
    %536 = vmatpush1.msra.mxu0 0.0
    %537 = vmatprep.subr.mxu0 0.0
    %538 = vmatpush1.msra.mxu0 0.0
    %539 = vmatprep.subr.mxu0 0.0
    %540 = vmatpush1.msra.mxu0 0.0
    %541 = vmatprep.subr.mxu0 0.0
    %542 = vmatpush1.msra.mxu0 0.0
    %543 = vmatprep.subr.mxu0 0.0
    %544 = vmatpush1.msra.mxu0 0.0
    %545 = vmatprep.subr.mxu0 0.0
    %546 = vmatpush1.msra.mxu0 0.0
    %547 = vmatprep.subr.mxu0 0.0
    %548 = vmatpush1.msra.mxu0 0.0
    %549 = vmatprep.subr.mxu0 0.0
    %550 = vmatpush1.msra.mxu0 0.0
    %551 = vmatprep.subr.mxu0 0.0
    %552 = vmatpush1.msra.mxu0 0.0
    %553 = vmatprep.mubr.f32.mxu0 0.0
    %v554 = vand.u32 %v114, 4294901760
    %555 = vmatmul.mubr.f32.gmra.mrb[0].mxu0 %v554
    %v556 = vpop.f32.mrb[0].mxu0
    %v557 = vadd.f32 %v466, %v556
    %v558 = vpop.f32.mrb[0].mxu0
    %559 = vmatprep.mubr.f32.mxu0 0.0
    %v560 = vand.u32 %v117, 4294901760
    %561 = vmatmul.mubr.f32.gmra.mrb[0].mxu0 %v560
    %v562 = vpop.f32.mrb[0].mxu0
    %v563 = vadd.f32 %v474, %v562
    %v564 = vpop.f32.mrb[0].mxu0
    %565 = vdwg.mxu0
    %566 = vmatprep.subr.mxu0 0.0
    %v567 = vand.u32 %v101, 4294901760
    %568 = vmatpush1.msra.mxu0 %v567
    %569 = vmatprep.subr.mxu0 0.0
    %v570 = vand.u32 %v102, 4294901760
    %571 = vmatpush1.msra.mxu0 %v570
    %572 = vmatprep.subr.mxu0 0.0
    %v573 = vand.u32 %v103, 4294901760
    %574 = vmatpush1.msra.mxu0 %v573
    %575 = vmatprep.subr.mxu0 0.0
    %v576 = vand.u32 %v104, 4294901760
    %577 = vmatpush1.msra.mxu0 %v576
    %578 = vmatprep.subr.mxu0 0.0
    %579 = vmatpush1.msra.mxu0 0.0
    %580 = vmatprep.subr.mxu0 0.0
    %581 = vmatpush1.msra.mxu0 0.0
    %582 = vmatprep.subr.mxu0 0.0
    %583 = vmatpush1.msra.mxu0 0.0
    %584 = vmatprep.subr.mxu0 0.0
    %585 = vmatpush1.msra.mxu0 0.0
    %586 = vmatprep.subr.mxu0 0.0
    %587 = vmatpush1.msra.mxu0 0.0
    %588 = vmatprep.subr.mxu0 0.0
    %589 = vmatpush1.msra.mxu0 0.0
    %590 = vmatprep.subr.mxu0 0.0
    %591 = vmatpush1.msra.mxu0 0.0
    %592 = vmatprep.subr.mxu0 0.0
    %593 = vmatpush1.msra.mxu0 0.0
    %594 = vmatprep.subr.mxu0 0.0
    %595 = vmatpush1.msra.mxu0 0.0
    %596 = vmatprep.subr.mxu0 0.0
    %597 = vmatpush1.msra.mxu0 0.0
    %598 = vmatprep.subr.mxu0 0.0
    %599 = vmatpush1.msra.mxu0 0.0
    %600 = vmatprep.subr.mxu0 0.0
    %601 = vmatpush1.msra.mxu0 0.0
    %602 = vmatprep.subr.mxu0 0.0
    %603 = vmatpush1.msra.mxu0 0.0
    %604 = vmatprep.subr.mxu0 0.0
    %605 = vmatpush1.msra.mxu0 0.0
    %606 = vmatprep.subr.mxu0 0.0
    %607 = vmatpush1.msra.mxu0 0.0
    %608 = vmatprep.subr.mxu0 0.0
    %609 = vmatpush1.msra.mxu0 0.0
    %610 = vmatprep.subr.mxu0 0.0
    %611 = vmatpush1.msra.mxu0 0.0
    %612 = vmatprep.subr.mxu0 0.0
    %613 = vmatpush1.msra.mxu0 0.0
    %614 = vmatprep.subr.mxu0 0.0
    %615 = vmatpush1.msra.mxu0 0.0
    %616 = vmatprep.subr.mxu0 0.0
    %617 = vmatpush1.msra.mxu0 0.0
    %618 = vmatprep.subr.mxu0 0.0
    %619 = vmatpush1.msra.mxu0 0.0
    %620 = vmatprep.subr.mxu0 0.0
    %621 = vmatpush1.msra.mxu0 0.0
    %622 = vmatprep.subr.mxu0 0.0
    %623 = vmatpush1.msra.mxu0 0.0
    %624 = vmatprep.subr.mxu0 0.0
    %625 = vmatpush1.msra.mxu0 0.0
    %626 = vmatprep.subr.mxu0 0.0
    %627 = vmatpush1.msra.mxu0 0.0
    %628 = vmatprep.subr.mxu0 0.0
    %629 = vmatpush1.msra.mxu0 0.0
    %630 = vmatprep.subr.mxu0 0.0
    %631 = vmatpush1.msra.mxu0 0.0
    %632 = vmatprep.subr.mxu0 0.0
    %633 = vmatpush1.msra.mxu0 0.0
    %634 = vmatprep.mubr.f32.mxu0 0.0
    %v635 = vand.u32 %v114, 4294901760
    %636 = vmatmul.mubr.f32.gmra.mrb[0].mxu0 %v635
    %v637 = vpop.f32.mrb[0].mxu0
    %v638 = vadd.f32 %v557, %v637
    %v639 = vpop.f32.mrb[0].mxu0
    %640 = vmatprep.mubr.f32.mxu0 0.0
    %v641 = vand.u32 %v117, 4294901760
    %642 = vmatmul.mubr.f32.gmra.mrb[0].mxu0 %v641
    %v643 = vpop.f32.mrb[0].mxu0
    %v644 = vadd.f32 %v563, %v643
    %v645 = vpop.f32.mrb[0].mxu0
    %646 = vdwg.mxu0
    %v647 = vld [vmem:[%s1] sm:$0x1]
    %v648 = vld [vmem:[%s1 + $0x1] sm:$0x1]
    %650 = vrot.lane.b32.xlu0 %v638, 96
    %v651 = vpop.permute.xlu0 %650
    %vm652 = vcmask 64512
    %v653 = vsel %vm652, %v638, 0
    %v655 = vsel %vm652, %v651, 0
    %657 = vmatprep.subr.mxu0 0.0
    %v658 = vand.u32 %v655, 4294901760
    %659 = vmatpush1.xpose.msra.mxu0 %v658
    %660 = vmatprep.subr.mxu0 0.0
    %661 = vmatpush1.xpose.msra.mxu0 0.0
    %662 = vmatprep.subr.mxu0 0.0
    %663 = vmatpush1.xpose.msra.mxu0 0.0
    %664 = vmatprep.subr.mxu0 0.0
    %665 = vmatpush1.xpose.msra.mxu0 0.0
    %666 = vmatprep.subr.mxu0 0.0
    %667 = vmatpush1.xpose.msra.mxu0 0.0
    %668 = vmatprep.subr.mxu0 0.0
    %669 = vmatpush1.xpose.msra.mxu0 0.0
    %670 = vmatprep.subr.mxu0 0.0
    %671 = vmatpush1.xpose.msra.mxu0 0.0
    %672 = vmatprep.subr.mxu0 0.0
    %673 = vmatpush1.xpose.msra.mxu0 0.0
    %674 = vmatprep.subr.mxu0 0.0
    %675 = vmatpush1.xpose.msra.mxu0 0.0
    %676 = vmatprep.subr.mxu0 0.0
    %677 = vmatpush1.xpose.msra.mxu0 0.0
    %678 = vmatprep.subr.mxu0 0.0
    %679 = vmatpush1.xpose.msra.mxu0 0.0
    %680 = vmatprep.subr.mxu0 0.0
    %681 = vmatpush1.xpose.msra.mxu0 0.0
    %682 = vmatprep.subr.mxu0 0.0
    %683 = vmatpush1.xpose.msra.mxu0 0.0
    %684 = vmatprep.subr.mxu0 0.0
    %685 = vmatpush1.xpose.msra.mxu0 0.0
    %686 = vmatprep.subr.mxu0 0.0
    %687 = vmatpush1.xpose.msra.mxu0 0.0
    %688 = vmatprep.subr.mxu0 0.0
    %689 = vmatpush1.xpose.msra.mxu0 0.0
    %690 = vmatprep.subr.mxu0 0.0
    %691 = vmatpush1.xpose.msra.mxu0 0.0
    %692 = vmatprep.subr.mxu0 0.0
    %693 = vmatpush1.xpose.msra.mxu0 0.0
    %694 = vmatprep.subr.mxu0 0.0
    %695 = vmatpush1.xpose.msra.mxu0 0.0
    %696 = vmatprep.subr.mxu0 0.0
    %697 = vmatpush1.xpose.msra.mxu0 0.0
    %698 = vmatprep.subr.mxu0 0.0
    %699 = vmatpush1.xpose.msra.mxu0 0.0
    %700 = vmatprep.subr.mxu0 0.0
    %701 = vmatpush1.xpose.msra.mxu0 0.0
    %702 = vmatprep.subr.mxu0 0.0
    %703 = vmatpush1.xpose.msra.mxu0 0.0
    %704 = vmatprep.subr.mxu0 0.0
    %705 = vmatpush1.xpose.msra.mxu0 0.0
    %706 = vmatprep.subr.mxu0 0.0
    %707 = vmatpush1.xpose.msra.mxu0 0.0
    %708 = vmatprep.subr.mxu0 0.0
    %709 = vmatpush1.xpose.msra.mxu0 0.0
    %710 = vmatprep.subr.mxu0 0.0
    %711 = vmatpush1.xpose.msra.mxu0 0.0
    %712 = vmatprep.subr.mxu0 0.0
    %713 = vmatpush1.xpose.msra.mxu0 0.0
    %714 = vmatprep.subr.mxu0 0.0
    %715 = vmatpush1.xpose.msra.mxu0 0.0
    %716 = vmatprep.subr.mxu0 0.0
    %717 = vmatpush1.xpose.msra.mxu0 0.0
    %718 = vmatprep.subr.mxu0 0.0
    %719 = vmatpush1.xpose.msra.mxu0 0.0
    %720 = vmatprep.subr.mxu0 0.0
    %721 = vmatpush1.xpose.msra.mxu0 0.0
    %722 = vmatprep.mubr.f32.mxu0 0.0
    %v723 = vand.u32 %v653, 4294901760
    %v724 = vsub.f32 %v653, %v723
    %v725 = vand.u32 %v724, 4294901760
    %v726 = vsub.f32 %v724, %v725
    %v727 = vand.u32 %v726, 4294901760
    %728 = vmatmul.mubr.f32.gmra.mrb[0].mxu0 %v727
    %v729 = vpop.f32.mrb[0].mxu0
    %v730 = vadd.f32 0.0, %v729
    %v731 = vpop.f32.mrb[0].mxu0
    %732 = vdwg.mxu0
    %733 = vmatprep.subr.mxu0 0.0
    %v734 = vand.u32 %v655, 4294901760
    %v735 = vsub.f32 %v655, %v734
    %v736 = vand.u32 %v735, 4294901760
    %v737 = vsub.f32 %v735, %v736
    %v738 = vand.u32 %v737, 4294901760
    %739 = vmatpush1.xpose.msra.mxu0 %v738
    %740 = vmatprep.subr.mxu0 0.0
    %741 = vmatpush1.xpose.msra.mxu0 0.0
    %742 = vmatprep.subr.mxu0 0.0
    %743 = vmatpush1.xpose.msra.mxu0 0.0
    %744 = vmatprep.subr.mxu0 0.0
    %745 = vmatpush1.xpose.msra.mxu0 0.0
    %746 = vmatprep.subr.mxu0 0.0
    %747 = vmatpush1.xpose.msra.mxu0 0.0
    %748 = vmatprep.subr.mxu0 0.0
    %749 = vmatpush1.xpose.msra.mxu0 0.0
    %750 = vmatprep.subr.mxu0 0.0
    %751 = vmatpush1.xpose.msra.mxu0 0.0
    %752 = vmatprep.subr.mxu0 0.0
    %753 = vmatpush1.xpose.msra.mxu0 0.0
    %754 = vmatprep.subr.mxu0 0.0
    %755 = vmatpush1.xpose.msra.mxu0 0.0
    %756 = vmatprep.subr.mxu0 0.0
    %757 = vmatpush1.xpose.msra.mxu0 0.0
    %758 = vmatprep.subr.mxu0 0.0
    %759 = vmatpush1.xpose.msra.mxu0 0.0
    %760 = vmatprep.subr.mxu0 0.0
    %761 = vmatpush1.xpose.msra.mxu0 0.0
    %762 = vmatprep.subr.mxu0 0.0
    %763 = vmatpush1.xpose.msra.mxu0 0.0
    %764 = vmatprep.subr.mxu0 0.0
    %765 = vmatpush1.xpose.msra.mxu0 0.0
    %766 = vmatprep.subr.mxu0 0.0
    %767 = vmatpush1.xpose.msra.mxu0 0.0
    %768 = vmatprep.subr.mxu0 0.0
    %769 = vmatpush1.xpose.msra.mxu0 0.0
    %770 = vmatprep.subr.mxu0 0.0
    %771 = vmatpush1.xpose.msra.mxu0 0.0
    %772 = vmatprep.subr.mxu0 0.0
    %773 = vmatpush1.xpose.msra.mxu0 0.0
    %774 = vmatprep.subr.mxu0 0.0
    %775 = vmatpush1.xpose.msra.mxu0 0.0
    %776 = vmatprep.subr.mxu0 0.0
    %777 = vmatpush1.xpose.msra.mxu0 0.0
    %778 = vmatprep.subr.mxu0 0.0
    %779 = vmatpush1.xpose.msra.mxu0 0.0
    %780 = vmatprep.subr.mxu0 0.0
    %781 = vmatpush1.xpose.msra.mxu0 0.0
    %782 = vmatprep.subr.mxu0 0.0
    %783 = vmatpush1.xpose.msra.mxu0 0.0
    %784 = vmatprep.subr.mxu0 0.0
    %785 = vmatpush1.xpose.msra.mxu0 0.0
    %786 = vmatprep.subr.mxu0 0.0
    %787 = vmatpush1.xpose.msra.mxu0 0.0
    %788 = vmatprep.subr.mxu0 0.0
    %789 = vmatpush1.xpose.msra.mxu0 0.0
    %790 = vmatprep.subr.mxu0 0.0
    %791 = vmatpush1.xpose.msra.mxu0 0.0
    %792 = vmatprep.subr.mxu0 0.0
    %793 = vmatpush1.xpose.msra.mxu0 0.0
    %794 = vmatprep.subr.mxu0 0.0
    %795 = vmatpush1.xpose.msra.mxu0 0.0
    %796 = vmatprep.subr.mxu0 0.0
    %797 = vmatpush1.xpose.msra.mxu0 0.0
    %798 = vmatprep.subr.mxu0 0.0
    %799 = vmatpush1.xpose.msra.mxu0 0.0
    %800 = vmatprep.subr.mxu0 0.0
    %801 = vmatpush1.xpose.msra.mxu0 0.0
    %802 = vmatprep.mubr.f32.mxu0 0.0
    %v803 = vand.u32 %v653, 4294901760
    %804 = vmatmul.mubr.f32.gmra.mrb[0].mxu0 %v803
    %v805 = vpop.f32.mrb[0].mxu0
    %v806 = vadd.f32 %v730, %v805
    %v807 = vpop.f32.mrb[0].mxu0
    %808 = vdwg.mxu0
    %809 = vmatprep.subr.mxu0 0.0
    %v810 = vand.u32 %v655, 4294901760
    %v811 = vsub.f32 %v655, %v810
    %812 = vmatpush1.xpose.msra.mxu0 %v811
    %813 = vmatprep.subr.mxu0 0.0
    %814 = vmatpush1.xpose.msra.mxu0 0.0
    %815 = vmatprep.subr.mxu0 0.0
    %816 = vmatpush1.xpose.msra.mxu0 0.0
    %817 = vmatprep.subr.mxu0 0.0
    %818 = vmatpush1.xpose.msra.mxu0 0.0
    %819 = vmatprep.subr.mxu0 0.0
    %820 = vmatpush1.xpose.msra.mxu0 0.0
    %821 = vmatprep.subr.mxu0 0.0
    %822 = vmatpush1.xpose.msra.mxu0 0.0
    %823 = vmatprep.subr.mxu0 0.0
    %824 = vmatpush1.xpose.msra.mxu0 0.0
    %825 = vmatprep.subr.mxu0 0.0
    %826 = vmatpush1.xpose.msra.mxu0 0.0
    %827 = vmatprep.subr.mxu0 0.0
    %828 = vmatpush1.xpose.msra.mxu0 0.0
    %829 = vmatprep.subr.mxu0 0.0
    %830 = vmatpush1.xpose.msra.mxu0 0.0
    %831 = vmatprep.subr.mxu0 0.0
    %832 = vmatpush1.xpose.msra.mxu0 0.0
    %833 = vmatprep.subr.mxu0 0.0
    %834 = vmatpush1.xpose.msra.mxu0 0.0
    %835 = vmatprep.subr.mxu0 0.0
    %836 = vmatpush1.xpose.msra.mxu0 0.0
    %837 = vmatprep.subr.mxu0 0.0
    %838 = vmatpush1.xpose.msra.mxu0 0.0
    %839 = vmatprep.subr.mxu0 0.0
    %840 = vmatpush1.xpose.msra.mxu0 0.0
    %841 = vmatprep.subr.mxu0 0.0
    %842 = vmatpush1.xpose.msra.mxu0 0.0
    %843 = vmatprep.subr.mxu0 0.0
    %844 = vmatpush1.xpose.msra.mxu0 0.0
    %845 = vmatprep.subr.mxu0 0.0
    %846 = vmatpush1.xpose.msra.mxu0 0.0
    %847 = vmatprep.subr.mxu0 0.0
    %848 = vmatpush1.xpose.msra.mxu0 0.0
    %849 = vmatprep.subr.mxu0 0.0
    %850 = vmatpush1.xpose.msra.mxu0 0.0
    %851 = vmatprep.subr.mxu0 0.0
    %852 = vmatpush1.xpose.msra.mxu0 0.0
    %853 = vmatprep.subr.mxu0 0.0
    %854 = vmatpush1.xpose.msra.mxu0 0.0
    %855 = vmatprep.subr.mxu0 0.0
    %856 = vmatpush1.xpose.msra.mxu0 0.0
    %857 = vmatprep.subr.mxu0 0.0
    %858 = vmatpush1.xpose.msra.mxu0 0.0
    %859 = vmatprep.subr.mxu0 0.0
    %860 = vmatpush1.xpose.msra.mxu0 0.0
    %861 = vmatprep.subr.mxu0 0.0
    %862 = vmatpush1.xpose.msra.mxu0 0.0
    %863 = vmatprep.subr.mxu0 0.0
    %864 = vmatpush1.xpose.msra.mxu0 0.0
    %865 = vmatprep.subr.mxu0 0.0
    %866 = vmatpush1.xpose.msra.mxu0 0.0
    %867 = vmatprep.subr.mxu0 0.0
    %868 = vmatpush1.xpose.msra.mxu0 0.0
    %869 = vmatprep.subr.mxu0 0.0
    %870 = vmatpush1.xpose.msra.mxu0 0.0
    %871 = vmatprep.subr.mxu0 0.0
    %872 = vmatpush1.xpose.msra.mxu0 0.0
    %873 = vmatprep.subr.mxu0 0.0
    %874 = vmatpush1.xpose.msra.mxu0 0.0
    %875 = vmatprep.mubr.f32.mxu0 0.0
    %v876 = vand.u32 %v653, 4294901760
    %v877 = vsub.f32 %v653, %v876
    %878 = vmatmul.mubr.f32.gmra.mrb[0].mxu0 %v877
    %v879 = vpop.f32.mrb[0].mxu0
    %v880 = vadd.f32 %v806, %v879
    %v881 = vpop.f32.mrb[0].mxu0
    %882 = vdwg.mxu0
    %883 = vmatprep.subr.mxu0 0.0
    %v884 = vand.u32 %v655, 4294901760
    %885 = vmatpush1.xpose.msra.mxu0 %v884
    %886 = vmatprep.subr.mxu0 0.0
    %887 = vmatpush1.xpose.msra.mxu0 0.0
    %888 = vmatprep.subr.mxu0 0.0
    %889 = vmatpush1.xpose.msra.mxu0 0.0
    %890 = vmatprep.subr.mxu0 0.0
    %891 = vmatpush1.xpose.msra.mxu0 0.0
    %892 = vmatprep.subr.mxu0 0.0
    %893 = vmatpush1.xpose.msra.mxu0 0.0
    %894 = vmatprep.subr.mxu0 0.0
    %895 = vmatpush1.xpose.msra.mxu0 0.0
    %896 = vmatprep.subr.mxu0 0.0
    %897 = vmatpush1.xpose.msra.mxu0 0.0
    %898 = vmatprep.subr.mxu0 0.0
    %899 = vmatpush1.xpose.msra.mxu0 0.0
    %900 = vmatprep.subr.mxu0 0.0
    %901 = vmatpush1.xpose.msra.mxu0 0.0
    %902 = vmatprep.subr.mxu0 0.0
    %903 = vmatpush1.xpose.msra.mxu0 0.0
    %904 = vmatprep.subr.mxu0 0.0
    %905 = vmatpush1.xpose.msra.mxu0 0.0
    %906 = vmatprep.subr.mxu0 0.0
    %907 = vmatpush1.xpose.msra.mxu0 0.0
    %908 = vmatprep.subr.mxu0 0.0
    %909 = vmatpush1.xpose.msra.mxu0 0.0
    %910 = vmatprep.subr.mxu0 0.0
    %911 = vmatpush1.xpose.msra.mxu0 0.0
    %912 = vmatprep.subr.mxu0 0.0
    %913 = vmatpush1.xpose.msra.mxu0 0.0
    %914 = vmatprep.subr.mxu0 0.0
    %915 = vmatpush1.xpose.msra.mxu0 0.0
    %916 = vmatprep.subr.mxu0 0.0
    %917 = vmatpush1.xpose.msra.mxu0 0.0
    %918 = vmatprep.subr.mxu0 0.0
    %919 = vmatpush1.xpose.msra.mxu0 0.0
    %920 = vmatprep.subr.mxu0 0.0
    %921 = vmatpush1.xpose.msra.mxu0 0.0
    %922 = vmatprep.subr.mxu0 0.0
    %923 = vmatpush1.xpose.msra.mxu0 0.0
    %924 = vmatprep.subr.mxu0 0.0
    %925 = vmatpush1.xpose.msra.mxu0 0.0
    %926 = vmatprep.subr.mxu0 0.0
    %927 = vmatpush1.xpose.msra.mxu0 0.0
    %928 = vmatprep.subr.mxu0 0.0
    %929 = vmatpush1.xpose.msra.mxu0 0.0
    %930 = vmatprep.subr.mxu0 0.0
    %931 = vmatpush1.xpose.msra.mxu0 0.0
    %932 = vmatprep.subr.mxu0 0.0
    %933 = vmatpush1.xpose.msra.mxu0 0.0
    %934 = vmatprep.subr.mxu0 0.0
    %935 = vmatpush1.xpose.msra.mxu0 0.0
    %936 = vmatprep.subr.mxu0 0.0
    %937 = vmatpush1.xpose.msra.mxu0 0.0
    %938 = vmatprep.subr.mxu0 0.0
    %939 = vmatpush1.xpose.msra.mxu0 0.0
    %940 = vmatprep.subr.mxu0 0.0
    %941 = vmatpush1.xpose.msra.mxu0 0.0
    %942 = vmatprep.subr.mxu0 0.0
    %943 = vmatpush1.xpose.msra.mxu0 0.0
    %944 = vmatprep.subr.mxu0 0.0
    %945 = vmatpush1.xpose.msra.mxu0 0.0
    %946 = vmatprep.subr.mxu0 0.0
    %947 = vmatpush1.xpose.msra.mxu0 0.0
    %948 = vmatprep.mubr.f32.mxu0 0.0
    %v949 = vand.u32 %v653, 4294901760
    %v950 = vsub.f32 %v653, %v949
    %v951 = vand.u32 %v950, 4294901760
    %952 = vmatmul.mubr.f32.gmra.mrb[0].mxu0 %v951
    %v953 = vpop.f32.mrb[0].mxu0
    %v954 = vadd.f32 %v880, %v953
    %v955 = vpop.f32.mrb[0].mxu0
    %956 = vdwg.mxu0
    %957 = vmatprep.subr.mxu0 0.0
    %v958 = vand.u32 %v655, 4294901760
    %v959 = vsub.f32 %v655, %v958
    %v960 = vand.u32 %v959, 4294901760
    %961 = vmatpush1.xpose.msra.mxu0 %v960
    %962 = vmatprep.subr.mxu0 0.0
    %963 = vmatpush1.xpose.msra.mxu0 0.0
    %964 = vmatprep.subr.mxu0 0.0
    %965 = vmatpush1.xpose.msra.mxu0 0.0
    %966 = vmatprep.subr.mxu0 0.0
    %967 = vmatpush1.xpose.msra.mxu0 0.0
    %968 = vmatprep.subr.mxu0 0.0
    %969 = vmatpush1.xpose.msra.mxu0 0.0
    %970 = vmatprep.subr.mxu0 0.0
    %971 = vmatpush1.xpose.msra.mxu0 0.0
    %972 = vmatprep.subr.mxu0 0.0
    %973 = vmatpush1.xpose.msra.mxu0 0.0
    %974 = vmatprep.subr.mxu0 0.0
    %975 = vmatpush1.xpose.msra.mxu0 0.0
    %976 = vmatprep.subr.mxu0 0.0
    %977 = vmatpush1.xpose.msra.mxu0 0.0
    %978 = vmatprep.subr.mxu0 0.0
    %979 = vmatpush1.xpose.msra.mxu0 0.0
    %980 = vmatprep.subr.mxu0 0.0
    %981 = vmatpush1.xpose.msra.mxu0 0.0
    %982 = vmatprep.subr.mxu0 0.0
    %983 = vmatpush1.xpose.msra.mxu0 0.0
    %984 = vmatprep.subr.mxu0 0.0
    %985 = vmatpush1.xpose.msra.mxu0 0.0
    %986 = vmatprep.subr.mxu0 0.0
    %987 = vmatpush1.xpose.msra.mxu0 0.0
    %988 = vmatprep.subr.mxu0 0.0
    %989 = vmatpush1.xpose.msra.mxu0 0.0
    %990 = vmatprep.subr.mxu0 0.0
    %991 = vmatpush1.xpose.msra.mxu0 0.0
    %992 = vmatprep.subr.mxu0 0.0
    %993 = vmatpush1.xpose.msra.mxu0 0.0
    %994 = vmatprep.subr.mxu0 0.0
    %995 = vmatpush1.xpose.msra.mxu0 0.0
    %996 = vmatprep.subr.mxu0 0.0
    %997 = vmatpush1.xpose.msra.mxu0 0.0
    %998 = vmatprep.subr.mxu0 0.0
    %999 = vmatpush1.xpose.msra.mxu0 0.0
    %1000 = vmatprep.subr.mxu0 0.0
    %1001 = vmatpush1.xpose.msra.mxu0 0.0
    %1002 = vmatprep.subr.mxu0 0.0
    %1003 = vmatpush1.xpose.msra.mxu0 0.0
    %1004 = vmatprep.subr.mxu0 0.0
    %1005 = vmatpush1.xpose.msra.mxu0 0.0
    %1006 = vmatprep.subr.mxu0 0.0
    %1007 = vmatpush1.xpose.msra.mxu0 0.0
    %1008 = vmatprep.subr.mxu0 0.0
    %1009 = vmatpush1.xpose.msra.mxu0 0.0
    %1010 = vmatprep.subr.mxu0 0.0
    %1011 = vmatpush1.xpose.msra.mxu0 0.0
    %1012 = vmatprep.subr.mxu0 0.0
    %1013 = vmatpush1.xpose.msra.mxu0 0.0
    %1014 = vmatprep.subr.mxu0 0.0
    %1015 = vmatpush1.xpose.msra.mxu0 0.0
    %1016 = vmatprep.subr.mxu0 0.0
    %1017 = vmatpush1.xpose.msra.mxu0 0.0
    %1018 = vmatprep.subr.mxu0 0.0
    %1019 = vmatpush1.xpose.msra.mxu0 0.0
    %1020 = vmatprep.subr.mxu0 0.0
    %1021 = vmatpush1.xpose.msra.mxu0 0.0
    %1022 = vmatprep.subr.mxu0 0.0
    %1023 = vmatpush1.xpose.msra.mxu0 0.0
    %1024 = vmatprep.mubr.f32.mxu0 0.0
    %v1025 = vand.u32 %v653, 4294901760
    %1026 = vmatmul.mubr.f32.gmra.mrb[0].mxu0 %v1025
    %v1027 = vpop.f32.mrb[0].mxu0
    %v1028 = vadd.f32 %v954, %v1027
    %v1029 = vpop.f32.mrb[0].mxu0
    %1030 = vdwg.mxu0
    %1031 = vmatprep.subr.mxu0 0.0
    %v1032 = vand.u32 %v655, 4294901760
    %1033 = vmatpush1.xpose.msra.mxu0 %v1032
    %1034 = vmatprep.subr.mxu0 0.0
    %1035 = vmatpush1.xpose.msra.mxu0 0.0
    %1036 = vmatprep.subr.mxu0 0.0
    %1037 = vmatpush1.xpose.msra.mxu0 0.0
    %1038 = vmatprep.subr.mxu0 0.0
    %1039 = vmatpush1.xpose.msra.mxu0 0.0
    %1040 = vmatprep.subr.mxu0 0.0
    %1041 = vmatpush1.xpose.msra.mxu0 0.0
    %1042 = vmatprep.subr.mxu0 0.0
    %1043 = vmatpush1.xpose.msra.mxu0 0.0
    %1044 = vmatprep.subr.mxu0 0.0
    %1045 = vmatpush1.xpose.msra.mxu0 0.0
    %1046 = vmatprep.subr.mxu0 0.0
    %1047 = vmatpush1.xpose.msra.mxu0 0.0
    %1048 = vmatprep.subr.mxu0 0.0
    %1049 = vmatpush1.xpose.msra.mxu0 0.0
    %1050 = vmatprep.subr.mxu0 0.0
    %1051 = vmatpush1.xpose.msra.mxu0 0.0
    %1052 = vmatprep.subr.mxu0 0.0
    %1053 = vmatpush1.xpose.msra.mxu0 0.0
    %1054 = vmatprep.subr.mxu0 0.0
    %1055 = vmatpush1.xpose.msra.mxu0 0.0
    %1056 = vmatprep.subr.mxu0 0.0
    %1057 = vmatpush1.xpose.msra.mxu0 0.0
    %1058 = vmatprep.subr.mxu0 0.0
    %1059 = vmatpush1.xpose.msra.mxu0 0.0
    %1060 = vmatprep.subr.mxu0 0.0
    %1061 = vmatpush1.xpose.msra.mxu0 0.0
    %1062 = vmatprep.subr.mxu0 0.0
    %1063 = vmatpush1.xpose.msra.mxu0 0.0
    %1064 = vmatprep.subr.mxu0 0.0
    %1065 = vmatpush1.xpose.msra.mxu0 0.0
    %1066 = vmatprep.subr.mxu0 0.0
    %1067 = vmatpush1.xpose.msra.mxu0 0.0
    %1068 = vmatprep.subr.mxu0 0.0
    %1069 = vmatpush1.xpose.msra.mxu0 0.0
    %1070 = vmatprep.subr.mxu0 0.0
    %1071 = vmatpush1.xpose.msra.mxu0 0.0
    %1072 = vmatprep.subr.mxu0 0.0
    %1073 = vmatpush1.xpose.msra.mxu0 0.0
    %1074 = vmatprep.subr.mxu0 0.0
    %1075 = vmatpush1.xpose.msra.mxu0 0.0
    %1076 = vmatprep.subr.mxu0 0.0
    %1077 = vmatpush1.xpose.msra.mxu0 0.0
    %1078 = vmatprep.subr.mxu0 0.0
    %1079 = vmatpush1.xpose.msra.mxu0 0.0
    %1080 = vmatprep.subr.mxu0 0.0
    %1081 = vmatpush1.xpose.msra.mxu0 0.0
    %1082 = vmatprep.subr.mxu0 0.0
    %1083 = vmatpush1.xpose.msra.mxu0 0.0
    %1084 = vmatprep.subr.mxu0 0.0
    %1085 = vmatpush1.xpose.msra.mxu0 0.0
    %1086 = vmatprep.subr.mxu0 0.0
    %1087 = vmatpush1.xpose.msra.mxu0 0.0
    %1088 = vmatprep.subr.mxu0 0.0
    %1089 = vmatpush1.xpose.msra.mxu0 0.0
    %1090 = vmatprep.subr.mxu0 0.0
    %1091 = vmatpush1.xpose.msra.mxu0 0.0
    %1092 = vmatprep.subr.mxu0 0.0
    %1093 = vmatpush1.xpose.msra.mxu0 0.0
    %1094 = vmatprep.subr.mxu0 0.0
    %1095 = vmatpush1.xpose.msra.mxu0 0.0
    %1096 = vmatprep.mubr.f32.mxu0 0.0
    %v1097 = vand.u32 %v653, 4294901760
    %1098 = vmatmul.mubr.f32.gmra.mrb[0].mxu0 %v1097
    %v1099 = vpop.f32.mrb[0].mxu0
    %v1100 = vadd.f32 %v1028, %v1099
    %v1101 = vpop.f32.mrb[0].mxu0
    %1102 = vdwg.mxu0
    %v1103 = vmul.f32 %v1100, 0.35355338
    %v1105 = vlaneseq
    %v1106 = vshrl.u32 %v1105, 7
    %v1107 = vsub.s32 0, %v1106
    %v1108 = vrot.slane %v647, %v1107
    %v1110 = vadd.f32 %v1103, %v1108
    %v1111 = vsel %vm652, %v1110, -inf
    %1112 = vmax.xlane.f32.xlu0 %v1111
    %v1113 = vpop.xlane.xlu0 %1112
    %v1114 = vsub.f32 %v1110, %v1113
    %v1115 = vmul.f32 %v1114, 1.442695
    %v1116 = vpow.pop %v1115
    %v1117 = vsel %vm652, %v1116, 0.0
    %1118 = vadd.xlane.f32.xlu0 %v1117
    %v1119 = vpop.xlane.xlu0 %1118
    %1120 = vrot.lane.b32.xlu0 %v638, 64
    %v1121 = vpop.permute.xlu0 %1120
    %v1124 = vsel %vm652, %v1116, 0
    %1126 = vmatprep.subr.mxu0 0.0
    %v1127 = vand.u32 %v1121, 4294901760
    %1128 = vmatpush1.msra.mxu0 %v1127
    %1129 = vmatprep.subr.mxu0 0.0
    %1130 = vmatpush1.msra.mxu0 0.0
    %1131 = vmatprep.subr.mxu0 0.0
    %1132 = vmatpush1.msra.mxu0 0.0
    %1133 = vmatprep.subr.mxu0 0.0
    %1134 = vmatpush1.msra.mxu0 0.0
    %1135 = vmatprep.subr.mxu0 0.0
    %1136 = vmatpush1.msra.mxu0 0.0
    %1137 = vmatprep.subr.mxu0 0.0
    %1138 = vmatpush1.msra.mxu0 0.0
    %1139 = vmatprep.subr.mxu0 0.0
    %1140 = vmatpush1.msra.mxu0 0.0
    %1141 = vmatprep.subr.mxu0 0.0
    %1142 = vmatpush1.msra.mxu0 0.0
    %1143 = vmatprep.subr.mxu0 0.0
    %1144 = vmatpush1.msra.mxu0 0.0
    %1145 = vmatprep.subr.mxu0 0.0
    %1146 = vmatpush1.msra.mxu0 0.0
    %1147 = vmatprep.subr.mxu0 0.0
    %1148 = vmatpush1.msra.mxu0 0.0
    %1149 = vmatprep.subr.mxu0 0.0
    %1150 = vmatpush1.msra.mxu0 0.0
    %1151 = vmatprep.subr.mxu0 0.0
    %1152 = vmatpush1.msra.mxu0 0.0
    %1153 = vmatprep.subr.mxu0 0.0
    %1154 = vmatpush1.msra.mxu0 0.0
    %1155 = vmatprep.subr.mxu0 0.0
    %1156 = vmatpush1.msra.mxu0 0.0
    %1157 = vmatprep.subr.mxu0 0.0
    %1158 = vmatpush1.msra.mxu0 0.0
    %1159 = vmatprep.subr.mxu0 0.0
    %1160 = vmatpush1.msra.mxu0 0.0
    %1161 = vmatprep.subr.mxu0 0.0
    %1162 = vmatpush1.msra.mxu0 0.0
    %1163 = vmatprep.subr.mxu0 0.0
    %1164 = vmatpush1.msra.mxu0 0.0
    %1165 = vmatprep.subr.mxu0 0.0
    %1166 = vmatpush1.msra.mxu0 0.0
    %1167 = vmatprep.subr.mxu0 0.0
    %1168 = vmatpush1.msra.mxu0 0.0
    %1169 = vmatprep.subr.mxu0 0.0
    %1170 = vmatpush1.msra.mxu0 0.0
    %1171 = vmatprep.subr.mxu0 0.0
    %1172 = vmatpush1.msra.mxu0 0.0
    %1173 = vmatprep.subr.mxu0 0.0
    %1174 = vmatpush1.msra.mxu0 0.0
    %1175 = vmatprep.subr.mxu0 0.0
    %1176 = vmatpush1.msra.mxu0 0.0
    %1177 = vmatprep.subr.mxu0 0.0
    %1178 = vmatpush1.msra.mxu0 0.0
    %1179 = vmatprep.subr.mxu0 0.0
    %1180 = vmatpush1.msra.mxu0 0.0
    %1181 = vmatprep.subr.mxu0 0.0
    %1182 = vmatpush1.msra.mxu0 0.0
    %1183 = vmatprep.subr.mxu0 0.0
    %1184 = vmatpush1.msra.mxu0 0.0
    %1185 = vmatprep.subr.mxu0 0.0
    %1186 = vmatpush1.msra.mxu0 0.0
    %1187 = vmatprep.subr.mxu0 0.0
    %1188 = vmatpush1.msra.mxu0 0.0
    %1189 = vmatprep.subr.mxu0 0.0
    %1190 = vmatpush1.msra.mxu0 0.0
    %1191 = vmatprep.mubr.f32.mxu0 0.0
    %v1192 = vand.u32 %v1124, 4294901760
    %v1193 = vsub.f32 %v1124, %v1192
    %v1194 = vand.u32 %v1193, 4294901760
    %v1195 = vsub.f32 %v1193, %v1194
    %v1196 = vand.u32 %v1195, 4294901760
    %1197 = vmatmul.mubr.f32.gmra.mrb[0].mxu0 %v1196
    %v1198 = vpop.f32.mrb[0].mxu0
    %v1199 = vadd.f32 0.0, %v1198
    %v1200 = vpop.f32.mrb[0].mxu0
    %1201 = vdwg.mxu0
    %1202 = vmatprep.subr.mxu0 0.0
    %v1203 = vand.u32 %v1121, 4294901760
    %v1204 = vsub.f32 %v1121, %v1203
    %v1205 = vand.u32 %v1204, 4294901760
    %v1206 = vsub.f32 %v1204, %v1205
    %v1207 = vand.u32 %v1206, 4294901760
    %1208 = vmatpush1.msra.mxu0 %v1207
    %1209 = vmatprep.subr.mxu0 0.0
    %1210 = vmatpush1.msra.mxu0 0.0
    %1211 = vmatprep.subr.mxu0 0.0
    %1212 = vmatpush1.msra.mxu0 0.0
    %1213 = vmatprep.subr.mxu0 0.0
    %1214 = vmatpush1.msra.mxu0 0.0
    %1215 = vmatprep.subr.mxu0 0.0
    %1216 = vmatpush1.msra.mxu0 0.0
    %1217 = vmatprep.subr.mxu0 0.0
    %1218 = vmatpush1.msra.mxu0 0.0
    %1219 = vmatprep.subr.mxu0 0.0
    %1220 = vmatpush1.msra.mxu0 0.0
    %1221 = vmatprep.subr.mxu0 0.0
    %1222 = vmatpush1.msra.mxu0 0.0
    %1223 = vmatprep.subr.mxu0 0.0
    %1224 = vmatpush1.msra.mxu0 0.0
    %1225 = vmatprep.subr.mxu0 0.0
    %1226 = vmatpush1.msra.mxu0 0.0
    %1227 = vmatprep.subr.mxu0 0.0
    %1228 = vmatpush1.msra.mxu0 0.0
    %1229 = vmatprep.subr.mxu0 0.0
    %1230 = vmatpush1.msra.mxu0 0.0
    %1231 = vmatprep.subr.mxu0 0.0
    %1232 = vmatpush1.msra.mxu0 0.0
    %1233 = vmatprep.subr.mxu0 0.0
    %1234 = vmatpush1.msra.mxu0 0.0
    %1235 = vmatprep.subr.mxu0 0.0
    %1236 = vmatpush1.msra.mxu0 0.0
    %1237 = vmatprep.subr.mxu0 0.0
    %1238 = vmatpush1.msra.mxu0 0.0
    %1239 = vmatprep.subr.mxu0 0.0
    %1240 = vmatpush1.msra.mxu0 0.0
    %1241 = vmatprep.subr.mxu0 0.0
    %1242 = vmatpush1.msra.mxu0 0.0
    %1243 = vmatprep.subr.mxu0 0.0
    %1244 = vmatpush1.msra.mxu0 0.0
    %1245 = vmatprep.subr.mxu0 0.0
    %1246 = vmatpush1.msra.mxu0 0.0
    %1247 = vmatprep.subr.mxu0 0.0
    %1248 = vmatpush1.msra.mxu0 0.0
    %1249 = vmatprep.subr.mxu0 0.0
    %1250 = vmatpush1.msra.mxu0 0.0
    %1251 = vmatprep.subr.mxu0 0.0
    %1252 = vmatpush1.msra.mxu0 0.0
    %1253 = vmatprep.subr.mxu0 0.0
    %1254 = vmatpush1.msra.mxu0 0.0
    %1255 = vmatprep.subr.mxu0 0.0
    %1256 = vmatpush1.msra.mxu0 0.0
    %1257 = vmatprep.subr.mxu0 0.0
    %1258 = vmatpush1.msra.mxu0 0.0
    %1259 = vmatprep.subr.mxu0 0.0
    %1260 = vmatpush1.msra.mxu0 0.0
    %1261 = vmatprep.subr.mxu0 0.0
    %1262 = vmatpush1.msra.mxu0 0.0
    %1263 = vmatprep.subr.mxu0 0.0
    %1264 = vmatpush1.msra.mxu0 0.0
    %1265 = vmatprep.subr.mxu0 0.0
    %1266 = vmatpush1.msra.mxu0 0.0
    %1267 = vmatprep.subr.mxu0 0.0
    %1268 = vmatpush1.msra.mxu0 0.0
    %1269 = vmatprep.subr.mxu0 0.0
    %1270 = vmatpush1.msra.mxu0 0.0
    %1271 = vmatprep.mubr.f32.mxu0 0.0
    %v1272 = vand.u32 %v1124, 4294901760
    %1273 = vmatmul.mubr.f32.gmra.mrb[0].mxu0 %v1272
    %v1274 = vpop.f32.mrb[0].mxu0
    %v1275 = vadd.f32 %v1199, %v1274
    %v1276 = vpop.f32.mrb[0].mxu0
    %1277 = vdwg.mxu0
    %1278 = vmatprep.subr.mxu0 0.0
    %v1279 = vand.u32 %v1121, 4294901760
    %v1280 = vsub.f32 %v1121, %v1279
    %1281 = vmatpush1.msra.mxu0 %v1280
    %1282 = vmatprep.subr.mxu0 0.0
    %1283 = vmatpush1.msra.mxu0 0.0
    %1284 = vmatprep.subr.mxu0 0.0
    %1285 = vmatpush1.msra.mxu0 0.0
    %1286 = vmatprep.subr.mxu0 0.0
    %1287 = vmatpush1.msra.mxu0 0.0
    %1288 = vmatprep.subr.mxu0 0.0
    %1289 = vmatpush1.msra.mxu0 0.0
    %1290 = vmatprep.subr.mxu0 0.0
    %1291 = vmatpush1.msra.mxu0 0.0
    %1292 = vmatprep.subr.mxu0 0.0
    %1293 = vmatpush1.msra.mxu0 0.0
    %1294 = vmatprep.subr.mxu0 0.0
    %1295 = vmatpush1.msra.mxu0 0.0
    %1296 = vmatprep.subr.mxu0 0.0
    %1297 = vmatpush1.msra.mxu0 0.0
    %1298 = vmatprep.subr.mxu0 0.0
    %1299 = vmatpush1.msra.mxu0 0.0
    %1300 = vmatprep.subr.mxu0 0.0
    %1301 = vmatpush1.msra.mxu0 0.0
    %1302 = vmatprep.subr.mxu0 0.0
    %1303 = vmatpush1.msra.mxu0 0.0
    %1304 = vmatprep.subr.mxu0 0.0
    %1305 = vmatpush1.msra.mxu0 0.0
    %1306 = vmatprep.subr.mxu0 0.0
    %1307 = vmatpush1.msra.mxu0 0.0
    %1308 = vmatprep.subr.mxu0 0.0
    %1309 = vmatpush1.msra.mxu0 0.0
    %1310 = vmatprep.subr.mxu0 0.0
    %1311 = vmatpush1.msra.mxu0 0.0
    %1312 = vmatprep.subr.mxu0 0.0
    %1313 = vmatpush1.msra.mxu0 0.0
    %1314 = vmatprep.subr.mxu0 0.0
    %1315 = vmatpush1.msra.mxu0 0.0
    %1316 = vmatprep.subr.mxu0 0.0
    %1317 = vmatpush1.msra.mxu0 0.0
    %1318 = vmatprep.subr.mxu0 0.0
    %1319 = vmatpush1.msra.mxu0 0.0
    %1320 = vmatprep.subr.mxu0 0.0
    %1321 = vmatpush1.msra.mxu0 0.0
    %1322 = vmatprep.subr.mxu0 0.0
    %1323 = vmatpush1.msra.mxu0 0.0
    %1324 = vmatprep.subr.mxu0 0.0
    %1325 = vmatpush1.msra.mxu0 0.0
    %1326 = vmatprep.subr.mxu0 0.0
    %1327 = vmatpush1.msra.mxu0 0.0
    %1328 = vmatprep.subr.mxu0 0.0
    %1329 = vmatpush1.msra.mxu0 0.0
    %1330 = vmatprep.subr.mxu0 0.0
    %1331 = vmatpush1.msra.mxu0 0.0
    %1332 = vmatprep.subr.mxu0 0.0
    %1333 = vmatpush1.msra.mxu0 0.0
    %1334 = vmatprep.subr.mxu0 0.0
    %1335 = vmatpush1.msra.mxu0 0.0
    %1336 = vmatprep.subr.mxu0 0.0
    %1337 = vmatpush1.msra.mxu0 0.0
    %1338 = vmatprep.subr.mxu0 0.0
    %1339 = vmatpush1.msra.mxu0 0.0
    %1340 = vmatprep.subr.mxu0 0.0
    %1341 = vmatpush1.msra.mxu0 0.0
    %1342 = vmatprep.subr.mxu0 0.0
    %1343 = vmatpush1.msra.mxu0 0.0
    %1344 = vmatprep.mubr.f32.mxu0 0.0
    %v1345 = vand.u32 %v1124, 4294901760
    %v1346 = vsub.f32 %v1124, %v1345
    %1347 = vmatmul.mubr.f32.gmra.mrb[0].mxu0 %v1346
    %v1348 = vpop.f32.mrb[0].mxu0
    %v1349 = vadd.f32 %v1275, %v1348
    %v1350 = vpop.f32.mrb[0].mxu0
    %1351 = vdwg.mxu0
    %1352 = vmatprep.subr.mxu0 0.0
    %v1353 = vand.u32 %v1121, 4294901760
    %1354 = vmatpush1.msra.mxu0 %v1353
    %1355 = vmatprep.subr.mxu0 0.0
    %1356 = vmatpush1.msra.mxu0 0.0
    %1357 = vmatprep.subr.mxu0 0.0
    %1358 = vmatpush1.msra.mxu0 0.0
    %1359 = vmatprep.subr.mxu0 0.0
    %1360 = vmatpush1.msra.mxu0 0.0
    %1361 = vmatprep.subr.mxu0 0.0
    %1362 = vmatpush1.msra.mxu0 0.0
    %1363 = vmatprep.subr.mxu0 0.0
    %1364 = vmatpush1.msra.mxu0 0.0
    %1365 = vmatprep.subr.mxu0 0.0
    %1366 = vmatpush1.msra.mxu0 0.0
    %1367 = vmatprep.subr.mxu0 0.0
    %1368 = vmatpush1.msra.mxu0 0.0
    %1369 = vmatprep.subr.mxu0 0.0
    %1370 = vmatpush1.msra.mxu0 0.0
    %1371 = vmatprep.subr.mxu0 0.0
    %1372 = vmatpush1.msra.mxu0 0.0
    %1373 = vmatprep.subr.mxu0 0.0
    %1374 = vmatpush1.msra.mxu0 0.0
    %1375 = vmatprep.subr.mxu0 0.0
    %1376 = vmatpush1.msra.mxu0 0.0
    %1377 = vmatprep.subr.mxu0 0.0
    %1378 = vmatpush1.msra.mxu0 0.0
    %1379 = vmatprep.subr.mxu0 0.0
    %1380 = vmatpush1.msra.mxu0 0.0
    %1381 = vmatprep.subr.mxu0 0.0
    %1382 = vmatpush1.msra.mxu0 0.0
    %1383 = vmatprep.subr.mxu0 0.0
    %1384 = vmatpush1.msra.mxu0 0.0
    %1385 = vmatprep.subr.mxu0 0.0
    %1386 = vmatpush1.msra.mxu0 0.0
    %1387 = vmatprep.subr.mxu0 0.0
    %1388 = vmatpush1.msra.mxu0 0.0
    %1389 = vmatprep.subr.mxu0 0.0
    %1390 = vmatpush1.msra.mxu0 0.0
    %1391 = vmatprep.subr.mxu0 0.0
    %1392 = vmatpush1.msra.mxu0 0.0
    %1393 = vmatprep.subr.mxu0 0.0
    %1394 = vmatpush1.msra.mxu0 0.0
    %1395 = vmatprep.subr.mxu0 0.0
    %1396 = vmatpush1.msra.mxu0 0.0
    %1397 = vmatprep.subr.mxu0 0.0
    %1398 = vmatpush1.msra.mxu0 0.0
    %1399 = vmatprep.subr.mxu0 0.0
    %1400 = vmatpush1.msra.mxu0 0.0
    %1401 = vmatprep.subr.mxu0 0.0
    %1402 = vmatpush1.msra.mxu0 0.0
    %1403 = vmatprep.subr.mxu0 0.0
    %1404 = vmatpush1.msra.mxu0 0.0
    %1405 = vmatprep.subr.mxu0 0.0
    %1406 = vmatpush1.msra.mxu0 0.0
    %1407 = vmatprep.subr.mxu0 0.0
    %1408 = vmatpush1.msra.mxu0 0.0
    %1409 = vmatprep.subr.mxu0 0.0
    %1410 = vmatpush1.msra.mxu0 0.0
    %1411 = vmatprep.subr.mxu0 0.0
    %1412 = vmatpush1.msra.mxu0 0.0
    %1413 = vmatprep.subr.mxu0 0.0
    %1414 = vmatpush1.msra.mxu0 0.0
    %1415 = vmatprep.subr.mxu0 0.0
    %1416 = vmatpush1.msra.mxu0 0.0
    %1417 = vmatprep.mubr.f32.mxu0 0.0
    %v1418 = vand.u32 %v1124, 4294901760
    %v1419 = vsub.f32 %v1124, %v1418
    %v1420 = vand.u32 %v1419, 4294901760
    %1421 = vmatmul.mubr.f32.gmra.mrb[0].mxu0 %v1420
    %v1422 = vpop.f32.mrb[0].mxu0
    %v1423 = vadd.f32 %v1349, %v1422
    %v1424 = vpop.f32.mrb[0].mxu0
    %1425 = vdwg.mxu0
    %1426 = vmatprep.subr.mxu0 0.0
    %v1427 = vand.u32 %v1121, 4294901760
    %v1428 = vsub.f32 %v1121, %v1427
    %v1429 = vand.u32 %v1428, 4294901760
    %1430 = vmatpush1.msra.mxu0 %v1429
    %1431 = vmatprep.subr.mxu0 0.0
    %1432 = vmatpush1.msra.mxu0 0.0
    %1433 = vmatprep.subr.mxu0 0.0
    %1434 = vmatpush1.msra.mxu0 0.0
    %1435 = vmatprep.subr.mxu0 0.0
    %1436 = vmatpush1.msra.mxu0 0.0
    %1437 = vmatprep.subr.mxu0 0.0
    %1438 = vmatpush1.msra.mxu0 0.0
    %1439 = vmatprep.subr.mxu0 0.0
    %1440 = vmatpush1.msra.mxu0 0.0
    %1441 = vmatprep.subr.mxu0 0.0
    %1442 = vmatpush1.msra.mxu0 0.0
    %1443 = vmatprep.subr.mxu0 0.0
    %1444 = vmatpush1.msra.mxu0 0.0
    %1445 = vmatprep.subr.mxu0 0.0
    %1446 = vmatpush1.msra.mxu0 0.0
    %1447 = vmatprep.subr.mxu0 0.0
    %1448 = vmatpush1.msra.mxu0 0.0
    %1449 = vmatprep.subr.mxu0 0.0
    %1450 = vmatpush1.msra.mxu0 0.0
    %1451 = vmatprep.subr.mxu0 0.0
    %1452 = vmatpush1.msra.mxu0 0.0
    %1453 = vmatprep.subr.mxu0 0.0
    %1454 = vmatpush1.msra.mxu0 0.0
    %1455 = vmatprep.subr.mxu0 0.0
    %1456 = vmatpush1.msra.mxu0 0.0
    %1457 = vmatprep.subr.mxu0 0.0
    %1458 = vmatpush1.msra.mxu0 0.0
    %1459 = vmatprep.subr.mxu0 0.0
    %1460 = vmatpush1.msra.mxu0 0.0
    %1461 = vmatprep.subr.mxu0 0.0
    %1462 = vmatpush1.msra.mxu0 0.0
    %1463 = vmatprep.subr.mxu0 0.0
    %1464 = vmatpush1.msra.mxu0 0.0
    %1465 = vmatprep.subr.mxu0 0.0
    %1466 = vmatpush1.msra.mxu0 0.0
    %1467 = vmatprep.subr.mxu0 0.0
    %1468 = vmatpush1.msra.mxu0 0.0
    %1469 = vmatprep.subr.mxu0 0.0
    %1470 = vmatpush1.msra.mxu0 0.0
    %1471 = vmatprep.subr.mxu0 0.0
    %1472 = vmatpush1.msra.mxu0 0.0
    %1473 = vmatprep.subr.mxu0 0.0
    %1474 = vmatpush1.msra.mxu0 0.0
    %1475 = vmatprep.subr.mxu0 0.0
    %1476 = vmatpush1.msra.mxu0 0.0
    %1477 = vmatprep.subr.mxu0 0.0
    %1478 = vmatpush1.msra.mxu0 0.0
    %1479 = vmatprep.subr.mxu0 0.0
    %1480 = vmatpush1.msra.mxu0 0.0
    %1481 = vmatprep.subr.mxu0 0.0
    %1482 = vmatpush1.msra.mxu0 0.0
    %1483 = vmatprep.subr.mxu0 0.0
    %1484 = vmatpush1.msra.mxu0 0.0
    %1485 = vmatprep.subr.mxu0 0.0
    %1486 = vmatpush1.msra.mxu0 0.0
    %1487 = vmatprep.subr.mxu0 0.0
    %1488 = vmatpush1.msra.mxu0 0.0
    %1489 = vmatprep.subr.mxu0 0.0
    %1490 = vmatpush1.msra.mxu0 0.0
    %1491 = vmatprep.subr.mxu0 0.0
    %1492 = vmatpush1.msra.mxu0 0.0
    %1493 = vmatprep.mubr.f32.mxu0 0.0
    %v1494 = vand.u32 %v1124, 4294901760
    %1495 = vmatmul.mubr.f32.gmra.mrb[0].mxu0 %v1494
    %v1496 = vpop.f32.mrb[0].mxu0
    %v1497 = vadd.f32 %v1423, %v1496
    %v1498 = vpop.f32.mrb[0].mxu0
    %1499 = vdwg.mxu0
    %1500 = vmatprep.subr.mxu0 0.0
    %v1501 = vand.u32 %v1121, 4294901760
    %1502 = vmatpush1.msra.mxu0 %v1501
    %1503 = vmatprep.subr.mxu0 0.0
    %1504 = vmatpush1.msra.mxu0 0.0
    %1505 = vmatprep.subr.mxu0 0.0
    %1506 = vmatpush1.msra.mxu0 0.0
    %1507 = vmatprep.subr.mxu0 0.0
    %1508 = vmatpush1.msra.mxu0 0.0
    %1509 = vmatprep.subr.mxu0 0.0
    %1510 = vmatpush1.msra.mxu0 0.0
    %1511 = vmatprep.subr.mxu0 0.0
    %1512 = vmatpush1.msra.mxu0 0.0
    %1513 = vmatprep.subr.mxu0 0.0
    %1514 = vmatpush1.msra.mxu0 0.0
    %1515 = vmatprep.subr.mxu0 0.0
    %1516 = vmatpush1.msra.mxu0 0.0
    %1517 = vmatprep.subr.mxu0 0.0
    %1518 = vmatpush1.msra.mxu0 0.0
    %1519 = vmatprep.subr.mxu0 0.0
    %1520 = vmatpush1.msra.mxu0 0.0
    %1521 = vmatprep.subr.mxu0 0.0
    %1522 = vmatpush1.msra.mxu0 0.0
    %1523 = vmatprep.subr.mxu0 0.0
    %1524 = vmatpush1.msra.mxu0 0.0
    %1525 = vmatprep.subr.mxu0 0.0
    %1526 = vmatpush1.msra.mxu0 0.0
    %1527 = vmatprep.subr.mxu0 0.0
    %1528 = vmatpush1.msra.mxu0 0.0
    %1529 = vmatprep.subr.mxu0 0.0
    %1530 = vmatpush1.msra.mxu0 0.0
    %1531 = vmatprep.subr.mxu0 0.0
    %1532 = vmatpush1.msra.mxu0 0.0
    %1533 = vmatprep.subr.mxu0 0.0
    %1534 = vmatpush1.msra.mxu0 0.0
    %1535 = vmatprep.subr.mxu0 0.0
    %1536 = vmatpush1.msra.mxu0 0.0
    %1537 = vmatprep.subr.mxu0 0.0
    %1538 = vmatpush1.msra.mxu0 0.0
    %1539 = vmatprep.subr.mxu0 0.0
    %1540 = vmatpush1.msra.mxu0 0.0
    %1541 = vmatprep.subr.mxu0 0.0
    %1542 = vmatpush1.msra.mxu0 0.0
    %1543 = vmatprep.subr.mxu0 0.0
    %1544 = vmatpush1.msra.mxu0 0.0
    %1545 = vmatprep.subr.mxu0 0.0
    %1546 = vmatpush1.msra.mxu0 0.0
    %1547 = vmatprep.subr.mxu0 0.0
    %1548 = vmatpush1.msra.mxu0 0.0
    %1549 = vmatprep.subr.mxu0 0.0
    %1550 = vmatpush1.msra.mxu0 0.0
    %1551 = vmatprep.subr.mxu0 0.0
    %1552 = vmatpush1.msra.mxu0 0.0
    %1553 = vmatprep.subr.mxu0 0.0
    %1554 = vmatpush1.msra.mxu0 0.0
    %1555 = vmatprep.subr.mxu0 0.0
    %1556 = vmatpush1.msra.mxu0 0.0
    %1557 = vmatprep.subr.mxu0 0.0
    %1558 = vmatpush1.msra.mxu0 0.0
    %1559 = vmatprep.subr.mxu0 0.0
    %1560 = vmatpush1.msra.mxu0 0.0
    %1561 = vmatprep.subr.mxu0 0.0
    %1562 = vmatpush1.msra.mxu0 0.0
    %1563 = vmatprep.subr.mxu0 0.0
    %1564 = vmatpush1.msra.mxu0 0.0
    %1565 = vmatprep.mubr.f32.mxu0 0.0
    %v1566 = vand.u32 %v1124, 4294901760
    %1567 = vmatmul.mubr.f32.gmra.mrb[0].mxu0 %v1566
    %v1568 = vpop.f32.mrb[0].mxu0
    %v1569 = vadd.f32 %v1497, %v1568
    %v1570 = vpop.f32.mrb[0].mxu0
    %1571 = vdwg.mxu0
    %v1572 = vrcp.pop %v1119
    %v1573 = vmul.f32 %v1119, %v1572
    %v1574 = vsub.f32 2.0, %v1573
    %v1575 = vmul.f32 %v1572, %v1574
    %v1576 = vmul.f32 %v1569, %v1575
    %1577 = vst.msk [vmem:[#allocation2] sm:$0xff] %vm652, %v1576
    %1578 = vrot.lane.b32.xlu0 %v638, 120
    %v1579 = vpop.permute.xlu0 %1578
    %1580 = vrot.lane.b32.xlu0 %v638, 88
    %v1581 = vpop.permute.xlu0 %1580
    %v1582 = vsel %vm652, %v1579, 0
    %v1584 = vsel %vm652, %v1581, 0
    %1586 = vmatprep.subr.mxu0 0.0
    %v1587 = vand.u32 %v1584, 4294901760
    %1588 = vmatpush1.xpose.msra.mxu0 %v1587
    %1589 = vmatprep.subr.mxu0 0.0
    %1590 = vmatpush1.xpose.msra.mxu0 0.0
    %1591 = vmatprep.subr.mxu0 0.0
    %1592 = vmatpush1.xpose.msra.mxu0 0.0
    %1593 = vmatprep.subr.mxu0 0.0
    %1594 = vmatpush1.xpose.msra.mxu0 0.0
    %1595 = vmatprep.subr.mxu0 0.0
    %1596 = vmatpush1.xpose.msra.mxu0 0.0
    %1597 = vmatprep.subr.mxu0 0.0
    %1598 = vmatpush1.xpose.msra.mxu0 0.0
    %1599 = vmatprep.subr.mxu0 0.0
    %1600 = vmatpush1.xpose.msra.mxu0 0.0
    %1601 = vmatprep.subr.mxu0 0.0
    %1602 = vmatpush1.xpose.msra.mxu0 0.0
    %1603 = vmatprep.subr.mxu0 0.0
    %1604 = vmatpush1.xpose.msra.mxu0 0.0
    %1605 = vmatprep.subr.mxu0 0.0
    %1606 = vmatpush1.xpose.msra.mxu0 0.0
    %1607 = vmatprep.subr.mxu0 0.0
    %1608 = vmatpush1.xpose.msra.mxu0 0.0
    %1609 = vmatprep.subr.mxu0 0.0
    %1610 = vmatpush1.xpose.msra.mxu0 0.0
    %1611 = vmatprep.subr.mxu0 0.0
    %1612 = vmatpush1.xpose.msra.mxu0 0.0
    %1613 = vmatprep.subr.mxu0 0.0
    %1614 = vmatpush1.xpose.msra.mxu0 0.0
    %1615 = vmatprep.subr.mxu0 0.0
    %1616 = vmatpush1.xpose.msra.mxu0 0.0
    %1617 = vmatprep.subr.mxu0 0.0
    %1618 = vmatpush1.xpose.msra.mxu0 0.0
    %1619 = vmatprep.subr.mxu0 0.0
    %1620 = vmatpush1.xpose.msra.mxu0 0.0
    %1621 = vmatprep.subr.mxu0 0.0
    %1622 = vmatpush1.xpose.msra.mxu0 0.0
    %1623 = vmatprep.subr.mxu0 0.0
    %1624 = vmatpush1.xpose.msra.mxu0 0.0
    %1625 = vmatprep.subr.mxu0 0.0
    %1626 = vmatpush1.xpose.msra.mxu0 0.0
    %1627 = vmatprep.subr.mxu0 0.0
    %1628 = vmatpush1.xpose.msra.mxu0 0.0
    %1629 = vmatprep.subr.mxu0 0.0
    %1630 = vmatpush1.xpose.msra.mxu0 0.0
    %1631 = vmatprep.subr.mxu0 0.0
    %1632 = vmatpush1.xpose.msra.mxu0 0.0
    %1633 = vmatprep.subr.mxu0 0.0
    %1634 = vmatpush1.xpose.msra.mxu0 0.0
    %1635 = vmatprep.subr.mxu0 0.0
    %1636 = vmatpush1.xpose.msra.mxu0 0.0
    %1637 = vmatprep.subr.mxu0 0.0
    %1638 = vmatpush1.xpose.msra.mxu0 0.0
    %1639 = vmatprep.subr.mxu0 0.0
    %1640 = vmatpush1.xpose.msra.mxu0 0.0
    %1641 = vmatprep.subr.mxu0 0.0
    %1642 = vmatpush1.xpose.msra.mxu0 0.0
    %1643 = vmatprep.subr.mxu0 0.0
    %1644 = vmatpush1.xpose.msra.mxu0 0.0
    %1645 = vmatprep.subr.mxu0 0.0
    %1646 = vmatpush1.xpose.msra.mxu0 0.0
    %1647 = vmatprep.subr.mxu0 0.0
    %1648 = vmatpush1.xpose.msra.mxu0 0.0
    %1649 = vmatprep.subr.mxu0 0.0
    %1650 = vmatpush1.xpose.msra.mxu0 0.0
    %1651 = vmatprep.mubr.f32.mxu0 0.0
    %v1652 = vand.u32 %v1582, 4294901760
    %v1653 = vsub.f32 %v1582, %v1652
    %v1654 = vand.u32 %v1653, 4294901760
    %v1655 = vsub.f32 %v1653, %v1654
    %v1656 = vand.u32 %v1655, 4294901760
    %1657 = vmatmul.mubr.f32.gmra.mrb[0].mxu0 %v1656
    %v1658 = vpop.f32.mrb[0].mxu0
    %v1659 = vadd.f32 0.0, %v1658
    %v1660 = vpop.f32.mrb[0].mxu0
    %1661 = vdwg.mxu0
    %1662 = vmatprep.subr.mxu0 0.0
    %v1663 = vand.u32 %v1584, 4294901760
    %v1664 = vsub.f32 %v1584, %v1663
    %v1665 = vand.u32 %v1664, 4294901760
    %v1666 = vsub.f32 %v1664, %v1665
    %v1667 = vand.u32 %v1666, 4294901760
    %1668 = vmatpush1.xpose.msra.mxu0 %v1667
    %1669 = vmatprep.subr.mxu0 0.0
    %1670 = vmatpush1.xpose.msra.mxu0 0.0
    %1671 = vmatprep.subr.mxu0 0.0
    %1672 = vmatpush1.xpose.msra.mxu0 0.0
    %1673 = vmatprep.subr.mxu0 0.0
    %1674 = vmatpush1.xpose.msra.mxu0 0.0
    %1675 = vmatprep.subr.mxu0 0.0
    %1676 = vmatpush1.xpose.msra.mxu0 0.0
    %1677 = vmatprep.subr.mxu0 0.0
    %1678 = vmatpush1.xpose.msra.mxu0 0.0
    %1679 = vmatprep.subr.mxu0 0.0
    %1680 = vmatpush1.xpose.msra.mxu0 0.0
    %1681 = vmatprep.subr.mxu0 0.0
    %1682 = vmatpush1.xpose.msra.mxu0 0.0
    %1683 = vmatprep.subr.mxu0 0.0
    %1684 = vmatpush1.xpose.msra.mxu0 0.0
    %1685 = vmatprep.subr.mxu0 0.0
    %1686 = vmatpush1.xpose.msra.mxu0 0.0
    %1687 = vmatprep.subr.mxu0 0.0
    %1688 = vmatpush1.xpose.msra.mxu0 0.0
    %1689 = vmatprep.subr.mxu0 0.0
    %1690 = vmatpush1.xpose.msra.mxu0 0.0
    %1691 = vmatprep.subr.mxu0 0.0
    %1692 = vmatpush1.xpose.msra.mxu0 0.0
    %1693 = vmatprep.subr.mxu0 0.0
    %1694 = vmatpush1.xpose.msra.mxu0 0.0
    %1695 = vmatprep.subr.mxu0 0.0
    %1696 = vmatpush1.xpose.msra.mxu0 0.0
    %1697 = vmatprep.subr.mxu0 0.0
    %1698 = vmatpush1.xpose.msra.mxu0 0.0
    %1699 = vmatprep.subr.mxu0 0.0
    %1700 = vmatpush1.xpose.msra.mxu0 0.0
    %1701 = vmatprep.subr.mxu0 0.0
    %1702 = vmatpush1.xpose.msra.mxu0 0.0
    %1703 = vmatprep.subr.mxu0 0.0
    %1704 = vmatpush1.xpose.msra.mxu0 0.0
    %1705 = vmatprep.subr.mxu0 0.0
    %1706 = vmatpush1.xpose.msra.mxu0 0.0
    %1707 = vmatprep.subr.mxu0 0.0
    %1708 = vmatpush1.xpose.msra.mxu0 0.0
    %1709 = vmatprep.subr.mxu0 0.0
    %1710 = vmatpush1.xpose.msra.mxu0 0.0
    %1711 = vmatprep.subr.mxu0 0.0
    %1712 = vmatpush1.xpose.msra.mxu0 0.0
    %1713 = vmatprep.subr.mxu0 0.0
    %1714 = vmatpush1.xpose.msra.mxu0 0.0
    %1715 = vmatprep.subr.mxu0 0.0
    %1716 = vmatpush1.xpose.msra.mxu0 0.0
    %1717 = vmatprep.subr.mxu0 0.0
    %1718 = vmatpush1.xpose.msra.mxu0 0.0
    %1719 = vmatprep.subr.mxu0 0.0
    %1720 = vmatpush1.xpose.msra.mxu0 0.0
    %1721 = vmatprep.subr.mxu0 0.0
    %1722 = vmatpush1.xpose.msra.mxu0 0.0
    %1723 = vmatprep.subr.mxu0 0.0
    %1724 = vmatpush1.xpose.msra.mxu0 0.0
    %1725 = vmatprep.subr.mxu0 0.0
    %1726 = vmatpush1.xpose.msra.mxu0 0.0
    %1727 = vmatprep.subr.mxu0 0.0
    %1728 = vmatpush1.xpose.msra.mxu0 0.0
    %1729 = vmatprep.subr.mxu0 0.0
    %1730 = vmatpush1.xpose.msra.mxu0 0.0
    %1731 = vmatprep.mubr.f32.mxu0 0.0
    %v1732 = vand.u32 %v1582, 4294901760
    %1733 = vmatmul.mubr.f32.gmra.mrb[0].mxu0 %v1732
    %v1734 = vpop.f32.mrb[0].mxu0
    %v1735 = vadd.f32 %v1659, %v1734
    %v1736 = vpop.f32.mrb[0].mxu0
    %1737 = vdwg.mxu0
    %1738 = vmatprep.subr.mxu0 0.0
    %v1739 = vand.u32 %v1584, 4294901760
    %v1740 = vsub.f32 %v1584, %v1739
    %1741 = vmatpush1.xpose.msra.mxu0 %v1740
    %1742 = vmatprep.subr.mxu0 0.0
    %1743 = vmatpush1.xpose.msra.mxu0 0.0
    %1744 = vmatprep.subr.mxu0 0.0
    %1745 = vmatpush1.xpose.msra.mxu0 0.0
    %1746 = vmatprep.subr.mxu0 0.0
    %1747 = vmatpush1.xpose.msra.mxu0 0.0
    %1748 = vmatprep.subr.mxu0 0.0
    %1749 = vmatpush1.xpose.msra.mxu0 0.0
    %1750 = vmatprep.subr.mxu0 0.0
    %1751 = vmatpush1.xpose.msra.mxu0 0.0
    %1752 = vmatprep.subr.mxu0 0.0
    %1753 = vmatpush1.xpose.msra.mxu0 0.0
    %1754 = vmatprep.subr.mxu0 0.0
    %1755 = vmatpush1.xpose.msra.mxu0 0.0
    %1756 = vmatprep.subr.mxu0 0.0
    %1757 = vmatpush1.xpose.msra.mxu0 0.0
    %1758 = vmatprep.subr.mxu0 0.0
    %1759 = vmatpush1.xpose.msra.mxu0 0.0
    %1760 = vmatprep.subr.mxu0 0.0
    %1761 = vmatpush1.xpose.msra.mxu0 0.0
    %1762 = vmatprep.subr.mxu0 0.0
    %1763 = vmatpush1.xpose.msra.mxu0 0.0
    %1764 = vmatprep.subr.mxu0 0.0
    %1765 = vmatpush1.xpose.msra.mxu0 0.0
    %1766 = vmatprep.subr.mxu0 0.0
    %1767 = vmatpush1.xpose.msra.mxu0 0.0
    %1768 = vmatprep.subr.mxu0 0.0
    %1769 = vmatpush1.xpose.msra.mxu0 0.0
    %1770 = vmatprep.subr.mxu0 0.0
    %1771 = vmatpush1.xpose.msra.mxu0 0.0
    %1772 = vmatprep.subr.mxu0 0.0
    %1773 = vmatpush1.xpose.msra.mxu0 0.0
    %1774 = vmatprep.subr.mxu0 0.0
    %1775 = vmatpush1.xpose.msra.mxu0 0.0
    %1776 = vmatprep.subr.mxu0 0.0
    %1777 = vmatpush1.xpose.msra.mxu0 0.0
    %1778 = vmatprep.subr.mxu0 0.0
    %1779 = vmatpush1.xpose.msra.mxu0 0.0
    %1780 = vmatprep.subr.mxu0 0.0
    %1781 = vmatpush1.xpose.msra.mxu0 0.0
    %1782 = vmatprep.subr.mxu0 0.0
    %1783 = vmatpush1.xpose.msra.mxu0 0.0
    %1784 = vmatprep.subr.mxu0 0.0
    %1785 = vmatpush1.xpose.msra.mxu0 0.0
    %1786 = vmatprep.subr.mxu0 0.0
    %1787 = vmatpush1.xpose.msra.mxu0 0.0
    %1788 = vmatprep.subr.mxu0 0.0
    %1789 = vmatpush1.xpose.msra.mxu0 0.0
    %1790 = vmatprep.subr.mxu0 0.0
    %1791 = vmatpush1.xpose.msra.mxu0 0.0
    %1792 = vmatprep.subr.mxu0 0.0
    %1793 = vmatpush1.xpose.msra.mxu0 0.0
    %1794 = vmatprep.subr.mxu0 0.0
    %1795 = vmatpush1.xpose.msra.mxu0 0.0
    %1796 = vmatprep.subr.mxu0 0.0
    %1797 = vmatpush1.xpose.msra.mxu0 0.0
    %1798 = vmatprep.subr.mxu0 0.0
    %1799 = vmatpush1.xpose.msra.mxu0 0.0
    %1800 = vmatprep.subr.mxu0 0.0
    %1801 = vmatpush1.xpose.msra.mxu0 0.0
    %1802 = vmatprep.subr.mxu0 0.0
    %1803 = vmatpush1.xpose.msra.mxu0 0.0
    %1804 = vmatprep.mubr.f32.mxu0 0.0
    %v1805 = vand.u32 %v1582, 4294901760
    %v1806 = vsub.f32 %v1582, %v1805
    %1807 = vmatmul.mubr.f32.gmra.mrb[0].mxu0 %v1806
    %v1808 = vpop.f32.mrb[0].mxu0
    %v1809 = vadd.f32 %v1735, %v1808
    %v1810 = vpop.f32.mrb[0].mxu0
    %1811 = vdwg.mxu0
    %1812 = vmatprep.subr.mxu0 0.0
    %v1813 = vand.u32 %v1584, 4294901760
    %1814 = vmatpush1.xpose.msra.mxu0 %v1813
    %1815 = vmatprep.subr.mxu0 0.0
    %1816 = vmatpush1.xpose.msra.mxu0 0.0
    %1817 = vmatprep.subr.mxu0 0.0
    %1818 = vmatpush1.xpose.msra.mxu0 0.0
    %1819 = vmatprep.subr.mxu0 0.0
    %1820 = vmatpush1.xpose.msra.mxu0 0.0
    %1821 = vmatprep.subr.mxu0 0.0
    %1822 = vmatpush1.xpose.msra.mxu0 0.0
    %1823 = vmatprep.subr.mxu0 0.0
    %1824 = vmatpush1.xpose.msra.mxu0 0.0
    %1825 = vmatprep.subr.mxu0 0.0
    %1826 = vmatpush1.xpose.msra.mxu0 0.0
    %1827 = vmatprep.subr.mxu0 0.0
    %1828 = vmatpush1.xpose.msra.mxu0 0.0
    %1829 = vmatprep.subr.mxu0 0.0
    %1830 = vmatpush1.xpose.msra.mxu0 0.0
    %1831 = vmatprep.subr.mxu0 0.0
    %1832 = vmatpush1.xpose.msra.mxu0 0.0
    %1833 = vmatprep.subr.mxu0 0.0
    %1834 = vmatpush1.xpose.msra.mxu0 0.0
    %1835 = vmatprep.subr.mxu0 0.0
    %1836 = vmatpush1.xpose.msra.mxu0 0.0
    %1837 = vmatprep.subr.mxu0 0.0
    %1838 = vmatpush1.xpose.msra.mxu0 0.0
    %1839 = vmatprep.subr.mxu0 0.0
    %1840 = vmatpush1.xpose.msra.mxu0 0.0
    %1841 = vmatprep.subr.mxu0 0.0
    %1842 = vmatpush1.xpose.msra.mxu0 0.0
    %1843 = vmatprep.subr.mxu0 0.0
    %1844 = vmatpush1.xpose.msra.mxu0 0.0
    %1845 = vmatprep.subr.mxu0 0.0
    %1846 = vmatpush1.xpose.msra.mxu0 0.0
    %1847 = vmatprep.subr.mxu0 0.0
    %1848 = vmatpush1.xpose.msra.mxu0 0.0
    %1849 = vmatprep.subr.mxu0 0.0
    %1850 = vmatpush1.xpose.msra.mxu0 0.0
    %1851 = vmatprep.subr.mxu0 0.0
    %1852 = vmatpush1.xpose.msra.mxu0 0.0
    %1853 = vmatprep.subr.mxu0 0.0
    %1854 = vmatpush1.xpose.msra.mxu0 0.0
    %1855 = vmatprep.subr.mxu0 0.0
    %1856 = vmatpush1.xpose.msra.mxu0 0.0
    %1857 = vmatprep.subr.mxu0 0.0
    %1858 = vmatpush1.xpose.msra.mxu0 0.0
    %1859 = vmatprep.subr.mxu0 0.0
    %1860 = vmatpush1.xpose.msra.mxu0 0.0
    %1861 = vmatprep.subr.mxu0 0.0
    %1862 = vmatpush1.xpose.msra.mxu0 0.0
    %1863 = vmatprep.subr.mxu0 0.0
    %1864 = vmatpush1.xpose.msra.mxu0 0.0
    %1865 = vmatprep.subr.mxu0 0.0
    %1866 = vmatpush1.xpose.msra.mxu0 0.0
    %1867 = vmatprep.subr.mxu0 0.0
    %1868 = vmatpush1.xpose.msra.mxu0 0.0
    %1869 = vmatprep.subr.mxu0 0.0
    %1870 = vmatpush1.xpose.msra.mxu0 0.0
    %1871 = vmatprep.subr.mxu0 0.0
    %1872 = vmatpush1.xpose.msra.mxu0 0.0
    %1873 = vmatprep.subr.mxu0 0.0
    %1874 = vmatpush1.xpose.msra.mxu0 0.0
    %1875 = vmatprep.subr.mxu0 0.0
    %1876 = vmatpush1.xpose.msra.mxu0 0.0
    %1877 = vmatprep.mubr.f32.mxu0 0.0
    %v1878 = vand.u32 %v1582, 4294901760
    %v1879 = vsub.f32 %v1582, %v1878
    %v1880 = vand.u32 %v1879, 4294901760
    %1881 = vmatmul.mubr.f32.gmra.mrb[0].mxu0 %v1880
    %v1882 = vpop.f32.mrb[0].mxu0
    %v1883 = vadd.f32 %v1809, %v1882
    %v1884 = vpop.f32.mrb[0].mxu0
    %1885 = vdwg.mxu0
    %1886 = vmatprep.subr.mxu0 0.0
    %v1887 = vand.u32 %v1584, 4294901760
    %v1888 = vsub.f32 %v1584, %v1887
    %v1889 = vand.u32 %v1888, 4294901760
    %1890 = vmatpush1.xpose.msra.mxu0 %v1889
    %1891 = vmatprep.subr.mxu0 0.0
    %1892 = vmatpush1.xpose.msra.mxu0 0.0
    %1893 = vmatprep.subr.mxu0 0.0
    %1894 = vmatpush1.xpose.msra.mxu0 0.0
    %1895 = vmatprep.subr.mxu0 0.0
    %1896 = vmatpush1.xpose.msra.mxu0 0.0
    %1897 = vmatprep.subr.mxu0 0.0
    %1898 = vmatpush1.xpose.msra.mxu0 0.0
    %1899 = vmatprep.subr.mxu0 0.0
    %1900 = vmatpush1.xpose.msra.mxu0 0.0
    %1901 = vmatprep.subr.mxu0 0.0
    %1902 = vmatpush1.xpose.msra.mxu0 0.0
    %1903 = vmatprep.subr.mxu0 0.0
    %1904 = vmatpush1.xpose.msra.mxu0 0.0
    %1905 = vmatprep.subr.mxu0 0.0
    %1906 = vmatpush1.xpose.msra.mxu0 0.0
    %1907 = vmatprep.subr.mxu0 0.0
    %1908 = vmatpush1.xpose.msra.mxu0 0.0
    %1909 = vmatprep.subr.mxu0 0.0
    %1910 = vmatpush1.xpose.msra.mxu0 0.0
    %1911 = vmatprep.subr.mxu0 0.0
    %1912 = vmatpush1.xpose.msra.mxu0 0.0
    %1913 = vmatprep.subr.mxu0 0.0
    %1914 = vmatpush1.xpose.msra.mxu0 0.0
    %1915 = vmatprep.subr.mxu0 0.0
    %1916 = vmatpush1.xpose.msra.mxu0 0.0
    %1917 = vmatprep.subr.mxu0 0.0
    %1918 = vmatpush1.xpose.msra.mxu0 0.0
    %1919 = vmatprep.subr.mxu0 0.0
    %1920 = vmatpush1.xpose.msra.mxu0 0.0
    %1921 = vmatprep.subr.mxu0 0.0
    %1922 = vmatpush1.xpose.msra.mxu0 0.0
    %1923 = vmatprep.subr.mxu0 0.0
    %1924 = vmatpush1.xpose.msra.mxu0 0.0
    %1925 = vmatprep.subr.mxu0 0.0
    %1926 = vmatpush1.xpose.msra.mxu0 0.0
    %1927 = vmatprep.subr.mxu0 0.0
    %1928 = vmatpush1.xpose.msra.mxu0 0.0
    %1929 = vmatprep.subr.mxu0 0.0
    %1930 = vmatpush1.xpose.msra.mxu0 0.0
    %1931 = vmatprep.subr.mxu0 0.0
    %1932 = vmatpush1.xpose.msra.mxu0 0.0
    %1933 = vmatprep.subr.mxu0 0.0
    %1934 = vmatpush1.xpose.msra.mxu0 0.0
    %1935 = vmatprep.subr.mxu0 0.0
    %1936 = vmatpush1.xpose.msra.mxu0 0.0
    %1937 = vmatprep.subr.mxu0 0.0
    %1938 = vmatpush1.xpose.msra.mxu0 0.0
    %1939 = vmatprep.subr.mxu0 0.0
    %1940 = vmatpush1.xpose.msra.mxu0 0.0
    %1941 = vmatprep.subr.mxu0 0.0
    %1942 = vmatpush1.xpose.msra.mxu0 0.0
    %1943 = vmatprep.subr.mxu0 0.0
    %1944 = vmatpush1.xpose.msra.mxu0 0.0
    %1945 = vmatprep.subr.mxu0 0.0
    %1946 = vmatpush1.xpose.msra.mxu0 0.0
    %1947 = vmatprep.subr.mxu0 0.0
    %1948 = vmatpush1.xpose.msra.mxu0 0.0
    %1949 = vmatprep.subr.mxu0 0.0
    %1950 = vmatpush1.xpose.msra.mxu0 0.0
    %1951 = vmatprep.subr.mxu0 0.0
    %1952 = vmatpush1.xpose.msra.mxu0 0.0
    %1953 = vmatprep.mubr.f32.mxu0 0.0
    %v1954 = vand.u32 %v1582, 4294901760
    %1955 = vmatmul.mubr.f32.gmra.mrb[0].mxu0 %v1954
    %v1956 = vpop.f32.mrb[0].mxu0
    %v1957 = vadd.f32 %v1883, %v1956
    %v1958 = vpop.f32.mrb[0].mxu0
    %1959 = vdwg.mxu0
    %1960 = vmatprep.subr.mxu0 0.0
    %v1961 = vand.u32 %v1584, 4294901760
    %1962 = vmatpush1.xpose.msra.mxu0 %v1961
    %1963 = vmatprep.subr.mxu0 0.0
    %1964 = vmatpush1.xpose.msra.mxu0 0.0
    %1965 = vmatprep.subr.mxu0 0.0
    %1966 = vmatpush1.xpose.msra.mxu0 0.0
    %1967 = vmatprep.subr.mxu0 0.0
    %1968 = vmatpush1.xpose.msra.mxu0 0.0
    %1969 = vmatprep.subr.mxu0 0.0
    %1970 = vmatpush1.xpose.msra.mxu0 0.0
    %1971 = vmatprep.subr.mxu0 0.0
    %1972 = vmatpush1.xpose.msra.mxu0 0.0
    %1973 = vmatprep.subr.mxu0 0.0
    %1974 = vmatpush1.xpose.msra.mxu0 0.0
    %1975 = vmatprep.subr.mxu0 0.0
    %1976 = vmatpush1.xpose.msra.mxu0 0.0
    %1977 = vmatprep.subr.mxu0 0.0
    %1978 = vmatpush1.xpose.msra.mxu0 0.0
    %1979 = vmatprep.subr.mxu0 0.0
    %1980 = vmatpush1.xpose.msra.mxu0 0.0
    %1981 = vmatprep.subr.mxu0 0.0
    %1982 = vmatpush1.xpose.msra.mxu0 0.0
    %1983 = vmatprep.subr.mxu0 0.0
    %1984 = vmatpush1.xpose.msra.mxu0 0.0
    %1985 = vmatprep.subr.mxu0 0.0
    %1986 = vmatpush1.xpose.msra.mxu0 0.0
    %1987 = vmatprep.subr.mxu0 0.0
    %1988 = vmatpush1.xpose.msra.mxu0 0.0
    %1989 = vmatprep.subr.mxu0 0.0
    %1990 = vmatpush1.xpose.msra.mxu0 0.0
    %1991 = vmatprep.subr.mxu0 0.0
    %1992 = vmatpush1.xpose.msra.mxu0 0.0
    %1993 = vmatprep.subr.mxu0 0.0
    %1994 = vmatpush1.xpose.msra.mxu0 0.0
    %1995 = vmatprep.subr.mxu0 0.0
    %1996 = vmatpush1.xpose.msra.mxu0 0.0
    %1997 = vmatprep.subr.mxu0 0.0
    %1998 = vmatpush1.xpose.msra.mxu0 0.0
    %1999 = vmatprep.subr.mxu0 0.0
    %2000 = vmatpush1.xpose.msra.mxu0 0.0
    %2001 = vmatprep.subr.mxu0 0.0
    %2002 = vmatpush1.xpose.msra.mxu0 0.0
    %2003 = vmatprep.subr.mxu0 0.0
    %2004 = vmatpush1.xpose.msra.mxu0 0.0
    %2005 = vmatprep.subr.mxu0 0.0
    %2006 = vmatpush1.xpose.msra.mxu0 0.0
    %2007 = vmatprep.subr.mxu0 0.0
    %2008 = vmatpush1.xpose.msra.mxu0 0.0
    %2009 = vmatprep.subr.mxu0 0.0
    %2010 = vmatpush1.xpose.msra.mxu0 0.0
    %2011 = vmatprep.subr.mxu0 0.0
    %2012 = vmatpush1.xpose.msra.mxu0 0.0
    %2013 = vmatprep.subr.mxu0 0.0
    %2014 = vmatpush1.xpose.msra.mxu0 0.0
    %2015 = vmatprep.subr.mxu0 0.0
    %2016 = vmatpush1.xpose.msra.mxu0 0.0
    %2017 = vmatprep.subr.mxu0 0.0
    %2018 = vmatpush1.xpose.msra.mxu0 0.0
    %2019 = vmatprep.subr.mxu0 0.0
    %2020 = vmatpush1.xpose.msra.mxu0 0.0
    %2021 = vmatprep.subr.mxu0 0.0
    %2022 = vmatpush1.xpose.msra.mxu0 0.0
    %2023 = vmatprep.subr.mxu0 0.0
    %2024 = vmatpush1.xpose.msra.mxu0 0.0
    %2025 = vmatprep.mubr.f32.mxu0 0.0
    %v2026 = vand.u32 %v1582, 4294901760
    %2027 = vmatmul.mubr.f32.gmra.mrb[0].mxu0 %v2026
    %v2028 = vpop.f32.mrb[0].mxu0
    %v2029 = vadd.f32 %v1957, %v2028
    %v2030 = vpop.f32.mrb[0].mxu0
    %2031 = vdwg.mxu0
    %v2032 = vmul.f32 %v2029, 0.35355338
    %v2033 = vadd.f32 %v2032, %v1108
    %v2034 = vsel %vm652, %v2033, -inf
    %2035 = vmax.xlane.f32.xlu0 %v2034
    %v2036 = vpop.xlane.xlu0 %2035
    %v2037 = vsub.f32 %v2033, %v2036
    %v2038 = vmul.f32 %v2037, 1.442695
    %v2039 = vpow.pop %v2038
    %v2040 = vsel %vm652, %v2039, 0.0
    %2041 = vadd.xlane.f32.xlu0 %v2040
    %v2042 = vpop.xlane.xlu0 %2041
    %2043 = vrot.lane.b32.xlu0 %v638, 56
    %v2044 = vpop.permute.xlu0 %2043
    %v2047 = vsel %vm652, %v2039, 0
    %2049 = vmatprep.subr.mxu0 0.0
    %v2050 = vand.u32 %v2044, 4294901760
    %2051 = vmatpush1.msra.mxu0 %v2050
    %2052 = vmatprep.subr.mxu0 0.0
    %2053 = vmatpush1.msra.mxu0 0.0
    %2054 = vmatprep.subr.mxu0 0.0
    %2055 = vmatpush1.msra.mxu0 0.0
    %2056 = vmatprep.subr.mxu0 0.0
    %2057 = vmatpush1.msra.mxu0 0.0
    %2058 = vmatprep.subr.mxu0 0.0
    %2059 = vmatpush1.msra.mxu0 0.0
    %2060 = vmatprep.subr.mxu0 0.0
    %2061 = vmatpush1.msra.mxu0 0.0
    %2062 = vmatprep.subr.mxu0 0.0
    %2063 = vmatpush1.msra.mxu0 0.0
    %2064 = vmatprep.subr.mxu0 0.0
    %2065 = vmatpush1.msra.mxu0 0.0
    %2066 = vmatprep.subr.mxu0 0.0
    %2067 = vmatpush1.msra.mxu0 0.0
    %2068 = vmatprep.subr.mxu0 0.0
    %2069 = vmatpush1.msra.mxu0 0.0
    %2070 = vmatprep.subr.mxu0 0.0
    %2071 = vmatpush1.msra.mxu0 0.0
    %2072 = vmatprep.subr.mxu0 0.0
    %2073 = vmatpush1.msra.mxu0 0.0
    %2074 = vmatprep.subr.mxu0 0.0
    %2075 = vmatpush1.msra.mxu0 0.0
    %2076 = vmatprep.subr.mxu0 0.0
    %2077 = vmatpush1.msra.mxu0 0.0
    %2078 = vmatprep.subr.mxu0 0.0
    %2079 = vmatpush1.msra.mxu0 0.0
    %2080 = vmatprep.subr.mxu0 0.0
    %2081 = vmatpush1.msra.mxu0 0.0
    %2082 = vmatprep.subr.mxu0 0.0
    %2083 = vmatpush1.msra.mxu0 0.0
    %2084 = vmatprep.subr.mxu0 0.0
    %2085 = vmatpush1.msra.mxu0 0.0
    %2086 = vmatprep.subr.mxu0 0.0
    %2087 = vmatpush1.msra.mxu0 0.0
    %2088 = vmatprep.subr.mxu0 0.0
    %2089 = vmatpush1.msra.mxu0 0.0
    %2090 = vmatprep.subr.mxu0 0.0
    %2091 = vmatpush1.msra.mxu0 0.0
    %2092 = vmatprep.subr.mxu0 0.0
    %2093 = vmatpush1.msra.mxu0 0.0
    %2094 = vmatprep.subr.mxu0 0.0
    %2095 = vmatpush1.msra.mxu0 0.0
    %2096 = vmatprep.subr.mxu0 0.0
    %2097 = vmatpush1.msra.mxu0 0.0
    %2098 = vmatprep.subr.mxu0 0.0
    %2099 = vmatpush1.msra.mxu0 0.0
    %2100 = vmatprep.subr.mxu0 0.0
    %2101 = vmatpush1.msra.mxu0 0.0
    %2102 = vmatprep.subr.mxu0 0.0
    %2103 = vmatpush1.msra.mxu0 0.0
    %2104 = vmatprep.subr.mxu0 0.0
    %2105 = vmatpush1.msra.mxu0 0.0
    %2106 = vmatprep.subr.mxu0 0.0
    %2107 = vmatpush1.msra.mxu0 0.0
    %2108 = vmatprep.subr.mxu0 0.0
    %2109 = vmatpush1.msra.mxu0 0.0
    %2110 = vmatprep.subr.mxu0 0.0
    %2111 = vmatpush1.msra.mxu0 0.0
    %2112 = vmatprep.subr.mxu0 0.0
    %2113 = vmatpush1.msra.mxu0 0.0
    %2114 = vmatprep.mubr.f32.mxu0 0.0
    %v2115 = vand.u32 %v2047, 4294901760
    %v2116 = vsub.f32 %v2047, %v2115
    %v2117 = vand.u32 %v2116, 4294901760
    %v2118 = vsub.f32 %v2116, %v2117
    %v2119 = vand.u32 %v2118, 4294901760
    %2120 = vmatmul.mubr.f32.gmra.mrb[0].mxu0 %v2119
    %v2121 = vpop.f32.mrb[0].mxu0
    %v2122 = vadd.f32 0.0, %v2121
    %v2123 = vpop.f32.mrb[0].mxu0
    %2124 = vdwg.mxu0
    %2125 = vmatprep.subr.mxu0 0.0
    %v2126 = vand.u32 %v2044, 4294901760
    %v2127 = vsub.f32 %v2044, %v2126
    %v2128 = vand.u32 %v2127, 4294901760
    %v2129 = vsub.f32 %v2127, %v2128
    %v2130 = vand.u32 %v2129, 4294901760
    %2131 = vmatpush1.msra.mxu0 %v2130
    %2132 = vmatprep.subr.mxu0 0.0
    %2133 = vmatpush1.msra.mxu0 0.0
    %2134 = vmatprep.subr.mxu0 0.0
    %2135 = vmatpush1.msra.mxu0 0.0
    %2136 = vmatprep.subr.mxu0 0.0
    %2137 = vmatpush1.msra.mxu0 0.0
    %2138 = vmatprep.subr.mxu0 0.0
    %2139 = vmatpush1.msra.mxu0 0.0
    %2140 = vmatprep.subr.mxu0 0.0
    %2141 = vmatpush1.msra.mxu0 0.0
    %2142 = vmatprep.subr.mxu0 0.0
    %2143 = vmatpush1.msra.mxu0 0.0
    %2144 = vmatprep.subr.mxu0 0.0
    %2145 = vmatpush1.msra.mxu0 0.0
    %2146 = vmatprep.subr.mxu0 0.0
    %2147 = vmatpush1.msra.mxu0 0.0
    %2148 = vmatprep.subr.mxu0 0.0
    %2149 = vmatpush1.msra.mxu0 0.0
    %2150 = vmatprep.subr.mxu0 0.0
    %2151 = vmatpush1.msra.mxu0 0.0
    %2152 = vmatprep.subr.mxu0 0.0
    %2153 = vmatpush1.msra.mxu0 0.0
    %2154 = vmatprep.subr.mxu0 0.0
    %2155 = vmatpush1.msra.mxu0 0.0
    %2156 = vmatprep.subr.mxu0 0.0
    %2157 = vmatpush1.msra.mxu0 0.0
    %2158 = vmatprep.subr.mxu0 0.0
    %2159 = vmatpush1.msra.mxu0 0.0
    %2160 = vmatprep.subr.mxu0 0.0
    %2161 = vmatpush1.msra.mxu0 0.0
    %2162 = vmatprep.subr.mxu0 0.0
    %2163 = vmatpush1.msra.mxu0 0.0
    %2164 = vmatprep.subr.mxu0 0.0
    %2165 = vmatpush1.msra.mxu0 0.0
    %2166 = vmatprep.subr.mxu0 0.0
    %2167 = vmatpush1.msra.mxu0 0.0
    %2168 = vmatprep.subr.mxu0 0.0
    %2169 = vmatpush1.msra.mxu0 0.0
    %2170 = vmatprep.subr.mxu0 0.0
    %2171 = vmatpush1.msra.mxu0 0.0
    %2172 = vmatprep.subr.mxu0 0.0
    %2173 = vmatpush1.msra.mxu0 0.0
    %2174 = vmatprep.subr.mxu0 0.0
    %2175 = vmatpush1.msra.mxu0 0.0
    %2176 = vmatprep.subr.mxu0 0.0
    %2177 = vmatpush1.msra.mxu0 0.0
    %2178 = vmatprep.subr.mxu0 0.0
    %2179 = vmatpush1.msra.mxu0 0.0
    %2180 = vmatprep.subr.mxu0 0.0
    %2181 = vmatpush1.msra.mxu0 0.0
    %2182 = vmatprep.subr.mxu0 0.0
    %2183 = vmatpush1.msra.mxu0 0.0
    %2184 = vmatprep.subr.mxu0 0.0
    %2185 = vmatpush1.msra.mxu0 0.0
    %2186 = vmatprep.subr.mxu0 0.0
    %2187 = vmatpush1.msra.mxu0 0.0
    %2188 = vmatprep.subr.mxu0 0.0
    %2189 = vmatpush1.msra.mxu0 0.0
    %2190 = vmatprep.subr.mxu0 0.0
    %2191 = vmatpush1.msra.mxu0 0.0
    %2192 = vmatprep.subr.mxu0 0.0
    %2193 = vmatpush1.msra.mxu0 0.0
    %2194 = vmatprep.mubr.f32.mxu0 0.0
    %v2195 = vand.u32 %v2047, 4294901760
    %2196 = vmatmul.mubr.f32.gmra.mrb[0].mxu0 %v2195
    %v2197 = vpop.f32.mrb[0].mxu0
    %v2198 = vadd.f32 %v2122, %v2197
    %v2199 = vpop.f32.mrb[0].mxu0
    %2200 = vdwg.mxu0
    %2201 = vmatprep.subr.mxu0 0.0
    %v2202 = vand.u32 %v2044, 4294901760
    %v2203 = vsub.f32 %v2044, %v2202
    %2204 = vmatpush1.msra.mxu0 %v2203
    %2205 = vmatprep.subr.mxu0 0.0
    %2206 = vmatpush1.msra.mxu0 0.0
    %2207 = vmatprep.subr.mxu0 0.0
    %2208 = vmatpush1.msra.mxu0 0.0
    %2209 = vmatprep.subr.mxu0 0.0
    %2210 = vmatpush1.msra.mxu0 0.0
    %2211 = vmatprep.subr.mxu0 0.0
    %2212 = vmatpush1.msra.mxu0 0.0
    %2213 = vmatprep.subr.mxu0 0.0
    %2214 = vmatpush1.msra.mxu0 0.0
    %2215 = vmatprep.subr.mxu0 0.0
    %2216 = vmatpush1.msra.mxu0 0.0
    %2217 = vmatprep.subr.mxu0 0.0
    %2218 = vmatpush1.msra.mxu0 0.0
    %2219 = vmatprep.subr.mxu0 0.0
    %2220 = vmatpush1.msra.mxu0 0.0
    %2221 = vmatprep.subr.mxu0 0.0
    %2222 = vmatpush1.msra.mxu0 0.0
    %2223 = vmatprep.subr.mxu0 0.0
    %2224 = vmatpush1.msra.mxu0 0.0
    %2225 = vmatprep.subr.mxu0 0.0
    %2226 = vmatpush1.msra.mxu0 0.0
    %2227 = vmatprep.subr.mxu0 0.0
    %2228 = vmatpush1.msra.mxu0 0.0
    %2229 = vmatprep.subr.mxu0 0.0
    %2230 = vmatpush1.msra.mxu0 0.0
    %2231 = vmatprep.subr.mxu0 0.0
    %2232 = vmatpush1.msra.mxu0 0.0
    %2233 = vmatprep.subr.mxu0 0.0
    %2234 = vmatpush1.msra.mxu0 0.0
    %2235 = vmatprep.subr.mxu0 0.0
    %2236 = vmatpush1.msra.mxu0 0.0
    %2237 = vmatprep.subr.mxu0 0.0
    %2238 = vmatpush1.msra.mxu0 0.0
    %2239 = vmatprep.subr.mxu0 0.0
    %2240 = vmatpush1.msra.mxu0 0.0
    %2241 = vmatprep.subr.mxu0 0.0
    %2242 = vmatpush1.msra.mxu0 0.0
    %2243 = vmatprep.subr.mxu0 0.0
    %2244 = vmatpush1.msra.mxu0 0.0
    %2245 = vmatprep.subr.mxu0 0.0
    %2246 = vmatpush1.msra.mxu0 0.0
    %2247 = vmatprep.subr.mxu0 0.0
    %2248 = vmatpush1.msra.mxu0 0.0
    %2249 = vmatprep.subr.mxu0 0.0
    %2250 = vmatpush1.msra.mxu0 0.0
    %2251 = vmatprep.subr.mxu0 0.0
    %2252 = vmatpush1.msra.mxu0 0.0
    %2253 = vmatprep.subr.mxu0 0.0
    %2254 = vmatpush1.msra.mxu0 0.0
    %2255 = vmatprep.subr.mxu0 0.0
    %2256 = vmatpush1.msra.mxu0 0.0
    %2257 = vmatprep.subr.mxu0 0.0
    %2258 = vmatpush1.msra.mxu0 0.0
    %2259 = vmatprep.subr.mxu0 0.0
    %2260 = vmatpush1.msra.mxu0 0.0
    %2261 = vmatprep.subr.mxu0 0.0
    %2262 = vmatpush1.msra.mxu0 0.0
    %2263 = vmatprep.subr.mxu0 0.0
    %2264 = vmatpush1.msra.mxu0 0.0
    %2265 = vmatprep.subr.mxu0 0.0
    %2266 = vmatpush1.msra.mxu0 0.0
    %2267 = vmatprep.mubr.f32.mxu0 0.0
    %v2268 = vand.u32 %v2047, 4294901760
    %v2269 = vsub.f32 %v2047, %v2268
    %2270 = vmatmul.mubr.f32.gmra.mrb[0].mxu0 %v2269
    %v2271 = vpop.f32.mrb[0].mxu0
    %v2272 = vadd.f32 %v2198, %v2271
    %v2273 = vpop.f32.mrb[0].mxu0
    %2274 = vdwg.mxu0
    %2275 = vmatprep.subr.mxu0 0.0
    %v2276 = vand.u32 %v2044, 4294901760
    %2277 = vmatpush1.msra.mxu0 %v2276
    %2278 = vmatprep.subr.mxu0 0.0
    %2279 = vmatpush1.msra.mxu0 0.0
    %2280 = vmatprep.subr.mxu0 0.0
    %2281 = vmatpush1.msra.mxu0 0.0
    %2282 = vmatprep.subr.mxu0 0.0
    %2283 = vmatpush1.msra.mxu0 0.0
    %2284 = vmatprep.subr.mxu0 0.0
    %2285 = vmatpush1.msra.mxu0 0.0
    %2286 = vmatprep.subr.mxu0 0.0
    %2287 = vmatpush1.msra.mxu0 0.0
    %2288 = vmatprep.subr.mxu0 0.0
    %2289 = vmatpush1.msra.mxu0 0.0
    %2290 = vmatprep.subr.mxu0 0.0
    %2291 = vmatpush1.msra.mxu0 0.0
    %2292 = vmatprep.subr.mxu0 0.0
    %2293 = vmatpush1.msra.mxu0 0.0
    %2294 = vmatprep.subr.mxu0 0.0
    %2295 = vmatpush1.msra.mxu0 0.0
    %2296 = vmatprep.subr.mxu0 0.0
    %2297 = vmatpush1.msra.mxu0 0.0
    %2298 = vmatprep.subr.mxu0 0.0
    %2299 = vmatpush1.msra.mxu0 0.0
    %2300 = vmatprep.subr.mxu0 0.0
    %2301 = vmatpush1.msra.mxu0 0.0
    %2302 = vmatprep.subr.mxu0 0.0
    %2303 = vmatpush1.msra.mxu0 0.0
    %2304 = vmatprep.subr.mxu0 0.0
    %2305 = vmatpush1.msra.mxu0 0.0
    %2306 = vmatprep.subr.mxu0 0.0
    %2307 = vmatpush1.msra.mxu0 0.0
    %2308 = vmatprep.subr.mxu0 0.0
    %2309 = vmatpush1.msra.mxu0 0.0
    %2310 = vmatprep.subr.mxu0 0.0
    %2311 = vmatpush1.msra.mxu0 0.0
    %2312 = vmatprep.subr.mxu0 0.0
    %2313 = vmatpush1.msra.mxu0 0.0
    %2314 = vmatprep.subr.mxu0 0.0
    %2315 = vmatpush1.msra.mxu0 0.0
    %2316 = vmatprep.subr.mxu0 0.0
    %2317 = vmatpush1.msra.mxu0 0.0
    %2318 = vmatprep.subr.mxu0 0.0
    %2319 = vmatpush1.msra.mxu0 0.0
    %2320 = vmatprep.subr.mxu0 0.0
    %2321 = vmatpush1.msra.mxu0 0.0
    %2322 = vmatprep.subr.mxu0 0.0
    %2323 = vmatpush1.msra.mxu0 0.0
    %2324 = vmatprep.subr.mxu0 0.0
    %2325 = vmatpush1.msra.mxu0 0.0
    %2326 = vmatprep.subr.mxu0 0.0
    %2327 = vmatpush1.msra.mxu0 0.0
    %2328 = vmatprep.subr.mxu0 0.0
    %2329 = vmatpush1.msra.mxu0 0.0
    %2330 = vmatprep.subr.mxu0 0.0
    %2331 = vmatpush1.msra.mxu0 0.0
    %2332 = vmatprep.subr.mxu0 0.0
    %2333 = vmatpush1.msra.mxu0 0.0
    %2334 = vmatprep.subr.mxu0 0.0
    %2335 = vmatpush1.msra.mxu0 0.0
    %2336 = vmatprep.subr.mxu0 0.0
    %2337 = vmatpush1.msra.mxu0 0.0
    %2338 = vmatprep.subr.mxu0 0.0
    %2339 = vmatpush1.msra.mxu0 0.0
    %2340 = vmatprep.mubr.f32.mxu0 0.0
    %v2341 = vand.u32 %v2047, 4294901760
    %v2342 = vsub.f32 %v2047, %v2341
    %v2343 = vand.u32 %v2342, 4294901760
    %2344 = vmatmul.mubr.f32.gmra.mrb[0].mxu0 %v2343
    %v2345 = vpop.f32.mrb[0].mxu0
    %v2346 = vadd.f32 %v2272, %v2345
    %v2347 = vpop.f32.mrb[0].mxu0
    %2348 = vdwg.mxu0
    %2349 = vmatprep.subr.mxu0 0.0
    %v2350 = vand.u32 %v2044, 4294901760
    %v2351 = vsub.f32 %v2044, %v2350
    %v2352 = vand.u32 %v2351, 4294901760
    %2353 = vmatpush1.msra.mxu0 %v2352
    %2354 = vmatprep.subr.mxu0 0.0
    %2355 = vmatpush1.msra.mxu0 0.0
    %2356 = vmatprep.subr.mxu0 0.0
    %2357 = vmatpush1.msra.mxu0 0.0
    %2358 = vmatprep.subr.mxu0 0.0
    %2359 = vmatpush1.msra.mxu0 0.0
    %2360 = vmatprep.subr.mxu0 0.0
    %2361 = vmatpush1.msra.mxu0 0.0
    %2362 = vmatprep.subr.mxu0 0.0
    %2363 = vmatpush1.msra.mxu0 0.0
    %2364 = vmatprep.subr.mxu0 0.0
    %2365 = vmatpush1.msra.mxu0 0.0
    %2366 = vmatprep.subr.mxu0 0.0
    %2367 = vmatpush1.msra.mxu0 0.0
    %2368 = vmatprep.subr.mxu0 0.0
    %2369 = vmatpush1.msra.mxu0 0.0
    %2370 = vmatprep.subr.mxu0 0.0
    %2371 = vmatpush1.msra.mxu0 0.0
    %2372 = vmatprep.subr.mxu0 0.0
    %2373 = vmatpush1.msra.mxu0 0.0
    %2374 = vmatprep.subr.mxu0 0.0
    %2375 = vmatpush1.msra.mxu0 0.0
    %2376 = vmatprep.subr.mxu0 0.0
    %2377 = vmatpush1.msra.mxu0 0.0
    %2378 = vmatprep.subr.mxu0 0.0
    %2379 = vmatpush1.msra.mxu0 0.0
    %2380 = vmatprep.subr.mxu0 0.0
    %2381 = vmatpush1.msra.mxu0 0.0
    %2382 = vmatprep.subr.mxu0 0.0
    %2383 = vmatpush1.msra.mxu0 0.0
    %2384 = vmatprep.subr.mxu0 0.0
    %2385 = vmatpush1.msra.mxu0 0.0
    %2386 = vmatprep.subr.mxu0 0.0
    %2387 = vmatpush1.msra.mxu0 0.0
    %2388 = vmatprep.subr.mxu0 0.0
    %2389 = vmatpush1.msra.mxu0 0.0
    %2390 = vmatprep.subr.mxu0 0.0
    %2391 = vmatpush1.msra.mxu0 0.0
    %2392 = vmatprep.subr.mxu0 0.0
    %2393 = vmatpush1.msra.mxu0 0.0
    %2394 = vmatprep.subr.mxu0 0.0
    %2395 = vmatpush1.msra.mxu0 0.0
    %2396 = vmatprep.subr.mxu0 0.0
    %2397 = vmatpush1.msra.mxu0 0.0
    %2398 = vmatprep.subr.mxu0 0.0
    %2399 = vmatpush1.msra.mxu0 0.0
    %2400 = vmatprep.subr.mxu0 0.0
    %2401 = vmatpush1.msra.mxu0 0.0
    %2402 = vmatprep.subr.mxu0 0.0
    %2403 = vmatpush1.msra.mxu0 0.0
    %2404 = vmatprep.subr.mxu0 0.0
    %2405 = vmatpush1.msra.mxu0 0.0
    %2406 = vmatprep.subr.mxu0 0.0
    %2407 = vmatpush1.msra.mxu0 0.0
    %2408 = vmatprep.subr.mxu0 0.0
    %2409 = vmatpush1.msra.mxu0 0.0
    %2410 = vmatprep.subr.mxu0 0.0
    %2411 = vmatpush1.msra.mxu0 0.0
    %2412 = vmatprep.subr.mxu0 0.0
    %2413 = vmatpush1.msra.mxu0 0.0
    %2414 = vmatprep.subr.mxu0 0.0
    %2415 = vmatpush1.msra.mxu0 0.0
    %2416 = vmatprep.mubr.f32.mxu0 0.0
    %v2417 = vand.u32 %v2047, 4294901760
    %2418 = vmatmul.mubr.f32.gmra.mrb[0].mxu0 %v2417
    %v2419 = vpop.f32.mrb[0].mxu0
    %v2420 = vadd.f32 %v2346, %v2419
    %v2421 = vpop.f32.mrb[0].mxu0
    %2422 = vdwg.mxu0
    %2423 = vmatprep.subr.mxu0 0.0
    %v2424 = vand.u32 %v2044, 4294901760
    %2425 = vmatpush1.msra.mxu0 %v2424
    %2426 = vmatprep.subr.mxu0 0.0
    %2427 = vmatpush1.msra.mxu0 0.0
    %2428 = vmatprep.subr.mxu0 0.0
    %2429 = vmatpush1.msra.mxu0 0.0
    %2430 = vmatprep.subr.mxu0 0.0
    %2431 = vmatpush1.msra.mxu0 0.0
    %2432 = vmatprep.subr.mxu0 0.0
    %2433 = vmatpush1.msra.mxu0 0.0
    %2434 = vmatprep.subr.mxu0 0.0
    %2435 = vmatpush1.msra.mxu0 0.0
    %2436 = vmatprep.subr.mxu0 0.0
    %2437 = vmatpush1.msra.mxu0 0.0
    %2438 = vmatprep.subr.mxu0 0.0
    %2439 = vmatpush1.msra.mxu0 0.0
    %2440 = vmatprep.subr.mxu0 0.0
    %2441 = vmatpush1.msra.mxu0 0.0
    %2442 = vmatprep.subr.mxu0 0.0
    %2443 = vmatpush1.msra.mxu0 0.0
    %2444 = vmatprep.subr.mxu0 0.0
    %2445 = vmatpush1.msra.mxu0 0.0
    %2446 = vmatprep.subr.mxu0 0.0
    %2447 = vmatpush1.msra.mxu0 0.0
    %2448 = vmatprep.subr.mxu0 0.0
    %2449 = vmatpush1.msra.mxu0 0.0
    %2450 = vmatprep.subr.mxu0 0.0
    %2451 = vmatpush1.msra.mxu0 0.0
    %2452 = vmatprep.subr.mxu0 0.0
    %2453 = vmatpush1.msra.mxu0 0.0
    %2454 = vmatprep.subr.mxu0 0.0
    %2455 = vmatpush1.msra.mxu0 0.0
    %2456 = vmatprep.subr.mxu0 0.0
    %2457 = vmatpush1.msra.mxu0 0.0
    %2458 = vmatprep.subr.mxu0 0.0
    %2459 = vmatpush1.msra.mxu0 0.0
    %2460 = vmatprep.subr.mxu0 0.0
    %2461 = vmatpush1.msra.mxu0 0.0
    %2462 = vmatprep.subr.mxu0 0.0
    %2463 = vmatpush1.msra.mxu0 0.0
    %2464 = vmatprep.subr.mxu0 0.0
    %2465 = vmatpush1.msra.mxu0 0.0
    %2466 = vmatprep.subr.mxu0 0.0
    %2467 = vmatpush1.msra.mxu0 0.0
    %2468 = vmatprep.subr.mxu0 0.0
    %2469 = vmatpush1.msra.mxu0 0.0
    %2470 = vmatprep.subr.mxu0 0.0
    %2471 = vmatpush1.msra.mxu0 0.0
    %2472 = vmatprep.subr.mxu0 0.0
    %2473 = vmatpush1.msra.mxu0 0.0
    %2474 = vmatprep.subr.mxu0 0.0
    %2475 = vmatpush1.msra.mxu0 0.0
    %2476 = vmatprep.subr.mxu0 0.0
    %2477 = vmatpush1.msra.mxu0 0.0
    %2478 = vmatprep.subr.mxu0 0.0
    %2479 = vmatpush1.msra.mxu0 0.0
    %2480 = vmatprep.subr.mxu0 0.0
    %2481 = vmatpush1.msra.mxu0 0.0
    %2482 = vmatprep.subr.mxu0 0.0
    %2483 = vmatpush1.msra.mxu0 0.0
    %2484 = vmatprep.subr.mxu0 0.0
    %2485 = vmatpush1.msra.mxu0 0.0
    %2486 = vmatprep.subr.mxu0 0.0
    %2487 = vmatpush1.msra.mxu0 0.0
    %2488 = vmatprep.mubr.f32.mxu0 0.0
    %v2489 = vand.u32 %v2047, 4294901760
    %2490 = vmatmul.mubr.f32.gmra.mrb[0].mxu0 %v2489
    %v2491 = vpop.f32.mrb[0].mxu0
    %v2492 = vadd.f32 %v2420, %v2491
    %v2493 = vpop.f32.mrb[0].mxu0
    %2494 = vdwg.mxu0
    %v2495 = vrcp.pop %v2042
    %v2496 = vmul.f32 %v2042, %v2495
    %v2497 = vsub.f32 2.0, %v2496
    %v2498 = vmul.f32 %v2495, %v2497
    %v2499 = vmul.f32 %v2492, %v2498
    %2501 = vrot.lane.b32.xlu0 %v2499, 8
    %v2502 = vpop.permute.xlu0 %2501
    %vm2504 = vcmask 130112
    %2505 = vst.msk [vmem:[#allocation2] sm:$0xff] %vm2504, %v2502
    %2506 = vrot.lane.b32.xlu0 %v638, 112
    %v2507 = vpop.permute.xlu0 %2506
    %2508 = vrot.lane.b32.xlu0 %v638, 80
    %v2509 = vpop.permute.xlu0 %2508
    %v2510 = vsel %vm652, %v2507, 0
    %v2512 = vsel %vm652, %v2509, 0
    %2514 = vmatprep.subr.mxu0 0.0
    %v2515 = vand.u32 %v2512, 4294901760
    %2516 = vmatpush1.xpose.msra.mxu0 %v2515
    %2517 = vmatprep.subr.mxu0 0.0
    %2518 = vmatpush1.xpose.msra.mxu0 0.0
    %2519 = vmatprep.subr.mxu0 0.0
    %2520 = vmatpush1.xpose.msra.mxu0 0.0
    %2521 = vmatprep.subr.mxu0 0.0
    %2522 = vmatpush1.xpose.msra.mxu0 0.0
    %2523 = vmatprep.subr.mxu0 0.0
    %2524 = vmatpush1.xpose.msra.mxu0 0.0
    %2525 = vmatprep.subr.mxu0 0.0
    %2526 = vmatpush1.xpose.msra.mxu0 0.0
    %2527 = vmatprep.subr.mxu0 0.0
    %2528 = vmatpush1.xpose.msra.mxu0 0.0
    %2529 = vmatprep.subr.mxu0 0.0
    %2530 = vmatpush1.xpose.msra.mxu0 0.0
    %2531 = vmatprep.subr.mxu0 0.0
    %2532 = vmatpush1.xpose.msra.mxu0 0.0
    %2533 = vmatprep.subr.mxu0 0.0
    %2534 = vmatpush1.xpose.msra.mxu0 0.0
    %2535 = vmatprep.subr.mxu0 0.0
    %2536 = vmatpush1.xpose.msra.mxu0 0.0
    %2537 = vmatprep.subr.mxu0 0.0
    %2538 = vmatpush1.xpose.msra.mxu0 0.0
    %2539 = vmatprep.subr.mxu0 0.0
    %2540 = vmatpush1.xpose.msra.mxu0 0.0
    %2541 = vmatprep.subr.mxu0 0.0
    %2542 = vmatpush1.xpose.msra.mxu0 0.0
    %2543 = vmatprep.subr.mxu0 0.0
    %2544 = vmatpush1.xpose.msra.mxu0 0.0
    %2545 = vmatprep.subr.mxu0 0.0
    %2546 = vmatpush1.xpose.msra.mxu0 0.0
    %2547 = vmatprep.subr.mxu0 0.0
    %2548 = vmatpush1.xpose.msra.mxu0 0.0
    %2549 = vmatprep.subr.mxu0 0.0
    %2550 = vmatpush1.xpose.msra.mxu0 0.0
    %2551 = vmatprep.subr.mxu0 0.0
    %2552 = vmatpush1.xpose.msra.mxu0 0.0
    %2553 = vmatprep.subr.mxu0 0.0
    %2554 = vmatpush1.xpose.msra.mxu0 0.0
    %2555 = vmatprep.subr.mxu0 0.0
    %2556 = vmatpush1.xpose.msra.mxu0 0.0
    %2557 = vmatprep.subr.mxu0 0.0
    %2558 = vmatpush1.xpose.msra.mxu0 0.0
    %2559 = vmatprep.subr.mxu0 0.0
    %2560 = vmatpush1.xpose.msra.mxu0 0.0
    %2561 = vmatprep.subr.mxu0 0.0
    %2562 = vmatpush1.xpose.msra.mxu0 0.0
    %2563 = vmatprep.subr.mxu0 0.0
    %2564 = vmatpush1.xpose.msra.mxu0 0.0
    %2565 = vmatprep.subr.mxu0 0.0
    %2566 = vmatpush1.xpose.msra.mxu0 0.0
    %2567 = vmatprep.subr.mxu0 0.0
    %2568 = vmatpush1.xpose.msra.mxu0 0.0
    %2569 = vmatprep.subr.mxu0 0.0
    %2570 = vmatpush1.xpose.msra.mxu0 0.0
    %2571 = vmatprep.subr.mxu0 0.0
    %2572 = vmatpush1.xpose.msra.mxu0 0.0
    %2573 = vmatprep.subr.mxu0 0.0
    %2574 = vmatpush1.xpose.msra.mxu0 0.0
    %2575 = vmatprep.subr.mxu0 0.0
    %2576 = vmatpush1.xpose.msra.mxu0 0.0
    %2577 = vmatprep.subr.mxu0 0.0
    %2578 = vmatpush1.xpose.msra.mxu0 0.0
    %2579 = vmatprep.mubr.f32.mxu0 0.0
    %v2580 = vand.u32 %v2510, 4294901760
    %v2581 = vsub.f32 %v2510, %v2580
    %v2582 = vand.u32 %v2581, 4294901760
    %v2583 = vsub.f32 %v2581, %v2582
    %v2584 = vand.u32 %v2583, 4294901760
    %2585 = vmatmul.mubr.f32.gmra.mrb[0].mxu0 %v2584
    %v2586 = vpop.f32.mrb[0].mxu0
    %v2587 = vadd.f32 0.0, %v2586
    %v2588 = vpop.f32.mrb[0].mxu0
    %2589 = vdwg.mxu0
    %2590 = vmatprep.subr.mxu0 0.0
    %v2591 = vand.u32 %v2512, 4294901760
    %v2592 = vsub.f32 %v2512, %v2591
    %v2593 = vand.u32 %v2592, 4294901760
    %v2594 = vsub.f32 %v2592, %v2593
    %v2595 = vand.u32 %v2594, 4294901760
    %2596 = vmatpush1.xpose.msra.mxu0 %v2595
    %2597 = vmatprep.subr.mxu0 0.0
    %2598 = vmatpush1.xpose.msra.mxu0 0.0
    %2599 = vmatprep.subr.mxu0 0.0
    %2600 = vmatpush1.xpose.msra.mxu0 0.0
    %2601 = vmatprep.subr.mxu0 0.0
    %2602 = vmatpush1.xpose.msra.mxu0 0.0
    %2603 = vmatprep.subr.mxu0 0.0
    %2604 = vmatpush1.xpose.msra.mxu0 0.0
    %2605 = vmatprep.subr.mxu0 0.0
    %2606 = vmatpush1.xpose.msra.mxu0 0.0
    %2607 = vmatprep.subr.mxu0 0.0
    %2608 = vmatpush1.xpose.msra.mxu0 0.0
    %2609 = vmatprep.subr.mxu0 0.0
    %2610 = vmatpush1.xpose.msra.mxu0 0.0
    %2611 = vmatprep.subr.mxu0 0.0
    %2612 = vmatpush1.xpose.msra.mxu0 0.0
    %2613 = vmatprep.subr.mxu0 0.0
    %2614 = vmatpush1.xpose.msra.mxu0 0.0
    %2615 = vmatprep.subr.mxu0 0.0
    %2616 = vmatpush1.xpose.msra.mxu0 0.0
    %2617 = vmatprep.subr.mxu0 0.0
    %2618 = vmatpush1.xpose.msra.mxu0 0.0
    %2619 = vmatprep.subr.mxu0 0.0
    %2620 = vmatpush1.xpose.msra.mxu0 0.0
    %2621 = vmatprep.subr.mxu0 0.0
    %2622 = vmatpush1.xpose.msra.mxu0 0.0
    %2623 = vmatprep.subr.mxu0 0.0
    %2624 = vmatpush1.xpose.msra.mxu0 0.0
    %2625 = vmatprep.subr.mxu0 0.0
    %2626 = vmatpush1.xpose.msra.mxu0 0.0
    %2627 = vmatprep.subr.mxu0 0.0
    %2628 = vmatpush1.xpose.msra.mxu0 0.0
    %2629 = vmatprep.subr.mxu0 0.0
    %2630 = vmatpush1.xpose.msra.mxu0 0.0
    %2631 = vmatprep.subr.mxu0 0.0
    %2632 = vmatpush1.xpose.msra.mxu0 0.0
    %2633 = vmatprep.subr.mxu0 0.0
    %2634 = vmatpush1.xpose.msra.mxu0 0.0
    %2635 = vmatprep.subr.mxu0 0.0
    %2636 = vmatpush1.xpose.msra.mxu0 0.0
    %2637 = vmatprep.subr.mxu0 0.0
    %2638 = vmatpush1.xpose.msra.mxu0 0.0
    %2639 = vmatprep.subr.mxu0 0.0
    %2640 = vmatpush1.xpose.msra.mxu0 0.0
    %2641 = vmatprep.subr.mxu0 0.0
    %2642 = vmatpush1.xpose.msra.mxu0 0.0
    %2643 = vmatprep.subr.mxu0 0.0
    %2644 = vmatpush1.xpose.msra.mxu0 0.0
    %2645 = vmatprep.subr.mxu0 0.0
    %2646 = vmatpush1.xpose.msra.mxu0 0.0
    %2647 = vmatprep.subr.mxu0 0.0
    %2648 = vmatpush1.xpose.msra.mxu0 0.0
    %2649 = vmatprep.subr.mxu0 0.0
    %2650 = vmatpush1.xpose.msra.mxu0 0.0
    %2651 = vmatprep.subr.mxu0 0.0
    %2652 = vmatpush1.xpose.msra.mxu0 0.0
    %2653 = vmatprep.subr.mxu0 0.0
    %2654 = vmatpush1.xpose.msra.mxu0 0.0
    %2655 = vmatprep.subr.mxu0 0.0
    %2656 = vmatpush1.xpose.msra.mxu0 0.0
    %2657 = vmatprep.subr.mxu0 0.0
    %2658 = vmatpush1.xpose.msra.mxu0 0.0
    %2659 = vmatprep.mubr.f32.mxu0 0.0
    %v2660 = vand.u32 %v2510, 4294901760
    %2661 = vmatmul.mubr.f32.gmra.mrb[0].mxu0 %v2660
    %v2662 = vpop.f32.mrb[0].mxu0
    %v2663 = vadd.f32 %v2587, %v2662
    %v2664 = vpop.f32.mrb[0].mxu0
    %2665 = vdwg.mxu0
    %2666 = vmatprep.subr.mxu0 0.0
    %v2667 = vand.u32 %v2512, 4294901760
    %v2668 = vsub.f32 %v2512, %v2667
    %2669 = vmatpush1.xpose.msra.mxu0 %v2668
    %2670 = vmatprep.subr.mxu0 0.0
    %2671 = vmatpush1.xpose.msra.mxu0 0.0
    %2672 = vmatprep.subr.mxu0 0.0
    %2673 = vmatpush1.xpose.msra.mxu0 0.0
    %2674 = vmatprep.subr.mxu0 0.0
    %2675 = vmatpush1.xpose.msra.mxu0 0.0
    %2676 = vmatprep.subr.mxu0 0.0
    %2677 = vmatpush1.xpose.msra.mxu0 0.0
    %2678 = vmatprep.subr.mxu0 0.0
    %2679 = vmatpush1.xpose.msra.mxu0 0.0
    %2680 = vmatprep.subr.mxu0 0.0
    %2681 = vmatpush1.xpose.msra.mxu0 0.0
    %2682 = vmatprep.subr.mxu0 0.0
    %2683 = vmatpush1.xpose.msra.mxu0 0.0
    %2684 = vmatprep.subr.mxu0 0.0
    %2685 = vmatpush1.xpose.msra.mxu0 0.0
    %2686 = vmatprep.subr.mxu0 0.0
    %2687 = vmatpush1.xpose.msra.mxu0 0.0
    %2688 = vmatprep.subr.mxu0 0.0
    %2689 = vmatpush1.xpose.msra.mxu0 0.0
    %2690 = vmatprep.subr.mxu0 0.0
    %2691 = vmatpush1.xpose.msra.mxu0 0.0
    %2692 = vmatprep.subr.mxu0 0.0
    %2693 = vmatpush1.xpose.msra.mxu0 0.0
    %2694 = vmatprep.subr.mxu0 0.0
    %2695 = vmatpush1.xpose.msra.mxu0 0.0
    %2696 = vmatprep.subr.mxu0 0.0
    %2697 = vmatpush1.xpose.msra.mxu0 0.0
    %2698 = vmatprep.subr.mxu0 0.0
    %2699 = vmatpush1.xpose.msra.mxu0 0.0
    %2700 = vmatprep.subr.mxu0 0.0
    %2701 = vmatpush1.xpose.msra.mxu0 0.0
    %2702 = vmatprep.subr.mxu0 0.0
    %2703 = vmatpush1.xpose.msra.mxu0 0.0
    %2704 = vmatprep.subr.mxu0 0.0
    %2705 = vmatpush1.xpose.msra.mxu0 0.0
    %2706 = vmatprep.subr.mxu0 0.0
    %2707 = vmatpush1.xpose.msra.mxu0 0.0
    %2708 = vmatprep.subr.mxu0 0.0
    %2709 = vmatpush1.xpose.msra.mxu0 0.0
    %2710 = vmatprep.subr.mxu0 0.0
    %2711 = vmatpush1.xpose.msra.mxu0 0.0
    %2712 = vmatprep.subr.mxu0 0.0
    %2713 = vmatpush1.xpose.msra.mxu0 0.0
    %2714 = vmatprep.subr.mxu0 0.0
    %2715 = vmatpush1.xpose.msra.mxu0 0.0
    %2716 = vmatprep.subr.mxu0 0.0
    %2717 = vmatpush1.xpose.msra.mxu0 0.0
    %2718 = vmatprep.subr.mxu0 0.0
    %2719 = vmatpush1.xpose.msra.mxu0 0.0
    %2720 = vmatprep.subr.mxu0 0.0
    %2721 = vmatpush1.xpose.msra.mxu0 0.0
    %2722 = vmatprep.subr.mxu0 0.0
    %2723 = vmatpush1.xpose.msra.mxu0 0.0
    %2724 = vmatprep.subr.mxu0 0.0
    %2725 = vmatpush1.xpose.msra.mxu0 0.0
    %2726 = vmatprep.subr.mxu0 0.0
    %2727 = vmatpush1.xpose.msra.mxu0 0.0
    %2728 = vmatprep.subr.mxu0 0.0
    %2729 = vmatpush1.xpose.msra.mxu0 0.0
    %2730 = vmatprep.subr.mxu0 0.0
    %2731 = vmatpush1.xpose.msra.mxu0 0.0
    %2732 = vmatprep.mubr.f32.mxu0 0.0
    %v2733 = vand.u32 %v2510, 4294901760
    %v2734 = vsub.f32 %v2510, %v2733
    %2735 = vmatmul.mubr.f32.gmra.mrb[0].mxu0 %v2734
    %v2736 = vpop.f32.mrb[0].mxu0
    %v2737 = vadd.f32 %v2663, %v2736
    %v2738 = vpop.f32.mrb[0].mxu0
    %2739 = vdwg.mxu0
    %2740 = vmatprep.subr.mxu0 0.0
    %v2741 = vand.u32 %v2512, 4294901760
    %2742 = vmatpush1.xpose.msra.mxu0 %v2741
    %2743 = vmatprep.subr.mxu0 0.0
    %2744 = vmatpush1.xpose.msra.mxu0 0.0
    %2745 = vmatprep.subr.mxu0 0.0
    %2746 = vmatpush1.xpose.msra.mxu0 0.0
    %2747 = vmatprep.subr.mxu0 0.0
    %2748 = vmatpush1.xpose.msra.mxu0 0.0
    %2749 = vmatprep.subr.mxu0 0.0
    %2750 = vmatpush1.xpose.msra.mxu0 0.0
    %2751 = vmatprep.subr.mxu0 0.0
    %2752 = vmatpush1.xpose.msra.mxu0 0.0
    %2753 = vmatprep.subr.mxu0 0.0
    %2754 = vmatpush1.xpose.msra.mxu0 0.0
    %2755 = vmatprep.subr.mxu0 0.0
    %2756 = vmatpush1.xpose.msra.mxu0 0.0
    %2757 = vmatprep.subr.mxu0 0.0
    %2758 = vmatpush1.xpose.msra.mxu0 0.0
    %2759 = vmatprep.subr.mxu0 0.0
    %2760 = vmatpush1.xpose.msra.mxu0 0.0
    %2761 = vmatprep.subr.mxu0 0.0
    %2762 = vmatpush1.xpose.msra.mxu0 0.0
    %2763 = vmatprep.subr.mxu0 0.0
    %2764 = vmatpush1.xpose.msra.mxu0 0.0
    %2765 = vmatprep.subr.mxu0 0.0
    %2766 = vmatpush1.xpose.msra.mxu0 0.0
    %2767 = vmatprep.subr.mxu0 0.0
    %2768 = vmatpush1.xpose.msra.mxu0 0.0
    %2769 = vmatprep.subr.mxu0 0.0
    %2770 = vmatpush1.xpose.msra.mxu0 0.0
    %2771 = vmatprep.subr.mxu0 0.0
    %2772 = vmatpush1.xpose.msra.mxu0 0.0
    %2773 = vmatprep.subr.mxu0 0.0
    %2774 = vmatpush1.xpose.msra.mxu0 0.0
    %2775 = vmatprep.subr.mxu0 0.0
    %2776 = vmatpush1.xpose.msra.mxu0 0.0
    %2777 = vmatprep.subr.mxu0 0.0
    %2778 = vmatpush1.xpose.msra.mxu0 0.0
    %2779 = vmatprep.subr.mxu0 0.0
    %2780 = vmatpush1.xpose.msra.mxu0 0.0
    %2781 = vmatprep.subr.mxu0 0.0
    %2782 = vmatpush1.xpose.msra.mxu0 0.0
    %2783 = vmatprep.subr.mxu0 0.0
    %2784 = vmatpush1.xpose.msra.mxu0 0.0
    %2785 = vmatprep.subr.mxu0 0.0
    %2786 = vmatpush1.xpose.msra.mxu0 0.0
    %2787 = vmatprep.subr.mxu0 0.0
    %2788 = vmatpush1.xpose.msra.mxu0 0.0
    %2789 = vmatprep.subr.mxu0 0.0
    %2790 = vmatpush1.xpose.msra.mxu0 0.0
    %2791 = vmatprep.subr.mxu0 0.0
    %2792 = vmatpush1.xpose.msra.mxu0 0.0
    %2793 = vmatprep.subr.mxu0 0.0
    %2794 = vmatpush1.xpose.msra.mxu0 0.0
    %2795 = vmatprep.subr.mxu0 0.0
    %2796 = vmatpush1.xpose.msra.mxu0 0.0
    %2797 = vmatprep.subr.mxu0 0.0
    %2798 = vmatpush1.xpose.msra.mxu0 0.0
    %2799 = vmatprep.subr.mxu0 0.0
    %2800 = vmatpush1.xpose.msra.mxu0 0.0
    %2801 = vmatprep.subr.mxu0 0.0
    %2802 = vmatpush1.xpose.msra.mxu0 0.0
    %2803 = vmatprep.subr.mxu0 0.0
    %2804 = vmatpush1.xpose.msra.mxu0 0.0
    %2805 = vmatprep.mubr.f32.mxu0 0.0
    %v2806 = vand.u32 %v2510, 4294901760
    %v2807 = vsub.f32 %v2510, %v2806
    %v2808 = vand.u32 %v2807, 4294901760
    %2809 = vmatmul.mubr.f32.gmra.mrb[0].mxu0 %v2808
    %v2810 = vpop.f32.mrb[0].mxu0
    %v2811 = vadd.f32 %v2737, %v2810
    %v2812 = vpop.f32.mrb[0].mxu0
    %2813 = vdwg.mxu0
    %2814 = vmatprep.subr.mxu0 0.0
    %v2815 = vand.u32 %v2512, 4294901760
    %v2816 = vsub.f32 %v2512, %v2815
    %v2817 = vand.u32 %v2816, 4294901760
    %2818 = vmatpush1.xpose.msra.mxu0 %v2817
    %2819 = vmatprep.subr.mxu0 0.0
    %2820 = vmatpush1.xpose.msra.mxu0 0.0
    %2821 = vmatprep.subr.mxu0 0.0
    %2822 = vmatpush1.xpose.msra.mxu0 0.0
    %2823 = vmatprep.subr.mxu0 0.0
    %2824 = vmatpush1.xpose.msra.mxu0 0.0
    %2825 = vmatprep.subr.mxu0 0.0
    %2826 = vmatpush1.xpose.msra.mxu0 0.0
    %2827 = vmatprep.subr.mxu0 0.0
    %2828 = vmatpush1.xpose.msra.mxu0 0.0
    %2829 = vmatprep.subr.mxu0 0.0
    %2830 = vmatpush1.xpose.msra.mxu0 0.0
    %2831 = vmatprep.subr.mxu0 0.0
    %2832 = vmatpush1.xpose.msra.mxu0 0.0
    %2833 = vmatprep.subr.mxu0 0.0
    %2834 = vmatpush1.xpose.msra.mxu0 0.0
    %2835 = vmatprep.subr.mxu0 0.0
    %2836 = vmatpush1.xpose.msra.mxu0 0.0
    %2837 = vmatprep.subr.mxu0 0.0
    %2838 = vmatpush1.xpose.msra.mxu0 0.0
    %2839 = vmatprep.subr.mxu0 0.0
    %2840 = vmatpush1.xpose.msra.mxu0 0.0
    %2841 = vmatprep.subr.mxu0 0.0
    %2842 = vmatpush1.xpose.msra.mxu0 0.0
    %2843 = vmatprep.subr.mxu0 0.0
    %2844 = vmatpush1.xpose.msra.mxu0 0.0
    %2845 = vmatprep.subr.mxu0 0.0
    %2846 = vmatpush1.xpose.msra.mxu0 0.0
    %2847 = vmatprep.subr.mxu0 0.0
    %2848 = vmatpush1.xpose.msra.mxu0 0.0
    %2849 = vmatprep.subr.mxu0 0.0
    %2850 = vmatpush1.xpose.msra.mxu0 0.0
    %2851 = vmatprep.subr.mxu0 0.0
    %2852 = vmatpush1.xpose.msra.mxu0 0.0
    %2853 = vmatprep.subr.mxu0 0.0
    %2854 = vmatpush1.xpose.msra.mxu0 0.0
    %2855 = vmatprep.subr.mxu0 0.0
    %2856 = vmatpush1.xpose.msra.mxu0 0.0
    %2857 = vmatprep.subr.mxu0 0.0
    %2858 = vmatpush1.xpose.msra.mxu0 0.0
    %2859 = vmatprep.subr.mxu0 0.0
    %2860 = vmatpush1.xpose.msra.mxu0 0.0
    %2861 = vmatprep.subr.mxu0 0.0
    %2862 = vmatpush1.xpose.msra.mxu0 0.0
    %2863 = vmatprep.subr.mxu0 0.0
    %2864 = vmatpush1.xpose.msra.mxu0 0.0
    %2865 = vmatprep.subr.mxu0 0.0
    %2866 = vmatpush1.xpose.msra.mxu0 0.0
    %2867 = vmatprep.subr.mxu0 0.0
    %2868 = vmatpush1.xpose.msra.mxu0 0.0
    %2869 = vmatprep.subr.mxu0 0.0
    %2870 = vmatpush1.xpose.msra.mxu0 0.0
    %2871 = vmatprep.subr.mxu0 0.0
    %2872 = vmatpush1.xpose.msra.mxu0 0.0
    %2873 = vmatprep.subr.mxu0 0.0
    %2874 = vmatpush1.xpose.msra.mxu0 0.0
    %2875 = vmatprep.subr.mxu0 0.0
    %2876 = vmatpush1.xpose.msra.mxu0 0.0
    %2877 = vmatprep.subr.mxu0 0.0
    %2878 = vmatpush1.xpose.msra.mxu0 0.0
    %2879 = vmatprep.subr.mxu0 0.0
    %2880 = vmatpush1.xpose.msra.mxu0 0.0
    %2881 = vmatprep.mubr.f32.mxu0 0.0
    %v2882 = vand.u32 %v2510, 4294901760
    %2883 = vmatmul.mubr.f32.gmra.mrb[0].mxu0 %v2882
    %v2884 = vpop.f32.mrb[0].mxu0
    %v2885 = vadd.f32 %v2811, %v2884
    %v2886 = vpop.f32.mrb[0].mxu0
    %2887 = vdwg.mxu0
    %2888 = vmatprep.subr.mxu0 0.0
    %v2889 = vand.u32 %v2512, 4294901760
    %2890 = vmatpush1.xpose.msra.mxu0 %v2889
    %2891 = vmatprep.subr.mxu0 0.0
    %2892 = vmatpush1.xpose.msra.mxu0 0.0
    %2893 = vmatprep.subr.mxu0 0.0
    %2894 = vmatpush1.xpose.msra.mxu0 0.0
    %2895 = vmatprep.subr.mxu0 0.0
    %2896 = vmatpush1.xpose.msra.mxu0 0.0
    %2897 = vmatprep.subr.mxu0 0.0
    %2898 = vmatpush1.xpose.msra.mxu0 0.0
    %2899 = vmatprep.subr.mxu0 0.0
    %2900 = vmatpush1.xpose.msra.mxu0 0.0
    %2901 = vmatprep.subr.mxu0 0.0
    %2902 = vmatpush1.xpose.msra.mxu0 0.0
    %2903 = vmatprep.subr.mxu0 0.0
    %2904 = vmatpush1.xpose.msra.mxu0 0.0
    %2905 = vmatprep.subr.mxu0 0.0
    %2906 = vmatpush1.xpose.msra.mxu0 0.0
    %2907 = vmatprep.subr.mxu0 0.0
    %2908 = vmatpush1.xpose.msra.mxu0 0.0
    %2909 = vmatprep.subr.mxu0 0.0
    %2910 = vmatpush1.xpose.msra.mxu0 0.0
    %2911 = vmatprep.subr.mxu0 0.0
    %2912 = vmatpush1.xpose.msra.mxu0 0.0
    %2913 = vmatprep.subr.mxu0 0.0
    %2914 = vmatpush1.xpose.msra.mxu0 0.0
    %2915 = vmatprep.subr.mxu0 0.0
    %2916 = vmatpush1.xpose.msra.mxu0 0.0
    %2917 = vmatprep.subr.mxu0 0.0
    %2918 = vmatpush1.xpose.msra.mxu0 0.0
    %2919 = vmatprep.subr.mxu0 0.0
    %2920 = vmatpush1.xpose.msra.mxu0 0.0
    %2921 = vmatprep.subr.mxu0 0.0
    %2922 = vmatpush1.xpose.msra.mxu0 0.0
    %2923 = vmatprep.subr.mxu0 0.0
    %2924 = vmatpush1.xpose.msra.mxu0 0.0
    %2925 = vmatprep.subr.mxu0 0.0
    %2926 = vmatpush1.xpose.msra.mxu0 0.0
    %2927 = vmatprep.subr.mxu0 0.0
    %2928 = vmatpush1.xpose.msra.mxu0 0.0
    %2929 = vmatprep.subr.mxu0 0.0
    %2930 = vmatpush1.xpose.msra.mxu0 0.0
    %2931 = vmatprep.subr.mxu0 0.0
    %2932 = vmatpush1.xpose.msra.mxu0 0.0
    %2933 = vmatprep.subr.mxu0 0.0
    %2934 = vmatpush1.xpose.msra.mxu0 0.0
    %2935 = vmatprep.subr.mxu0 0.0
    %2936 = vmatpush1.xpose.msra.mxu0 0.0
    %2937 = vmatprep.subr.mxu0 0.0
    %2938 = vmatpush1.xpose.msra.mxu0 0.0
    %2939 = vmatprep.subr.mxu0 0.0
    %2940 = vmatpush1.xpose.msra.mxu0 0.0
    %2941 = vmatprep.subr.mxu0 0.0
    %2942 = vmatpush1.xpose.msra.mxu0 0.0
    %2943 = vmatprep.subr.mxu0 0.0
    %2944 = vmatpush1.xpose.msra.mxu0 0.0
    %2945 = vmatprep.subr.mxu0 0.0
    %2946 = vmatpush1.xpose.msra.mxu0 0.0
    %2947 = vmatprep.subr.mxu0 0.0
    %2948 = vmatpush1.xpose.msra.mxu0 0.0
    %2949 = vmatprep.subr.mxu0 0.0
    %2950 = vmatpush1.xpose.msra.mxu0 0.0
    %2951 = vmatprep.subr.mxu0 0.0
    %2952 = vmatpush1.xpose.msra.mxu0 0.0
    %2953 = vmatprep.mubr.f32.mxu0 0.0
    %v2954 = vand.u32 %v2510, 4294901760
    %2955 = vmatmul.mubr.f32.gmra.mrb[0].mxu0 %v2954
    %v2956 = vpop.f32.mrb[0].mxu0
    %v2957 = vadd.f32 %v2885, %v2956
    %v2958 = vpop.f32.mrb[0].mxu0
    %2959 = vdwg.mxu0
    %v2960 = vmul.f32 %v2957, 0.35355338
    %v2961 = vadd.f32 %v2960, %v1108
    %v2962 = vsel %vm652, %v2961, -inf
    %2963 = vmax.xlane.f32.xlu0 %v2962
    %v2964 = vpop.xlane.xlu0 %2963
    %v2965 = vsub.f32 %v2961, %v2964
    %v2966 = vmul.f32 %v2965, 1.442695
    %v2967 = vpow.pop %v2966
    %v2968 = vsel %vm652, %v2967, 0.0
    %2969 = vadd.xlane.f32.xlu0 %v2968
    %v2970 = vpop.xlane.xlu0 %2969
    %2971 = vrot.lane.b32.xlu0 %v638, 48
    %v2972 = vpop.permute.xlu0 %2971
    %v2975 = vsel %vm652, %v2967, 0
    %2977 = vmatprep.subr.mxu0 0.0
    %v2978 = vand.u32 %v2972, 4294901760
    %2979 = vmatpush1.msra.mxu0 %v2978
    %2980 = vmatprep.subr.mxu0 0.0
    %2981 = vmatpush1.msra.mxu0 0.0
    %2982 = vmatprep.subr.mxu0 0.0
    %2983 = vmatpush1.msra.mxu0 0.0
    %2984 = vmatprep.subr.mxu0 0.0
    %2985 = vmatpush1.msra.mxu0 0.0
    %2986 = vmatprep.subr.mxu0 0.0
    %2987 = vmatpush1.msra.mxu0 0.0
    %2988 = vmatprep.subr.mxu0 0.0
    %2989 = vmatpush1.msra.mxu0 0.0
    %2990 = vmatprep.subr.mxu0 0.0
    %2991 = vmatpush1.msra.mxu0 0.0
    %2992 = vmatprep.subr.mxu0 0.0
    %2993 = vmatpush1.msra.mxu0 0.0
    %2994 = vmatprep.subr.mxu0 0.0
    %2995 = vmatpush1.msra.mxu0 0.0
    %2996 = vmatprep.subr.mxu0 0.0
    %2997 = vmatpush1.msra.mxu0 0.0
    %2998 = vmatprep.subr.mxu0 0.0
    %2999 = vmatpush1.msra.mxu0 0.0
    %3000 = vmatprep.subr.mxu0 0.0
    %3001 = vmatpush1.msra.mxu0 0.0
    %3002 = vmatprep.subr.mxu0 0.0
    %3003 = vmatpush1.msra.mxu0 0.0
    %3004 = vmatprep.subr.mxu0 0.0
    %3005 = vmatpush1.msra.mxu0 0.0
    %3006 = vmatprep.subr.mxu0 0.0
    %3007 = vmatpush1.msra.mxu0 0.0
    %3008 = vmatprep.subr.mxu0 0.0
    %3009 = vmatpush1.msra.mxu0 0.0
    %3010 = vmatprep.subr.mxu0 0.0
    %3011 = vmatpush1.msra.mxu0 0.0
    %3012 = vmatprep.subr.mxu0 0.0
    %3013 = vmatpush1.msra.mxu0 0.0
    %3014 = vmatprep.subr.mxu0 0.0
    %3015 = vmatpush1.msra.mxu0 0.0
    %3016 = vmatprep.subr.mxu0 0.0
    %3017 = vmatpush1.msra.mxu0 0.0
    %3018 = vmatprep.subr.mxu0 0.0
    %3019 = vmatpush1.msra.mxu0 0.0
    %3020 = vmatprep.subr.mxu0 0.0
    %3021 = vmatpush1.msra.mxu0 0.0
    %3022 = vmatprep.subr.mxu0 0.0
    %3023 = vmatpush1.msra.mxu0 0.0
    %3024 = vmatprep.subr.mxu0 0.0
    %3025 = vmatpush1.msra.mxu0 0.0
    %3026 = vmatprep.subr.mxu0 0.0
    %3027 = vmatpush1.msra.mxu0 0.0
    %3028 = vmatprep.subr.mxu0 0.0
    %3029 = vmatpush1.msra.mxu0 0.0
    %3030 = vmatprep.subr.mxu0 0.0
    %3031 = vmatpush1.msra.mxu0 0.0
    %3032 = vmatprep.subr.mxu0 0.0
    %3033 = vmatpush1.msra.mxu0 0.0
    %3034 = vmatprep.subr.mxu0 0.0
    %3035 = vmatpush1.msra.mxu0 0.0
    %3036 = vmatprep.subr.mxu0 0.0
    %3037 = vmatpush1.msra.mxu0 0.0
    %3038 = vmatprep.subr.mxu0 0.0
    %3039 = vmatpush1.msra.mxu0 0.0
    %3040 = vmatprep.subr.mxu0 0.0
    %3041 = vmatpush1.msra.mxu0 0.0
    %3042 = vmatprep.mubr.f32.mxu0 0.0
    %v3043 = vand.u32 %v2975, 4294901760
    %v3044 = vsub.f32 %v2975, %v3043
    %v3045 = vand.u32 %v3044, 4294901760
    %v3046 = vsub.f32 %v3044, %v3045
    %v3047 = vand.u32 %v3046, 4294901760
    %3048 = vmatmul.mubr.f32.gmra.mrb[0].mxu0 %v3047
    %v3049 = vpop.f32.mrb[0].mxu0
    %v3050 = vadd.f32 0.0, %v3049
    %v3051 = vpop.f32.mrb[0].mxu0
    %3052 = vdwg.mxu0
    %3053 = vmatprep.subr.mxu0 0.0
    %v3054 = vand.u32 %v2972, 4294901760
    %v3055 = vsub.f32 %v2972, %v3054
    %v3056 = vand.u32 %v3055, 4294901760
    %v3057 = vsub.f32 %v3055, %v3056
    %v3058 = vand.u32 %v3057, 4294901760
    %3059 = vmatpush1.msra.mxu0 %v3058
    %3060 = vmatprep.subr.mxu0 0.0
    %3061 = vmatpush1.msra.mxu0 0.0
    %3062 = vmatprep.subr.mxu0 0.0
    %3063 = vmatpush1.msra.mxu0 0.0
    %3064 = vmatprep.subr.mxu0 0.0
    %3065 = vmatpush1.msra.mxu0 0.0
    %3066 = vmatprep.subr.mxu0 0.0
    %3067 = vmatpush1.msra.mxu0 0.0
    %3068 = vmatprep.subr.mxu0 0.0
    %3069 = vmatpush1.msra.mxu0 0.0
    %3070 = vmatprep.subr.mxu0 0.0
    %3071 = vmatpush1.msra.mxu0 0.0
    %3072 = vmatprep.subr.mxu0 0.0
    %3073 = vmatpush1.msra.mxu0 0.0
    %3074 = vmatprep.subr.mxu0 0.0
    %3075 = vmatpush1.msra.mxu0 0.0
    %3076 = vmatprep.subr.mxu0 0.0
    %3077 = vmatpush1.msra.mxu0 0.0
    %3078 = vmatprep.subr.mxu0 0.0
    %3079 = vmatpush1.msra.mxu0 0.0
    %3080 = vmatprep.subr.mxu0 0.0
    %3081 = vmatpush1.msra.mxu0 0.0
    %3082 = vmatprep.subr.mxu0 0.0
    %3083 = vmatpush1.msra.mxu0 0.0
    %3084 = vmatprep.subr.mxu0 0.0
    %3085 = vmatpush1.msra.mxu0 0.0
    %3086 = vmatprep.subr.mxu0 0.0
    %3087 = vmatpush1.msra.mxu0 0.0
    %3088 = vmatprep.subr.mxu0 0.0
    %3089 = vmatpush1.msra.mxu0 0.0
    %3090 = vmatprep.subr.mxu0 0.0
    %3091 = vmatpush1.msra.mxu0 0.0
    %3092 = vmatprep.subr.mxu0 0.0
    %3093 = vmatpush1.msra.mxu0 0.0
    %3094 = vmatprep.subr.mxu0 0.0
    %3095 = vmatpush1.msra.mxu0 0.0
    %3096 = vmatprep.subr.mxu0 0.0
    %3097 = vmatpush1.msra.mxu0 0.0
    %3098 = vmatprep.subr.mxu0 0.0
    %3099 = vmatpush1.msra.mxu0 0.0
    %3100 = vmatprep.subr.mxu0 0.0
    %3101 = vmatpush1.msra.mxu0 0.0
    %3102 = vmatprep.subr.mxu0 0.0
    %3103 = vmatpush1.msra.mxu0 0.0
    %3104 = vmatprep.subr.mxu0 0.0
    %3105 = vmatpush1.msra.mxu0 0.0
    %3106 = vmatprep.subr.mxu0 0.0
    %3107 = vmatpush1.msra.mxu0 0.0
    %3108 = vmatprep.subr.mxu0 0.0
    %3109 = vmatpush1.msra.mxu0 0.0
    %3110 = vmatprep.subr.mxu0 0.0
    %3111 = vmatpush1.msra.mxu0 0.0
    %3112 = vmatprep.subr.mxu0 0.0
    %3113 = vmatpush1.msra.mxu0 0.0
    %3114 = vmatprep.subr.mxu0 0.0
    %3115 = vmatpush1.msra.mxu0 0.0
    %3116 = vmatprep.subr.mxu0 0.0
    %3117 = vmatpush1.msra.mxu0 0.0
    %3118 = vmatprep.subr.mxu0 0.0
    %3119 = vmatpush1.msra.mxu0 0.0
    %3120 = vmatprep.subr.mxu0 0.0
    %3121 = vmatpush1.msra.mxu0 0.0
    %3122 = vmatprep.mubr.f32.mxu0 0.0
    %v3123 = vand.u32 %v2975, 4294901760
    %3124 = vmatmul.mubr.f32.gmra.mrb[0].mxu0 %v3123
    %v3125 = vpop.f32.mrb[0].mxu0
    %v3126 = vadd.f32 %v3050, %v3125
    %v3127 = vpop.f32.mrb[0].mxu0
    %3128 = vdwg.mxu0
    %3129 = vmatprep.subr.mxu0 0.0
    %v3130 = vand.u32 %v2972, 4294901760
    %v3131 = vsub.f32 %v2972, %v3130
    %3132 = vmatpush1.msra.mxu0 %v3131
    %3133 = vmatprep.subr.mxu0 0.0
    %3134 = vmatpush1.msra.mxu0 0.0
    %3135 = vmatprep.subr.mxu0 0.0
    %3136 = vmatpush1.msra.mxu0 0.0
    %3137 = vmatprep.subr.mxu0 0.0
    %3138 = vmatpush1.msra.mxu0 0.0
    %3139 = vmatprep.subr.mxu0 0.0
    %3140 = vmatpush1.msra.mxu0 0.0
    %3141 = vmatprep.subr.mxu0 0.0
    %3142 = vmatpush1.msra.mxu0 0.0
    %3143 = vmatprep.subr.mxu0 0.0
    %3144 = vmatpush1.msra.mxu0 0.0
    %3145 = vmatprep.subr.mxu0 0.0
    %3146 = vmatpush1.msra.mxu0 0.0
    %3147 = vmatprep.subr.mxu0 0.0
    %3148 = vmatpush1.msra.mxu0 0.0
    %3149 = vmatprep.subr.mxu0 0.0
    %3150 = vmatpush1.msra.mxu0 0.0
    %3151 = vmatprep.subr.mxu0 0.0
    %3152 = vmatpush1.msra.mxu0 0.0
    %3153 = vmatprep.subr.mxu0 0.0
    %3154 = vmatpush1.msra.mxu0 0.0
    %3155 = vmatprep.subr.mxu0 0.0
    %3156 = vmatpush1.msra.mxu0 0.0
    %3157 = vmatprep.subr.mxu0 0.0
    %3158 = vmatpush1.msra.mxu0 0.0
    %3159 = vmatprep.subr.mxu0 0.0
    %3160 = vmatpush1.msra.mxu0 0.0
    %3161 = vmatprep.subr.mxu0 0.0
    %3162 = vmatpush1.msra.mxu0 0.0
    %3163 = vmatprep.subr.mxu0 0.0
    %3164 = vmatpush1.msra.mxu0 0.0
    %3165 = vmatprep.subr.mxu0 0.0
    %3166 = vmatpush1.msra.mxu0 0.0
    %3167 = vmatprep.subr.mxu0 0.0
    %3168 = vmatpush1.msra.mxu0 0.0
    %3169 = vmatprep.subr.mxu0 0.0
    %3170 = vmatpush1.msra.mxu0 0.0
    %3171 = vmatprep.subr.mxu0 0.0
    %3172 = vmatpush1.msra.mxu0 0.0
    %3173 = vmatprep.subr.mxu0 0.0
    %3174 = vmatpush1.msra.mxu0 0.0
    %3175 = vmatprep.subr.mxu0 0.0
    %3176 = vmatpush1.msra.mxu0 0.0
    %3177 = vmatprep.subr.mxu0 0.0
    %3178 = vmatpush1.msra.mxu0 0.0
    %3179 = vmatprep.subr.mxu0 0.0
    %3180 = vmatpush1.msra.mxu0 0.0
    %3181 = vmatprep.subr.mxu0 0.0
    %3182 = vmatpush1.msra.mxu0 0.0
    %3183 = vmatprep.subr.mxu0 0.0
    %3184 = vmatpush1.msra.mxu0 0.0
    %3185 = vmatprep.subr.mxu0 0.0
    %3186 = vmatpush1.msra.mxu0 0.0
    %3187 = vmatprep.subr.mxu0 0.0
    %3188 = vmatpush1.msra.mxu0 0.0
    %3189 = vmatprep.subr.mxu0 0.0
    %3190 = vmatpush1.msra.mxu0 0.0
    %3191 = vmatprep.subr.mxu0 0.0
    %3192 = vmatpush1.msra.mxu0 0.0
    %3193 = vmatprep.subr.mxu0 0.0
    %3194 = vmatpush1.msra.mxu0 0.0
    %3195 = vmatprep.mubr.f32.mxu0 0.0
    %v3196 = vand.u32 %v2975, 4294901760
    %v3197 = vsub.f32 %v2975, %v3196
    %3198 = vmatmul.mubr.f32.gmra.mrb[0].mxu0 %v3197
    %v3199 = vpop.f32.mrb[0].mxu0
    %v3200 = vadd.f32 %v3126, %v3199
    %v3201 = vpop.f32.mrb[0].mxu0
    %3202 = vdwg.mxu0
    %3203 = vmatprep.subr.mxu0 0.0
    %v3204 = vand.u32 %v2972, 4294901760
    %3205 = vmatpush1.msra.mxu0 %v3204
    %3206 = vmatprep.subr.mxu0 0.0
    %3207 = vmatpush1.msra.mxu0 0.0
    %3208 = vmatprep.subr.mxu0 0.0
    %3209 = vmatpush1.msra.mxu0 0.0
    %3210 = vmatprep.subr.mxu0 0.0
    %3211 = vmatpush1.msra.mxu0 0.0
    %3212 = vmatprep.subr.mxu0 0.0
    %3213 = vmatpush1.msra.mxu0 0.0
    %3214 = vmatprep.subr.mxu0 0.0
    %3215 = vmatpush1.msra.mxu0 0.0
    %3216 = vmatprep.subr.mxu0 0.0
    %3217 = vmatpush1.msra.mxu0 0.0
    %3218 = vmatprep.subr.mxu0 0.0
    %3219 = vmatpush1.msra.mxu0 0.0
    %3220 = vmatprep.subr.mxu0 0.0
    %3221 = vmatpush1.msra.mxu0 0.0
    %3222 = vmatprep.subr.mxu0 0.0
    %3223 = vmatpush1.msra.mxu0 0.0
    %3224 = vmatprep.subr.mxu0 0.0
    %3225 = vmatpush1.msra.mxu0 0.0
    %3226 = vmatprep.subr.mxu0 0.0
    %3227 = vmatpush1.msra.mxu0 0.0
    %3228 = vmatprep.subr.mxu0 0.0
    %3229 = vmatpush1.msra.mxu0 0.0
    %3230 = vmatprep.subr.mxu0 0.0
    %3231 = vmatpush1.msra.mxu0 0.0
    %3232 = vmatprep.subr.mxu0 0.0
    %3233 = vmatpush1.msra.mxu0 0.0
    %3234 = vmatprep.subr.mxu0 0.0
    %3235 = vmatpush1.msra.mxu0 0.0
    %3236 = vmatprep.subr.mxu0 0.0
    %3237 = vmatpush1.msra.mxu0 0.0
    %3238 = vmatprep.subr.mxu0 0.0
    %3239 = vmatpush1.msra.mxu0 0.0
    %3240 = vmatprep.subr.mxu0 0.0
    %3241 = vmatpush1.msra.mxu0 0.0
    %3242 = vmatprep.subr.mxu0 0.0
    %3243 = vmatpush1.msra.mxu0 0.0
    %3244 = vmatprep.subr.mxu0 0.0
    %3245 = vmatpush1.msra.mxu0 0.0
    %3246 = vmatprep.subr.mxu0 0.0
    %3247 = vmatpush1.msra.mxu0 0.0
    %3248 = vmatprep.subr.mxu0 0.0
    %3249 = vmatpush1.msra.mxu0 0.0
    %3250 = vmatprep.subr.mxu0 0.0
    %3251 = vmatpush1.msra.mxu0 0.0
    %3252 = vmatprep.subr.mxu0 0.0
    %3253 = vmatpush1.msra.mxu0 0.0
    %3254 = vmatprep.subr.mxu0 0.0
    %3255 = vmatpush1.msra.mxu0 0.0
    %3256 = vmatprep.subr.mxu0 0.0
    %3257 = vmatpush1.msra.mxu0 0.0
    %3258 = vmatprep.subr.mxu0 0.0
    %3259 = vmatpush1.msra.mxu0 0.0
    %3260 = vmatprep.subr.mxu0 0.0
    %3261 = vmatpush1.msra.mxu0 0.0
    %3262 = vmatprep.subr.mxu0 0.0
    %3263 = vmatpush1.msra.mxu0 0.0
    %3264 = vmatprep.subr.mxu0 0.0
    %3265 = vmatpush1.msra.mxu0 0.0
    %3266 = vmatprep.subr.mxu0 0.0
    %3267 = vmatpush1.msra.mxu0 0.0
    %3268 = vmatprep.mubr.f32.mxu0 0.0
    %v3269 = vand.u32 %v2975, 4294901760
    %v3270 = vsub.f32 %v2975, %v3269
    %v3271 = vand.u32 %v3270, 4294901760
    %3272 = vmatmul.mubr.f32.gmra.mrb[0].mxu0 %v3271
    %v3273 = vpop.f32.mrb[0].mxu0
    %v3274 = vadd.f32 %v3200, %v3273
    %v3275 = vpop.f32.mrb[0].mxu0
    %3276 = vdwg.mxu0
    %3277 = vmatprep.subr.mxu0 0.0
    %v3278 = vand.u32 %v2972, 4294901760
    %v3279 = vsub.f32 %v2972, %v3278
    %v3280 = vand.u32 %v3279, 4294901760
    %3281 = vmatpush1.msra.mxu0 %v3280
    %3282 = vmatprep.subr.mxu0 0.0
    %3283 = vmatpush1.msra.mxu0 0.0
    %3284 = vmatprep.subr.mxu0 0.0
    %3285 = vmatpush1.msra.mxu0 0.0
    %3286 = vmatprep.subr.mxu0 0.0
    %3287 = vmatpush1.msra.mxu0 0.0
    %3288 = vmatprep.subr.mxu0 0.0
    %3289 = vmatpush1.msra.mxu0 0.0
    %3290 = vmatprep.subr.mxu0 0.0
    %3291 = vmatpush1.msra.mxu0 0.0
    %3292 = vmatprep.subr.mxu0 0.0
    %3293 = vmatpush1.msra.mxu0 0.0
    %3294 = vmatprep.subr.mxu0 0.0
    %3295 = vmatpush1.msra.mxu0 0.0
    %3296 = vmatprep.subr.mxu0 0.0
    %3297 = vmatpush1.msra.mxu0 0.0
    %3298 = vmatprep.subr.mxu0 0.0
    %3299 = vmatpush1.msra.mxu0 0.0
    %3300 = vmatprep.subr.mxu0 0.0
    %3301 = vmatpush1.msra.mxu0 0.0
    %3302 = vmatprep.subr.mxu0 0.0
    %3303 = vmatpush1.msra.mxu0 0.0
    %3304 = vmatprep.subr.mxu0 0.0
    %3305 = vmatpush1.msra.mxu0 0.0
    %3306 = vmatprep.subr.mxu0 0.0
    %3307 = vmatpush1.msra.mxu0 0.0
    %3308 = vmatprep.subr.mxu0 0.0
    %3309 = vmatpush1.msra.mxu0 0.0
    %3310 = vmatprep.subr.mxu0 0.0
    %3311 = vmatpush1.msra.mxu0 0.0
    %3312 = vmatprep.subr.mxu0 0.0
    %3313 = vmatpush1.msra.mxu0 0.0
    %3314 = vmatprep.subr.mxu0 0.0
    %3315 = vmatpush1.msra.mxu0 0.0
    %3316 = vmatprep.subr.mxu0 0.0
    %3317 = vmatpush1.msra.mxu0 0.0
    %3318 = vmatprep.subr.mxu0 0.0
    %3319 = vmatpush1.msra.mxu0 0.0
    %3320 = vmatprep.subr.mxu0 0.0
    %3321 = vmatpush1.msra.mxu0 0.0
    %3322 = vmatprep.subr.mxu0 0.0
    %3323 = vmatpush1.msra.mxu0 0.0
    %3324 = vmatprep.subr.mxu0 0.0
    %3325 = vmatpush1.msra.mxu0 0.0
    %3326 = vmatprep.subr.mxu0 0.0
    %3327 = vmatpush1.msra.mxu0 0.0
    %3328 = vmatprep.subr.mxu0 0.0
    %3329 = vmatpush1.msra.mxu0 0.0
    %3330 = vmatprep.subr.mxu0 0.0
    %3331 = vmatpush1.msra.mxu0 0.0
    %3332 = vmatprep.subr.mxu0 0.0
    %3333 = vmatpush1.msra.mxu0 0.0
    %3334 = vmatprep.subr.mxu0 0.0
    %3335 = vmatpush1.msra.mxu0 0.0
    %3336 = vmatprep.subr.mxu0 0.0
    %3337 = vmatpush1.msra.mxu0 0.0
    %3338 = vmatprep.subr.mxu0 0.0
    %3339 = vmatpush1.msra.mxu0 0.0
    %3340 = vmatprep.subr.mxu0 0.0
    %3341 = vmatpush1.msra.mxu0 0.0
    %3342 = vmatprep.subr.mxu0 0.0
    %3343 = vmatpush1.msra.mxu0 0.0
    %3344 = vmatprep.mubr.f32.mxu0 0.0
    %v3345 = vand.u32 %v2975, 4294901760
    %3346 = vmatmul.mubr.f32.gmra.mrb[0].mxu0 %v3345
    %v3347 = vpop.f32.mrb[0].mxu0
    %v3348 = vadd.f32 %v3274, %v3347
    %v3349 = vpop.f32.mrb[0].mxu0
    %3350 = vdwg.mxu0
    %3351 = vmatprep.subr.mxu0 0.0
    %v3352 = vand.u32 %v2972, 4294901760
    %3353 = vmatpush1.msra.mxu0 %v3352
    %3354 = vmatprep.subr.mxu0 0.0
    %3355 = vmatpush1.msra.mxu0 0.0
    %3356 = vmatprep.subr.mxu0 0.0
    %3357 = vmatpush1.msra.mxu0 0.0
    %3358 = vmatprep.subr.mxu0 0.0
    %3359 = vmatpush1.msra.mxu0 0.0
    %3360 = vmatprep.subr.mxu0 0.0
    %3361 = vmatpush1.msra.mxu0 0.0
    %3362 = vmatprep.subr.mxu0 0.0
    %3363 = vmatpush1.msra.mxu0 0.0
    %3364 = vmatprep.subr.mxu0 0.0
    %3365 = vmatpush1.msra.mxu0 0.0
    %3366 = vmatprep.subr.mxu0 0.0
    %3367 = vmatpush1.msra.mxu0 0.0
    %3368 = vmatprep.subr.mxu0 0.0
    %3369 = vmatpush1.msra.mxu0 0.0
    %3370 = vmatprep.subr.mxu0 0.0
    %3371 = vmatpush1.msra.mxu0 0.0
    %3372 = vmatprep.subr.mxu0 0.0
    %3373 = vmatpush1.msra.mxu0 0.0
    %3374 = vmatprep.subr.mxu0 0.0
    %3375 = vmatpush1.msra.mxu0 0.0
    %3376 = vmatprep.subr.mxu0 0.0
    %3377 = vmatpush1.msra.mxu0 0.0
    %3378 = vmatprep.subr.mxu0 0.0
    %3379 = vmatpush1.msra.mxu0 0.0
    %3380 = vmatprep.subr.mxu0 0.0
    %3381 = vmatpush1.msra.mxu0 0.0
    %3382 = vmatprep.subr.mxu0 0.0
    %3383 = vmatpush1.msra.mxu0 0.0
    %3384 = vmatprep.subr.mxu0 0.0
    %3385 = vmatpush1.msra.mxu0 0.0
    %3386 = vmatprep.subr.mxu0 0.0
    %3387 = vmatpush1.msra.mxu0 0.0
    %3388 = vmatprep.subr.mxu0 0.0
    %3389 = vmatpush1.msra.mxu0 0.0
    %3390 = vmatprep.subr.mxu0 0.0
    %3391 = vmatpush1.msra.mxu0 0.0
    %3392 = vmatprep.subr.mxu0 0.0
    %3393 = vmatpush1.msra.mxu0 0.0
    %3394 = vmatprep.subr.mxu0 0.0
    %3395 = vmatpush1.msra.mxu0 0.0
    %3396 = vmatprep.subr.mxu0 0.0
    %3397 = vmatpush1.msra.mxu0 0.0
    %3398 = vmatprep.subr.mxu0 0.0
    %3399 = vmatpush1.msra.mxu0 0.0
    %3400 = vmatprep.subr.mxu0 0.0
    %3401 = vmatpush1.msra.mxu0 0.0
    %3402 = vmatprep.subr.mxu0 0.0
    %3403 = vmatpush1.msra.mxu0 0.0
    %3404 = vmatprep.subr.mxu0 0.0
    %3405 = vmatpush1.msra.mxu0 0.0
    %3406 = vmatprep.subr.mxu0 0.0
    %3407 = vmatpush1.msra.mxu0 0.0
    %3408 = vmatprep.subr.mxu0 0.0
    %3409 = vmatpush1.msra.mxu0 0.0
    %3410 = vmatprep.subr.mxu0 0.0
    %3411 = vmatpush1.msra.mxu0 0.0
    %3412 = vmatprep.subr.mxu0 0.0
    %3413 = vmatpush1.msra.mxu0 0.0
    %3414 = vmatprep.subr.mxu0 0.0
    %3415 = vmatpush1.msra.mxu0 0.0
    %3416 = vmatprep.mubr.f32.mxu0 0.0
    %v3417 = vand.u32 %v2975, 4294901760
    %3418 = vmatmul.mubr.f32.gmra.mrb[0].mxu0 %v3417
    %v3419 = vpop.f32.mrb[0].mxu0
    %v3420 = vadd.f32 %v3348, %v3419
    %v3421 = vpop.f32.mrb[0].mxu0
    %3422 = vdwg.mxu0
    %v3423 = vrcp.pop %v2970
    %v3424 = vmul.f32 %v2970, %v3423
    %v3425 = vsub.f32 2.0, %v3424
    %v3426 = vmul.f32 %v3423, %v3425
    %v3427 = vmul.f32 %v3420, %v3426
    %3429 = vrot.lane.b32.xlu0 %v3427, 16
    %v3430 = vpop.permute.xlu0 %3429
    %vm3432 = vcmask 195712
    %3433 = vst.msk [vmem:[#allocation2] sm:$0xff] %vm3432, %v3430
    %3434 = vrot.lane.b32.xlu0 %v638, 104
    %v3435 = vpop.permute.xlu0 %3434
    %3436 = vrot.lane.b32.xlu0 %v638, 72
    %v3437 = vpop.permute.xlu0 %3436
    %v3438 = vsel %vm652, %v3435, 0
    %v3440 = vsel %vm652, %v3437, 0
    %3442 = vmatprep.subr.mxu0 0.0
    %v3443 = vand.u32 %v3440, 4294901760
    %3444 = vmatpush1.xpose.msra.mxu0 %v3443
    %3445 = vmatprep.subr.mxu0 0.0
    %3446 = vmatpush1.xpose.msra.mxu0 0.0
    %3447 = vmatprep.subr.mxu0 0.0
    %3448 = vmatpush1.xpose.msra.mxu0 0.0
    %3449 = vmatprep.subr.mxu0 0.0
    %3450 = vmatpush1.xpose.msra.mxu0 0.0
    %3451 = vmatprep.subr.mxu0 0.0
    %3452 = vmatpush1.xpose.msra.mxu0 0.0
    %3453 = vmatprep.subr.mxu0 0.0
    %3454 = vmatpush1.xpose.msra.mxu0 0.0
    %3455 = vmatprep.subr.mxu0 0.0
    %3456 = vmatpush1.xpose.msra.mxu0 0.0
    %3457 = vmatprep.subr.mxu0 0.0
    %3458 = vmatpush1.xpose.msra.mxu0 0.0
    %3459 = vmatprep.subr.mxu0 0.0
    %3460 = vmatpush1.xpose.msra.mxu0 0.0
    %3461 = vmatprep.subr.mxu0 0.0
    %3462 = vmatpush1.xpose.msra.mxu0 0.0
    %3463 = vmatprep.subr.mxu0 0.0
    %3464 = vmatpush1.xpose.msra.mxu0 0.0
    %3465 = vmatprep.subr.mxu0 0.0
    %3466 = vmatpush1.xpose.msra.mxu0 0.0
    %3467 = vmatprep.subr.mxu0 0.0
    %3468 = vmatpush1.xpose.msra.mxu0 0.0
    %3469 = vmatprep.subr.mxu0 0.0
    %3470 = vmatpush1.xpose.msra.mxu0 0.0
    %3471 = vmatprep.subr.mxu0 0.0
    %3472 = vmatpush1.xpose.msra.mxu0 0.0
    %3473 = vmatprep.subr.mxu0 0.0
    %3474 = vmatpush1.xpose.msra.mxu0 0.0
    %3475 = vmatprep.subr.mxu0 0.0
    %3476 = vmatpush1.xpose.msra.mxu0 0.0
    %3477 = vmatprep.subr.mxu0 0.0
    %3478 = vmatpush1.xpose.msra.mxu0 0.0
    %3479 = vmatprep.subr.mxu0 0.0
    %3480 = vmatpush1.xpose.msra.mxu0 0.0
    %3481 = vmatprep.subr.mxu0 0.0
    %3482 = vmatpush1.xpose.msra.mxu0 0.0
    %3483 = vmatprep.subr.mxu0 0.0
    %3484 = vmatpush1.xpose.msra.mxu0 0.0
    %3485 = vmatprep.subr.mxu0 0.0
    %3486 = vmatpush1.xpose.msra.mxu0 0.0
    %3487 = vmatprep.subr.mxu0 0.0
    %3488 = vmatpush1.xpose.msra.mxu0 0.0
    %3489 = vmatprep.subr.mxu0 0.0
    %3490 = vmatpush1.xpose.msra.mxu0 0.0
    %3491 = vmatprep.subr.mxu0 0.0
    %3492 = vmatpush1.xpose.msra.mxu0 0.0
    %3493 = vmatprep.subr.mxu0 0.0
    %3494 = vmatpush1.xpose.msra.mxu0 0.0
    %3495 = vmatprep.subr.mxu0 0.0
    %3496 = vmatpush1.xpose.msra.mxu0 0.0
    %3497 = vmatprep.subr.mxu0 0.0
    %3498 = vmatpush1.xpose.msra.mxu0 0.0
    %3499 = vmatprep.subr.mxu0 0.0
    %3500 = vmatpush1.xpose.msra.mxu0 0.0
    %3501 = vmatprep.subr.mxu0 0.0
    %3502 = vmatpush1.xpose.msra.mxu0 0.0
    %3503 = vmatprep.subr.mxu0 0.0
    %3504 = vmatpush1.xpose.msra.mxu0 0.0
    %3505 = vmatprep.subr.mxu0 0.0
    %3506 = vmatpush1.xpose.msra.mxu0 0.0
    %3507 = vmatprep.mubr.f32.mxu0 0.0
    %v3508 = vand.u32 %v3438, 4294901760
    %v3509 = vsub.f32 %v3438, %v3508
    %v3510 = vand.u32 %v3509, 4294901760
    %v3511 = vsub.f32 %v3509, %v3510
    %v3512 = vand.u32 %v3511, 4294901760
    %3513 = vmatmul.mubr.f32.gmra.mrb[0].mxu0 %v3512
    %v3514 = vpop.f32.mrb[0].mxu0
    %v3515 = vadd.f32 0.0, %v3514
    %v3516 = vpop.f32.mrb[0].mxu0
    %3517 = vdwg.mxu0
    %3518 = vmatprep.subr.mxu0 0.0
    %v3519 = vand.u32 %v3440, 4294901760
    %v3520 = vsub.f32 %v3440, %v3519
    %v3521 = vand.u32 %v3520, 4294901760
    %v3522 = vsub.f32 %v3520, %v3521
    %v3523 = vand.u32 %v3522, 4294901760
    %3524 = vmatpush1.xpose.msra.mxu0 %v3523
    %3525 = vmatprep.subr.mxu0 0.0
    %3526 = vmatpush1.xpose.msra.mxu0 0.0
    %3527 = vmatprep.subr.mxu0 0.0
    %3528 = vmatpush1.xpose.msra.mxu0 0.0
    %3529 = vmatprep.subr.mxu0 0.0
    %3530 = vmatpush1.xpose.msra.mxu0 0.0
    %3531 = vmatprep.subr.mxu0 0.0
    %3532 = vmatpush1.xpose.msra.mxu0 0.0
    %3533 = vmatprep.subr.mxu0 0.0
    %3534 = vmatpush1.xpose.msra.mxu0 0.0
    %3535 = vmatprep.subr.mxu0 0.0
    %3536 = vmatpush1.xpose.msra.mxu0 0.0
    %3537 = vmatprep.subr.mxu0 0.0
    %3538 = vmatpush1.xpose.msra.mxu0 0.0
    %3539 = vmatprep.subr.mxu0 0.0
    %3540 = vmatpush1.xpose.msra.mxu0 0.0
    %3541 = vmatprep.subr.mxu0 0.0
    %3542 = vmatpush1.xpose.msra.mxu0 0.0
    %3543 = vmatprep.subr.mxu0 0.0
    %3544 = vmatpush1.xpose.msra.mxu0 0.0
    %3545 = vmatprep.subr.mxu0 0.0
    %3546 = vmatpush1.xpose.msra.mxu0 0.0
    %3547 = vmatprep.subr.mxu0 0.0
    %3548 = vmatpush1.xpose.msra.mxu0 0.0
    %3549 = vmatprep.subr.mxu0 0.0
    %3550 = vmatpush1.xpose.msra.mxu0 0.0
    %3551 = vmatprep.subr.mxu0 0.0
    %3552 = vmatpush1.xpose.msra.mxu0 0.0
    %3553 = vmatprep.subr.mxu0 0.0
    %3554 = vmatpush1.xpose.msra.mxu0 0.0
    %3555 = vmatprep.subr.mxu0 0.0
    %3556 = vmatpush1.xpose.msra.mxu0 0.0
    %3557 = vmatprep.subr.mxu0 0.0
    %3558 = vmatpush1.xpose.msra.mxu0 0.0
    %3559 = vmatprep.subr.mxu0 0.0
    %3560 = vmatpush1.xpose.msra.mxu0 0.0
    %3561 = vmatprep.subr.mxu0 0.0
    %3562 = vmatpush1.xpose.msra.mxu0 0.0
    %3563 = vmatprep.subr.mxu0 0.0
    %3564 = vmatpush1.xpose.msra.mxu0 0.0
    %3565 = vmatprep.subr.mxu0 0.0
    %3566 = vmatpush1.xpose.msra.mxu0 0.0
    %3567 = vmatprep.subr.mxu0 0.0
    %3568 = vmatpush1.xpose.msra.mxu0 0.0
    %3569 = vmatprep.subr.mxu0 0.0
    %3570 = vmatpush1.xpose.msra.mxu0 0.0
    %3571 = vmatprep.subr.mxu0 0.0
    %3572 = vmatpush1.xpose.msra.mxu0 0.0
    %3573 = vmatprep.subr.mxu0 0.0
    %3574 = vmatpush1.xpose.msra.mxu0 0.0
    %3575 = vmatprep.subr.mxu0 0.0
    %3576 = vmatpush1.xpose.msra.mxu0 0.0
    %3577 = vmatprep.subr.mxu0 0.0
    %3578 = vmatpush1.xpose.msra.mxu0 0.0
    %3579 = vmatprep.subr.mxu0 0.0
    %3580 = vmatpush1.xpose.msra.mxu0 0.0
    %3581 = vmatprep.subr.mxu0 0.0
    %3582 = vmatpush1.xpose.msra.mxu0 0.0
    %3583 = vmatprep.subr.mxu0 0.0
    %3584 = vmatpush1.xpose.msra.mxu0 0.0
    %3585 = vmatprep.subr.mxu0 0.0
    %3586 = vmatpush1.xpose.msra.mxu0 0.0
    %3587 = vmatprep.mubr.f32.mxu0 0.0
    %v3588 = vand.u32 %v3438, 4294901760
    %3589 = vmatmul.mubr.f32.gmra.mrb[0].mxu0 %v3588
    %v3590 = vpop.f32.mrb[0].mxu0
    %v3591 = vadd.f32 %v3515, %v3590
    %v3592 = vpop.f32.mrb[0].mxu0
    %3593 = vdwg.mxu0
    %3594 = vmatprep.subr.mxu0 0.0
    %v3595 = vand.u32 %v3440, 4294901760
    %v3596 = vsub.f32 %v3440, %v3595
    %3597 = vmatpush1.xpose.msra.mxu0 %v3596
    %3598 = vmatprep.subr.mxu0 0.0
    %3599 = vmatpush1.xpose.msra.mxu0 0.0
    %3600 = vmatprep.subr.mxu0 0.0
    %3601 = vmatpush1.xpose.msra.mxu0 0.0
    %3602 = vmatprep.subr.mxu0 0.0
    %3603 = vmatpush1.xpose.msra.mxu0 0.0
    %3604 = vmatprep.subr.mxu0 0.0
    %3605 = vmatpush1.xpose.msra.mxu0 0.0
    %3606 = vmatprep.subr.mxu0 0.0
    %3607 = vmatpush1.xpose.msra.mxu0 0.0
    %3608 = vmatprep.subr.mxu0 0.0
    %3609 = vmatpush1.xpose.msra.mxu0 0.0
    %3610 = vmatprep.subr.mxu0 0.0
    %3611 = vmatpush1.xpose.msra.mxu0 0.0
    %3612 = vmatprep.subr.mxu0 0.0
    %3613 = vmatpush1.xpose.msra.mxu0 0.0
    %3614 = vmatprep.subr.mxu0 0.0
    %3615 = vmatpush1.xpose.msra.mxu0 0.0
    %3616 = vmatprep.subr.mxu0 0.0
    %3617 = vmatpush1.xpose.msra.mxu0 0.0
    %3618 = vmatprep.subr.mxu0 0.0
    %3619 = vmatpush1.xpose.msra.mxu0 0.0
    %3620 = vmatprep.subr.mxu0 0.0
    %3621 = vmatpush1.xpose.msra.mxu0 0.0
    %3622 = vmatprep.subr.mxu0 0.0
    %3623 = vmatpush1.xpose.msra.mxu0 0.0
    %3624 = vmatprep.subr.mxu0 0.0
    %3625 = vmatpush1.xpose.msra.mxu0 0.0
    %3626 = vmatprep.subr.mxu0 0.0
    %3627 = vmatpush1.xpose.msra.mxu0 0.0
    %3628 = vmatprep.subr.mxu0 0.0
    %3629 = vmatpush1.xpose.msra.mxu0 0.0
    %3630 = vmatprep.subr.mxu0 0.0
    %3631 = vmatpush1.xpose.msra.mxu0 0.0
    %3632 = vmatprep.subr.mxu0 0.0
    %3633 = vmatpush1.xpose.msra.mxu0 0.0
    %3634 = vmatprep.subr.mxu0 0.0
    %3635 = vmatpush1.xpose.msra.mxu0 0.0
    %3636 = vmatprep.subr.mxu0 0.0
    %3637 = vmatpush1.xpose.msra.mxu0 0.0
    %3638 = vmatprep.subr.mxu0 0.0
    %3639 = vmatpush1.xpose.msra.mxu0 0.0
    %3640 = vmatprep.subr.mxu0 0.0
    %3641 = vmatpush1.xpose.msra.mxu0 0.0
    %3642 = vmatprep.subr.mxu0 0.0
    %3643 = vmatpush1.xpose.msra.mxu0 0.0
    %3644 = vmatprep.subr.mxu0 0.0
    %3645 = vmatpush1.xpose.msra.mxu0 0.0
    %3646 = vmatprep.subr.mxu0 0.0
    %3647 = vmatpush1.xpose.msra.mxu0 0.0
    %3648 = vmatprep.subr.mxu0 0.0
    %3649 = vmatpush1.xpose.msra.mxu0 0.0
    %3650 = vmatprep.subr.mxu0 0.0
    %3651 = vmatpush1.xpose.msra.mxu0 0.0
    %3652 = vmatprep.subr.mxu0 0.0
    %3653 = vmatpush1.xpose.msra.mxu0 0.0
    %3654 = vmatprep.subr.mxu0 0.0
    %3655 = vmatpush1.xpose.msra.mxu0 0.0
    %3656 = vmatprep.subr.mxu0 0.0
    %3657 = vmatpush1.xpose.msra.mxu0 0.0
    %3658 = vmatprep.subr.mxu0 0.0
    %3659 = vmatpush1.xpose.msra.mxu0 0.0
    %3660 = vmatprep.mubr.f32.mxu0 0.0
    %v3661 = vand.u32 %v3438, 4294901760
    %v3662 = vsub.f32 %v3438, %v3661
    %3663 = vmatmul.mubr.f32.gmra.mrb[0].mxu0 %v3662
    %v3664 = vpop.f32.mrb[0].mxu0
    %v3665 = vadd.f32 %v3591, %v3664
    %v3666 = vpop.f32.mrb[0].mxu0
    %3667 = vdwg.mxu0
    %3668 = vmatprep.subr.mxu0 0.0
    %v3669 = vand.u32 %v3440, 4294901760
    %3670 = vmatpush1.xpose.msra.mxu0 %v3669
    %3671 = vmatprep.subr.mxu0 0.0
    %3672 = vmatpush1.xpose.msra.mxu0 0.0
    %3673 = vmatprep.subr.mxu0 0.0
    %3674 = vmatpush1.xpose.msra.mxu0 0.0
    %3675 = vmatprep.subr.mxu0 0.0
    %3676 = vmatpush1.xpose.msra.mxu0 0.0
    %3677 = vmatprep.subr.mxu0 0.0
    %3678 = vmatpush1.xpose.msra.mxu0 0.0
    %3679 = vmatprep.subr.mxu0 0.0
    %3680 = vmatpush1.xpose.msra.mxu0 0.0
    %3681 = vmatprep.subr.mxu0 0.0
    %3682 = vmatpush1.xpose.msra.mxu0 0.0
    %3683 = vmatprep.subr.mxu0 0.0
    %3684 = vmatpush1.xpose.msra.mxu0 0.0
    %3685 = vmatprep.subr.mxu0 0.0
    %3686 = vmatpush1.xpose.msra.mxu0 0.0
    %3687 = vmatprep.subr.mxu0 0.0
    %3688 = vmatpush1.xpose.msra.mxu0 0.0
    %3689 = vmatprep.subr.mxu0 0.0
    %3690 = vmatpush1.xpose.msra.mxu0 0.0
    %3691 = vmatprep.subr.mxu0 0.0
    %3692 = vmatpush1.xpose.msra.mxu0 0.0
    %3693 = vmatprep.subr.mxu0 0.0
    %3694 = vmatpush1.xpose.msra.mxu0 0.0
    %3695 = vmatprep.subr.mxu0 0.0
    %3696 = vmatpush1.xpose.msra.mxu0 0.0
    %3697 = vmatprep.subr.mxu0 0.0
    %3698 = vmatpush1.xpose.msra.mxu0 0.0
    %3699 = vmatprep.subr.mxu0 0.0
    %3700 = vmatpush1.xpose.msra.mxu0 0.0
    %3701 = vmatprep.subr.mxu0 0.0
    %3702 = vmatpush1.xpose.msra.mxu0 0.0
    %3703 = vmatprep.subr.mxu0 0.0
    %3704 = vmatpush1.xpose.msra.mxu0 0.0
    %3705 = vmatprep.subr.mxu0 0.0
    %3706 = vmatpush1.xpose.msra.mxu0 0.0
    %3707 = vmatprep.subr.mxu0 0.0
    %3708 = vmatpush1.xpose.msra.mxu0 0.0
    %3709 = vmatprep.subr.mxu0 0.0
    %3710 = vmatpush1.xpose.msra.mxu0 0.0
    %3711 = vmatprep.subr.mxu0 0.0
    %3712 = vmatpush1.xpose.msra.mxu0 0.0
    %3713 = vmatprep.subr.mxu0 0.0
    %3714 = vmatpush1.xpose.msra.mxu0 0.0
    %3715 = vmatprep.subr.mxu0 0.0
    %3716 = vmatpush1.xpose.msra.mxu0 0.0
    %3717 = vmatprep.subr.mxu0 0.0
    %3718 = vmatpush1.xpose.msra.mxu0 0.0
    %3719 = vmatprep.subr.mxu0 0.0
    %3720 = vmatpush1.xpose.msra.mxu0 0.0
    %3721 = vmatprep.subr.mxu0 0.0
    %3722 = vmatpush1.xpose.msra.mxu0 0.0
    %3723 = vmatprep.subr.mxu0 0.0
    %3724 = vmatpush1.xpose.msra.mxu0 0.0
    %3725 = vmatprep.subr.mxu0 0.0
    %3726 = vmatpush1.xpose.msra.mxu0 0.0
    %3727 = vmatprep.subr.mxu0 0.0
    %3728 = vmatpush1.xpose.msra.mxu0 0.0
    %3729 = vmatprep.subr.mxu0 0.0
    %3730 = vmatpush1.xpose.msra.mxu0 0.0
    %3731 = vmatprep.subr.mxu0 0.0
    %3732 = vmatpush1.xpose.msra.mxu0 0.0
    %3733 = vmatprep.mubr.f32.mxu0 0.0
    %v3734 = vand.u32 %v3438, 4294901760
    %v3735 = vsub.f32 %v3438, %v3734
    %v3736 = vand.u32 %v3735, 4294901760
    %3737 = vmatmul.mubr.f32.gmra.mrb[0].mxu0 %v3736
    %v3738 = vpop.f32.mrb[0].mxu0
    %v3739 = vadd.f32 %v3665, %v3738
    %v3740 = vpop.f32.mrb[0].mxu0
    %3741 = vdwg.mxu0
    %3742 = vmatprep.subr.mxu0 0.0
    %v3743 = vand.u32 %v3440, 4294901760
    %v3744 = vsub.f32 %v3440, %v3743
    %v3745 = vand.u32 %v3744, 4294901760
    %3746 = vmatpush1.xpose.msra.mxu0 %v3745
    %3747 = vmatprep.subr.mxu0 0.0
    %3748 = vmatpush1.xpose.msra.mxu0 0.0
    %3749 = vmatprep.subr.mxu0 0.0
    %3750 = vmatpush1.xpose.msra.mxu0 0.0
    %3751 = vmatprep.subr.mxu0 0.0
    %3752 = vmatpush1.xpose.msra.mxu0 0.0
    %3753 = vmatprep.subr.mxu0 0.0
    %3754 = vmatpush1.xpose.msra.mxu0 0.0
    %3755 = vmatprep.subr.mxu0 0.0
    %3756 = vmatpush1.xpose.msra.mxu0 0.0
    %3757 = vmatprep.subr.mxu0 0.0
    %3758 = vmatpush1.xpose.msra.mxu0 0.0
    %3759 = vmatprep.subr.mxu0 0.0
    %3760 = vmatpush1.xpose.msra.mxu0 0.0
    %3761 = vmatprep.subr.mxu0 0.0
    %3762 = vmatpush1.xpose.msra.mxu0 0.0
    %3763 = vmatprep.subr.mxu0 0.0
    %3764 = vmatpush1.xpose.msra.mxu0 0.0
    %3765 = vmatprep.subr.mxu0 0.0
    %3766 = vmatpush1.xpose.msra.mxu0 0.0
    %3767 = vmatprep.subr.mxu0 0.0
    %3768 = vmatpush1.xpose.msra.mxu0 0.0
    %3769 = vmatprep.subr.mxu0 0.0
    %3770 = vmatpush1.xpose.msra.mxu0 0.0
    %3771 = vmatprep.subr.mxu0 0.0
    %3772 = vmatpush1.xpose.msra.mxu0 0.0
    %3773 = vmatprep.subr.mxu0 0.0
    %3774 = vmatpush1.xpose.msra.mxu0 0.0
    %3775 = vmatprep.subr.mxu0 0.0
    %3776 = vmatpush1.xpose.msra.mxu0 0.0
    %3777 = vmatprep.subr.mxu0 0.0
    %3778 = vmatpush1.xpose.msra.mxu0 0.0
    %3779 = vmatprep.subr.mxu0 0.0
    %3780 = vmatpush1.xpose.msra.mxu0 0.0
    %3781 = vmatprep.subr.mxu0 0.0
    %3782 = vmatpush1.xpose.msra.mxu0 0.0
    %3783 = vmatprep.subr.mxu0 0.0
    %3784 = vmatpush1.xpose.msra.mxu0 0.0
    %3785 = vmatprep.subr.mxu0 0.0
    %3786 = vmatpush1.xpose.msra.mxu0 0.0
    %3787 = vmatprep.subr.mxu0 0.0
    %3788 = vmatpush1.xpose.msra.mxu0 0.0
    %3789 = vmatprep.subr.mxu0 0.0
    %3790 = vmatpush1.xpose.msra.mxu0 0.0
    %3791 = vmatprep.subr.mxu0 0.0
    %3792 = vmatpush1.xpose.msra.mxu0 0.0
    %3793 = vmatprep.subr.mxu0 0.0
    %3794 = vmatpush1.xpose.msra.mxu0 0.0
    %3795 = vmatprep.subr.mxu0 0.0
    %3796 = vmatpush1.xpose.msra.mxu0 0.0
    %3797 = vmatprep.subr.mxu0 0.0
    %3798 = vmatpush1.xpose.msra.mxu0 0.0
    %3799 = vmatprep.subr.mxu0 0.0
    %3800 = vmatpush1.xpose.msra.mxu0 0.0
    %3801 = vmatprep.subr.mxu0 0.0
    %3802 = vmatpush1.xpose.msra.mxu0 0.0
    %3803 = vmatprep.subr.mxu0 0.0
    %3804 = vmatpush1.xpose.msra.mxu0 0.0
    %3805 = vmatprep.subr.mxu0 0.0
    %3806 = vmatpush1.xpose.msra.mxu0 0.0
    %3807 = vmatprep.subr.mxu0 0.0
    %3808 = vmatpush1.xpose.msra.mxu0 0.0
    %3809 = vmatprep.mubr.f32.mxu0 0.0
    %v3810 = vand.u32 %v3438, 4294901760
    %3811 = vmatmul.mubr.f32.gmra.mrb[0].mxu0 %v3810
    %v3812 = vpop.f32.mrb[0].mxu0
    %v3813 = vadd.f32 %v3739, %v3812
    %v3814 = vpop.f32.mrb[0].mxu0
    %3815 = vdwg.mxu0
    %3816 = vmatprep.subr.mxu0 0.0
    %v3817 = vand.u32 %v3440, 4294901760
    %3818 = vmatpush1.xpose.msra.mxu0 %v3817
    %3819 = vmatprep.subr.mxu0 0.0
    %3820 = vmatpush1.xpose.msra.mxu0 0.0
    %3821 = vmatprep.subr.mxu0 0.0
    %3822 = vmatpush1.xpose.msra.mxu0 0.0
    %3823 = vmatprep.subr.mxu0 0.0
    %3824 = vmatpush1.xpose.msra.mxu0 0.0
    %3825 = vmatprep.subr.mxu0 0.0
    %3826 = vmatpush1.xpose.msra.mxu0 0.0
    %3827 = vmatprep.subr.mxu0 0.0
    %3828 = vmatpush1.xpose.msra.mxu0 0.0
    %3829 = vmatprep.subr.mxu0 0.0
    %3830 = vmatpush1.xpose.msra.mxu0 0.0
    %3831 = vmatprep.subr.mxu0 0.0
    %3832 = vmatpush1.xpose.msra.mxu0 0.0
    %3833 = vmatprep.subr.mxu0 0.0
    %3834 = vmatpush1.xpose.msra.mxu0 0.0
    %3835 = vmatprep.subr.mxu0 0.0
    %3836 = vmatpush1.xpose.msra.mxu0 0.0
    %3837 = vmatprep.subr.mxu0 0.0
    %3838 = vmatpush1.xpose.msra.mxu0 0.0
    %3839 = vmatprep.subr.mxu0 0.0
    %3840 = vmatpush1.xpose.msra.mxu0 0.0
    %3841 = vmatprep.subr.mxu0 0.0
    %3842 = vmatpush1.xpose.msra.mxu0 0.0
    %3843 = vmatprep.subr.mxu0 0.0
    %3844 = vmatpush1.xpose.msra.mxu0 0.0
    %3845 = vmatprep.subr.mxu0 0.0
    %3846 = vmatpush1.xpose.msra.mxu0 0.0
    %3847 = vmatprep.subr.mxu0 0.0
    %3848 = vmatpush1.xpose.msra.mxu0 0.0
    %3849 = vmatprep.subr.mxu0 0.0
    %3850 = vmatpush1.xpose.msra.mxu0 0.0
    %3851 = vmatprep.subr.mxu0 0.0
    %3852 = vmatpush1.xpose.msra.mxu0 0.0
    %3853 = vmatprep.subr.mxu0 0.0
    %3854 = vmatpush1.xpose.msra.mxu0 0.0
    %3855 = vmatprep.subr.mxu0 0.0
    %3856 = vmatpush1.xpose.msra.mxu0 0.0
    %3857 = vmatprep.subr.mxu0 0.0
    %3858 = vmatpush1.xpose.msra.mxu0 0.0
    %3859 = vmatprep.subr.mxu0 0.0
    %3860 = vmatpush1.xpose.msra.mxu0 0.0
    %3861 = vmatprep.subr.mxu0 0.0
    %3862 = vmatpush1.xpose.msra.mxu0 0.0
    %3863 = vmatprep.subr.mxu0 0.0
    %3864 = vmatpush1.xpose.msra.mxu0 0.0
    %3865 = vmatprep.subr.mxu0 0.0
    %3866 = vmatpush1.xpose.msra.mxu0 0.0
    %3867 = vmatprep.subr.mxu0 0.0
    %3868 = vmatpush1.xpose.msra.mxu0 0.0
    %3869 = vmatprep.subr.mxu0 0.0
    %3870 = vmatpush1.xpose.msra.mxu0 0.0
    %3871 = vmatprep.subr.mxu0 0.0
    %3872 = vmatpush1.xpose.msra.mxu0 0.0
    %3873 = vmatprep.subr.mxu0 0.0
    %3874 = vmatpush1.xpose.msra.mxu0 0.0
    %3875 = vmatprep.subr.mxu0 0.0
    %3876 = vmatpush1.xpose.msra.mxu0 0.0
    %3877 = vmatprep.subr.mxu0 0.0
    %3878 = vmatpush1.xpose.msra.mxu0 0.0
    %3879 = vmatprep.subr.mxu0 0.0
    %3880 = vmatpush1.xpose.msra.mxu0 0.0
    %3881 = vmatprep.mubr.f32.mxu0 0.0
    %v3882 = vand.u32 %v3438, 4294901760
    %3883 = vmatmul.mubr.f32.gmra.mrb[0].mxu0 %v3882
    %v3884 = vpop.f32.mrb[0].mxu0
    %v3885 = vadd.f32 %v3813, %v3884
    %v3886 = vpop.f32.mrb[0].mxu0
    %3887 = vdwg.mxu0
    %v3888 = vmul.f32 %v3885, 0.35355338
    %v3889 = vadd.f32 %v3888, %v1108
    %v3890 = vsel %vm652, %v3889, -inf
    %3891 = vmax.xlane.f32.xlu0 %v3890
    %v3892 = vpop.xlane.xlu0 %3891
    %v3893 = vsub.f32 %v3889, %v3892
    %v3894 = vmul.f32 %v3893, 1.442695
    %v3895 = vpow.pop %v3894
    %v3896 = vsel %vm652, %v3895, 0.0
    %3897 = vadd.xlane.f32.xlu0 %v3896
    %v3898 = vpop.xlane.xlu0 %3897
    %3899 = vrot.lane.b32.xlu0 %v638, 40
    %v3900 = vpop.permute.xlu0 %3899
    %v3903 = vsel %vm652, %v3895, 0
    %3905 = vmatprep.subr.mxu0 0.0
    %v3906 = vand.u32 %v3900, 4294901760
    %3907 = vmatpush1.msra.mxu0 %v3906
    %3908 = vmatprep.subr.mxu0 0.0
    %3909 = vmatpush1.msra.mxu0 0.0
    %3910 = vmatprep.subr.mxu0 0.0
    %3911 = vmatpush1.msra.mxu0 0.0
    %3912 = vmatprep.subr.mxu0 0.0
    %3913 = vmatpush1.msra.mxu0 0.0
    %3914 = vmatprep.subr.mxu0 0.0
    %3915 = vmatpush1.msra.mxu0 0.0
    %3916 = vmatprep.subr.mxu0 0.0
    %3917 = vmatpush1.msra.mxu0 0.0
    %3918 = vmatprep.subr.mxu0 0.0
    %3919 = vmatpush1.msra.mxu0 0.0
    %3920 = vmatprep.subr.mxu0 0.0
    %3921 = vmatpush1.msra.mxu0 0.0
    %3922 = vmatprep.subr.mxu0 0.0
    %3923 = vmatpush1.msra.mxu0 0.0
    %3924 = vmatprep.subr.mxu0 0.0
    %3925 = vmatpush1.msra.mxu0 0.0
    %3926 = vmatprep.subr.mxu0 0.0
    %3927 = vmatpush1.msra.mxu0 0.0
    %3928 = vmatprep.subr.mxu0 0.0
    %3929 = vmatpush1.msra.mxu0 0.0
    %3930 = vmatprep.subr.mxu0 0.0
    %3931 = vmatpush1.msra.mxu0 0.0
    %3932 = vmatprep.subr.mxu0 0.0
    %3933 = vmatpush1.msra.mxu0 0.0
    %3934 = vmatprep.subr.mxu0 0.0
    %3935 = vmatpush1.msra.mxu0 0.0
    %3936 = vmatprep.subr.mxu0 0.0
    %3937 = vmatpush1.msra.mxu0 0.0
    %3938 = vmatprep.subr.mxu0 0.0
    %3939 = vmatpush1.msra.mxu0 0.0
    %3940 = vmatprep.subr.mxu0 0.0
    %3941 = vmatpush1.msra.mxu0 0.0
    %3942 = vmatprep.subr.mxu0 0.0
    %3943 = vmatpush1.msra.mxu0 0.0
    %3944 = vmatprep.subr.mxu0 0.0
    %3945 = vmatpush1.msra.mxu0 0.0
    %3946 = vmatprep.subr.mxu0 0.0
    %3947 = vmatpush1.msra.mxu0 0.0
    %3948 = vmatprep.subr.mxu0 0.0
    %3949 = vmatpush1.msra.mxu0 0.0
    %3950 = vmatprep.subr.mxu0 0.0
    %3951 = vmatpush1.msra.mxu0 0.0
    %3952 = vmatprep.subr.mxu0 0.0
    %3953 = vmatpush1.msra.mxu0 0.0
    %3954 = vmatprep.subr.mxu0 0.0
    %3955 = vmatpush1.msra.mxu0 0.0
    %3956 = vmatprep.subr.mxu0 0.0
    %3957 = vmatpush1.msra.mxu0 0.0
    %3958 = vmatprep.subr.mxu0 0.0
    %3959 = vmatpush1.msra.mxu0 0.0
    %3960 = vmatprep.subr.mxu0 0.0
    %3961 = vmatpush1.msra.mxu0 0.0
    %3962 = vmatprep.subr.mxu0 0.0
    %3963 = vmatpush1.msra.mxu0 0.0
    %3964 = vmatprep.subr.mxu0 0.0
    %3965 = vmatpush1.msra.mxu0 0.0
    %3966 = vmatprep.subr.mxu0 0.0
    %3967 = vmatpush1.msra.mxu0 0.0
    %3968 = vmatprep.subr.mxu0 0.0
    %3969 = vmatpush1.msra.mxu0 0.0
    %3970 = vmatprep.mubr.f32.mxu0 0.0
    %v3971 = vand.u32 %v3903, 4294901760
    %v3972 = vsub.f32 %v3903, %v3971
    %v3973 = vand.u32 %v3972, 4294901760
    %v3974 = vsub.f32 %v3972, %v3973
    %v3975 = vand.u32 %v3974, 4294901760
    %3976 = vmatmul.mubr.f32.gmra.mrb[0].mxu0 %v3975
    %v3977 = vpop.f32.mrb[0].mxu0
    %v3978 = vadd.f32 0.0, %v3977
    %v3979 = vpop.f32.mrb[0].mxu0
    %3980 = vdwg.mxu0
    %3981 = vmatprep.subr.mxu0 0.0
    %v3982 = vand.u32 %v3900, 4294901760
    %v3983 = vsub.f32 %v3900, %v3982
    %v3984 = vand.u32 %v3983, 4294901760
    %v3985 = vsub.f32 %v3983, %v3984
    %v3986 = vand.u32 %v3985, 4294901760
    %3987 = vmatpush1.msra.mxu0 %v3986
    %3988 = vmatprep.subr.mxu0 0.0
    %3989 = vmatpush1.msra.mxu0 0.0
    %3990 = vmatprep.subr.mxu0 0.0
    %3991 = vmatpush1.msra.mxu0 0.0
    %3992 = vmatprep.subr.mxu0 0.0
    %3993 = vmatpush1.msra.mxu0 0.0
    %3994 = vmatprep.subr.mxu0 0.0
    %3995 = vmatpush1.msra.mxu0 0.0
    %3996 = vmatprep.subr.mxu0 0.0
    %3997 = vmatpush1.msra.mxu0 0.0
    %3998 = vmatprep.subr.mxu0 0.0
    %3999 = vmatpush1.msra.mxu0 0.0
    %4000 = vmatprep.subr.mxu0 0.0
    %4001 = vmatpush1.msra.mxu0 0.0
    %4002 = vmatprep.subr.mxu0 0.0
    %4003 = vmatpush1.msra.mxu0 0.0
    %4004 = vmatprep.subr.mxu0 0.0
    %4005 = vmatpush1.msra.mxu0 0.0
    %4006 = vmatprep.subr.mxu0 0.0
    %4007 = vmatpush1.msra.mxu0 0.0
    %4008 = vmatprep.subr.mxu0 0.0
    %4009 = vmatpush1.msra.mxu0 0.0
    %4010 = vmatprep.subr.mxu0 0.0
    %4011 = vmatpush1.msra.mxu0 0.0
    %4012 = vmatprep.subr.mxu0 0.0
    %4013 = vmatpush1.msra.mxu0 0.0
    %4014 = vmatprep.subr.mxu0 0.0
    %4015 = vmatpush1.msra.mxu0 0.0
    %4016 = vmatprep.subr.mxu0 0.0
    %4017 = vmatpush1.msra.mxu0 0.0
    %4018 = vmatprep.subr.mxu0 0.0
    %4019 = vmatpush1.msra.mxu0 0.0
    %4020 = vmatprep.subr.mxu0 0.0
    %4021 = vmatpush1.msra.mxu0 0.0
    %4022 = vmatprep.subr.mxu0 0.0
    %4023 = vmatpush1.msra.mxu0 0.0
    %4024 = vmatprep.subr.mxu0 0.0
    %4025 = vmatpush1.msra.mxu0 0.0
    %4026 = vmatprep.subr.mxu0 0.0
    %4027 = vmatpush1.msra.mxu0 0.0
    %4028 = vmatprep.subr.mxu0 0.0
    %4029 = vmatpush1.msra.mxu0 0.0
    %4030 = vmatprep.subr.mxu0 0.0
    %4031 = vmatpush1.msra.mxu0 0.0
    %4032 = vmatprep.subr.mxu0 0.0
    %4033 = vmatpush1.msra.mxu0 0.0
    %4034 = vmatprep.subr.mxu0 0.0
    %4035 = vmatpush1.msra.mxu0 0.0
    %4036 = vmatprep.subr.mxu0 0.0
    %4037 = vmatpush1.msra.mxu0 0.0
    %4038 = vmatprep.subr.mxu0 0.0
    %4039 = vmatpush1.msra.mxu0 0.0
    %4040 = vmatprep.subr.mxu0 0.0
    %4041 = vmatpush1.msra.mxu0 0.0
    %4042 = vmatprep.subr.mxu0 0.0
    %4043 = vmatpush1.msra.mxu0 0.0
    %4044 = vmatprep.subr.mxu0 0.0
    %4045 = vmatpush1.msra.mxu0 0.0
    %4046 = vmatprep.subr.mxu0 0.0
    %4047 = vmatpush1.msra.mxu0 0.0
    %4048 = vmatprep.subr.mxu0 0.0
    %4049 = vmatpush1.msra.mxu0 0.0
    %4050 = vmatprep.mubr.f32.mxu0 0.0
    %v4051 = vand.u32 %v3903, 4294901760
    %4052 = vmatmul.mubr.f32.gmra.mrb[0].mxu0 %v4051
    %v4053 = vpop.f32.mrb[0].mxu0
    %v4054 = vadd.f32 %v3978, %v4053
    %v4055 = vpop.f32.mrb[0].mxu0
    %4056 = vdwg.mxu0
    %4057 = vmatprep.subr.mxu0 0.0
    %v4058 = vand.u32 %v3900, 4294901760
    %v4059 = vsub.f32 %v3900, %v4058
    %4060 = vmatpush1.msra.mxu0 %v4059
    %4061 = vmatprep.subr.mxu0 0.0
    %4062 = vmatpush1.msra.mxu0 0.0
    %4063 = vmatprep.subr.mxu0 0.0
    %4064 = vmatpush1.msra.mxu0 0.0
    %4065 = vmatprep.subr.mxu0 0.0
    %4066 = vmatpush1.msra.mxu0 0.0
    %4067 = vmatprep.subr.mxu0 0.0
    %4068 = vmatpush1.msra.mxu0 0.0
    %4069 = vmatprep.subr.mxu0 0.0
    %4070 = vmatpush1.msra.mxu0 0.0
    %4071 = vmatprep.subr.mxu0 0.0
    %4072 = vmatpush1.msra.mxu0 0.0
    %4073 = vmatprep.subr.mxu0 0.0
    %4074 = vmatpush1.msra.mxu0 0.0
    %4075 = vmatprep.subr.mxu0 0.0
    %4076 = vmatpush1.msra.mxu0 0.0
    %4077 = vmatprep.subr.mxu0 0.0
    %4078 = vmatpush1.msra.mxu0 0.0
    %4079 = vmatprep.subr.mxu0 0.0
    %4080 = vmatpush1.msra.mxu0 0.0
    %4081 = vmatprep.subr.mxu0 0.0
    %4082 = vmatpush1.msra.mxu0 0.0
    %4083 = vmatprep.subr.mxu0 0.0
    %4084 = vmatpush1.msra.mxu0 0.0
    %4085 = vmatprep.subr.mxu0 0.0
    %4086 = vmatpush1.msra.mxu0 0.0
    %4087 = vmatprep.subr.mxu0 0.0
    %4088 = vmatpush1.msra.mxu0 0.0
    %4089 = vmatprep.subr.mxu0 0.0
    %4090 = vmatpush1.msra.mxu0 0.0
    %4091 = vmatprep.subr.mxu0 0.0
    %4092 = vmatpush1.msra.mxu0 0.0
    %4093 = vmatprep.subr.mxu0 0.0
    %4094 = vmatpush1.msra.mxu0 0.0
    %4095 = vmatprep.subr.mxu0 0.0
    %4096 = vmatpush1.msra.mxu0 0.0
    %4097 = vmatprep.subr.mxu0 0.0
    %4098 = vmatpush1.msra.mxu0 0.0
    %4099 = vmatprep.subr.mxu0 0.0
    %4100 = vmatpush1.msra.mxu0 0.0
    %4101 = vmatprep.subr.mxu0 0.0
    %4102 = vmatpush1.msra.mxu0 0.0
    %4103 = vmatprep.subr.mxu0 0.0
    %4104 = vmatpush1.msra.mxu0 0.0
    %4105 = vmatprep.subr.mxu0 0.0
    %4106 = vmatpush1.msra.mxu0 0.0
    %4107 = vmatprep.subr.mxu0 0.0
    %4108 = vmatpush1.msra.mxu0 0.0
    %4109 = vmatprep.subr.mxu0 0.0
    %4110 = vmatpush1.msra.mxu0 0.0
    %4111 = vmatprep.subr.mxu0 0.0
    %4112 = vmatpush1.msra.mxu0 0.0
    %4113 = vmatprep.subr.mxu0 0.0
    %4114 = vmatpush1.msra.mxu0 0.0
    %4115 = vmatprep.subr.mxu0 0.0
    %4116 = vmatpush1.msra.mxu0 0.0
    %4117 = vmatprep.subr.mxu0 0.0
    %4118 = vmatpush1.msra.mxu0 0.0
    %4119 = vmatprep.subr.mxu0 0.0
    %4120 = vmatpush1.msra.mxu0 0.0
    %4121 = vmatprep.subr.mxu0 0.0
    %4122 = vmatpush1.msra.mxu0 0.0
    %4123 = vmatprep.mubr.f32.mxu0 0.0
    %v4124 = vand.u32 %v3903, 4294901760
    %v4125 = vsub.f32 %v3903, %v4124
    %4126 = vmatmul.mubr.f32.gmra.mrb[0].mxu0 %v4125
    %v4127 = vpop.f32.mrb[0].mxu0
    %v4128 = vadd.f32 %v4054, %v4127
    %v4129 = vpop.f32.mrb[0].mxu0
    %4130 = vdwg.mxu0
    %4131 = vmatprep.subr.mxu0 0.0
    %v4132 = vand.u32 %v3900, 4294901760
    %4133 = vmatpush1.msra.mxu0 %v4132
    %4134 = vmatprep.subr.mxu0 0.0
    %4135 = vmatpush1.msra.mxu0 0.0
    %4136 = vmatprep.subr.mxu0 0.0
    %4137 = vmatpush1.msra.mxu0 0.0
    %4138 = vmatprep.subr.mxu0 0.0
    %4139 = vmatpush1.msra.mxu0 0.0
    %4140 = vmatprep.subr.mxu0 0.0
    %4141 = vmatpush1.msra.mxu0 0.0
    %4142 = vmatprep.subr.mxu0 0.0
    %4143 = vmatpush1.msra.mxu0 0.0
    %4144 = vmatprep.subr.mxu0 0.0
    %4145 = vmatpush1.msra.mxu0 0.0
    %4146 = vmatprep.subr.mxu0 0.0
    %4147 = vmatpush1.msra.mxu0 0.0
    %4148 = vmatprep.subr.mxu0 0.0
    %4149 = vmatpush1.msra.mxu0 0.0
    %4150 = vmatprep.subr.mxu0 0.0
    %4151 = vmatpush1.msra.mxu0 0.0
    %4152 = vmatprep.subr.mxu0 0.0
    %4153 = vmatpush1.msra.mxu0 0.0
    %4154 = vmatprep.subr.mxu0 0.0
    %4155 = vmatpush1.msra.mxu0 0.0
    %4156 = vmatprep.subr.mxu0 0.0
    %4157 = vmatpush1.msra.mxu0 0.0
    %4158 = vmatprep.subr.mxu0 0.0
    %4159 = vmatpush1.msra.mxu0 0.0
    %4160 = vmatprep.subr.mxu0 0.0
    %4161 = vmatpush1.msra.mxu0 0.0
    %4162 = vmatprep.subr.mxu0 0.0
    %4163 = vmatpush1.msra.mxu0 0.0
    %4164 = vmatprep.subr.mxu0 0.0
    %4165 = vmatpush1.msra.mxu0 0.0
    %4166 = vmatprep.subr.mxu0 0.0
    %4167 = vmatpush1.msra.mxu0 0.0
    %4168 = vmatprep.subr.mxu0 0.0
    %4169 = vmatpush1.msra.mxu0 0.0
    %4170 = vmatprep.subr.mxu0 0.0
    %4171 = vmatpush1.msra.mxu0 0.0
    %4172 = vmatprep.subr.mxu0 0.0
    %4173 = vmatpush1.msra.mxu0 0.0
    %4174 = vmatprep.subr.mxu0 0.0
    %4175 = vmatpush1.msra.mxu0 0.0
    %4176 = vmatprep.subr.mxu0 0.0
    %4177 = vmatpush1.msra.mxu0 0.0
    %4178 = vmatprep.subr.mxu0 0.0
    %4179 = vmatpush1.msra.mxu0 0.0
    %4180 = vmatprep.subr.mxu0 0.0
    %4181 = vmatpush1.msra.mxu0 0.0
    %4182 = vmatprep.subr.mxu0 0.0
    %4183 = vmatpush1.msra.mxu0 0.0
    %4184 = vmatprep.subr.mxu0 0.0
    %4185 = vmatpush1.msra.mxu0 0.0
    %4186 = vmatprep.subr.mxu0 0.0
    %4187 = vmatpush1.msra.mxu0 0.0
    %4188 = vmatprep.subr.mxu0 0.0
    %4189 = vmatpush1.msra.mxu0 0.0
    %4190 = vmatprep.subr.mxu0 0.0
    %4191 = vmatpush1.msra.mxu0 0.0
    %4192 = vmatprep.subr.mxu0 0.0
    %4193 = vmatpush1.msra.mxu0 0.0
    %4194 = vmatprep.subr.mxu0 0.0
    %4195 = vmatpush1.msra.mxu0 0.0
    %4196 = vmatprep.mubr.f32.mxu0 0.0
    %v4197 = vand.u32 %v3903, 4294901760
    %v4198 = vsub.f32 %v3903, %v4197
    %v4199 = vand.u32 %v4198, 4294901760
    %4200 = vmatmul.mubr.f32.gmra.mrb[0].mxu0 %v4199
    %v4201 = vpop.f32.mrb[0].mxu0
    %v4202 = vadd.f32 %v4128, %v4201
    %v4203 = vpop.f32.mrb[0].mxu0
    %4204 = vdwg.mxu0
    %4205 = vmatprep.subr.mxu0 0.0
    %v4206 = vand.u32 %v3900, 4294901760
    %v4207 = vsub.f32 %v3900, %v4206
    %v4208 = vand.u32 %v4207, 4294901760
    %4209 = vmatpush1.msra.mxu0 %v4208
    %4210 = vmatprep.subr.mxu0 0.0
    %4211 = vmatpush1.msra.mxu0 0.0
    %4212 = vmatprep.subr.mxu0 0.0
    %4213 = vmatpush1.msra.mxu0 0.0
    %4214 = vmatprep.subr.mxu0 0.0
    %4215 = vmatpush1.msra.mxu0 0.0
    %4216 = vmatprep.subr.mxu0 0.0
    %4217 = vmatpush1.msra.mxu0 0.0
    %4218 = vmatprep.subr.mxu0 0.0
    %4219 = vmatpush1.msra.mxu0 0.0
    %4220 = vmatprep.subr.mxu0 0.0
    %4221 = vmatpush1.msra.mxu0 0.0
    %4222 = vmatprep.subr.mxu0 0.0
    %4223 = vmatpush1.msra.mxu0 0.0
    %4224 = vmatprep.subr.mxu0 0.0
    %4225 = vmatpush1.msra.mxu0 0.0
    %4226 = vmatprep.subr.mxu0 0.0
    %4227 = vmatpush1.msra.mxu0 0.0
    %4228 = vmatprep.subr.mxu0 0.0
    %4229 = vmatpush1.msra.mxu0 0.0
    %4230 = vmatprep.subr.mxu0 0.0
    %4231 = vmatpush1.msra.mxu0 0.0
    %4232 = vmatprep.subr.mxu0 0.0
    %4233 = vmatpush1.msra.mxu0 0.0
    %4234 = vmatprep.subr.mxu0 0.0
    %4235 = vmatpush1.msra.mxu0 0.0
    %4236 = vmatprep.subr.mxu0 0.0
    %4237 = vmatpush1.msra.mxu0 0.0
    %4238 = vmatprep.subr.mxu0 0.0
    %4239 = vmatpush1.msra.mxu0 0.0
    %4240 = vmatprep.subr.mxu0 0.0
    %4241 = vmatpush1.msra.mxu0 0.0
    %4242 = vmatprep.subr.mxu0 0.0
    %4243 = vmatpush1.msra.mxu0 0.0
    %4244 = vmatprep.subr.mxu0 0.0
    %4245 = vmatpush1.msra.mxu0 0.0
    %4246 = vmatprep.subr.mxu0 0.0
    %4247 = vmatpush1.msra.mxu0 0.0
    %4248 = vmatprep.subr.mxu0 0.0
    %4249 = vmatpush1.msra.mxu0 0.0
    %4250 = vmatprep.subr.mxu0 0.0
    %4251 = vmatpush1.msra.mxu0 0.0
    %4252 = vmatprep.subr.mxu0 0.0
    %4253 = vmatpush1.msra.mxu0 0.0
    %4254 = vmatprep.subr.mxu0 0.0
    %4255 = vmatpush1.msra.mxu0 0.0
    %4256 = vmatprep.subr.mxu0 0.0
    %4257 = vmatpush1.msra.mxu0 0.0
    %4258 = vmatprep.subr.mxu0 0.0
    %4259 = vmatpush1.msra.mxu0 0.0
    %4260 = vmatprep.subr.mxu0 0.0
    %4261 = vmatpush1.msra.mxu0 0.0
    %4262 = vmatprep.subr.mxu0 0.0
    %4263 = vmatpush1.msra.mxu0 0.0
    %4264 = vmatprep.subr.mxu0 0.0
    %4265 = vmatpush1.msra.mxu0 0.0
    %4266 = vmatprep.subr.mxu0 0.0
    %4267 = vmatpush1.msra.mxu0 0.0
    %4268 = vmatprep.subr.mxu0 0.0
    %4269 = vmatpush1.msra.mxu0 0.0
    %4270 = vmatprep.subr.mxu0 0.0
    %4271 = vmatpush1.msra.mxu0 0.0
    %4272 = vmatprep.mubr.f32.mxu0 0.0
    %v4273 = vand.u32 %v3903, 4294901760
    %4274 = vmatmul.mubr.f32.gmra.mrb[0].mxu0 %v4273
    %v4275 = vpop.f32.mrb[0].mxu0
    %v4276 = vadd.f32 %v4202, %v4275
    %v4277 = vpop.f32.mrb[0].mxu0
    %4278 = vdwg.mxu0
    %4279 = vmatprep.subr.mxu0 0.0
    %v4280 = vand.u32 %v3900, 4294901760
    %4281 = vmatpush1.msra.mxu0 %v4280
    %4282 = vmatprep.subr.mxu0 0.0
    %4283 = vmatpush1.msra.mxu0 0.0
    %4284 = vmatprep.subr.mxu0 0.0
    %4285 = vmatpush1.msra.mxu0 0.0
    %4286 = vmatprep.subr.mxu0 0.0
    %4287 = vmatpush1.msra.mxu0 0.0
    %4288 = vmatprep.subr.mxu0 0.0
    %4289 = vmatpush1.msra.mxu0 0.0
    %4290 = vmatprep.subr.mxu0 0.0
    %4291 = vmatpush1.msra.mxu0 0.0
    %4292 = vmatprep.subr.mxu0 0.0
    %4293 = vmatpush1.msra.mxu0 0.0
    %4294 = vmatprep.subr.mxu0 0.0
    %4295 = vmatpush1.msra.mxu0 0.0
    %4296 = vmatprep.subr.mxu0 0.0
    %4297 = vmatpush1.msra.mxu0 0.0
    %4298 = vmatprep.subr.mxu0 0.0
    %4299 = vmatpush1.msra.mxu0 0.0
    %4300 = vmatprep.subr.mxu0 0.0
    %4301 = vmatpush1.msra.mxu0 0.0
    %4302 = vmatprep.subr.mxu0 0.0
    %4303 = vmatpush1.msra.mxu0 0.0
    %4304 = vmatprep.subr.mxu0 0.0
    %4305 = vmatpush1.msra.mxu0 0.0
    %4306 = vmatprep.subr.mxu0 0.0
    %4307 = vmatpush1.msra.mxu0 0.0
    %4308 = vmatprep.subr.mxu0 0.0
    %4309 = vmatpush1.msra.mxu0 0.0
    %4310 = vmatprep.subr.mxu0 0.0
    %4311 = vmatpush1.msra.mxu0 0.0
    %4312 = vmatprep.subr.mxu0 0.0
    %4313 = vmatpush1.msra.mxu0 0.0
    %4314 = vmatprep.subr.mxu0 0.0
    %4315 = vmatpush1.msra.mxu0 0.0
    %4316 = vmatprep.subr.mxu0 0.0
    %4317 = vmatpush1.msra.mxu0 0.0
    %4318 = vmatprep.subr.mxu0 0.0
    %4319 = vmatpush1.msra.mxu0 0.0
    %4320 = vmatprep.subr.mxu0 0.0
    %4321 = vmatpush1.msra.mxu0 0.0
    %4322 = vmatprep.subr.mxu0 0.0
    %4323 = vmatpush1.msra.mxu0 0.0
    %4324 = vmatprep.subr.mxu0 0.0
    %4325 = vmatpush1.msra.mxu0 0.0
    %4326 = vmatprep.subr.mxu0 0.0
    %4327 = vmatpush1.msra.mxu0 0.0
    %4328 = vmatprep.subr.mxu0 0.0
    %4329 = vmatpush1.msra.mxu0 0.0
    %4330 = vmatprep.subr.mxu0 0.0
    %4331 = vmatpush1.msra.mxu0 0.0
    %4332 = vmatprep.subr.mxu0 0.0
    %4333 = vmatpush1.msra.mxu0 0.0
    %4334 = vmatprep.subr.mxu0 0.0
    %4335 = vmatpush1.msra.mxu0 0.0
    %4336 = vmatprep.subr.mxu0 0.0
    %4337 = vmatpush1.msra.mxu0 0.0
    %4338 = vmatprep.subr.mxu0 0.0
    %4339 = vmatpush1.msra.mxu0 0.0
    %4340 = vmatprep.subr.mxu0 0.0
    %4341 = vmatpush1.msra.mxu0 0.0
    %4342 = vmatprep.subr.mxu0 0.0
    %4343 = vmatpush1.msra.mxu0 0.0
    %4344 = vmatprep.mubr.f32.mxu0 0.0
    %v4345 = vand.u32 %v3903, 4294901760
    %4346 = vmatmul.mubr.f32.gmra.mrb[0].mxu0 %v4345
    %v4347 = vpop.f32.mrb[0].mxu0
    %v4348 = vadd.f32 %v4276, %v4347
    %v4349 = vpop.f32.mrb[0].mxu0
    %4350 = vdwg.mxu0
    %v4351 = vrcp.pop %v3898
    %v4352 = vmul.f32 %v3898, %v4351
    %v4353 = vsub.f32 2.0, %v4352
    %v4354 = vmul.f32 %v4351, %v4353
    %v4355 = vmul.f32 %v4348, %v4354
    %4357 = vrot.lane.b32.xlu0 %v4355, 24
    %v4358 = vpop.permute.xlu0 %4357
    %vm4360 = vcmask 261312
    %4361 = vst.msk [vmem:[#allocation2] sm:$0xff] %vm4360, %v4358
    %4363 = vrot.lane.b32.xlu0 %v644, 96
    %v4364 = vpop.permute.xlu0 %4363
    %v4365 = vsel %vm652, %v644, 0
    %v4367 = vsel %vm652, %v4364, 0
    %4369 = vmatprep.subr.mxu0 0.0
    %v4370 = vand.u32 %v4367, 4294901760
    %4371 = vmatpush1.xpose.msra.mxu0 %v4370
    %4372 = vmatprep.subr.mxu0 0.0
    %4373 = vmatpush1.xpose.msra.mxu0 0.0
    %4374 = vmatprep.subr.mxu0 0.0
    %4375 = vmatpush1.xpose.msra.mxu0 0.0
    %4376 = vmatprep.subr.mxu0 0.0
    %4377 = vmatpush1.xpose.msra.mxu0 0.0
    %4378 = vmatprep.subr.mxu0 0.0
    %4379 = vmatpush1.xpose.msra.mxu0 0.0
    %4380 = vmatprep.subr.mxu0 0.0
    %4381 = vmatpush1.xpose.msra.mxu0 0.0
    %4382 = vmatprep.subr.mxu0 0.0
    %4383 = vmatpush1.xpose.msra.mxu0 0.0
    %4384 = vmatprep.subr.mxu0 0.0
    %4385 = vmatpush1.xpose.msra.mxu0 0.0
    %4386 = vmatprep.subr.mxu0 0.0
    %4387 = vmatpush1.xpose.msra.mxu0 0.0
    %4388 = vmatprep.subr.mxu0 0.0
    %4389 = vmatpush1.xpose.msra.mxu0 0.0
    %4390 = vmatprep.subr.mxu0 0.0
    %4391 = vmatpush1.xpose.msra.mxu0 0.0
    %4392 = vmatprep.subr.mxu0 0.0
    %4393 = vmatpush1.xpose.msra.mxu0 0.0
    %4394 = vmatprep.subr.mxu0 0.0
    %4395 = vmatpush1.xpose.msra.mxu0 0.0
    %4396 = vmatprep.subr.mxu0 0.0
    %4397 = vmatpush1.xpose.msra.mxu0 0.0
    %4398 = vmatprep.subr.mxu0 0.0
    %4399 = vmatpush1.xpose.msra.mxu0 0.0
    %4400 = vmatprep.subr.mxu0 0.0
    %4401 = vmatpush1.xpose.msra.mxu0 0.0
    %4402 = vmatprep.subr.mxu0 0.0
    %4403 = vmatpush1.xpose.msra.mxu0 0.0
    %4404 = vmatprep.subr.mxu0 0.0
    %4405 = vmatpush1.xpose.msra.mxu0 0.0
    %4406 = vmatprep.subr.mxu0 0.0
    %4407 = vmatpush1.xpose.msra.mxu0 0.0
    %4408 = vmatprep.subr.mxu0 0.0
    %4409 = vmatpush1.xpose.msra.mxu0 0.0
    %4410 = vmatprep.subr.mxu0 0.0
    %4411 = vmatpush1.xpose.msra.mxu0 0.0
    %4412 = vmatprep.subr.mxu0 0.0
    %4413 = vmatpush1.xpose.msra.mxu0 0.0
    %4414 = vmatprep.subr.mxu0 0.0
    %4415 = vmatpush1.xpose.msra.mxu0 0.0
    %4416 = vmatprep.subr.mxu0 0.0
    %4417 = vmatpush1.xpose.msra.mxu0 0.0
    %4418 = vmatprep.subr.mxu0 0.0
    %4419 = vmatpush1.xpose.msra.mxu0 0.0
    %4420 = vmatprep.subr.mxu0 0.0
    %4421 = vmatpush1.xpose.msra.mxu0 0.0
    %4422 = vmatprep.subr.mxu0 0.0
    %4423 = vmatpush1.xpose.msra.mxu0 0.0
    %4424 = vmatprep.subr.mxu0 0.0
    %4425 = vmatpush1.xpose.msra.mxu0 0.0
    %4426 = vmatprep.subr.mxu0 0.0
    %4427 = vmatpush1.xpose.msra.mxu0 0.0
    %4428 = vmatprep.subr.mxu0 0.0
    %4429 = vmatpush1.xpose.msra.mxu0 0.0
    %4430 = vmatprep.subr.mxu0 0.0
    %4431 = vmatpush1.xpose.msra.mxu0 0.0
    %4432 = vmatprep.subr.mxu0 0.0
    %4433 = vmatpush1.xpose.msra.mxu0 0.0
    %4434 = vmatprep.mubr.f32.mxu0 0.0
    %v4435 = vand.u32 %v4365, 4294901760
    %v4436 = vsub.f32 %v4365, %v4435
    %v4437 = vand.u32 %v4436, 4294901760
    %v4438 = vsub.f32 %v4436, %v4437
    %v4439 = vand.u32 %v4438, 4294901760
    %4440 = vmatmul.mubr.f32.gmra.mrb[0].mxu0 %v4439
    %v4441 = vpop.f32.mrb[0].mxu0
    %v4442 = vadd.f32 0.0, %v4441
    %v4443 = vpop.f32.mrb[0].mxu0
    %4444 = vdwg.mxu0
    %4445 = vmatprep.subr.mxu0 0.0
    %v4446 = vand.u32 %v4367, 4294901760
    %v4447 = vsub.f32 %v4367, %v4446
    %v4448 = vand.u32 %v4447, 4294901760
    %v4449 = vsub.f32 %v4447, %v4448
    %v4450 = vand.u32 %v4449, 4294901760
    %4451 = vmatpush1.xpose.msra.mxu0 %v4450
    %4452 = vmatprep.subr.mxu0 0.0
    %4453 = vmatpush1.xpose.msra.mxu0 0.0
    %4454 = vmatprep.subr.mxu0 0.0
    %4455 = vmatpush1.xpose.msra.mxu0 0.0
    %4456 = vmatprep.subr.mxu0 0.0
    %4457 = vmatpush1.xpose.msra.mxu0 0.0
    %4458 = vmatprep.subr.mxu0 0.0
    %4459 = vmatpush1.xpose.msra.mxu0 0.0
    %4460 = vmatprep.subr.mxu0 0.0
    %4461 = vmatpush1.xpose.msra.mxu0 0.0
    %4462 = vmatprep.subr.mxu0 0.0
    %4463 = vmatpush1.xpose.msra.mxu0 0.0
    %4464 = vmatprep.subr.mxu0 0.0
    %4465 = vmatpush1.xpose.msra.mxu0 0.0
    %4466 = vmatprep.subr.mxu0 0.0
    %4467 = vmatpush1.xpose.msra.mxu0 0.0
    %4468 = vmatprep.subr.mxu0 0.0
    %4469 = vmatpush1.xpose.msra.mxu0 0.0
    %4470 = vmatprep.subr.mxu0 0.0
    %4471 = vmatpush1.xpose.msra.mxu0 0.0
    %4472 = vmatprep.subr.mxu0 0.0
    %4473 = vmatpush1.xpose.msra.mxu0 0.0
    %4474 = vmatprep.subr.mxu0 0.0
    %4475 = vmatpush1.xpose.msra.mxu0 0.0
    %4476 = vmatprep.subr.mxu0 0.0
    %4477 = vmatpush1.xpose.msra.mxu0 0.0
    %4478 = vmatprep.subr.mxu0 0.0
    %4479 = vmatpush1.xpose.msra.mxu0 0.0
    %4480 = vmatprep.subr.mxu0 0.0
    %4481 = vmatpush1.xpose.msra.mxu0 0.0
    %4482 = vmatprep.subr.mxu0 0.0
    %4483 = vmatpush1.xpose.msra.mxu0 0.0
    %4484 = vmatprep.subr.mxu0 0.0
    %4485 = vmatpush1.xpose.msra.mxu0 0.0
    %4486 = vmatprep.subr.mxu0 0.0
    %4487 = vmatpush1.xpose.msra.mxu0 0.0
    %4488 = vmatprep.subr.mxu0 0.0
    %4489 = vmatpush1.xpose.msra.mxu0 0.0
    %4490 = vmatprep.subr.mxu0 0.0
    %4491 = vmatpush1.xpose.msra.mxu0 0.0
    %4492 = vmatprep.subr.mxu0 0.0
    %4493 = vmatpush1.xpose.msra.mxu0 0.0
    %4494 = vmatprep.subr.mxu0 0.0
    %4495 = vmatpush1.xpose.msra.mxu0 0.0
    %4496 = vmatprep.subr.mxu0 0.0
    %4497 = vmatpush1.xpose.msra.mxu0 0.0
    %4498 = vmatprep.subr.mxu0 0.0
    %4499 = vmatpush1.xpose.msra.mxu0 0.0
    %4500 = vmatprep.subr.mxu0 0.0
    %4501 = vmatpush1.xpose.msra.mxu0 0.0
    %4502 = vmatprep.subr.mxu0 0.0
    %4503 = vmatpush1.xpose.msra.mxu0 0.0
    %4504 = vmatprep.subr.mxu0 0.0
    %4505 = vmatpush1.xpose.msra.mxu0 0.0
    %4506 = vmatprep.subr.mxu0 0.0
    %4507 = vmatpush1.xpose.msra.mxu0 0.0
    %4508 = vmatprep.subr.mxu0 0.0
    %4509 = vmatpush1.xpose.msra.mxu0 0.0
    %4510 = vmatprep.subr.mxu0 0.0
    %4511 = vmatpush1.xpose.msra.mxu0 0.0
    %4512 = vmatprep.subr.mxu0 0.0
    %4513 = vmatpush1.xpose.msra.mxu0 0.0
    %4514 = vmatprep.mubr.f32.mxu0 0.0
    %v4515 = vand.u32 %v4365, 4294901760
    %4516 = vmatmul.mubr.f32.gmra.mrb[0].mxu0 %v4515
    %v4517 = vpop.f32.mrb[0].mxu0
    %v4518 = vadd.f32 %v4442, %v4517
    %v4519 = vpop.f32.mrb[0].mxu0
    %4520 = vdwg.mxu0
    %4521 = vmatprep.subr.mxu0 0.0
    %v4522 = vand.u32 %v4367, 4294901760
    %v4523 = vsub.f32 %v4367, %v4522
    %4524 = vmatpush1.xpose.msra.mxu0 %v4523
    %4525 = vmatprep.subr.mxu0 0.0
    %4526 = vmatpush1.xpose.msra.mxu0 0.0
    %4527 = vmatprep.subr.mxu0 0.0
    %4528 = vmatpush1.xpose.msra.mxu0 0.0
    %4529 = vmatprep.subr.mxu0 0.0
    %4530 = vmatpush1.xpose.msra.mxu0 0.0
    %4531 = vmatprep.subr.mxu0 0.0
    %4532 = vmatpush1.xpose.msra.mxu0 0.0
    %4533 = vmatprep.subr.mxu0 0.0
    %4534 = vmatpush1.xpose.msra.mxu0 0.0
    %4535 = vmatprep.subr.mxu0 0.0
    %4536 = vmatpush1.xpose.msra.mxu0 0.0
    %4537 = vmatprep.subr.mxu0 0.0
    %4538 = vmatpush1.xpose.msra.mxu0 0.0
    %4539 = vmatprep.subr.mxu0 0.0
    %4540 = vmatpush1.xpose.msra.mxu0 0.0
    %4541 = vmatprep.subr.mxu0 0.0
    %4542 = vmatpush1.xpose.msra.mxu0 0.0
    %4543 = vmatprep.subr.mxu0 0.0
    %4544 = vmatpush1.xpose.msra.mxu0 0.0
    %4545 = vmatprep.subr.mxu0 0.0
    %4546 = vmatpush1.xpose.msra.mxu0 0.0
    %4547 = vmatprep.subr.mxu0 0.0
    %4548 = vmatpush1.xpose.msra.mxu0 0.0
    %4549 = vmatprep.subr.mxu0 0.0
    %4550 = vmatpush1.xpose.msra.mxu0 0.0
    %4551 = vmatprep.subr.mxu0 0.0
    %4552 = vmatpush1.xpose.msra.mxu0 0.0
    %4553 = vmatprep.subr.mxu0 0.0
    %4554 = vmatpush1.xpose.msra.mxu0 0.0
    %4555 = vmatprep.subr.mxu0 0.0
    %4556 = vmatpush1.xpose.msra.mxu0 0.0
    %4557 = vmatprep.subr.mxu0 0.0
    %4558 = vmatpush1.xpose.msra.mxu0 0.0
    %4559 = vmatprep.subr.mxu0 0.0
    %4560 = vmatpush1.xpose.msra.mxu0 0.0
    %4561 = vmatprep.subr.mxu0 0.0
    %4562 = vmatpush1.xpose.msra.mxu0 0.0
    %4563 = vmatprep.subr.mxu0 0.0
    %4564 = vmatpush1.xpose.msra.mxu0 0.0
    %4565 = vmatprep.subr.mxu0 0.0
    %4566 = vmatpush1.xpose.msra.mxu0 0.0
    %4567 = vmatprep.subr.mxu0 0.0
    %4568 = vmatpush1.xpose.msra.mxu0 0.0
    %4569 = vmatprep.subr.mxu0 0.0
    %4570 = vmatpush1.xpose.msra.mxu0 0.0
    %4571 = vmatprep.subr.mxu0 0.0
    %4572 = vmatpush1.xpose.msra.mxu0 0.0
    %4573 = vmatprep.subr.mxu0 0.0
    %4574 = vmatpush1.xpose.msra.mxu0 0.0
    %4575 = vmatprep.subr.mxu0 0.0
    %4576 = vmatpush1.xpose.msra.mxu0 0.0
    %4577 = vmatprep.subr.mxu0 0.0
    %4578 = vmatpush1.xpose.msra.mxu0 0.0
    %4579 = vmatprep.subr.mxu0 0.0
    %4580 = vmatpush1.xpose.msra.mxu0 0.0
    %4581 = vmatprep.subr.mxu0 0.0
    %4582 = vmatpush1.xpose.msra.mxu0 0.0
    %4583 = vmatprep.subr.mxu0 0.0
    %4584 = vmatpush1.xpose.msra.mxu0 0.0
    %4585 = vmatprep.subr.mxu0 0.0
    %4586 = vmatpush1.xpose.msra.mxu0 0.0
    %4587 = vmatprep.mubr.f32.mxu0 0.0
    %v4588 = vand.u32 %v4365, 4294901760
    %v4589 = vsub.f32 %v4365, %v4588
    %4590 = vmatmul.mubr.f32.gmra.mrb[0].mxu0 %v4589
    %v4591 = vpop.f32.mrb[0].mxu0
    %v4592 = vadd.f32 %v4518, %v4591
    %v4593 = vpop.f32.mrb[0].mxu0
    %4594 = vdwg.mxu0
    %4595 = vmatprep.subr.mxu0 0.0
    %v4596 = vand.u32 %v4367, 4294901760
    %4597 = vmatpush1.xpose.msra.mxu0 %v4596
    %4598 = vmatprep.subr.mxu0 0.0
    %4599 = vmatpush1.xpose.msra.mxu0 0.0
    %4600 = vmatprep.subr.mxu0 0.0
    %4601 = vmatpush1.xpose.msra.mxu0 0.0
    %4602 = vmatprep.subr.mxu0 0.0
    %4603 = vmatpush1.xpose.msra.mxu0 0.0
    %4604 = vmatprep.subr.mxu0 0.0
    %4605 = vmatpush1.xpose.msra.mxu0 0.0
    %4606 = vmatprep.subr.mxu0 0.0
    %4607 = vmatpush1.xpose.msra.mxu0 0.0
    %4608 = vmatprep.subr.mxu0 0.0
    %4609 = vmatpush1.xpose.msra.mxu0 0.0
    %4610 = vmatprep.subr.mxu0 0.0
    %4611 = vmatpush1.xpose.msra.mxu0 0.0
    %4612 = vmatprep.subr.mxu0 0.0
    %4613 = vmatpush1.xpose.msra.mxu0 0.0
    %4614 = vmatprep.subr.mxu0 0.0
    %4615 = vmatpush1.xpose.msra.mxu0 0.0
    %4616 = vmatprep.subr.mxu0 0.0
    %4617 = vmatpush1.xpose.msra.mxu0 0.0
    %4618 = vmatprep.subr.mxu0 0.0
    %4619 = vmatpush1.xpose.msra.mxu0 0.0
    %4620 = vmatprep.subr.mxu0 0.0
    %4621 = vmatpush1.xpose.msra.mxu0 0.0
    %4622 = vmatprep.subr.mxu0 0.0
    %4623 = vmatpush1.xpose.msra.mxu0 0.0
    %4624 = vmatprep.subr.mxu0 0.0
    %4625 = vmatpush1.xpose.msra.mxu0 0.0
    %4626 = vmatprep.subr.mxu0 0.0
    %4627 = vmatpush1.xpose.msra.mxu0 0.0
    %4628 = vmatprep.subr.mxu0 0.0
    %4629 = vmatpush1.xpose.msra.mxu0 0.0
    %4630 = vmatprep.subr.mxu0 0.0
    %4631 = vmatpush1.xpose.msra.mxu0 0.0
    %4632 = vmatprep.subr.mxu0 0.0
    %4633 = vmatpush1.xpose.msra.mxu0 0.0
    %4634 = vmatprep.subr.mxu0 0.0
    %4635 = vmatpush1.xpose.msra.mxu0 0.0
    %4636 = vmatprep.subr.mxu0 0.0
    %4637 = vmatpush1.xpose.msra.mxu0 0.0
    %4638 = vmatprep.subr.mxu0 0.0
    %4639 = vmatpush1.xpose.msra.mxu0 0.0
    %4640 = vmatprep.subr.mxu0 0.0
    %4641 = vmatpush1.xpose.msra.mxu0 0.0
    %4642 = vmatprep.subr.mxu0 0.0
    %4643 = vmatpush1.xpose.msra.mxu0 0.0
    %4644 = vmatprep.subr.mxu0 0.0
    %4645 = vmatpush1.xpose.msra.mxu0 0.0
    %4646 = vmatprep.subr.mxu0 0.0
    %4647 = vmatpush1.xpose.msra.mxu0 0.0
    %4648 = vmatprep.subr.mxu0 0.0
    %4649 = vmatpush1.xpose.msra.mxu0 0.0
    %4650 = vmatprep.subr.mxu0 0.0
    %4651 = vmatpush1.xpose.msra.mxu0 0.0
    %4652 = vmatprep.subr.mxu0 0.0
    %4653 = vmatpush1.xpose.msra.mxu0 0.0
    %4654 = vmatprep.subr.mxu0 0.0
    %4655 = vmatpush1.xpose.msra.mxu0 0.0
    %4656 = vmatprep.subr.mxu0 0.0
    %4657 = vmatpush1.xpose.msra.mxu0 0.0
    %4658 = vmatprep.subr.mxu0 0.0
    %4659 = vmatpush1.xpose.msra.mxu0 0.0
    %4660 = vmatprep.mubr.f32.mxu0 0.0
    %v4661 = vand.u32 %v4365, 4294901760
    %v4662 = vsub.f32 %v4365, %v4661
    %v4663 = vand.u32 %v4662, 4294901760
    %4664 = vmatmul.mubr.f32.gmra.mrb[0].mxu0 %v4663
    %v4665 = vpop.f32.mrb[0].mxu0
    %v4666 = vadd.f32 %v4592, %v4665
    %v4667 = vpop.f32.mrb[0].mxu0
    %4668 = vdwg.mxu0
    %4669 = vmatprep.subr.mxu0 0.0
    %v4670 = vand.u32 %v4367, 4294901760
    %v4671 = vsub.f32 %v4367, %v4670
    %v4672 = vand.u32 %v4671, 4294901760
    %4673 = vmatpush1.xpose.msra.mxu0 %v4672
    %4674 = vmatprep.subr.mxu0 0.0
    %4675 = vmatpush1.xpose.msra.mxu0 0.0
    %4676 = vmatprep.subr.mxu0 0.0
    %4677 = vmatpush1.xpose.msra.mxu0 0.0
    %4678 = vmatprep.subr.mxu0 0.0
    %4679 = vmatpush1.xpose.msra.mxu0 0.0
    %4680 = vmatprep.subr.mxu0 0.0
    %4681 = vmatpush1.xpose.msra.mxu0 0.0
    %4682 = vmatprep.subr.mxu0 0.0
    %4683 = vmatpush1.xpose.msra.mxu0 0.0
    %4684 = vmatprep.subr.mxu0 0.0
    %4685 = vmatpush1.xpose.msra.mxu0 0.0
    %4686 = vmatprep.subr.mxu0 0.0
    %4687 = vmatpush1.xpose.msra.mxu0 0.0
    %4688 = vmatprep.subr.mxu0 0.0
    %4689 = vmatpush1.xpose.msra.mxu0 0.0
    %4690 = vmatprep.subr.mxu0 0.0
    %4691 = vmatpush1.xpose.msra.mxu0 0.0
    %4692 = vmatprep.subr.mxu0 0.0
    %4693 = vmatpush1.xpose.msra.mxu0 0.0
    %4694 = vmatprep.subr.mxu0 0.0
    %4695 = vmatpush1.xpose.msra.mxu0 0.0
    %4696 = vmatprep.subr.mxu0 0.0
    %4697 = vmatpush1.xpose.msra.mxu0 0.0
    %4698 = vmatprep.subr.mxu0 0.0
    %4699 = vmatpush1.xpose.msra.mxu0 0.0
    %4700 = vmatprep.subr.mxu0 0.0
    %4701 = vmatpush1.xpose.msra.mxu0 0.0
    %4702 = vmatprep.subr.mxu0 0.0
    %4703 = vmatpush1.xpose.msra.mxu0 0.0
    %4704 = vmatprep.subr.mxu0 0.0
    %4705 = vmatpush1.xpose.msra.mxu0 0.0
    %4706 = vmatprep.subr.mxu0 0.0
    %4707 = vmatpush1.xpose.msra.mxu0 0.0
    %4708 = vmatprep.subr.mxu0 0.0
    %4709 = vmatpush1.xpose.msra.mxu0 0.0
    %4710 = vmatprep.subr.mxu0 0.0
    %4711 = vmatpush1.xpose.msra.mxu0 0.0
    %4712 = vmatprep.subr.mxu0 0.0
    %4713 = vmatpush1.xpose.msra.mxu0 0.0
    %4714 = vmatprep.subr.mxu0 0.0
    %4715 = vmatpush1.xpose.msra.mxu0 0.0
    %4716 = vmatprep.subr.mxu0 0.0
    %4717 = vmatpush1.xpose.msra.mxu0 0.0
    %4718 = vmatprep.subr.mxu0 0.0
    %4719 = vmatpush1.xpose.msra.mxu0 0.0
    %4720 = vmatprep.subr.mxu0 0.0
    %4721 = vmatpush1.xpose.msra.mxu0 0.0
    %4722 = vmatprep.subr.mxu0 0.0
    %4723 = vmatpush1.xpose.msra.mxu0 0.0
    %4724 = vmatprep.subr.mxu0 0.0
    %4725 = vmatpush1.xpose.msra.mxu0 0.0
    %4726 = vmatprep.subr.mxu0 0.0
    %4727 = vmatpush1.xpose.msra.mxu0 0.0
    %4728 = vmatprep.subr.mxu0 0.0
    %4729 = vmatpush1.xpose.msra.mxu0 0.0
    %4730 = vmatprep.subr.mxu0 0.0
    %4731 = vmatpush1.xpose.msra.mxu0 0.0
    %4732 = vmatprep.subr.mxu0 0.0
    %4733 = vmatpush1.xpose.msra.mxu0 0.0
    %4734 = vmatprep.subr.mxu0 0.0
    %4735 = vmatpush1.xpose.msra.mxu0 0.0
    %4736 = vmatprep.mubr.f32.mxu0 0.0
    %v4737 = vand.u32 %v4365, 4294901760
    %4738 = vmatmul.mubr.f32.gmra.mrb[0].mxu0 %v4737
    %v4739 = vpop.f32.mrb[0].mxu0
    %v4740 = vadd.f32 %v4666, %v4739
    %v4741 = vpop.f32.mrb[0].mxu0
    %4742 = vdwg.mxu0
    %4743 = vmatprep.subr.mxu0 0.0
    %v4744 = vand.u32 %v4367, 4294901760
    %4745 = vmatpush1.xpose.msra.mxu0 %v4744
    %4746 = vmatprep.subr.mxu0 0.0
    %4747 = vmatpush1.xpose.msra.mxu0 0.0
    %4748 = vmatprep.subr.mxu0 0.0
    %4749 = vmatpush1.xpose.msra.mxu0 0.0
    %4750 = vmatprep.subr.mxu0 0.0
    %4751 = vmatpush1.xpose.msra.mxu0 0.0
    %4752 = vmatprep.subr.mxu0 0.0
    %4753 = vmatpush1.xpose.msra.mxu0 0.0
    %4754 = vmatprep.subr.mxu0 0.0
    %4755 = vmatpush1.xpose.msra.mxu0 0.0
    %4756 = vmatprep.subr.mxu0 0.0
    %4757 = vmatpush1.xpose.msra.mxu0 0.0
    %4758 = vmatprep.subr.mxu0 0.0
    %4759 = vmatpush1.xpose.msra.mxu0 0.0
    %4760 = vmatprep.subr.mxu0 0.0
    %4761 = vmatpush1.xpose.msra.mxu0 0.0
    %4762 = vmatprep.subr.mxu0 0.0
    %4763 = vmatpush1.xpose.msra.mxu0 0.0
    %4764 = vmatprep.subr.mxu0 0.0
    %4765 = vmatpush1.xpose.msra.mxu0 0.0
    %4766 = vmatprep.subr.mxu0 0.0
    %4767 = vmatpush1.xpose.msra.mxu0 0.0
    %4768 = vmatprep.subr.mxu0 0.0
    %4769 = vmatpush1.xpose.msra.mxu0 0.0
    %4770 = vmatprep.subr.mxu0 0.0
    %4771 = vmatpush1.xpose.msra.mxu0 0.0
    %4772 = vmatprep.subr.mxu0 0.0
    %4773 = vmatpush1.xpose.msra.mxu0 0.0
    %4774 = vmatprep.subr.mxu0 0.0
    %4775 = vmatpush1.xpose.msra.mxu0 0.0
    %4776 = vmatprep.subr.mxu0 0.0
    %4777 = vmatpush1.xpose.msra.mxu0 0.0
    %4778 = vmatprep.subr.mxu0 0.0
    %4779 = vmatpush1.xpose.msra.mxu0 0.0
    %4780 = vmatprep.subr.mxu0 0.0
    %4781 = vmatpush1.xpose.msra.mxu0 0.0
    %4782 = vmatprep.subr.mxu0 0.0
    %4783 = vmatpush1.xpose.msra.mxu0 0.0
    %4784 = vmatprep.subr.mxu0 0.0
    %4785 = vmatpush1.xpose.msra.mxu0 0.0
    %4786 = vmatprep.subr.mxu0 0.0
    %4787 = vmatpush1.xpose.msra.mxu0 0.0
    %4788 = vmatprep.subr.mxu0 0.0
    %4789 = vmatpush1.xpose.msra.mxu0 0.0
    %4790 = vmatprep.subr.mxu0 0.0
    %4791 = vmatpush1.xpose.msra.mxu0 0.0
    %4792 = vmatprep.subr.mxu0 0.0
    %4793 = vmatpush1.xpose.msra.mxu0 0.0
    %4794 = vmatprep.subr.mxu0 0.0
    %4795 = vmatpush1.xpose.msra.mxu0 0.0
    %4796 = vmatprep.subr.mxu0 0.0
    %4797 = vmatpush1.xpose.msra.mxu0 0.0
    %4798 = vmatprep.subr.mxu0 0.0
    %4799 = vmatpush1.xpose.msra.mxu0 0.0
    %4800 = vmatprep.subr.mxu0 0.0
    %4801 = vmatpush1.xpose.msra.mxu0 0.0
    %4802 = vmatprep.subr.mxu0 0.0
    %4803 = vmatpush1.xpose.msra.mxu0 0.0
    %4804 = vmatprep.subr.mxu0 0.0
    %4805 = vmatpush1.xpose.msra.mxu0 0.0
    %4806 = vmatprep.subr.mxu0 0.0
    %4807 = vmatpush1.xpose.msra.mxu0 0.0
    %4808 = vmatprep.mubr.f32.mxu0 0.0
    %v4809 = vand.u32 %v4365, 4294901760
    %4810 = vmatmul.mubr.f32.gmra.mrb[0].mxu0 %v4809
    %v4811 = vpop.f32.mrb[0].mxu0
    %v4812 = vadd.f32 %v4740, %v4811
    %v4813 = vpop.f32.mrb[0].mxu0
    %4814 = vdwg.mxu0
    %v4815 = vmul.f32 %v4812, 0.35355338
    %v4817 = vlaneseq
    %v4818 = vshrl.u32 %v4817, 7
    %v4819 = vsub.s32 0, %v4818
    %v4820 = vrot.slane %v648, %v4819
    %v4822 = vadd.f32 %v4815, %v4820
    %v4823 = vsel %vm652, %v4822, -inf
    %4824 = vmax.xlane.f32.xlu0 %v4823
    %v4825 = vpop.xlane.xlu0 %4824
    %v4826 = vsub.f32 %v4822, %v4825
    %v4827 = vmul.f32 %v4826, 1.442695
    %v4828 = vpow.pop %v4827
    %v4829 = vsel %vm652, %v4828, 0.0
    %4830 = vadd.xlane.f32.xlu0 %v4829
    %v4831 = vpop.xlane.xlu0 %4830
    %4832 = vrot.lane.b32.xlu0 %v644, 64
    %v4833 = vpop.permute.xlu0 %4832
    %v4836 = vsel %vm652, %v4828, 0
    %4838 = vmatprep.subr.mxu0 0.0
    %v4839 = vand.u32 %v4833, 4294901760
    %4840 = vmatpush1.msra.mxu0 %v4839
    %4841 = vmatprep.subr.mxu0 0.0
    %4842 = vmatpush1.msra.mxu0 0.0
    %4843 = vmatprep.subr.mxu0 0.0
    %4844 = vmatpush1.msra.mxu0 0.0
    %4845 = vmatprep.subr.mxu0 0.0
    %4846 = vmatpush1.msra.mxu0 0.0
    %4847 = vmatprep.subr.mxu0 0.0
    %4848 = vmatpush1.msra.mxu0 0.0
    %4849 = vmatprep.subr.mxu0 0.0
    %4850 = vmatpush1.msra.mxu0 0.0
    %4851 = vmatprep.subr.mxu0 0.0
    %4852 = vmatpush1.msra.mxu0 0.0
    %4853 = vmatprep.subr.mxu0 0.0
    %4854 = vmatpush1.msra.mxu0 0.0
    %4855 = vmatprep.subr.mxu0 0.0
    %4856 = vmatpush1.msra.mxu0 0.0
    %4857 = vmatprep.subr.mxu0 0.0
    %4858 = vmatpush1.msra.mxu0 0.0
    %4859 = vmatprep.subr.mxu0 0.0
    %4860 = vmatpush1.msra.mxu0 0.0
    %4861 = vmatprep.subr.mxu0 0.0
    %4862 = vmatpush1.msra.mxu0 0.0
    %4863 = vmatprep.subr.mxu0 0.0
    %4864 = vmatpush1.msra.mxu0 0.0
    %4865 = vmatprep.subr.mxu0 0.0
    %4866 = vmatpush1.msra.mxu0 0.0
    %4867 = vmatprep.subr.mxu0 0.0
    %4868 = vmatpush1.msra.mxu0 0.0
    %4869 = vmatprep.subr.mxu0 0.0
    %4870 = vmatpush1.msra.mxu0 0.0
    %4871 = vmatprep.subr.mxu0 0.0
    %4872 = vmatpush1.msra.mxu0 0.0
    %4873 = vmatprep.subr.mxu0 0.0
    %4874 = vmatpush1.msra.mxu0 0.0
    %4875 = vmatprep.subr.mxu0 0.0
    %4876 = vmatpush1.msra.mxu0 0.0
    %4877 = vmatprep.subr.mxu0 0.0
    %4878 = vmatpush1.msra.mxu0 0.0
    %4879 = vmatprep.subr.mxu0 0.0
    %4880 = vmatpush1.msra.mxu0 0.0
    %4881 = vmatprep.subr.mxu0 0.0
    %4882 = vmatpush1.msra.mxu0 0.0
    %4883 = vmatprep.subr.mxu0 0.0
    %4884 = vmatpush1.msra.mxu0 0.0
    %4885 = vmatprep.subr.mxu0 0.0
    %4886 = vmatpush1.msra.mxu0 0.0
    %4887 = vmatprep.subr.mxu0 0.0
    %4888 = vmatpush1.msra.mxu0 0.0
    %4889 = vmatprep.subr.mxu0 0.0
    %4890 = vmatpush1.msra.mxu0 0.0
    %4891 = vmatprep.subr.mxu0 0.0
    %4892 = vmatpush1.msra.mxu0 0.0
    %4893 = vmatprep.subr.mxu0 0.0
    %4894 = vmatpush1.msra.mxu0 0.0
    %4895 = vmatprep.subr.mxu0 0.0
    %4896 = vmatpush1.msra.mxu0 0.0
    %4897 = vmatprep.subr.mxu0 0.0
    %4898 = vmatpush1.msra.mxu0 0.0
    %4899 = vmatprep.subr.mxu0 0.0
    %4900 = vmatpush1.msra.mxu0 0.0
    %4901 = vmatprep.subr.mxu0 0.0
    %4902 = vmatpush1.msra.mxu0 0.0
    %4903 = vmatprep.mubr.f32.mxu0 0.0
    %v4904 = vand.u32 %v4836, 4294901760
    %v4905 = vsub.f32 %v4836, %v4904
    %v4906 = vand.u32 %v4905, 4294901760
    %v4907 = vsub.f32 %v4905, %v4906
    %v4908 = vand.u32 %v4907, 4294901760
    %4909 = vmatmul.mubr.f32.gmra.mrb[0].mxu0 %v4908
    %v4910 = vpop.f32.mrb[0].mxu0
    %v4911 = vadd.f32 0.0, %v4910
    %v4912 = vpop.f32.mrb[0].mxu0
    %4913 = vdwg.mxu0
    %4914 = vmatprep.subr.mxu0 0.0
    %v4915 = vand.u32 %v4833, 4294901760
    %v4916 = vsub.f32 %v4833, %v4915
    %v4917 = vand.u32 %v4916, 4294901760
    %v4918 = vsub.f32 %v4916, %v4917
    %v4919 = vand.u32 %v4918, 4294901760
    %4920 = vmatpush1.msra.mxu0 %v4919
    %4921 = vmatprep.subr.mxu0 0.0
    %4922 = vmatpush1.msra.mxu0 0.0
    %4923 = vmatprep.subr.mxu0 0.0
    %4924 = vmatpush1.msra.mxu0 0.0
    %4925 = vmatprep.subr.mxu0 0.0
    %4926 = vmatpush1.msra.mxu0 0.0
    %4927 = vmatprep.subr.mxu0 0.0
    %4928 = vmatpush1.msra.mxu0 0.0
    %4929 = vmatprep.subr.mxu0 0.0
    %4930 = vmatpush1.msra.mxu0 0.0
    %4931 = vmatprep.subr.mxu0 0.0
    %4932 = vmatpush1.msra.mxu0 0.0
    %4933 = vmatprep.subr.mxu0 0.0
    %4934 = vmatpush1.msra.mxu0 0.0
    %4935 = vmatprep.subr.mxu0 0.0
    %4936 = vmatpush1.msra.mxu0 0.0
    %4937 = vmatprep.subr.mxu0 0.0
    %4938 = vmatpush1.msra.mxu0 0.0
    %4939 = vmatprep.subr.mxu0 0.0
    %4940 = vmatpush1.msra.mxu0 0.0
    %4941 = vmatprep.subr.mxu0 0.0
    %4942 = vmatpush1.msra.mxu0 0.0
    %4943 = vmatprep.subr.mxu0 0.0
    %4944 = vmatpush1.msra.mxu0 0.0
    %4945 = vmatprep.subr.mxu0 0.0
    %4946 = vmatpush1.msra.mxu0 0.0
    %4947 = vmatprep.subr.mxu0 0.0
    %4948 = vmatpush1.msra.mxu0 0.0
    %4949 = vmatprep.subr.mxu0 0.0
    %4950 = vmatpush1.msra.mxu0 0.0
    %4951 = vmatprep.subr.mxu0 0.0
    %4952 = vmatpush1.msra.mxu0 0.0
    %4953 = vmatprep.subr.mxu0 0.0
    %4954 = vmatpush1.msra.mxu0 0.0
    %4955 = vmatprep.subr.mxu0 0.0
    %4956 = vmatpush1.msra.mxu0 0.0
    %4957 = vmatprep.subr.mxu0 0.0
    %4958 = vmatpush1.msra.mxu0 0.0
    %4959 = vmatprep.subr.mxu0 0.0
    %4960 = vmatpush1.msra.mxu0 0.0
    %4961 = vmatprep.subr.mxu0 0.0
    %4962 = vmatpush1.msra.mxu0 0.0
    %4963 = vmatprep.subr.mxu0 0.0
    %4964 = vmatpush1.msra.mxu0 0.0
    %4965 = vmatprep.subr.mxu0 0.0
    %4966 = vmatpush1.msra.mxu0 0.0
    %4967 = vmatprep.subr.mxu0 0.0
    %4968 = vmatpush1.msra.mxu0 0.0
    %4969 = vmatprep.subr.mxu0 0.0
    %4970 = vmatpush1.msra.mxu0 0.0
    %4971 = vmatprep.subr.mxu0 0.0
    %4972 = vmatpush1.msra.mxu0 0.0
    %4973 = vmatprep.subr.mxu0 0.0
    %4974 = vmatpush1.msra.mxu0 0.0
    %4975 = vmatprep.subr.mxu0 0.0
    %4976 = vmatpush1.msra.mxu0 0.0
    %4977 = vmatprep.subr.mxu0 0.0
    %4978 = vmatpush1.msra.mxu0 0.0
    %4979 = vmatprep.subr.mxu0 0.0
    %4980 = vmatpush1.msra.mxu0 0.0
    %4981 = vmatprep.subr.mxu0 0.0
    %4982 = vmatpush1.msra.mxu0 0.0
    %4983 = vmatprep.mubr.f32.mxu0 0.0
    %v4984 = vand.u32 %v4836, 4294901760
    %4985 = vmatmul.mubr.f32.gmra.mrb[0].mxu0 %v4984
    %v4986 = vpop.f32.mrb[0].mxu0
    %v4987 = vadd.f32 %v4911, %v4986
    %v4988 = vpop.f32.mrb[0].mxu0
    %4989 = vdwg.mxu0
    %4990 = vmatprep.subr.mxu0 0.0
    %v4991 = vand.u32 %v4833, 4294901760
    %v4992 = vsub.f32 %v4833, %v4991
    %4993 = vmatpush1.msra.mxu0 %v4992
    %4994 = vmatprep.subr.mxu0 0.0
    %4995 = vmatpush1.msra.mxu0 0.0
    %4996 = vmatprep.subr.mxu0 0.0
    %4997 = vmatpush1.msra.mxu0 0.0
    %4998 = vmatprep.subr.mxu0 0.0
    %4999 = vmatpush1.msra.mxu0 0.0
    %5000 = vmatprep.subr.mxu0 0.0
    %5001 = vmatpush1.msra.mxu0 0.0
    %5002 = vmatprep.subr.mxu0 0.0
    %5003 = vmatpush1.msra.mxu0 0.0
    %5004 = vmatprep.subr.mxu0 0.0
    %5005 = vmatpush1.msra.mxu0 0.0
    %5006 = vmatprep.subr.mxu0 0.0
    %5007 = vmatpush1.msra.mxu0 0.0
    %5008 = vmatprep.subr.mxu0 0.0
    %5009 = vmatpush1.msra.mxu0 0.0
    %5010 = vmatprep.subr.mxu0 0.0
    %5011 = vmatpush1.msra.mxu0 0.0
    %5012 = vmatprep.subr.mxu0 0.0
    %5013 = vmatpush1.msra.mxu0 0.0
    %5014 = vmatprep.subr.mxu0 0.0
    %5015 = vmatpush1.msra.mxu0 0.0
    %5016 = vmatprep.subr.mxu0 0.0
    %5017 = vmatpush1.msra.mxu0 0.0
    %5018 = vmatprep.subr.mxu0 0.0
    %5019 = vmatpush1.msra.mxu0 0.0
    %5020 = vmatprep.subr.mxu0 0.0
    %5021 = vmatpush1.msra.mxu0 0.0
    %5022 = vmatprep.subr.mxu0 0.0
    %5023 = vmatpush1.msra.mxu0 0.0
    %5024 = vmatprep.subr.mxu0 0.0
    %5025 = vmatpush1.msra.mxu0 0.0
    %5026 = vmatprep.subr.mxu0 0.0
    %5027 = vmatpush1.msra.mxu0 0.0
    %5028 = vmatprep.subr.mxu0 0.0
    %5029 = vmatpush1.msra.mxu0 0.0
    %5030 = vmatprep.subr.mxu0 0.0
    %5031 = vmatpush1.msra.mxu0 0.0
    %5032 = vmatprep.subr.mxu0 0.0
    %5033 = vmatpush1.msra.mxu0 0.0
    %5034 = vmatprep.subr.mxu0 0.0
    %5035 = vmatpush1.msra.mxu0 0.0
    %5036 = vmatprep.subr.mxu0 0.0
    %5037 = vmatpush1.msra.mxu0 0.0
    %5038 = vmatprep.subr.mxu0 0.0
    %5039 = vmatpush1.msra.mxu0 0.0
    %5040 = vmatprep.subr.mxu0 0.0
    %5041 = vmatpush1.msra.mxu0 0.0
    %5042 = vmatprep.subr.mxu0 0.0
    %5043 = vmatpush1.msra.mxu0 0.0
    %5044 = vmatprep.subr.mxu0 0.0
    %5045 = vmatpush1.msra.mxu0 0.0
    %5046 = vmatprep.subr.mxu0 0.0
    %5047 = vmatpush1.msra.mxu0 0.0
    %5048 = vmatprep.subr.mxu0 0.0
    %5049 = vmatpush1.msra.mxu0 0.0
    %5050 = vmatprep.subr.mxu0 0.0
    %5051 = vmatpush1.msra.mxu0 0.0
    %5052 = vmatprep.subr.mxu0 0.0
    %5053 = vmatpush1.msra.mxu0 0.0
    %5054 = vmatprep.subr.mxu0 0.0
    %5055 = vmatpush1.msra.mxu0 0.0
    %5056 = vmatprep.mubr.f32.mxu0 0.0
    %v5057 = vand.u32 %v4836, 4294901760
    %v5058 = vsub.f32 %v4836, %v5057
    %5059 = vmatmul.mubr.f32.gmra.mrb[0].mxu0 %v5058
    %v5060 = vpop.f32.mrb[0].mxu0
    %v5061 = vadd.f32 %v4987, %v5060
    %v5062 = vpop.f32.mrb[0].mxu0
    %5063 = vdwg.mxu0
    %5064 = vmatprep.subr.mxu0 0.0
    %v5065 = vand.u32 %v4833, 4294901760
    %5066 = vmatpush1.msra.mxu0 %v5065
    %5067 = vmatprep.subr.mxu0 0.0
    %5068 = vmatpush1.msra.mxu0 0.0
    %5069 = vmatprep.subr.mxu0 0.0
    %5070 = vmatpush1.msra.mxu0 0.0
    %5071 = vmatprep.subr.mxu0 0.0
    %5072 = vmatpush1.msra.mxu0 0.0
    %5073 = vmatprep.subr.mxu0 0.0
    %5074 = vmatpush1.msra.mxu0 0.0
    %5075 = vmatprep.subr.mxu0 0.0
    %5076 = vmatpush1.msra.mxu0 0.0
    %5077 = vmatprep.subr.mxu0 0.0
    %5078 = vmatpush1.msra.mxu0 0.0
    %5079 = vmatprep.subr.mxu0 0.0
    %5080 = vmatpush1.msra.mxu0 0.0
    %5081 = vmatprep.subr.mxu0 0.0
    %5082 = vmatpush1.msra.mxu0 0.0
    %5083 = vmatprep.subr.mxu0 0.0
    %5084 = vmatpush1.msra.mxu0 0.0
    %5085 = vmatprep.subr.mxu0 0.0
    %5086 = vmatpush1.msra.mxu0 0.0
    %5087 = vmatprep.subr.mxu0 0.0
    %5088 = vmatpush1.msra.mxu0 0.0
    %5089 = vmatprep.subr.mxu0 0.0
    %5090 = vmatpush1.msra.mxu0 0.0
    %5091 = vmatprep.subr.mxu0 0.0
    %5092 = vmatpush1.msra.mxu0 0.0
    %5093 = vmatprep.subr.mxu0 0.0
    %5094 = vmatpush1.msra.mxu0 0.0
    %5095 = vmatprep.subr.mxu0 0.0
    %5096 = vmatpush1.msra.mxu0 0.0
    %5097 = vmatprep.subr.mxu0 0.0
    %5098 = vmatpush1.msra.mxu0 0.0
    %5099 = vmatprep.subr.mxu0 0.0
    %5100 = vmatpush1.msra.mxu0 0.0
    %5101 = vmatprep.subr.mxu0 0.0
    %5102 = vmatpush1.msra.mxu0 0.0
    %5103 = vmatprep.subr.mxu0 0.0
    %5104 = vmatpush1.msra.mxu0 0.0
    %5105 = vmatprep.subr.mxu0 0.0
    %5106 = vmatpush1.msra.mxu0 0.0
    %5107 = vmatprep.subr.mxu0 0.0
    %5108 = vmatpush1.msra.mxu0 0.0
    %5109 = vmatprep.subr.mxu0 0.0
    %5110 = vmatpush1.msra.mxu0 0.0
    %5111 = vmatprep.subr.mxu0 0.0
    %5112 = vmatpush1.msra.mxu0 0.0
    %5113 = vmatprep.subr.mxu0 0.0
    %5114 = vmatpush1.msra.mxu0 0.0
    %5115 = vmatprep.subr.mxu0 0.0
    %5116 = vmatpush1.msra.mxu0 0.0
    %5117 = vmatprep.subr.mxu0 0.0
    %5118 = vmatpush1.msra.mxu0 0.0
    %5119 = vmatprep.subr.mxu0 0.0
    %5120 = vmatpush1.msra.mxu0 0.0
    %5121 = vmatprep.subr.mxu0 0.0
    %5122 = vmatpush1.msra.mxu0 0.0
    %5123 = vmatprep.subr.mxu0 0.0
    %5124 = vmatpush1.msra.mxu0 0.0
    %5125 = vmatprep.subr.mxu0 0.0
    %5126 = vmatpush1.msra.mxu0 0.0
    %5127 = vmatprep.subr.mxu0 0.0
    %5128 = vmatpush1.msra.mxu0 0.0
    %5129 = vmatprep.mubr.f32.mxu0 0.0
    %v5130 = vand.u32 %v4836, 4294901760
    %v5131 = vsub.f32 %v4836, %v5130
    %v5132 = vand.u32 %v5131, 4294901760
    %5133 = vmatmul.mubr.f32.gmra.mrb[0].mxu0 %v5132
    %v5134 = vpop.f32.mrb[0].mxu0
    %v5135 = vadd.f32 %v5061, %v5134
    %v5136 = vpop.f32.mrb[0].mxu0
    %5137 = vdwg.mxu0
    %5138 = vmatprep.subr.mxu0 0.0
    %v5139 = vand.u32 %v4833, 4294901760
    %v5140 = vsub.f32 %v4833, %v5139
    %v5141 = vand.u32 %v5140, 4294901760
    %5142 = vmatpush1.msra.mxu0 %v5141
    %5143 = vmatprep.subr.mxu0 0.0
    %5144 = vmatpush1.msra.mxu0 0.0
    %5145 = vmatprep.subr.mxu0 0.0
    %5146 = vmatpush1.msra.mxu0 0.0
    %5147 = vmatprep.subr.mxu0 0.0
    %5148 = vmatpush1.msra.mxu0 0.0
    %5149 = vmatprep.subr.mxu0 0.0
    %5150 = vmatpush1.msra.mxu0 0.0
    %5151 = vmatprep.subr.mxu0 0.0
    %5152 = vmatpush1.msra.mxu0 0.0
    %5153 = vmatprep.subr.mxu0 0.0
    %5154 = vmatpush1.msra.mxu0 0.0
    %5155 = vmatprep.subr.mxu0 0.0
    %5156 = vmatpush1.msra.mxu0 0.0
    %5157 = vmatprep.subr.mxu0 0.0
    %5158 = vmatpush1.msra.mxu0 0.0
    %5159 = vmatprep.subr.mxu0 0.0
    %5160 = vmatpush1.msra.mxu0 0.0
    %5161 = vmatprep.subr.mxu0 0.0
    %5162 = vmatpush1.msra.mxu0 0.0
    %5163 = vmatprep.subr.mxu0 0.0
    %5164 = vmatpush1.msra.mxu0 0.0
    %5165 = vmatprep.subr.mxu0 0.0
    %5166 = vmatpush1.msra.mxu0 0.0
    %5167 = vmatprep.subr.mxu0 0.0
    %5168 = vmatpush1.msra.mxu0 0.0
    %5169 = vmatprep.subr.mxu0 0.0
    %5170 = vmatpush1.msra.mxu0 0.0
    %5171 = vmatprep.subr.mxu0 0.0
    %5172 = vmatpush1.msra.mxu0 0.0
    %5173 = vmatprep.subr.mxu0 0.0
    %5174 = vmatpush1.msra.mxu0 0.0
    %5175 = vmatprep.subr.mxu0 0.0
    %5176 = vmatpush1.msra.mxu0 0.0
    %5177 = vmatprep.subr.mxu0 0.0
    %5178 = vmatpush1.msra.mxu0 0.0
    %5179 = vmatprep.subr.mxu0 0.0
    %5180 = vmatpush1.msra.mxu0 0.0
    %5181 = vmatprep.subr.mxu0 0.0
    %5182 = vmatpush1.msra.mxu0 0.0
    %5183 = vmatprep.subr.mxu0 0.0
    %5184 = vmatpush1.msra.mxu0 0.0
    %5185 = vmatprep.subr.mxu0 0.0
    %5186 = vmatpush1.msra.mxu0 0.0
    %5187 = vmatprep.subr.mxu0 0.0
    %5188 = vmatpush1.msra.mxu0 0.0
    %5189 = vmatprep.subr.mxu0 0.0
    %5190 = vmatpush1.msra.mxu0 0.0
    %5191 = vmatprep.subr.mxu0 0.0
    %5192 = vmatpush1.msra.mxu0 0.0
    %5193 = vmatprep.subr.mxu0 0.0
    %5194 = vmatpush1.msra.mxu0 0.0
    %5195 = vmatprep.subr.mxu0 0.0
    %5196 = vmatpush1.msra.mxu0 0.0
    %5197 = vmatprep.subr.mxu0 0.0
    %5198 = vmatpush1.msra.mxu0 0.0
    %5199 = vmatprep.subr.mxu0 0.0
    %5200 = vmatpush1.msra.mxu0 0.0
    %5201 = vmatprep.subr.mxu0 0.0
    %5202 = vmatpush1.msra.mxu0 0.0
    %5203 = vmatprep.subr.mxu0 0.0
    %5204 = vmatpush1.msra.mxu0 0.0
    %5205 = vmatprep.mubr.f32.mxu0 0.0
    %v5206 = vand.u32 %v4836, 4294901760
    %5207 = vmatmul.mubr.f32.gmra.mrb[0].mxu0 %v5206
    %v5208 = vpop.f32.mrb[0].mxu0
    %v5209 = vadd.f32 %v5135, %v5208
    %v5210 = vpop.f32.mrb[0].mxu0
    %5211 = vdwg.mxu0
    %5212 = vmatprep.subr.mxu0 0.0
    %v5213 = vand.u32 %v4833, 4294901760
    %5214 = vmatpush1.msra.mxu0 %v5213
    %5215 = vmatprep.subr.mxu0 0.0
    %5216 = vmatpush1.msra.mxu0 0.0
    %5217 = vmatprep.subr.mxu0 0.0
    %5218 = vmatpush1.msra.mxu0 0.0
    %5219 = vmatprep.subr.mxu0 0.0
    %5220 = vmatpush1.msra.mxu0 0.0
    %5221 = vmatprep.subr.mxu0 0.0
    %5222 = vmatpush1.msra.mxu0 0.0
    %5223 = vmatprep.subr.mxu0 0.0
    %5224 = vmatpush1.msra.mxu0 0.0
    %5225 = vmatprep.subr.mxu0 0.0
    %5226 = vmatpush1.msra.mxu0 0.0
    %5227 = vmatprep.subr.mxu0 0.0
    %5228 = vmatpush1.msra.mxu0 0.0
    %5229 = vmatprep.subr.mxu0 0.0
    %5230 = vmatpush1.msra.mxu0 0.0
    %5231 = vmatprep.subr.mxu0 0.0
    %5232 = vmatpush1.msra.mxu0 0.0
    %5233 = vmatprep.subr.mxu0 0.0
    %5234 = vmatpush1.msra.mxu0 0.0
    %5235 = vmatprep.subr.mxu0 0.0
    %5236 = vmatpush1.msra.mxu0 0.0
    %5237 = vmatprep.subr.mxu0 0.0
    %5238 = vmatpush1.msra.mxu0 0.0
    %5239 = vmatprep.subr.mxu0 0.0
    %5240 = vmatpush1.msra.mxu0 0.0
    %5241 = vmatprep.subr.mxu0 0.0
    %5242 = vmatpush1.msra.mxu0 0.0
    %5243 = vmatprep.subr.mxu0 0.0
    %5244 = vmatpush1.msra.mxu0 0.0
    %5245 = vmatprep.subr.mxu0 0.0
    %5246 = vmatpush1.msra.mxu0 0.0
    %5247 = vmatprep.subr.mxu0 0.0
    %5248 = vmatpush1.msra.mxu0 0.0
    %5249 = vmatprep.subr.mxu0 0.0
    %5250 = vmatpush1.msra.mxu0 0.0
    %5251 = vmatprep.subr.mxu0 0.0
    %5252 = vmatpush1.msra.mxu0 0.0
    %5253 = vmatprep.subr.mxu0 0.0
    %5254 = vmatpush1.msra.mxu0 0.0
    %5255 = vmatprep.subr.mxu0 0.0
    %5256 = vmatpush1.msra.mxu0 0.0
    %5257 = vmatprep.subr.mxu0 0.0
    %5258 = vmatpush1.msra.mxu0 0.0
    %5259 = vmatprep.subr.mxu0 0.0
    %5260 = vmatpush1.msra.mxu0 0.0
    %5261 = vmatprep.subr.mxu0 0.0
    %5262 = vmatpush1.msra.mxu0 0.0
    %5263 = vmatprep.subr.mxu0 0.0
    %5264 = vmatpush1.msra.mxu0 0.0
    %5265 = vmatprep.subr.mxu0 0.0
    %5266 = vmatpush1.msra.mxu0 0.0
    %5267 = vmatprep.subr.mxu0 0.0
    %5268 = vmatpush1.msra.mxu0 0.0
    %5269 = vmatprep.subr.mxu0 0.0
    %5270 = vmatpush1.msra.mxu0 0.0
    %5271 = vmatprep.subr.mxu0 0.0
    %5272 = vmatpush1.msra.mxu0 0.0
    %5273 = vmatprep.subr.mxu0 0.0
    %5274 = vmatpush1.msra.mxu0 0.0
    %5275 = vmatprep.subr.mxu0 0.0
    %5276 = vmatpush1.msra.mxu0 0.0
    %5277 = vmatprep.mubr.f32.mxu0 0.0
    %v5278 = vand.u32 %v4836, 4294901760
    %5279 = vmatmul.mubr.f32.gmra.mrb[0].mxu0 %v5278
    %v5280 = vpop.f32.mrb[0].mxu0
    %v5281 = vadd.f32 %v5209, %v5280
    %v5282 = vpop.f32.mrb[0].mxu0
    %5283 = vdwg.mxu0
    %v5284 = vrcp.pop %v4831
    %v5285 = vmul.f32 %v4831, %v5284
    %v5286 = vsub.f32 2.0, %v5285
    %v5287 = vmul.f32 %v5284, %v5286
    %v5288 = vmul.f32 %v5281, %v5287
    %5289 = vst.msk [vmem:[#allocation2 + $0x8] sm:$0xff] %vm652, %v5288
    %5290 = vrot.lane.b32.xlu0 %v644, 120
    %v5291 = vpop.permute.xlu0 %5290
    %5292 = vrot.lane.b32.xlu0 %v644, 88
    %v5293 = vpop.permute.xlu0 %5292
    %v5294 = vsel %vm652, %v5291, 0
    %v5296 = vsel %vm652, %v5293, 0
    %5298 = vmatprep.subr.mxu0 0.0
    %v5299 = vand.u32 %v5296, 4294901760
    %5300 = vmatpush1.xpose.msra.mxu0 %v5299
    %5301 = vmatprep.subr.mxu0 0.0
    %5302 = vmatpush1.xpose.msra.mxu0 0.0
    %5303 = vmatprep.subr.mxu0 0.0
    %5304 = vmatpush1.xpose.msra.mxu0 0.0
    %5305 = vmatprep.subr.mxu0 0.0
    %5306 = vmatpush1.xpose.msra.mxu0 0.0
    %5307 = vmatprep.subr.mxu0 0.0
    %5308 = vmatpush1.xpose.msra.mxu0 0.0
    %5309 = vmatprep.subr.mxu0 0.0
    %5310 = vmatpush1.xpose.msra.mxu0 0.0
    %5311 = vmatprep.subr.mxu0 0.0
    %5312 = vmatpush1.xpose.msra.mxu0 0.0
    %5313 = vmatprep.subr.mxu0 0.0
    %5314 = vmatpush1.xpose.msra.mxu0 0.0
    %5315 = vmatprep.subr.mxu0 0.0
    %5316 = vmatpush1.xpose.msra.mxu0 0.0
    %5317 = vmatprep.subr.mxu0 0.0
    %5318 = vmatpush1.xpose.msra.mxu0 0.0
    %5319 = vmatprep.subr.mxu0 0.0
    %5320 = vmatpush1.xpose.msra.mxu0 0.0
    %5321 = vmatprep.subr.mxu0 0.0
    %5322 = vmatpush1.xpose.msra.mxu0 0.0
    %5323 = vmatprep.subr.mxu0 0.0
    %5324 = vmatpush1.xpose.msra.mxu0 0.0
    %5325 = vmatprep.subr.mxu0 0.0
    %5326 = vmatpush1.xpose.msra.mxu0 0.0
    %5327 = vmatprep.subr.mxu0 0.0
    %5328 = vmatpush1.xpose.msra.mxu0 0.0
    %5329 = vmatprep.subr.mxu0 0.0
    %5330 = vmatpush1.xpose.msra.mxu0 0.0
    %5331 = vmatprep.subr.mxu0 0.0
    %5332 = vmatpush1.xpose.msra.mxu0 0.0
    %5333 = vmatprep.subr.mxu0 0.0
    %5334 = vmatpush1.xpose.msra.mxu0 0.0
    %5335 = vmatprep.subr.mxu0 0.0
    %5336 = vmatpush1.xpose.msra.mxu0 0.0
    %5337 = vmatprep.subr.mxu0 0.0
    %5338 = vmatpush1.xpose.msra.mxu0 0.0
    %5339 = vmatprep.subr.mxu0 0.0
    %5340 = vmatpush1.xpose.msra.mxu0 0.0
    %5341 = vmatprep.subr.mxu0 0.0
    %5342 = vmatpush1.xpose.msra.mxu0 0.0
    %5343 = vmatprep.subr.mxu0 0.0
    %5344 = vmatpush1.xpose.msra.mxu0 0.0
    %5345 = vmatprep.subr.mxu0 0.0
    %5346 = vmatpush1.xpose.msra.mxu0 0.0
    %5347 = vmatprep.subr.mxu0 0.0
    %5348 = vmatpush1.xpose.msra.mxu0 0.0
    %5349 = vmatprep.subr.mxu0 0.0
    %5350 = vmatpush1.xpose.msra.mxu0 0.0
    %5351 = vmatprep.subr.mxu0 0.0
    %5352 = vmatpush1.xpose.msra.mxu0 0.0
    %5353 = vmatprep.subr.mxu0 0.0
    %5354 = vmatpush1.xpose.msra.mxu0 0.0
    %5355 = vmatprep.subr.mxu0 0.0
    %5356 = vmatpush1.xpose.msra.mxu0 0.0
    %5357 = vmatprep.subr.mxu0 0.0
    %5358 = vmatpush1.xpose.msra.mxu0 0.0
    %5359 = vmatprep.subr.mxu0 0.0
    %5360 = vmatpush1.xpose.msra.mxu0 0.0
    %5361 = vmatprep.subr.mxu0 0.0
    %5362 = vmatpush1.xpose.msra.mxu0 0.0
    %5363 = vmatprep.mubr.f32.mxu0 0.0
    %v5364 = vand.u32 %v5294, 4294901760
    %v5365 = vsub.f32 %v5294, %v5364
    %v5366 = vand.u32 %v5365, 4294901760
    %v5367 = vsub.f32 %v5365, %v5366
    %v5368 = vand.u32 %v5367, 4294901760
    %5369 = vmatmul.mubr.f32.gmra.mrb[0].mxu0 %v5368
    %v5370 = vpop.f32.mrb[0].mxu0
    %v5371 = vadd.f32 0.0, %v5370
    %v5372 = vpop.f32.mrb[0].mxu0
    %5373 = vdwg.mxu0
    %5374 = vmatprep.subr.mxu0 0.0
    %v5375 = vand.u32 %v5296, 4294901760
    %v5376 = vsub.f32 %v5296, %v5375
    %v5377 = vand.u32 %v5376, 4294901760
    %v5378 = vsub.f32 %v5376, %v5377
    %v5379 = vand.u32 %v5378, 4294901760
    %5380 = vmatpush1.xpose.msra.mxu0 %v5379
    %5381 = vmatprep.subr.mxu0 0.0
    %5382 = vmatpush1.xpose.msra.mxu0 0.0
    %5383 = vmatprep.subr.mxu0 0.0
    %5384 = vmatpush1.xpose.msra.mxu0 0.0
    %5385 = vmatprep.subr.mxu0 0.0
    %5386 = vmatpush1.xpose.msra.mxu0 0.0
    %5387 = vmatprep.subr.mxu0 0.0
    %5388 = vmatpush1.xpose.msra.mxu0 0.0
    %5389 = vmatprep.subr.mxu0 0.0
    %5390 = vmatpush1.xpose.msra.mxu0 0.0
    %5391 = vmatprep.subr.mxu0 0.0
    %5392 = vmatpush1.xpose.msra.mxu0 0.0
    %5393 = vmatprep.subr.mxu0 0.0
    %5394 = vmatpush1.xpose.msra.mxu0 0.0
    %5395 = vmatprep.subr.mxu0 0.0
    %5396 = vmatpush1.xpose.msra.mxu0 0.0
    %5397 = vmatprep.subr.mxu0 0.0
    %5398 = vmatpush1.xpose.msra.mxu0 0.0
    %5399 = vmatprep.subr.mxu0 0.0
    %5400 = vmatpush1.xpose.msra.mxu0 0.0
    %5401 = vmatprep.subr.mxu0 0.0
    %5402 = vmatpush1.xpose.msra.mxu0 0.0
    %5403 = vmatprep.subr.mxu0 0.0
    %5404 = vmatpush1.xpose.msra.mxu0 0.0
    %5405 = vmatprep.subr.mxu0 0.0
    %5406 = vmatpush1.xpose.msra.mxu0 0.0
    %5407 = vmatprep.subr.mxu0 0.0
    %5408 = vmatpush1.xpose.msra.mxu0 0.0
    %5409 = vmatprep.subr.mxu0 0.0
    %5410 = vmatpush1.xpose.msra.mxu0 0.0
    %5411 = vmatprep.subr.mxu0 0.0
    %5412 = vmatpush1.xpose.msra.mxu0 0.0
    %5413 = vmatprep.subr.mxu0 0.0
    %5414 = vmatpush1.xpose.msra.mxu0 0.0
    %5415 = vmatprep.subr.mxu0 0.0
    %5416 = vmatpush1.xpose.msra.mxu0 0.0
    %5417 = vmatprep.subr.mxu0 0.0
    %5418 = vmatpush1.xpose.msra.mxu0 0.0
    %5419 = vmatprep.subr.mxu0 0.0
    %5420 = vmatpush1.xpose.msra.mxu0 0.0
    %5421 = vmatprep.subr.mxu0 0.0
    %5422 = vmatpush1.xpose.msra.mxu0 0.0
    %5423 = vmatprep.subr.mxu0 0.0
    %5424 = vmatpush1.xpose.msra.mxu0 0.0
    %5425 = vmatprep.subr.mxu0 0.0
    %5426 = vmatpush1.xpose.msra.mxu0 0.0
    %5427 = vmatprep.subr.mxu0 0.0
    %5428 = vmatpush1.xpose.msra.mxu0 0.0
    %5429 = vmatprep.subr.mxu0 0.0
    %5430 = vmatpush1.xpose.msra.mxu0 0.0
    %5431 = vmatprep.subr.mxu0 0.0
    %5432 = vmatpush1.xpose.msra.mxu0 0.0
    %5433 = vmatprep.subr.mxu0 0.0
    %5434 = vmatpush1.xpose.msra.mxu0 0.0
    %5435 = vmatprep.subr.mxu0 0.0
    %5436 = vmatpush1.xpose.msra.mxu0 0.0
    %5437 = vmatprep.subr.mxu0 0.0
    %5438 = vmatpush1.xpose.msra.mxu0 0.0
    %5439 = vmatprep.subr.mxu0 0.0
    %5440 = vmatpush1.xpose.msra.mxu0 0.0
    %5441 = vmatprep.subr.mxu0 0.0
    %5442 = vmatpush1.xpose.msra.mxu0 0.0
    %5443 = vmatprep.mubr.f32.mxu0 0.0
    %v5444 = vand.u32 %v5294, 4294901760
    %5445 = vmatmul.mubr.f32.gmra.mrb[0].mxu0 %v5444
    %v5446 = vpop.f32.mrb[0].mxu0
    %v5447 = vadd.f32 %v5371, %v5446
    %v5448 = vpop.f32.mrb[0].mxu0
    %5449 = vdwg.mxu0
    %5450 = vmatprep.subr.mxu0 0.0
    %v5451 = vand.u32 %v5296, 4294901760
    %v5452 = vsub.f32 %v5296, %v5451
    %5453 = vmatpush1.xpose.msra.mxu0 %v5452
    %5454 = vmatprep.subr.mxu0 0.0
    %5455 = vmatpush1.xpose.msra.mxu0 0.0
    %5456 = vmatprep.subr.mxu0 0.0
    %5457 = vmatpush1.xpose.msra.mxu0 0.0
    %5458 = vmatprep.subr.mxu0 0.0
    %5459 = vmatpush1.xpose.msra.mxu0 0.0
    %5460 = vmatprep.subr.mxu0 0.0
    %5461 = vmatpush1.xpose.msra.mxu0 0.0
    %5462 = vmatprep.subr.mxu0 0.0
    %5463 = vmatpush1.xpose.msra.mxu0 0.0
    %5464 = vmatprep.subr.mxu0 0.0
    %5465 = vmatpush1.xpose.msra.mxu0 0.0
    %5466 = vmatprep.subr.mxu0 0.0
    %5467 = vmatpush1.xpose.msra.mxu0 0.0
    %5468 = vmatprep.subr.mxu0 0.0
    %5469 = vmatpush1.xpose.msra.mxu0 0.0
    %5470 = vmatprep.subr.mxu0 0.0
    %5471 = vmatpush1.xpose.msra.mxu0 0.0
    %5472 = vmatprep.subr.mxu0 0.0
    %5473 = vmatpush1.xpose.msra.mxu0 0.0
    %5474 = vmatprep.subr.mxu0 0.0
    %5475 = vmatpush1.xpose.msra.mxu0 0.0
    %5476 = vmatprep.subr.mxu0 0.0
    %5477 = vmatpush1.xpose.msra.mxu0 0.0
    %5478 = vmatprep.subr.mxu0 0.0
    %5479 = vmatpush1.xpose.msra.mxu0 0.0
    %5480 = vmatprep.subr.mxu0 0.0
    %5481 = vmatpush1.xpose.msra.mxu0 0.0
    %5482 = vmatprep.subr.mxu0 0.0
    %5483 = vmatpush1.xpose.msra.mxu0 0.0
    %5484 = vmatprep.subr.mxu0 0.0
    %5485 = vmatpush1.xpose.msra.mxu0 0.0
    %5486 = vmatprep.subr.mxu0 0.0
    %5487 = vmatpush1.xpose.msra.mxu0 0.0
    %5488 = vmatprep.subr.mxu0 0.0
    %5489 = vmatpush1.xpose.msra.mxu0 0.0
    %5490 = vmatprep.subr.mxu0 0.0
    %5491 = vmatpush1.xpose.msra.mxu0 0.0
    %5492 = vmatprep.subr.mxu0 0.0
    %5493 = vmatpush1.xpose.msra.mxu0 0.0
    %5494 = vmatprep.subr.mxu0 0.0
    %5495 = vmatpush1.xpose.msra.mxu0 0.0
    %5496 = vmatprep.subr.mxu0 0.0
    %5497 = vmatpush1.xpose.msra.mxu0 0.0
    %5498 = vmatprep.subr.mxu0 0.0
    %5499 = vmatpush1.xpose.msra.mxu0 0.0
    %5500 = vmatprep.subr.mxu0 0.0
    %5501 = vmatpush1.xpose.msra.mxu0 0.0
    %5502 = vmatprep.subr.mxu0 0.0
    %5503 = vmatpush1.xpose.msra.mxu0 0.0
    %5504 = vmatprep.subr.mxu0 0.0
    %5505 = vmatpush1.xpose.msra.mxu0 0.0
    %5506 = vmatprep.subr.mxu0 0.0
    %5507 = vmatpush1.xpose.msra.mxu0 0.0
    %5508 = vmatprep.subr.mxu0 0.0
    %5509 = vmatpush1.xpose.msra.mxu0 0.0
    %5510 = vmatprep.subr.mxu0 0.0
    %5511 = vmatpush1.xpose.msra.mxu0 0.0
    %5512 = vmatprep.subr.mxu0 0.0
    %5513 = vmatpush1.xpose.msra.mxu0 0.0
    %5514 = vmatprep.subr.mxu0 0.0
    %5515 = vmatpush1.xpose.msra.mxu0 0.0
    %5516 = vmatprep.mubr.f32.mxu0 0.0
    %v5517 = vand.u32 %v5294, 4294901760
    %v5518 = vsub.f32 %v5294, %v5517
    %5519 = vmatmul.mubr.f32.gmra.mrb[0].mxu0 %v5518
    %v5520 = vpop.f32.mrb[0].mxu0
    %v5521 = vadd.f32 %v5447, %v5520
    %v5522 = vpop.f32.mrb[0].mxu0
    %5523 = vdwg.mxu0
    %5524 = vmatprep.subr.mxu0 0.0
    %v5525 = vand.u32 %v5296, 4294901760
    %5526 = vmatpush1.xpose.msra.mxu0 %v5525
    %5527 = vmatprep.subr.mxu0 0.0
    %5528 = vmatpush1.xpose.msra.mxu0 0.0
    %5529 = vmatprep.subr.mxu0 0.0
    %5530 = vmatpush1.xpose.msra.mxu0 0.0
    %5531 = vmatprep.subr.mxu0 0.0
    %5532 = vmatpush1.xpose.msra.mxu0 0.0
    %5533 = vmatprep.subr.mxu0 0.0
    %5534 = vmatpush1.xpose.msra.mxu0 0.0
    %5535 = vmatprep.subr.mxu0 0.0
    %5536 = vmatpush1.xpose.msra.mxu0 0.0
    %5537 = vmatprep.subr.mxu0 0.0
    %5538 = vmatpush1.xpose.msra.mxu0 0.0
    %5539 = vmatprep.subr.mxu0 0.0
    %5540 = vmatpush1.xpose.msra.mxu0 0.0
    %5541 = vmatprep.subr.mxu0 0.0
    %5542 = vmatpush1.xpose.msra.mxu0 0.0
    %5543 = vmatprep.subr.mxu0 0.0
    %5544 = vmatpush1.xpose.msra.mxu0 0.0
    %5545 = vmatprep.subr.mxu0 0.0
    %5546 = vmatpush1.xpose.msra.mxu0 0.0
    %5547 = vmatprep.subr.mxu0 0.0
    %5548 = vmatpush1.xpose.msra.mxu0 0.0
    %5549 = vmatprep.subr.mxu0 0.0
    %5550 = vmatpush1.xpose.msra.mxu0 0.0
    %5551 = vmatprep.subr.mxu0 0.0
    %5552 = vmatpush1.xpose.msra.mxu0 0.0
    %5553 = vmatprep.subr.mxu0 0.0
    %5554 = vmatpush1.xpose.msra.mxu0 0.0
    %5555 = vmatprep.subr.mxu0 0.0
    %5556 = vmatpush1.xpose.msra.mxu0 0.0
    %5557 = vmatprep.subr.mxu0 0.0
    %5558 = vmatpush1.xpose.msra.mxu0 0.0
    %5559 = vmatprep.subr.mxu0 0.0
    %5560 = vmatpush1.xpose.msra.mxu0 0.0
    %5561 = vmatprep.subr.mxu0 0.0
    %5562 = vmatpush1.xpose.msra.mxu0 0.0
    %5563 = vmatprep.subr.mxu0 0.0
    %5564 = vmatpush1.xpose.msra.mxu0 0.0
    %5565 = vmatprep.subr.mxu0 0.0
    %5566 = vmatpush1.xpose.msra.mxu0 0.0
    %5567 = vmatprep.subr.mxu0 0.0
    %5568 = vmatpush1.xpose.msra.mxu0 0.0
    %5569 = vmatprep.subr.mxu0 0.0
    %5570 = vmatpush1.xpose.msra.mxu0 0.0
    %5571 = vmatprep.subr.mxu0 0.0
    %5572 = vmatpush1.xpose.msra.mxu0 0.0
    %5573 = vmatprep.subr.mxu0 0.0
    %5574 = vmatpush1.xpose.msra.mxu0 0.0
    %5575 = vmatprep.subr.mxu0 0.0
    %5576 = vmatpush1.xpose.msra.mxu0 0.0
    %5577 = vmatprep.subr.mxu0 0.0
    %5578 = vmatpush1.xpose.msra.mxu0 0.0
    %5579 = vmatprep.subr.mxu0 0.0
    %5580 = vmatpush1.xpose.msra.mxu0 0.0
    %5581 = vmatprep.subr.mxu0 0.0
    %5582 = vmatpush1.xpose.msra.mxu0 0.0
    %5583 = vmatprep.subr.mxu0 0.0
    %5584 = vmatpush1.xpose.msra.mxu0 0.0
    %5585 = vmatprep.subr.mxu0 0.0
    %5586 = vmatpush1.xpose.msra.mxu0 0.0
    %5587 = vmatprep.subr.mxu0 0.0
    %5588 = vmatpush1.xpose.msra.mxu0 0.0
    %5589 = vmatprep.mubr.f32.mxu0 0.0
    %v5590 = vand.u32 %v5294, 4294901760
    %v5591 = vsub.f32 %v5294, %v5590
    %v5592 = vand.u32 %v5591, 4294901760
    %5593 = vmatmul.mubr.f32.gmra.mrb[0].mxu0 %v5592
    %v5594 = vpop.f32.mrb[0].mxu0
    %v5595 = vadd.f32 %v5521, %v5594
    %v5596 = vpop.f32.mrb[0].mxu0
    %5597 = vdwg.mxu0
    %5598 = vmatprep.subr.mxu0 0.0
    %v5599 = vand.u32 %v5296, 4294901760
    %v5600 = vsub.f32 %v5296, %v5599
    %v5601 = vand.u32 %v5600, 4294901760
    %5602 = vmatpush1.xpose.msra.mxu0 %v5601
    %5603 = vmatprep.subr.mxu0 0.0
    %5604 = vmatpush1.xpose.msra.mxu0 0.0
    %5605 = vmatprep.subr.mxu0 0.0
    %5606 = vmatpush1.xpose.msra.mxu0 0.0
    %5607 = vmatprep.subr.mxu0 0.0
    %5608 = vmatpush1.xpose.msra.mxu0 0.0
    %5609 = vmatprep.subr.mxu0 0.0
    %5610 = vmatpush1.xpose.msra.mxu0 0.0
    %5611 = vmatprep.subr.mxu0 0.0
    %5612 = vmatpush1.xpose.msra.mxu0 0.0
    %5613 = vmatprep.subr.mxu0 0.0
    %5614 = vmatpush1.xpose.msra.mxu0 0.0
    %5615 = vmatprep.subr.mxu0 0.0
    %5616 = vmatpush1.xpose.msra.mxu0 0.0
    %5617 = vmatprep.subr.mxu0 0.0
    %5618 = vmatpush1.xpose.msra.mxu0 0.0
    %5619 = vmatprep.subr.mxu0 0.0
    %5620 = vmatpush1.xpose.msra.mxu0 0.0
    %5621 = vmatprep.subr.mxu0 0.0
    %5622 = vmatpush1.xpose.msra.mxu0 0.0
    %5623 = vmatprep.subr.mxu0 0.0
    %5624 = vmatpush1.xpose.msra.mxu0 0.0
    %5625 = vmatprep.subr.mxu0 0.0
    %5626 = vmatpush1.xpose.msra.mxu0 0.0
    %5627 = vmatprep.subr.mxu0 0.0
    %5628 = vmatpush1.xpose.msra.mxu0 0.0
    %5629 = vmatprep.subr.mxu0 0.0
    %5630 = vmatpush1.xpose.msra.mxu0 0.0
    %5631 = vmatprep.subr.mxu0 0.0
    %5632 = vmatpush1.xpose.msra.mxu0 0.0
    %5633 = vmatprep.subr.mxu0 0.0
    %5634 = vmatpush1.xpose.msra.mxu0 0.0
    %5635 = vmatprep.subr.mxu0 0.0
    %5636 = vmatpush1.xpose.msra.mxu0 0.0
    %5637 = vmatprep.subr.mxu0 0.0
    %5638 = vmatpush1.xpose.msra.mxu0 0.0
    %5639 = vmatprep.subr.mxu0 0.0
    %5640 = vmatpush1.xpose.msra.mxu0 0.0
    %5641 = vmatprep.subr.mxu0 0.0
    %5642 = vmatpush1.xpose.msra.mxu0 0.0
    %5643 = vmatprep.subr.mxu0 0.0
    %5644 = vmatpush1.xpose.msra.mxu0 0.0
    %5645 = vmatprep.subr.mxu0 0.0
    %5646 = vmatpush1.xpose.msra.mxu0 0.0
    %5647 = vmatprep.subr.mxu0 0.0
    %5648 = vmatpush1.xpose.msra.mxu0 0.0
    %5649 = vmatprep.subr.mxu0 0.0
    %5650 = vmatpush1.xpose.msra.mxu0 0.0
    %5651 = vmatprep.subr.mxu0 0.0
    %5652 = vmatpush1.xpose.msra.mxu0 0.0
    %5653 = vmatprep.subr.mxu0 0.0
    %5654 = vmatpush1.xpose.msra.mxu0 0.0
    %5655 = vmatprep.subr.mxu0 0.0
    %5656 = vmatpush1.xpose.msra.mxu0 0.0
    %5657 = vmatprep.subr.mxu0 0.0
    %5658 = vmatpush1.xpose.msra.mxu0 0.0
    %5659 = vmatprep.subr.mxu0 0.0
    %5660 = vmatpush1.xpose.msra.mxu0 0.0
    %5661 = vmatprep.subr.mxu0 0.0
    %5662 = vmatpush1.xpose.msra.mxu0 0.0
    %5663 = vmatprep.subr.mxu0 0.0
    %5664 = vmatpush1.xpose.msra.mxu0 0.0
    %5665 = vmatprep.mubr.f32.mxu0 0.0
    %v5666 = vand.u32 %v5294, 4294901760
    %5667 = vmatmul.mubr.f32.gmra.mrb[0].mxu0 %v5666
    %v5668 = vpop.f32.mrb[0].mxu0
    %v5669 = vadd.f32 %v5595, %v5668
    %v5670 = vpop.f32.mrb[0].mxu0
    %5671 = vdwg.mxu0
    %5672 = vmatprep.subr.mxu0 0.0
    %v5673 = vand.u32 %v5296, 4294901760
    %5674 = vmatpush1.xpose.msra.mxu0 %v5673
    %5675 = vmatprep.subr.mxu0 0.0
    %5676 = vmatpush1.xpose.msra.mxu0 0.0
    %5677 = vmatprep.subr.mxu0 0.0
    %5678 = vmatpush1.xpose.msra.mxu0 0.0
    %5679 = vmatprep.subr.mxu0 0.0
    %5680 = vmatpush1.xpose.msra.mxu0 0.0
    %5681 = vmatprep.subr.mxu0 0.0
    %5682 = vmatpush1.xpose.msra.mxu0 0.0
    %5683 = vmatprep.subr.mxu0 0.0
    %5684 = vmatpush1.xpose.msra.mxu0 0.0
    %5685 = vmatprep.subr.mxu0 0.0
    %5686 = vmatpush1.xpose.msra.mxu0 0.0
    %5687 = vmatprep.subr.mxu0 0.0
    %5688 = vmatpush1.xpose.msra.mxu0 0.0
    %5689 = vmatprep.subr.mxu0 0.0
    %5690 = vmatpush1.xpose.msra.mxu0 0.0
    %5691 = vmatprep.subr.mxu0 0.0
    %5692 = vmatpush1.xpose.msra.mxu0 0.0
    %5693 = vmatprep.subr.mxu0 0.0
    %5694 = vmatpush1.xpose.msra.mxu0 0.0
    %5695 = vmatprep.subr.mxu0 0.0
    %5696 = vmatpush1.xpose.msra.mxu0 0.0
    %5697 = vmatprep.subr.mxu0 0.0
    %5698 = vmatpush1.xpose.msra.mxu0 0.0
    %5699 = vmatprep.subr.mxu0 0.0
    %5700 = vmatpush1.xpose.msra.mxu0 0.0
    %5701 = vmatprep.subr.mxu0 0.0
    %5702 = vmatpush1.xpose.msra.mxu0 0.0
    %5703 = vmatprep.subr.mxu0 0.0
    %5704 = vmatpush1.xpose.msra.mxu0 0.0
    %5705 = vmatprep.subr.mxu0 0.0
    %5706 = vmatpush1.xpose.msra.mxu0 0.0
    %5707 = vmatprep.subr.mxu0 0.0
    %5708 = vmatpush1.xpose.msra.mxu0 0.0
    %5709 = vmatprep.subr.mxu0 0.0
    %5710 = vmatpush1.xpose.msra.mxu0 0.0
    %5711 = vmatprep.subr.mxu0 0.0
    %5712 = vmatpush1.xpose.msra.mxu0 0.0
    %5713 = vmatprep.subr.mxu0 0.0
    %5714 = vmatpush1.xpose.msra.mxu0 0.0
    %5715 = vmatprep.subr.mxu0 0.0
    %5716 = vmatpush1.xpose.msra.mxu0 0.0
    %5717 = vmatprep.subr.mxu0 0.0
    %5718 = vmatpush1.xpose.msra.mxu0 0.0
    %5719 = vmatprep.subr.mxu0 0.0
    %5720 = vmatpush1.xpose.msra.mxu0 0.0
    %5721 = vmatprep.subr.mxu0 0.0
    %5722 = vmatpush1.xpose.msra.mxu0 0.0
    %5723 = vmatprep.subr.mxu0 0.0
    %5724 = vmatpush1.xpose.msra.mxu0 0.0
    %5725 = vmatprep.subr.mxu0 0.0
    %5726 = vmatpush1.xpose.msra.mxu0 0.0
    %5727 = vmatprep.subr.mxu0 0.0
    %5728 = vmatpush1.xpose.msra.mxu0 0.0
    %5729 = vmatprep.subr.mxu0 0.0
    %5730 = vmatpush1.xpose.msra.mxu0 0.0
    %5731 = vmatprep.subr.mxu0 0.0
    %5732 = vmatpush1.xpose.msra.mxu0 0.0
    %5733 = vmatprep.subr.mxu0 0.0
    %5734 = vmatpush1.xpose.msra.mxu0 0.0
    %5735 = vmatprep.subr.mxu0 0.0
    %5736 = vmatpush1.xpose.msra.mxu0 0.0
    %5737 = vmatprep.mubr.f32.mxu0 0.0
    %v5738 = vand.u32 %v5294, 4294901760
    %5739 = vmatmul.mubr.f32.gmra.mrb[0].mxu0 %v5738
    %v5740 = vpop.f32.mrb[0].mxu0
    %v5741 = vadd.f32 %v5669, %v5740
    %v5742 = vpop.f32.mrb[0].mxu0
    %5743 = vdwg.mxu0
    %v5744 = vmul.f32 %v5741, 0.35355338
    %v5745 = vadd.f32 %v5744, %v4820
    %v5746 = vsel %vm652, %v5745, -inf
    %5747 = vmax.xlane.f32.xlu0 %v5746
    %v5748 = vpop.xlane.xlu0 %5747
    %v5749 = vsub.f32 %v5745, %v5748
    %v5750 = vmul.f32 %v5749, 1.442695
    %v5751 = vpow.pop %v5750
    %v5752 = vsel %vm652, %v5751, 0.0
    %5753 = vadd.xlane.f32.xlu0 %v5752
    %v5754 = vpop.xlane.xlu0 %5753
    %5755 = vrot.lane.b32.xlu0 %v644, 56
    %v5756 = vpop.permute.xlu0 %5755
    %v5759 = vsel %vm652, %v5751, 0
    %5761 = vmatprep.subr.mxu0 0.0
    %v5762 = vand.u32 %v5756, 4294901760
    %5763 = vmatpush1.msra.mxu0 %v5762
    %5764 = vmatprep.subr.mxu0 0.0
    %5765 = vmatpush1.msra.mxu0 0.0
    %5766 = vmatprep.subr.mxu0 0.0
    %5767 = vmatpush1.msra.mxu0 0.0
    %5768 = vmatprep.subr.mxu0 0.0
    %5769 = vmatpush1.msra.mxu0 0.0
    %5770 = vmatprep.subr.mxu0 0.0
    %5771 = vmatpush1.msra.mxu0 0.0
    %5772 = vmatprep.subr.mxu0 0.0
    %5773 = vmatpush1.msra.mxu0 0.0
    %5774 = vmatprep.subr.mxu0 0.0
    %5775 = vmatpush1.msra.mxu0 0.0
    %5776 = vmatprep.subr.mxu0 0.0
    %5777 = vmatpush1.msra.mxu0 0.0
    %5778 = vmatprep.subr.mxu0 0.0
    %5779 = vmatpush1.msra.mxu0 0.0
    %5780 = vmatprep.subr.mxu0 0.0
    %5781 = vmatpush1.msra.mxu0 0.0
    %5782 = vmatprep.subr.mxu0 0.0
    %5783 = vmatpush1.msra.mxu0 0.0
    %5784 = vmatprep.subr.mxu0 0.0
    %5785 = vmatpush1.msra.mxu0 0.0
    %5786 = vmatprep.subr.mxu0 0.0
    %5787 = vmatpush1.msra.mxu0 0.0
    %5788 = vmatprep.subr.mxu0 0.0
    %5789 = vmatpush1.msra.mxu0 0.0
    %5790 = vmatprep.subr.mxu0 0.0
    %5791 = vmatpush1.msra.mxu0 0.0
    %5792 = vmatprep.subr.mxu0 0.0
    %5793 = vmatpush1.msra.mxu0 0.0
    %5794 = vmatprep.subr.mxu0 0.0
    %5795 = vmatpush1.msra.mxu0 0.0
    %5796 = vmatprep.subr.mxu0 0.0
    %5797 = vmatpush1.msra.mxu0 0.0
    %5798 = vmatprep.subr.mxu0 0.0
    %5799 = vmatpush1.msra.mxu0 0.0
    %5800 = vmatprep.subr.mxu0 0.0
    %5801 = vmatpush1.msra.mxu0 0.0
    %5802 = vmatprep.subr.mxu0 0.0
    %5803 = vmatpush1.msra.mxu0 0.0
    %5804 = vmatprep.subr.mxu0 0.0
    %5805 = vmatpush1.msra.mxu0 0.0
    %5806 = vmatprep.subr.mxu0 0.0
    %5807 = vmatpush1.msra.mxu0 0.0
    %5808 = vmatprep.subr.mxu0 0.0
    %5809 = vmatpush1.msra.mxu0 0.0
    %5810 = vmatprep.subr.mxu0 0.0
    %5811 = vmatpush1.msra.mxu0 0.0
    %5812 = vmatprep.subr.mxu0 0.0
    %5813 = vmatpush1.msra.mxu0 0.0
    %5814 = vmatprep.subr.mxu0 0.0
    %5815 = vmatpush1.msra.mxu0 0.0
    %5816 = vmatprep.subr.mxu0 0.0
    %5817 = vmatpush1.msra.mxu0 0.0
    %5818 = vmatprep.subr.mxu0 0.0
    %5819 = vmatpush1.msra.mxu0 0.0
    %5820 = vmatprep.subr.mxu0 0.0
    %5821 = vmatpush1.msra.mxu0 0.0
    %5822 = vmatprep.subr.mxu0 0.0
    %5823 = vmatpush1.msra.mxu0 0.0
    %5824 = vmatprep.subr.mxu0 0.0
    %5825 = vmatpush1.msra.mxu0 0.0
    %5826 = vmatprep.mubr.f32.mxu0 0.0
    %v5827 = vand.u32 %v5759, 4294901760
    %v5828 = vsub.f32 %v5759, %v5827
    %v5829 = vand.u32 %v5828, 4294901760
    %v5830 = vsub.f32 %v5828, %v5829
    %v5831 = vand.u32 %v5830, 4294901760
    %5832 = vmatmul.mubr.f32.gmra.mrb[0].mxu0 %v5831
    %v5833 = vpop.f32.mrb[0].mxu0
    %v5834 = vadd.f32 0.0, %v5833
    %v5835 = vpop.f32.mrb[0].mxu0
    %5836 = vdwg.mxu0
    %5837 = vmatprep.subr.mxu0 0.0
    %v5838 = vand.u32 %v5756, 4294901760
    %v5839 = vsub.f32 %v5756, %v5838
    %v5840 = vand.u32 %v5839, 4294901760
    %v5841 = vsub.f32 %v5839, %v5840
    %v5842 = vand.u32 %v5841, 4294901760
    %5843 = vmatpush1.msra.mxu0 %v5842
    %5844 = vmatprep.subr.mxu0 0.0
    %5845 = vmatpush1.msra.mxu0 0.0
    %5846 = vmatprep.subr.mxu0 0.0
    %5847 = vmatpush1.msra.mxu0 0.0
    %5848 = vmatprep.subr.mxu0 0.0
    %5849 = vmatpush1.msra.mxu0 0.0
    %5850 = vmatprep.subr.mxu0 0.0
    %5851 = vmatpush1.msra.mxu0 0.0
    %5852 = vmatprep.subr.mxu0 0.0
    %5853 = vmatpush1.msra.mxu0 0.0
    %5854 = vmatprep.subr.mxu0 0.0
    %5855 = vmatpush1.msra.mxu0 0.0
    %5856 = vmatprep.subr.mxu0 0.0
    %5857 = vmatpush1.msra.mxu0 0.0
    %5858 = vmatprep.subr.mxu0 0.0
    %5859 = vmatpush1.msra.mxu0 0.0
    %5860 = vmatprep.subr.mxu0 0.0
    %5861 = vmatpush1.msra.mxu0 0.0
    %5862 = vmatprep.subr.mxu0 0.0
    %5863 = vmatpush1.msra.mxu0 0.0
    %5864 = vmatprep.subr.mxu0 0.0
    %5865 = vmatpush1.msra.mxu0 0.0
    %5866 = vmatprep.subr.mxu0 0.0
    %5867 = vmatpush1.msra.mxu0 0.0
    %5868 = vmatprep.subr.mxu0 0.0
    %5869 = vmatpush1.msra.mxu0 0.0
    %5870 = vmatprep.subr.mxu0 0.0
    %5871 = vmatpush1.msra.mxu0 0.0
    %5872 = vmatprep.subr.mxu0 0.0
    %5873 = vmatpush1.msra.mxu0 0.0
    %5874 = vmatprep.subr.mxu0 0.0
    %5875 = vmatpush1.msra.mxu0 0.0
    %5876 = vmatprep.subr.mxu0 0.0
    %5877 = vmatpush1.msra.mxu0 0.0
    %5878 = vmatprep.subr.mxu0 0.0
    %5879 = vmatpush1.msra.mxu0 0.0
    %5880 = vmatprep.subr.mxu0 0.0
    %5881 = vmatpush1.msra.mxu0 0.0
    %5882 = vmatprep.subr.mxu0 0.0
    %5883 = vmatpush1.msra.mxu0 0.0
    %5884 = vmatprep.subr.mxu0 0.0
    %5885 = vmatpush1.msra.mxu0 0.0
    %5886 = vmatprep.subr.mxu0 0.0
    %5887 = vmatpush1.msra.mxu0 0.0
    %5888 = vmatprep.subr.mxu0 0.0
    %5889 = vmatpush1.msra.mxu0 0.0
    %5890 = vmatprep.subr.mxu0 0.0
    %5891 = vmatpush1.msra.mxu0 0.0
    %5892 = vmatprep.subr.mxu0 0.0
    %5893 = vmatpush1.msra.mxu0 0.0
    %5894 = vmatprep.subr.mxu0 0.0
    %5895 = vmatpush1.msra.mxu0 0.0
    %5896 = vmatprep.subr.mxu0 0.0
    %5897 = vmatpush1.msra.mxu0 0.0
    %5898 = vmatprep.subr.mxu0 0.0
    %5899 = vmatpush1.msra.mxu0 0.0
    %5900 = vmatprep.subr.mxu0 0.0
    %5901 = vmatpush1.msra.mxu0 0.0
    %5902 = vmatprep.subr.mxu0 0.0
    %5903 = vmatpush1.msra.mxu0 0.0
    %5904 = vmatprep.subr.mxu0 0.0
    %5905 = vmatpush1.msra.mxu0 0.0
    %5906 = vmatprep.mubr.f32.mxu0 0.0
    %v5907 = vand.u32 %v5759, 4294901760
    %5908 = vmatmul.mubr.f32.gmra.mrb[0].mxu0 %v5907
    %v5909 = vpop.f32.mrb[0].mxu0
    %v5910 = vadd.f32 %v5834, %v5909
    %v5911 = vpop.f32.mrb[0].mxu0
    %5912 = vdwg.mxu0
    %5913 = vmatprep.subr.mxu0 0.0
    %v5914 = vand.u32 %v5756, 4294901760
    %v5915 = vsub.f32 %v5756, %v5914
    %5916 = vmatpush1.msra.mxu0 %v5915
    %5917 = vmatprep.subr.mxu0 0.0
    %5918 = vmatpush1.msra.mxu0 0.0
    %5919 = vmatprep.subr.mxu0 0.0
    %5920 = vmatpush1.msra.mxu0 0.0
    %5921 = vmatprep.subr.mxu0 0.0
    %5922 = vmatpush1.msra.mxu0 0.0
    %5923 = vmatprep.subr.mxu0 0.0
    %5924 = vmatpush1.msra.mxu0 0.0
    %5925 = vmatprep.subr.mxu0 0.0
    %5926 = vmatpush1.msra.mxu0 0.0
    %5927 = vmatprep.subr.mxu0 0.0
    %5928 = vmatpush1.msra.mxu0 0.0
    %5929 = vmatprep.subr.mxu0 0.0
    %5930 = vmatpush1.msra.mxu0 0.0
    %5931 = vmatprep.subr.mxu0 0.0
    %5932 = vmatpush1.msra.mxu0 0.0
    %5933 = vmatprep.subr.mxu0 0.0
    %5934 = vmatpush1.msra.mxu0 0.0
    %5935 = vmatprep.subr.mxu0 0.0
    %5936 = vmatpush1.msra.mxu0 0.0
    %5937 = vmatprep.subr.mxu0 0.0
    %5938 = vmatpush1.msra.mxu0 0.0
    %5939 = vmatprep.subr.mxu0 0.0
    %5940 = vmatpush1.msra.mxu0 0.0
    %5941 = vmatprep.subr.mxu0 0.0
    %5942 = vmatpush1.msra.mxu0 0.0
    %5943 = vmatprep.subr.mxu0 0.0
    %5944 = vmatpush1.msra.mxu0 0.0
    %5945 = vmatprep.subr.mxu0 0.0
    %5946 = vmatpush1.msra.mxu0 0.0
    %5947 = vmatprep.subr.mxu0 0.0
    %5948 = vmatpush1.msra.mxu0 0.0
    %5949 = vmatprep.subr.mxu0 0.0
    %5950 = vmatpush1.msra.mxu0 0.0
    %5951 = vmatprep.subr.mxu0 0.0
    %5952 = vmatpush1.msra.mxu0 0.0
    %5953 = vmatprep.subr.mxu0 0.0
    %5954 = vmatpush1.msra.mxu0 0.0
    %5955 = vmatprep.subr.mxu0 0.0
    %5956 = vmatpush1.msra.mxu0 0.0
    %5957 = vmatprep.subr.mxu0 0.0
    %5958 = vmatpush1.msra.mxu0 0.0
    %5959 = vmatprep.subr.mxu0 0.0
    %5960 = vmatpush1.msra.mxu0 0.0
    %5961 = vmatprep.subr.mxu0 0.0
    %5962 = vmatpush1.msra.mxu0 0.0
    %5963 = vmatprep.subr.mxu0 0.0
    %5964 = vmatpush1.msra.mxu0 0.0
    %5965 = vmatprep.subr.mxu0 0.0
    %5966 = vmatpush1.msra.mxu0 0.0
    %5967 = vmatprep.subr.mxu0 0.0
    %5968 = vmatpush1.msra.mxu0 0.0
    %5969 = vmatprep.subr.mxu0 0.0
    %5970 = vmatpush1.msra.mxu0 0.0
    %5971 = vmatprep.subr.mxu0 0.0
    %5972 = vmatpush1.msra.mxu0 0.0
    %5973 = vmatprep.subr.mxu0 0.0
    %5974 = vmatpush1.msra.mxu0 0.0
    %5975 = vmatprep.subr.mxu0 0.0
    %5976 = vmatpush1.msra.mxu0 0.0
    %5977 = vmatprep.subr.mxu0 0.0
    %5978 = vmatpush1.msra.mxu0 0.0
    %5979 = vmatprep.mubr.f32.mxu0 0.0
    %v5980 = vand.u32 %v5759, 4294901760
    %v5981 = vsub.f32 %v5759, %v5980
    %5982 = vmatmul.mubr.f32.gmra.mrb[0].mxu0 %v5981
    %v5983 = vpop.f32.mrb[0].mxu0
    %v5984 = vadd.f32 %v5910, %v5983
    %v5985 = vpop.f32.mrb[0].mxu0
    %5986 = vdwg.mxu0
    %5987 = vmatprep.subr.mxu0 0.0
    %v5988 = vand.u32 %v5756, 4294901760
    %5989 = vmatpush1.msra.mxu0 %v5988
    %5990 = vmatprep.subr.mxu0 0.0
    %5991 = vmatpush1.msra.mxu0 0.0
    %5992 = vmatprep.subr.mxu0 0.0
    %5993 = vmatpush1.msra.mxu0 0.0
    %5994 = vmatprep.subr.mxu0 0.0
    %5995 = vmatpush1.msra.mxu0 0.0
    %5996 = vmatprep.subr.mxu0 0.0
    %5997 = vmatpush1.msra.mxu0 0.0
    %5998 = vmatprep.subr.mxu0 0.0
    %5999 = vmatpush1.msra.mxu0 0.0
    %6000 = vmatprep.subr.mxu0 0.0
    %6001 = vmatpush1.msra.mxu0 0.0
    %6002 = vmatprep.subr.mxu0 0.0
    %6003 = vmatpush1.msra.mxu0 0.0
    %6004 = vmatprep.subr.mxu0 0.0
    %6005 = vmatpush1.msra.mxu0 0.0
    %6006 = vmatprep.subr.mxu0 0.0
    %6007 = vmatpush1.msra.mxu0 0.0
    %6008 = vmatprep.subr.mxu0 0.0
    %6009 = vmatpush1.msra.mxu0 0.0
    %6010 = vmatprep.subr.mxu0 0.0
    %6011 = vmatpush1.msra.mxu0 0.0
    %6012 = vmatprep.subr.mxu0 0.0
    %6013 = vmatpush1.msra.mxu0 0.0
    %6014 = vmatprep.subr.mxu0 0.0
    %6015 = vmatpush1.msra.mxu0 0.0
    %6016 = vmatprep.subr.mxu0 0.0
    %6017 = vmatpush1.msra.mxu0 0.0
    %6018 = vmatprep.subr.mxu0 0.0
    %6019 = vmatpush1.msra.mxu0 0.0
    %6020 = vmatprep.subr.mxu0 0.0
    %6021 = vmatpush1.msra.mxu0 0.0
    %6022 = vmatprep.subr.mxu0 0.0
    %6023 = vmatpush1.msra.mxu0 0.0
    %6024 = vmatprep.subr.mxu0 0.0
    %6025 = vmatpush1.msra.mxu0 0.0
    %6026 = vmatprep.subr.mxu0 0.0
    %6027 = vmatpush1.msra.mxu0 0.0
    %6028 = vmatprep.subr.mxu0 0.0
    %6029 = vmatpush1.msra.mxu0 0.0
    %6030 = vmatprep.subr.mxu0 0.0
    %6031 = vmatpush1.msra.mxu0 0.0
    %6032 = vmatprep.subr.mxu0 0.0
    %6033 = vmatpush1.msra.mxu0 0.0
    %6034 = vmatprep.subr.mxu0 0.0
    %6035 = vmatpush1.msra.mxu0 0.0
    %6036 = vmatprep.subr.mxu0 0.0
    %6037 = vmatpush1.msra.mxu0 0.0
    %6038 = vmatprep.subr.mxu0 0.0
    %6039 = vmatpush1.msra.mxu0 0.0
    %6040 = vmatprep.subr.mxu0 0.0
    %6041 = vmatpush1.msra.mxu0 0.0
    %6042 = vmatprep.subr.mxu0 0.0
    %6043 = vmatpush1.msra.mxu0 0.0
    %6044 = vmatprep.subr.mxu0 0.0
    %6045 = vmatpush1.msra.mxu0 0.0
    %6046 = vmatprep.subr.mxu0 0.0
    %6047 = vmatpush1.msra.mxu0 0.0
    %6048 = vmatprep.subr.mxu0 0.0
    %6049 = vmatpush1.msra.mxu0 0.0
    %6050 = vmatprep.subr.mxu0 0.0
    %6051 = vmatpush1.msra.mxu0 0.0
    %6052 = vmatprep.mubr.f32.mxu0 0.0
    %v6053 = vand.u32 %v5759, 4294901760
    %v6054 = vsub.f32 %v5759, %v6053
    %v6055 = vand.u32 %v6054, 4294901760
    %6056 = vmatmul.mubr.f32.gmra.mrb[0].mxu0 %v6055
    %v6057 = vpop.f32.mrb[0].mxu0
    %v6058 = vadd.f32 %v5984, %v6057
    %v6059 = vpop.f32.mrb[0].mxu0
    %6060 = vdwg.mxu0
    %6061 = vmatprep.subr.mxu0 0.0
    %v6062 = vand.u32 %v5756, 4294901760
    %v6063 = vsub.f32 %v5756, %v6062
    %v6064 = vand.u32 %v6063, 4294901760
    %6065 = vmatpush1.msra.mxu0 %v6064
    %6066 = vmatprep.subr.mxu0 0.0
    %6067 = vmatpush1.msra.mxu0 0.0
    %6068 = vmatprep.subr.mxu0 0.0
    %6069 = vmatpush1.msra.mxu0 0.0
    %6070 = vmatprep.subr.mxu0 0.0
    %6071 = vmatpush1.msra.mxu0 0.0
    %6072 = vmatprep.subr.mxu0 0.0
    %6073 = vmatpush1.msra.mxu0 0.0
    %6074 = vmatprep.subr.mxu0 0.0
    %6075 = vmatpush1.msra.mxu0 0.0
    %6076 = vmatprep.subr.mxu0 0.0
    %6077 = vmatpush1.msra.mxu0 0.0
    %6078 = vmatprep.subr.mxu0 0.0
    %6079 = vmatpush1.msra.mxu0 0.0
    %6080 = vmatprep.subr.mxu0 0.0
    %6081 = vmatpush1.msra.mxu0 0.0
    %6082 = vmatprep.subr.mxu0 0.0
    %6083 = vmatpush1.msra.mxu0 0.0
    %6084 = vmatprep.subr.mxu0 0.0
    %6085 = vmatpush1.msra.mxu0 0.0
    %6086 = vmatprep.subr.mxu0 0.0
    %6087 = vmatpush1.msra.mxu0 0.0
    %6088 = vmatprep.subr.mxu0 0.0
    %6089 = vmatpush1.msra.mxu0 0.0
    %6090 = vmatprep.subr.mxu0 0.0
    %6091 = vmatpush1.msra.mxu0 0.0
    %6092 = vmatprep.subr.mxu0 0.0
    %6093 = vmatpush1.msra.mxu0 0.0
    %6094 = vmatprep.subr.mxu0 0.0
    %6095 = vmatpush1.msra.mxu0 0.0
    %6096 = vmatprep.subr.mxu0 0.0
    %6097 = vmatpush1.msra.mxu0 0.0
    %6098 = vmatprep.subr.mxu0 0.0
    %6099 = vmatpush1.msra.mxu0 0.0
    %6100 = vmatprep.subr.mxu0 0.0
    %6101 = vmatpush1.msra.mxu0 0.0
    %6102 = vmatprep.subr.mxu0 0.0
    %6103 = vmatpush1.msra.mxu0 0.0
    %6104 = vmatprep.subr.mxu0 0.0
    %6105 = vmatpush1.msra.mxu0 0.0
    %6106 = vmatprep.subr.mxu0 0.0
    %6107 = vmatpush1.msra.mxu0 0.0
    %6108 = vmatprep.subr.mxu0 0.0
    %6109 = vmatpush1.msra.mxu0 0.0
    %6110 = vmatprep.subr.mxu0 0.0
    %6111 = vmatpush1.msra.mxu0 0.0
    %6112 = vmatprep.subr.mxu0 0.0
    %6113 = vmatpush1.msra.mxu0 0.0
    %6114 = vmatprep.subr.mxu0 0.0
    %6115 = vmatpush1.msra.mxu0 0.0
    %6116 = vmatprep.subr.mxu0 0.0
    %6117 = vmatpush1.msra.mxu0 0.0
    %6118 = vmatprep.subr.mxu0 0.0
    %6119 = vmatpush1.msra.mxu0 0.0
    %6120 = vmatprep.subr.mxu0 0.0
    %6121 = vmatpush1.msra.mxu0 0.0
    %6122 = vmatprep.subr.mxu0 0.0
    %6123 = vmatpush1.msra.mxu0 0.0
    %6124 = vmatprep.subr.mxu0 0.0
    %6125 = vmatpush1.msra.mxu0 0.0
    %6126 = vmatprep.subr.mxu0 0.0
    %6127 = vmatpush1.msra.mxu0 0.0
    %6128 = vmatprep.mubr.f32.mxu0 0.0
    %v6129 = vand.u32 %v5759, 4294901760
    %6130 = vmatmul.mubr.f32.gmra.mrb[0].mxu0 %v6129
    %v6131 = vpop.f32.mrb[0].mxu0
    %v6132 = vadd.f32 %v6058, %v6131
    %v6133 = vpop.f32.mrb[0].mxu0
    %6134 = vdwg.mxu0
    %6135 = vmatprep.subr.mxu0 0.0
    %v6136 = vand.u32 %v5756, 4294901760
    %6137 = vmatpush1.msra.mxu0 %v6136
    %6138 = vmatprep.subr.mxu0 0.0
    %6139 = vmatpush1.msra.mxu0 0.0
    %6140 = vmatprep.subr.mxu0 0.0
    %6141 = vmatpush1.msra.mxu0 0.0
    %6142 = vmatprep.subr.mxu0 0.0
    %6143 = vmatpush1.msra.mxu0 0.0
    %6144 = vmatprep.subr.mxu0 0.0
    %6145 = vmatpush1.msra.mxu0 0.0
    %6146 = vmatprep.subr.mxu0 0.0
    %6147 = vmatpush1.msra.mxu0 0.0
    %6148 = vmatprep.subr.mxu0 0.0
    %6149 = vmatpush1.msra.mxu0 0.0
    %6150 = vmatprep.subr.mxu0 0.0
    %6151 = vmatpush1.msra.mxu0 0.0
    %6152 = vmatprep.subr.mxu0 0.0
    %6153 = vmatpush1.msra.mxu0 0.0
    %6154 = vmatprep.subr.mxu0 0.0
    %6155 = vmatpush1.msra.mxu0 0.0
    %6156 = vmatprep.subr.mxu0 0.0
    %6157 = vmatpush1.msra.mxu0 0.0
    %6158 = vmatprep.subr.mxu0 0.0
    %6159 = vmatpush1.msra.mxu0 0.0
    %6160 = vmatprep.subr.mxu0 0.0
    %6161 = vmatpush1.msra.mxu0 0.0
    %6162 = vmatprep.subr.mxu0 0.0
    %6163 = vmatpush1.msra.mxu0 0.0
    %6164 = vmatprep.subr.mxu0 0.0
    %6165 = vmatpush1.msra.mxu0 0.0
    %6166 = vmatprep.subr.mxu0 0.0
    %6167 = vmatpush1.msra.mxu0 0.0
    %6168 = vmatprep.subr.mxu0 0.0
    %6169 = vmatpush1.msra.mxu0 0.0
    %6170 = vmatprep.subr.mxu0 0.0
    %6171 = vmatpush1.msra.mxu0 0.0
    %6172 = vmatprep.subr.mxu0 0.0
    %6173 = vmatpush1.msra.mxu0 0.0
    %6174 = vmatprep.subr.mxu0 0.0
    %6175 = vmatpush1.msra.mxu0 0.0
    %6176 = vmatprep.subr.mxu0 0.0
    %6177 = vmatpush1.msra.mxu0 0.0
    %6178 = vmatprep.subr.mxu0 0.0
    %6179 = vmatpush1.msra.mxu0 0.0
    %6180 = vmatprep.subr.mxu0 0.0
    %6181 = vmatpush1.msra.mxu0 0.0
    %6182 = vmatprep.subr.mxu0 0.0
    %6183 = vmatpush1.msra.mxu0 0.0
    %6184 = vmatprep.subr.mxu0 0.0
    %6185 = vmatpush1.msra.mxu0 0.0
    %6186 = vmatprep.subr.mxu0 0.0
    %6187 = vmatpush1.msra.mxu0 0.0
    %6188 = vmatprep.subr.mxu0 0.0
    %6189 = vmatpush1.msra.mxu0 0.0
    %6190 = vmatprep.subr.mxu0 0.0
    %6191 = vmatpush1.msra.mxu0 0.0
    %6192 = vmatprep.subr.mxu0 0.0
    %6193 = vmatpush1.msra.mxu0 0.0
    %6194 = vmatprep.subr.mxu0 0.0
    %6195 = vmatpush1.msra.mxu0 0.0
    %6196 = vmatprep.subr.mxu0 0.0
    %6197 = vmatpush1.msra.mxu0 0.0
    %6198 = vmatprep.subr.mxu0 0.0
    %6199 = vmatpush1.msra.mxu0 0.0
    %6200 = vmatprep.mubr.f32.mxu0 0.0
    %v6201 = vand.u32 %v5759, 4294901760
    %6202 = vmatmul.mubr.f32.gmra.mrb[0].mxu0 %v6201
    %v6203 = vpop.f32.mrb[0].mxu0
    %v6204 = vadd.f32 %v6132, %v6203
    %v6205 = vpop.f32.mrb[0].mxu0
    %6206 = vdwg.mxu0
    %v6207 = vrcp.pop %v5754
    %v6208 = vmul.f32 %v5754, %v6207
    %v6209 = vsub.f32 2.0, %v6208
    %v6210 = vmul.f32 %v6207, %v6209
    %v6211 = vmul.f32 %v6204, %v6210
    %6213 = vrot.lane.b32.xlu0 %v6211, 8
    %v6214 = vpop.permute.xlu0 %6213
    %6216 = vst.msk [vmem:[#allocation2 + $0x8] sm:$0xff] %vm2504, %v6214
    %6217 = vrot.lane.b32.xlu0 %v644, 112
    %v6218 = vpop.permute.xlu0 %6217
    %6219 = vrot.lane.b32.xlu0 %v644, 80
    %v6220 = vpop.permute.xlu0 %6219
    %v6221 = vsel %vm652, %v6218, 0
    %v6223 = vsel %vm652, %v6220, 0
    %6225 = vmatprep.subr.mxu0 0.0
    %v6226 = vand.u32 %v6223, 4294901760
    %6227 = vmatpush1.xpose.msra.mxu0 %v6226
    %6228 = vmatprep.subr.mxu0 0.0
    %6229 = vmatpush1.xpose.msra.mxu0 0.0
    %6230 = vmatprep.subr.mxu0 0.0
    %6231 = vmatpush1.xpose.msra.mxu0 0.0
    %6232 = vmatprep.subr.mxu0 0.0
    %6233 = vmatpush1.xpose.msra.mxu0 0.0
    %6234 = vmatprep.subr.mxu0 0.0
    %6235 = vmatpush1.xpose.msra.mxu0 0.0
    %6236 = vmatprep.subr.mxu0 0.0
    %6237 = vmatpush1.xpose.msra.mxu0 0.0
    %6238 = vmatprep.subr.mxu0 0.0
    %6239 = vmatpush1.xpose.msra.mxu0 0.0
    %6240 = vmatprep.subr.mxu0 0.0
    %6241 = vmatpush1.xpose.msra.mxu0 0.0
    %6242 = vmatprep.subr.mxu0 0.0
    %6243 = vmatpush1.xpose.msra.mxu0 0.0
    %6244 = vmatprep.subr.mxu0 0.0
    %6245 = vmatpush1.xpose.msra.mxu0 0.0
    %6246 = vmatprep.subr.mxu0 0.0
    %6247 = vmatpush1.xpose.msra.mxu0 0.0
    %6248 = vmatprep.subr.mxu0 0.0
    %6249 = vmatpush1.xpose.msra.mxu0 0.0
    %6250 = vmatprep.subr.mxu0 0.0
    %6251 = vmatpush1.xpose.msra.mxu0 0.0
    %6252 = vmatprep.subr.mxu0 0.0
    %6253 = vmatpush1.xpose.msra.mxu0 0.0
    %6254 = vmatprep.subr.mxu0 0.0
    %6255 = vmatpush1.xpose.msra.mxu0 0.0
    %6256 = vmatprep.subr.mxu0 0.0
    %6257 = vmatpush1.xpose.msra.mxu0 0.0
    %6258 = vmatprep.subr.mxu0 0.0
    %6259 = vmatpush1.xpose.msra.mxu0 0.0
    %6260 = vmatprep.subr.mxu0 0.0
    %6261 = vmatpush1.xpose.msra.mxu0 0.0
    %6262 = vmatprep.subr.mxu0 0.0
    %6263 = vmatpush1.xpose.msra.mxu0 0.0
    %6264 = vmatprep.subr.mxu0 0.0
    %6265 = vmatpush1.xpose.msra.mxu0 0.0
    %6266 = vmatprep.subr.mxu0 0.0
    %6267 = vmatpush1.xpose.msra.mxu0 0.0
    %6268 = vmatprep.subr.mxu0 0.0
    %6269 = vmatpush1.xpose.msra.mxu0 0.0
    %6270 = vmatprep.subr.mxu0 0.0
    %6271 = vmatpush1.xpose.msra.mxu0 0.0
    %6272 = vmatprep.subr.mxu0 0.0
    %6273 = vmatpush1.xpose.msra.mxu0 0.0
    %6274 = vmatprep.subr.mxu0 0.0
    %6275 = vmatpush1.xpose.msra.mxu0 0.0
    %6276 = vmatprep.subr.mxu0 0.0
    %6277 = vmatpush1.xpose.msra.mxu0 0.0
    %6278 = vmatprep.subr.mxu0 0.0
    %6279 = vmatpush1.xpose.msra.mxu0 0.0
    %6280 = vmatprep.subr.mxu0 0.0
    %6281 = vmatpush1.xpose.msra.mxu0 0.0
    %6282 = vmatprep.subr.mxu0 0.0
    %6283 = vmatpush1.xpose.msra.mxu0 0.0
    %6284 = vmatprep.subr.mxu0 0.0
    %6285 = vmatpush1.xpose.msra.mxu0 0.0
    %6286 = vmatprep.subr.mxu0 0.0
    %6287 = vmatpush1.xpose.msra.mxu0 0.0
    %6288 = vmatprep.subr.mxu0 0.0
    %6289 = vmatpush1.xpose.msra.mxu0 0.0
    %6290 = vmatprep.mubr.f32.mxu0 0.0
    %v6291 = vand.u32 %v6221, 4294901760
    %v6292 = vsub.f32 %v6221, %v6291
    %v6293 = vand.u32 %v6292, 4294901760
    %v6294 = vsub.f32 %v6292, %v6293
    %v6295 = vand.u32 %v6294, 4294901760
    %6296 = vmatmul.mubr.f32.gmra.mrb[0].mxu0 %v6295
    %v6297 = vpop.f32.mrb[0].mxu0
    %v6298 = vadd.f32 0.0, %v6297
    %v6299 = vpop.f32.mrb[0].mxu0
    %6300 = vdwg.mxu0
    %6301 = vmatprep.subr.mxu0 0.0
    %v6302 = vand.u32 %v6223, 4294901760
    %v6303 = vsub.f32 %v6223, %v6302
    %v6304 = vand.u32 %v6303, 4294901760
    %v6305 = vsub.f32 %v6303, %v6304
    %v6306 = vand.u32 %v6305, 4294901760
    %6307 = vmatpush1.xpose.msra.mxu0 %v6306
    %6308 = vmatprep.subr.mxu0 0.0
    %6309 = vmatpush1.xpose.msra.mxu0 0.0
    %6310 = vmatprep.subr.mxu0 0.0
    %6311 = vmatpush1.xpose.msra.mxu0 0.0
    %6312 = vmatprep.subr.mxu0 0.0
    %6313 = vmatpush1.xpose.msra.mxu0 0.0
    %6314 = vmatprep.subr.mxu0 0.0
    %6315 = vmatpush1.xpose.msra.mxu0 0.0
    %6316 = vmatprep.subr.mxu0 0.0
    %6317 = vmatpush1.xpose.msra.mxu0 0.0
    %6318 = vmatprep.subr.mxu0 0.0
    %6319 = vmatpush1.xpose.msra.mxu0 0.0
    %6320 = vmatprep.subr.mxu0 0.0
    %6321 = vmatpush1.xpose.msra.mxu0 0.0
    %6322 = vmatprep.subr.mxu0 0.0
    %6323 = vmatpush1.xpose.msra.mxu0 0.0
    %6324 = vmatprep.subr.mxu0 0.0
    %6325 = vmatpush1.xpose.msra.mxu0 0.0
    %6326 = vmatprep.subr.mxu0 0.0
    %6327 = vmatpush1.xpose.msra.mxu0 0.0
    %6328 = vmatprep.subr.mxu0 0.0
    %6329 = vmatpush1.xpose.msra.mxu0 0.0
    %6330 = vmatprep.subr.mxu0 0.0
    %6331 = vmatpush1.xpose.msra.mxu0 0.0
    %6332 = vmatprep.subr.mxu0 0.0
    %6333 = vmatpush1.xpose.msra.mxu0 0.0
    %6334 = vmatprep.subr.mxu0 0.0
    %6335 = vmatpush1.xpose.msra.mxu0 0.0
    %6336 = vmatprep.subr.mxu0 0.0
    %6337 = vmatpush1.xpose.msra.mxu0 0.0
    %6338 = vmatprep.subr.mxu0 0.0
    %6339 = vmatpush1.xpose.msra.mxu0 0.0
    %6340 = vmatprep.subr.mxu0 0.0
    %6341 = vmatpush1.xpose.msra.mxu0 0.0
    %6342 = vmatprep.subr.mxu0 0.0
    %6343 = vmatpush1.xpose.msra.mxu0 0.0
    %6344 = vmatprep.subr.mxu0 0.0
    %6345 = vmatpush1.xpose.msra.mxu0 0.0
    %6346 = vmatprep.subr.mxu0 0.0
    %6347 = vmatpush1.xpose.msra.mxu0 0.0
    %6348 = vmatprep.subr.mxu0 0.0
    %6349 = vmatpush1.xpose.msra.mxu0 0.0
    %6350 = vmatprep.subr.mxu0 0.0
    %6351 = vmatpush1.xpose.msra.mxu0 0.0
    %6352 = vmatprep.subr.mxu0 0.0
    %6353 = vmatpush1.xpose.msra.mxu0 0.0
    %6354 = vmatprep.subr.mxu0 0.0
    %6355 = vmatpush1.xpose.msra.mxu0 0.0
    %6356 = vmatprep.subr.mxu0 0.0
    %6357 = vmatpush1.xpose.msra.mxu0 0.0
    %6358 = vmatprep.subr.mxu0 0.0
    %6359 = vmatpush1.xpose.msra.mxu0 0.0
    %6360 = vmatprep.subr.mxu0 0.0
    %6361 = vmatpush1.xpose.msra.mxu0 0.0
    %6362 = vmatprep.subr.mxu0 0.0
    %6363 = vmatpush1.xpose.msra.mxu0 0.0
    %6364 = vmatprep.subr.mxu0 0.0
    %6365 = vmatpush1.xpose.msra.mxu0 0.0
    %6366 = vmatprep.subr.mxu0 0.0
    %6367 = vmatpush1.xpose.msra.mxu0 0.0
    %6368 = vmatprep.subr.mxu0 0.0
    %6369 = vmatpush1.xpose.msra.mxu0 0.0
    %6370 = vmatprep.mubr.f32.mxu0 0.0
    %v6371 = vand.u32 %v6221, 4294901760
    %6372 = vmatmul.mubr.f32.gmra.mrb[0].mxu0 %v6371
    %v6373 = vpop.f32.mrb[0].mxu0
    %v6374 = vadd.f32 %v6298, %v6373
    %v6375 = vpop.f32.mrb[0].mxu0
    %6376 = vdwg.mxu0
    %6377 = vmatprep.subr.mxu0 0.0
    %v6378 = vand.u32 %v6223, 4294901760
    %v6379 = vsub.f32 %v6223, %v6378
    %6380 = vmatpush1.xpose.msra.mxu0 %v6379
    %6381 = vmatprep.subr.mxu0 0.0
    %6382 = vmatpush1.xpose.msra.mxu0 0.0
    %6383 = vmatprep.subr.mxu0 0.0
    %6384 = vmatpush1.xpose.msra.mxu0 0.0
    %6385 = vmatprep.subr.mxu0 0.0
    %6386 = vmatpush1.xpose.msra.mxu0 0.0
    %6387 = vmatprep.subr.mxu0 0.0
    %6388 = vmatpush1.xpose.msra.mxu0 0.0
    %6389 = vmatprep.subr.mxu0 0.0
    %6390 = vmatpush1.xpose.msra.mxu0 0.0
    %6391 = vmatprep.subr.mxu0 0.0
    %6392 = vmatpush1.xpose.msra.mxu0 0.0
    %6393 = vmatprep.subr.mxu0 0.0
    %6394 = vmatpush1.xpose.msra.mxu0 0.0
    %6395 = vmatprep.subr.mxu0 0.0
    %6396 = vmatpush1.xpose.msra.mxu0 0.0
    %6397 = vmatprep.subr.mxu0 0.0
    %6398 = vmatpush1.xpose.msra.mxu0 0.0
    %6399 = vmatprep.subr.mxu0 0.0
    %6400 = vmatpush1.xpose.msra.mxu0 0.0
    %6401 = vmatprep.subr.mxu0 0.0
    %6402 = vmatpush1.xpose.msra.mxu0 0.0
    %6403 = vmatprep.subr.mxu0 0.0
    %6404 = vmatpush1.xpose.msra.mxu0 0.0
    %6405 = vmatprep.subr.mxu0 0.0
    %6406 = vmatpush1.xpose.msra.mxu0 0.0
    %6407 = vmatprep.subr.mxu0 0.0
    %6408 = vmatpush1.xpose.msra.mxu0 0.0
    %6409 = vmatprep.subr.mxu0 0.0
    %6410 = vmatpush1.xpose.msra.mxu0 0.0
    %6411 = vmatprep.subr.mxu0 0.0
    %6412 = vmatpush1.xpose.msra.mxu0 0.0
    %6413 = vmatprep.subr.mxu0 0.0
    %6414 = vmatpush1.xpose.msra.mxu0 0.0
    %6415 = vmatprep.subr.mxu0 0.0
    %6416 = vmatpush1.xpose.msra.mxu0 0.0
    %6417 = vmatprep.subr.mxu0 0.0
    %6418 = vmatpush1.xpose.msra.mxu0 0.0
    %6419 = vmatprep.subr.mxu0 0.0
    %6420 = vmatpush1.xpose.msra.mxu0 0.0
    %6421 = vmatprep.subr.mxu0 0.0
    %6422 = vmatpush1.xpose.msra.mxu0 0.0
    %6423 = vmatprep.subr.mxu0 0.0
    %6424 = vmatpush1.xpose.msra.mxu0 0.0
    %6425 = vmatprep.subr.mxu0 0.0
    %6426 = vmatpush1.xpose.msra.mxu0 0.0
    %6427 = vmatprep.subr.mxu0 0.0
    %6428 = vmatpush1.xpose.msra.mxu0 0.0
    %6429 = vmatprep.subr.mxu0 0.0
    %6430 = vmatpush1.xpose.msra.mxu0 0.0
    %6431 = vmatprep.subr.mxu0 0.0
    %6432 = vmatpush1.xpose.msra.mxu0 0.0
    %6433 = vmatprep.subr.mxu0 0.0
    %6434 = vmatpush1.xpose.msra.mxu0 0.0
    %6435 = vmatprep.subr.mxu0 0.0
    %6436 = vmatpush1.xpose.msra.mxu0 0.0
    %6437 = vmatprep.subr.mxu0 0.0
    %6438 = vmatpush1.xpose.msra.mxu0 0.0
    %6439 = vmatprep.subr.mxu0 0.0
    %6440 = vmatpush1.xpose.msra.mxu0 0.0
    %6441 = vmatprep.subr.mxu0 0.0
    %6442 = vmatpush1.xpose.msra.mxu0 0.0
    %6443 = vmatprep.mubr.f32.mxu0 0.0
    %v6444 = vand.u32 %v6221, 4294901760
    %v6445 = vsub.f32 %v6221, %v6444
    %6446 = vmatmul.mubr.f32.gmra.mrb[0].mxu0 %v6445
    %v6447 = vpop.f32.mrb[0].mxu0
    %v6448 = vadd.f32 %v6374, %v6447
    %v6449 = vpop.f32.mrb[0].mxu0
    %6450 = vdwg.mxu0
    %6451 = vmatprep.subr.mxu0 0.0
    %v6452 = vand.u32 %v6223, 4294901760
    %6453 = vmatpush1.xpose.msra.mxu0 %v6452
    %6454 = vmatprep.subr.mxu0 0.0
    %6455 = vmatpush1.xpose.msra.mxu0 0.0
    %6456 = vmatprep.subr.mxu0 0.0
    %6457 = vmatpush1.xpose.msra.mxu0 0.0
    %6458 = vmatprep.subr.mxu0 0.0
    %6459 = vmatpush1.xpose.msra.mxu0 0.0
    %6460 = vmatprep.subr.mxu0 0.0
    %6461 = vmatpush1.xpose.msra.mxu0 0.0
    %6462 = vmatprep.subr.mxu0 0.0
    %6463 = vmatpush1.xpose.msra.mxu0 0.0
    %6464 = vmatprep.subr.mxu0 0.0
    %6465 = vmatpush1.xpose.msra.mxu0 0.0
    %6466 = vmatprep.subr.mxu0 0.0
    %6467 = vmatpush1.xpose.msra.mxu0 0.0
    %6468 = vmatprep.subr.mxu0 0.0
    %6469 = vmatpush1.xpose.msra.mxu0 0.0
    %6470 = vmatprep.subr.mxu0 0.0
    %6471 = vmatpush1.xpose.msra.mxu0 0.0
    %6472 = vmatprep.subr.mxu0 0.0
    %6473 = vmatpush1.xpose.msra.mxu0 0.0
    %6474 = vmatprep.subr.mxu0 0.0
    %6475 = vmatpush1.xpose.msra.mxu0 0.0
    %6476 = vmatprep.subr.mxu0 0.0
    %6477 = vmatpush1.xpose.msra.mxu0 0.0
    %6478 = vmatprep.subr.mxu0 0.0
    %6479 = vmatpush1.xpose.msra.mxu0 0.0
    %6480 = vmatprep.subr.mxu0 0.0
    %6481 = vmatpush1.xpose.msra.mxu0 0.0
    %6482 = vmatprep.subr.mxu0 0.0
    %6483 = vmatpush1.xpose.msra.mxu0 0.0
    %6484 = vmatprep.subr.mxu0 0.0
    %6485 = vmatpush1.xpose.msra.mxu0 0.0
    %6486 = vmatprep.subr.mxu0 0.0
    %6487 = vmatpush1.xpose.msra.mxu0 0.0
    %6488 = vmatprep.subr.mxu0 0.0
    %6489 = vmatpush1.xpose.msra.mxu0 0.0
    %6490 = vmatprep.subr.mxu0 0.0
    %6491 = vmatpush1.xpose.msra.mxu0 0.0
    %6492 = vmatprep.subr.mxu0 0.0
    %6493 = vmatpush1.xpose.msra.mxu0 0.0
    %6494 = vmatprep.subr.mxu0 0.0
    %6495 = vmatpush1.xpose.msra.mxu0 0.0
    %6496 = vmatprep.subr.mxu0 0.0
    %6497 = vmatpush1.xpose.msra.mxu0 0.0
    %6498 = vmatprep.subr.mxu0 0.0
    %6499 = vmatpush1.xpose.msra.mxu0 0.0
    %6500 = vmatprep.subr.mxu0 0.0
    %6501 = vmatpush1.xpose.msra.mxu0 0.0
    %6502 = vmatprep.subr.mxu0 0.0
    %6503 = vmatpush1.xpose.msra.mxu0 0.0
    %6504 = vmatprep.subr.mxu0 0.0
    %6505 = vmatpush1.xpose.msra.mxu0 0.0
    %6506 = vmatprep.subr.mxu0 0.0
    %6507 = vmatpush1.xpose.msra.mxu0 0.0
    %6508 = vmatprep.subr.mxu0 0.0
    %6509 = vmatpush1.xpose.msra.mxu0 0.0
    %6510 = vmatprep.subr.mxu0 0.0
    %6511 = vmatpush1.xpose.msra.mxu0 0.0
    %6512 = vmatprep.subr.mxu0 0.0
    %6513 = vmatpush1.xpose.msra.mxu0 0.0
    %6514 = vmatprep.subr.mxu0 0.0
    %6515 = vmatpush1.xpose.msra.mxu0 0.0
    %6516 = vmatprep.mubr.f32.mxu0 0.0
    %v6517 = vand.u32 %v6221, 4294901760
    %v6518 = vsub.f32 %v6221, %v6517
    %v6519 = vand.u32 %v6518, 4294901760
    %6520 = vmatmul.mubr.f32.gmra.mrb[0].mxu0 %v6519
    %v6521 = vpop.f32.mrb[0].mxu0
    %v6522 = vadd.f32 %v6448, %v6521
    %v6523 = vpop.f32.mrb[0].mxu0
    %6524 = vdwg.mxu0
    %6525 = vmatprep.subr.mxu0 0.0
    %v6526 = vand.u32 %v6223, 4294901760
    %v6527 = vsub.f32 %v6223, %v6526
    %v6528 = vand.u32 %v6527, 4294901760
    %6529 = vmatpush1.xpose.msra.mxu0 %v6528
    %6530 = vmatprep.subr.mxu0 0.0
    %6531 = vmatpush1.xpose.msra.mxu0 0.0
    %6532 = vmatprep.subr.mxu0 0.0
    %6533 = vmatpush1.xpose.msra.mxu0 0.0
    %6534 = vmatprep.subr.mxu0 0.0
    %6535 = vmatpush1.xpose.msra.mxu0 0.0
    %6536 = vmatprep.subr.mxu0 0.0
    %6537 = vmatpush1.xpose.msra.mxu0 0.0
    %6538 = vmatprep.subr.mxu0 0.0
    %6539 = vmatpush1.xpose.msra.mxu0 0.0
    %6540 = vmatprep.subr.mxu0 0.0
    %6541 = vmatpush1.xpose.msra.mxu0 0.0
    %6542 = vmatprep.subr.mxu0 0.0
    %6543 = vmatpush1.xpose.msra.mxu0 0.0
    %6544 = vmatprep.subr.mxu0 0.0
    %6545 = vmatpush1.xpose.msra.mxu0 0.0
    %6546 = vmatprep.subr.mxu0 0.0
    %6547 = vmatpush1.xpose.msra.mxu0 0.0
    %6548 = vmatprep.subr.mxu0 0.0
    %6549 = vmatpush1.xpose.msra.mxu0 0.0
    %6550 = vmatprep.subr.mxu0 0.0
    %6551 = vmatpush1.xpose.msra.mxu0 0.0
    %6552 = vmatprep.subr.mxu0 0.0
    %6553 = vmatpush1.xpose.msra.mxu0 0.0
    %6554 = vmatprep.subr.mxu0 0.0
    %6555 = vmatpush1.xpose.msra.mxu0 0.0
    %6556 = vmatprep.subr.mxu0 0.0
    %6557 = vmatpush1.xpose.msra.mxu0 0.0
    %6558 = vmatprep.subr.mxu0 0.0
    %6559 = vmatpush1.xpose.msra.mxu0 0.0
    %6560 = vmatprep.subr.mxu0 0.0
    %6561 = vmatpush1.xpose.msra.mxu0 0.0
    %6562 = vmatprep.subr.mxu0 0.0
    %6563 = vmatpush1.xpose.msra.mxu0 0.0
    %6564 = vmatprep.subr.mxu0 0.0
    %6565 = vmatpush1.xpose.msra.mxu0 0.0
    %6566 = vmatprep.subr.mxu0 0.0
    %6567 = vmatpush1.xpose.msra.mxu0 0.0
    %6568 = vmatprep.subr.mxu0 0.0
    %6569 = vmatpush1.xpose.msra.mxu0 0.0
    %6570 = vmatprep.subr.mxu0 0.0
    %6571 = vmatpush1.xpose.msra.mxu0 0.0
    %6572 = vmatprep.subr.mxu0 0.0
    %6573 = vmatpush1.xpose.msra.mxu0 0.0
    %6574 = vmatprep.subr.mxu0 0.0
    %6575 = vmatpush1.xpose.msra.mxu0 0.0
    %6576 = vmatprep.subr.mxu0 0.0
    %6577 = vmatpush1.xpose.msra.mxu0 0.0
    %6578 = vmatprep.subr.mxu0 0.0
    %6579 = vmatpush1.xpose.msra.mxu0 0.0
    %6580 = vmatprep.subr.mxu0 0.0
    %6581 = vmatpush1.xpose.msra.mxu0 0.0
    %6582 = vmatprep.subr.mxu0 0.0
    %6583 = vmatpush1.xpose.msra.mxu0 0.0
    %6584 = vmatprep.subr.mxu0 0.0
    %6585 = vmatpush1.xpose.msra.mxu0 0.0
    %6586 = vmatprep.subr.mxu0 0.0
    %6587 = vmatpush1.xpose.msra.mxu0 0.0
    %6588 = vmatprep.subr.mxu0 0.0
    %6589 = vmatpush1.xpose.msra.mxu0 0.0
    %6590 = vmatprep.subr.mxu0 0.0
    %6591 = vmatpush1.xpose.msra.mxu0 0.0
    %6592 = vmatprep.mubr.f32.mxu0 0.0
    %v6593 = vand.u32 %v6221, 4294901760
    %6594 = vmatmul.mubr.f32.gmra.mrb[0].mxu0 %v6593
    %v6595 = vpop.f32.mrb[0].mxu0
    %v6596 = vadd.f32 %v6522, %v6595
    %v6597 = vpop.f32.mrb[0].mxu0
    %6598 = vdwg.mxu0
    %6599 = vmatprep.subr.mxu0 0.0
    %v6600 = vand.u32 %v6223, 4294901760
    %6601 = vmatpush1.xpose.msra.mxu0 %v6600
    %6602 = vmatprep.subr.mxu0 0.0
    %6603 = vmatpush1.xpose.msra.mxu0 0.0
    %6604 = vmatprep.subr.mxu0 0.0
    %6605 = vmatpush1.xpose.msra.mxu0 0.0
    %6606 = vmatprep.subr.mxu0 0.0
    %6607 = vmatpush1.xpose.msra.mxu0 0.0
    %6608 = vmatprep.subr.mxu0 0.0
    %6609 = vmatpush1.xpose.msra.mxu0 0.0
    %6610 = vmatprep.subr.mxu0 0.0
    %6611 = vmatpush1.xpose.msra.mxu0 0.0
    %6612 = vmatprep.subr.mxu0 0.0
    %6613 = vmatpush1.xpose.msra.mxu0 0.0
    %6614 = vmatprep.subr.mxu0 0.0
    %6615 = vmatpush1.xpose.msra.mxu0 0.0
    %6616 = vmatprep.subr.mxu0 0.0
    %6617 = vmatpush1.xpose.msra.mxu0 0.0
    %6618 = vmatprep.subr.mxu0 0.0
    %6619 = vmatpush1.xpose.msra.mxu0 0.0
    %6620 = vmatprep.subr.mxu0 0.0
    %6621 = vmatpush1.xpose.msra.mxu0 0.0
    %6622 = vmatprep.subr.mxu0 0.0
    %6623 = vmatpush1.xpose.msra.mxu0 0.0
    %6624 = vmatprep.subr.mxu0 0.0
    %6625 = vmatpush1.xpose.msra.mxu0 0.0
    %6626 = vmatprep.subr.mxu0 0.0
    %6627 = vmatpush1.xpose.msra.mxu0 0.0
    %6628 = vmatprep.subr.mxu0 0.0
    %6629 = vmatpush1.xpose.msra.mxu0 0.0
    %6630 = vmatprep.subr.mxu0 0.0
    %6631 = vmatpush1.xpose.msra.mxu0 0.0
    %6632 = vmatprep.subr.mxu0 0.0
    %6633 = vmatpush1.xpose.msra.mxu0 0.0
    %6634 = vmatprep.subr.mxu0 0.0
    %6635 = vmatpush1.xpose.msra.mxu0 0.0
    %6636 = vmatprep.subr.mxu0 0.0
    %6637 = vmatpush1.xpose.msra.mxu0 0.0
    %6638 = vmatprep.subr.mxu0 0.0
    %6639 = vmatpush1.xpose.msra.mxu0 0.0
    %6640 = vmatprep.subr.mxu0 0.0
    %6641 = vmatpush1.xpose.msra.mxu0 0.0
    %6642 = vmatprep.subr.mxu0 0.0
    %6643 = vmatpush1.xpose.msra.mxu0 0.0
    %6644 = vmatprep.subr.mxu0 0.0
    %6645 = vmatpush1.xpose.msra.mxu0 0.0
    %6646 = vmatprep.subr.mxu0 0.0
    %6647 = vmatpush1.xpose.msra.mxu0 0.0
    %6648 = vmatprep.subr.mxu0 0.0
    %6649 = vmatpush1.xpose.msra.mxu0 0.0
    %6650 = vmatprep.subr.mxu0 0.0
    %6651 = vmatpush1.xpose.msra.mxu0 0.0
    %6652 = vmatprep.subr.mxu0 0.0
    %6653 = vmatpush1.xpose.msra.mxu0 0.0
    %6654 = vmatprep.subr.mxu0 0.0
    %6655 = vmatpush1.xpose.msra.mxu0 0.0
    %6656 = vmatprep.subr.mxu0 0.0
    %6657 = vmatpush1.xpose.msra.mxu0 0.0
    %6658 = vmatprep.subr.mxu0 0.0
    %6659 = vmatpush1.xpose.msra.mxu0 0.0
    %6660 = vmatprep.subr.mxu0 0.0
    %6661 = vmatpush1.xpose.msra.mxu0 0.0
    %6662 = vmatprep.subr.mxu0 0.0
    %6663 = vmatpush1.xpose.msra.mxu0 0.0
    %6664 = vmatprep.mubr.f32.mxu0 0.0
    %v6665 = vand.u32 %v6221, 4294901760
    %6666 = vmatmul.mubr.f32.gmra.mrb[0].mxu0 %v6665
    %v6667 = vpop.f32.mrb[0].mxu0
    %v6668 = vadd.f32 %v6596, %v6667
    %v6669 = vpop.f32.mrb[0].mxu0
    %6670 = vdwg.mxu0
    %v6671 = vmul.f32 %v6668, 0.35355338
    %v6672 = vadd.f32 %v6671, %v4820
    %v6673 = vsel %vm652, %v6672, -inf
    %6674 = vmax.xlane.f32.xlu0 %v6673
    %v6675 = vpop.xlane.xlu0 %6674
    %v6676 = vsub.f32 %v6672, %v6675
    %v6677 = vmul.f32 %v6676, 1.442695
    %v6678 = vpow.pop %v6677
    %v6679 = vsel %vm652, %v6678, 0.0
    %6680 = vadd.xlane.f32.xlu0 %v6679
    %v6681 = vpop.xlane.xlu0 %6680
    %6682 = vrot.lane.b32.xlu0 %v644, 48
    %v6683 = vpop.permute.xlu0 %6682
    %v6686 = vsel %vm652, %v6678, 0
    %6688 = vmatprep.subr.mxu0 0.0
    %v6689 = vand.u32 %v6683, 4294901760
    %6690 = vmatpush1.msra.mxu0 %v6689
    %6691 = vmatprep.subr.mxu0 0.0
    %6692 = vmatpush1.msra.mxu0 0.0
    %6693 = vmatprep.subr.mxu0 0.0
    %6694 = vmatpush1.msra.mxu0 0.0
    %6695 = vmatprep.subr.mxu0 0.0
    %6696 = vmatpush1.msra.mxu0 0.0
    %6697 = vmatprep.subr.mxu0 0.0
    %6698 = vmatpush1.msra.mxu0 0.0
    %6699 = vmatprep.subr.mxu0 0.0
    %6700 = vmatpush1.msra.mxu0 0.0
    %6701 = vmatprep.subr.mxu0 0.0
    %6702 = vmatpush1.msra.mxu0 0.0
    %6703 = vmatprep.subr.mxu0 0.0
    %6704 = vmatpush1.msra.mxu0 0.0
    %6705 = vmatprep.subr.mxu0 0.0
    %6706 = vmatpush1.msra.mxu0 0.0
    %6707 = vmatprep.subr.mxu0 0.0
    %6708 = vmatpush1.msra.mxu0 0.0
    %6709 = vmatprep.subr.mxu0 0.0
    %6710 = vmatpush1.msra.mxu0 0.0
    %6711 = vmatprep.subr.mxu0 0.0
    %6712 = vmatpush1.msra.mxu0 0.0
    %6713 = vmatprep.subr.mxu0 0.0
    %6714 = vmatpush1.msra.mxu0 0.0
    %6715 = vmatprep.subr.mxu0 0.0
    %6716 = vmatpush1.msra.mxu0 0.0
    %6717 = vmatprep.subr.mxu0 0.0
    %6718 = vmatpush1.msra.mxu0 0.0
    %6719 = vmatprep.subr.mxu0 0.0
    %6720 = vmatpush1.msra.mxu0 0.0
    %6721 = vmatprep.subr.mxu0 0.0
    %6722 = vmatpush1.msra.mxu0 0.0
    %6723 = vmatprep.subr.mxu0 0.0
    %6724 = vmatpush1.msra.mxu0 0.0
    %6725 = vmatprep.subr.mxu0 0.0
    %6726 = vmatpush1.msra.mxu0 0.0
    %6727 = vmatprep.subr.mxu0 0.0
    %6728 = vmatpush1.msra.mxu0 0.0
    %6729 = vmatprep.subr.mxu0 0.0
    %6730 = vmatpush1.msra.mxu0 0.0
    %6731 = vmatprep.subr.mxu0 0.0
    %6732 = vmatpush1.msra.mxu0 0.0
    %6733 = vmatprep.subr.mxu0 0.0
    %6734 = vmatpush1.msra.mxu0 0.0
    %6735 = vmatprep.subr.mxu0 0.0
    %6736 = vmatpush1.msra.mxu0 0.0
    %6737 = vmatprep.subr.mxu0 0.0
    %6738 = vmatpush1.msra.mxu0 0.0
    %6739 = vmatprep.subr.mxu0 0.0
    %6740 = vmatpush1.msra.mxu0 0.0
    %6741 = vmatprep.subr.mxu0 0.0
    %6742 = vmatpush1.msra.mxu0 0.0
    %6743 = vmatprep.subr.mxu0 0.0
    %6744 = vmatpush1.msra.mxu0 0.0
    %6745 = vmatprep.subr.mxu0 0.0
    %6746 = vmatpush1.msra.mxu0 0.0
    %6747 = vmatprep.subr.mxu0 0.0
    %6748 = vmatpush1.msra.mxu0 0.0
    %6749 = vmatprep.subr.mxu0 0.0
    %6750 = vmatpush1.msra.mxu0 0.0
    %6751 = vmatprep.subr.mxu0 0.0
    %6752 = vmatpush1.msra.mxu0 0.0
    %6753 = vmatprep.mubr.f32.mxu0 0.0
    %v6754 = vand.u32 %v6686, 4294901760
    %v6755 = vsub.f32 %v6686, %v6754
    %v6756 = vand.u32 %v6755, 4294901760
    %v6757 = vsub.f32 %v6755, %v6756
    %v6758 = vand.u32 %v6757, 4294901760
    %6759 = vmatmul.mubr.f32.gmra.mrb[0].mxu0 %v6758
    %v6760 = vpop.f32.mrb[0].mxu0
    %v6761 = vadd.f32 0.0, %v6760
    %v6762 = vpop.f32.mrb[0].mxu0
    %6763 = vdwg.mxu0
    %6764 = vmatprep.subr.mxu0 0.0
    %v6765 = vand.u32 %v6683, 4294901760
    %v6766 = vsub.f32 %v6683, %v6765
    %v6767 = vand.u32 %v6766, 4294901760
    %v6768 = vsub.f32 %v6766, %v6767
    %v6769 = vand.u32 %v6768, 4294901760
    %6770 = vmatpush1.msra.mxu0 %v6769
    %6771 = vmatprep.subr.mxu0 0.0
    %6772 = vmatpush1.msra.mxu0 0.0
    %6773 = vmatprep.subr.mxu0 0.0
    %6774 = vmatpush1.msra.mxu0 0.0
    %6775 = vmatprep.subr.mxu0 0.0
    %6776 = vmatpush1.msra.mxu0 0.0
    %6777 = vmatprep.subr.mxu0 0.0
    %6778 = vmatpush1.msra.mxu0 0.0
    %6779 = vmatprep.subr.mxu0 0.0
    %6780 = vmatpush1.msra.mxu0 0.0
    %6781 = vmatprep.subr.mxu0 0.0
    %6782 = vmatpush1.msra.mxu0 0.0
    %6783 = vmatprep.subr.mxu0 0.0
    %6784 = vmatpush1.msra.mxu0 0.0
    %6785 = vmatprep.subr.mxu0 0.0
    %6786 = vmatpush1.msra.mxu0 0.0
    %6787 = vmatprep.subr.mxu0 0.0
    %6788 = vmatpush1.msra.mxu0 0.0
    %6789 = vmatprep.subr.mxu0 0.0
    %6790 = vmatpush1.msra.mxu0 0.0
    %6791 = vmatprep.subr.mxu0 0.0
    %6792 = vmatpush1.msra.mxu0 0.0
    %6793 = vmatprep.subr.mxu0 0.0
    %6794 = vmatpush1.msra.mxu0 0.0
    %6795 = vmatprep.subr.mxu0 0.0
    %6796 = vmatpush1.msra.mxu0 0.0
    %6797 = vmatprep.subr.mxu0 0.0
    %6798 = vmatpush1.msra.mxu0 0.0
    %6799 = vmatprep.subr.mxu0 0.0
    %6800 = vmatpush1.msra.mxu0 0.0
    %6801 = vmatprep.subr.mxu0 0.0
    %6802 = vmatpush1.msra.mxu0 0.0
    %6803 = vmatprep.subr.mxu0 0.0
    %6804 = vmatpush1.msra.mxu0 0.0
    %6805 = vmatprep.subr.mxu0 0.0
    %6806 = vmatpush1.msra.mxu0 0.0
    %6807 = vmatprep.subr.mxu0 0.0
    %6808 = vmatpush1.msra.mxu0 0.0
    %6809 = vmatprep.subr.mxu0 0.0
    %6810 = vmatpush1.msra.mxu0 0.0
    %6811 = vmatprep.subr.mxu0 0.0
    %6812 = vmatpush1.msra.mxu0 0.0
    %6813 = vmatprep.subr.mxu0 0.0
    %6814 = vmatpush1.msra.mxu0 0.0
    %6815 = vmatprep.subr.mxu0 0.0
    %6816 = vmatpush1.msra.mxu0 0.0
    %6817 = vmatprep.subr.mxu0 0.0
    %6818 = vmatpush1.msra.mxu0 0.0
    %6819 = vmatprep.subr.mxu0 0.0
    %6820 = vmatpush1.msra.mxu0 0.0
    %6821 = vmatprep.subr.mxu0 0.0
    %6822 = vmatpush1.msra.mxu0 0.0
    %6823 = vmatprep.subr.mxu0 0.0
    %6824 = vmatpush1.msra.mxu0 0.0
    %6825 = vmatprep.subr.mxu0 0.0
    %6826 = vmatpush1.msra.mxu0 0.0
    %6827 = vmatprep.subr.mxu0 0.0
    %6828 = vmatpush1.msra.mxu0 0.0
    %6829 = vmatprep.subr.mxu0 0.0
    %6830 = vmatpush1.msra.mxu0 0.0
    %6831 = vmatprep.subr.mxu0 0.0
    %6832 = vmatpush1.msra.mxu0 0.0
    %6833 = vmatprep.mubr.f32.mxu0 0.0
    %v6834 = vand.u32 %v6686, 4294901760
    %6835 = vmatmul.mubr.f32.gmra.mrb[0].mxu0 %v6834
    %v6836 = vpop.f32.mrb[0].mxu0
    %v6837 = vadd.f32 %v6761, %v6836
    %v6838 = vpop.f32.mrb[0].mxu0
    %6839 = vdwg.mxu0
    %6840 = vmatprep.subr.mxu0 0.0
    %v6841 = vand.u32 %v6683, 4294901760
    %v6842 = vsub.f32 %v6683, %v6841
    %6843 = vmatpush1.msra.mxu0 %v6842
    %6844 = vmatprep.subr.mxu0 0.0
    %6845 = vmatpush1.msra.mxu0 0.0
    %6846 = vmatprep.subr.mxu0 0.0
    %6847 = vmatpush1.msra.mxu0 0.0
    %6848 = vmatprep.subr.mxu0 0.0
    %6849 = vmatpush1.msra.mxu0 0.0
    %6850 = vmatprep.subr.mxu0 0.0
    %6851 = vmatpush1.msra.mxu0 0.0
    %6852 = vmatprep.subr.mxu0 0.0
    %6853 = vmatpush1.msra.mxu0 0.0
    %6854 = vmatprep.subr.mxu0 0.0
    %6855 = vmatpush1.msra.mxu0 0.0
    %6856 = vmatprep.subr.mxu0 0.0
    %6857 = vmatpush1.msra.mxu0 0.0
    %6858 = vmatprep.subr.mxu0 0.0
    %6859 = vmatpush1.msra.mxu0 0.0
    %6860 = vmatprep.subr.mxu0 0.0
    %6861 = vmatpush1.msra.mxu0 0.0
    %6862 = vmatprep.subr.mxu0 0.0
    %6863 = vmatpush1.msra.mxu0 0.0
    %6864 = vmatprep.subr.mxu0 0.0
    %6865 = vmatpush1.msra.mxu0 0.0
    %6866 = vmatprep.subr.mxu0 0.0
    %6867 = vmatpush1.msra.mxu0 0.0
    %6868 = vmatprep.subr.mxu0 0.0
    %6869 = vmatpush1.msra.mxu0 0.0
    %6870 = vmatprep.subr.mxu0 0.0
    %6871 = vmatpush1.msra.mxu0 0.0
    %6872 = vmatprep.subr.mxu0 0.0
    %6873 = vmatpush1.msra.mxu0 0.0
    %6874 = vmatprep.subr.mxu0 0.0
    %6875 = vmatpush1.msra.mxu0 0.0
    %6876 = vmatprep.subr.mxu0 0.0
    %6877 = vmatpush1.msra.mxu0 0.0
    %6878 = vmatprep.subr.mxu0 0.0
    %6879 = vmatpush1.msra.mxu0 0.0
    %6880 = vmatprep.subr.mxu0 0.0
    %6881 = vmatpush1.msra.mxu0 0.0
    %6882 = vmatprep.subr.mxu0 0.0
    %6883 = vmatpush1.msra.mxu0 0.0
    %6884 = vmatprep.subr.mxu0 0.0
    %6885 = vmatpush1.msra.mxu0 0.0
    %6886 = vmatprep.subr.mxu0 0.0
    %6887 = vmatpush1.msra.mxu0 0.0
    %6888 = vmatprep.subr.mxu0 0.0
    %6889 = vmatpush1.msra.mxu0 0.0
    %6890 = vmatprep.subr.mxu0 0.0
    %6891 = vmatpush1.msra.mxu0 0.0
    %6892 = vmatprep.subr.mxu0 0.0
    %6893 = vmatpush1.msra.mxu0 0.0
    %6894 = vmatprep.subr.mxu0 0.0
    %6895 = vmatpush1.msra.mxu0 0.0
    %6896 = vmatprep.subr.mxu0 0.0
    %6897 = vmatpush1.msra.mxu0 0.0
    %6898 = vmatprep.subr.mxu0 0.0
    %6899 = vmatpush1.msra.mxu0 0.0
    %6900 = vmatprep.subr.mxu0 0.0
    %6901 = vmatpush1.msra.mxu0 0.0
    %6902 = vmatprep.subr.mxu0 0.0
    %6903 = vmatpush1.msra.mxu0 0.0
    %6904 = vmatprep.subr.mxu0 0.0
    %6905 = vmatpush1.msra.mxu0 0.0
    %6906 = vmatprep.mubr.f32.mxu0 0.0
    %v6907 = vand.u32 %v6686, 4294901760
    %v6908 = vsub.f32 %v6686, %v6907
    %6909 = vmatmul.mubr.f32.gmra.mrb[0].mxu0 %v6908
    %v6910 = vpop.f32.mrb[0].mxu0
    %v6911 = vadd.f32 %v6837, %v6910
    %v6912 = vpop.f32.mrb[0].mxu0
    %6913 = vdwg.mxu0
    %6914 = vmatprep.subr.mxu0 0.0
    %v6915 = vand.u32 %v6683, 4294901760
    %6916 = vmatpush1.msra.mxu0 %v6915
    %6917 = vmatprep.subr.mxu0 0.0
    %6918 = vmatpush1.msra.mxu0 0.0
    %6919 = vmatprep.subr.mxu0 0.0
    %6920 = vmatpush1.msra.mxu0 0.0
    %6921 = vmatprep.subr.mxu0 0.0
    %6922 = vmatpush1.msra.mxu0 0.0
    %6923 = vmatprep.subr.mxu0 0.0
    %6924 = vmatpush1.msra.mxu0 0.0
    %6925 = vmatprep.subr.mxu0 0.0
    %6926 = vmatpush1.msra.mxu0 0.0
    %6927 = vmatprep.subr.mxu0 0.0
    %6928 = vmatpush1.msra.mxu0 0.0
    %6929 = vmatprep.subr.mxu0 0.0
    %6930 = vmatpush1.msra.mxu0 0.0
    %6931 = vmatprep.subr.mxu0 0.0
    %6932 = vmatpush1.msra.mxu0 0.0
    %6933 = vmatprep.subr.mxu0 0.0
    %6934 = vmatpush1.msra.mxu0 0.0
    %6935 = vmatprep.subr.mxu0 0.0
    %6936 = vmatpush1.msra.mxu0 0.0
    %6937 = vmatprep.subr.mxu0 0.0
    %6938 = vmatpush1.msra.mxu0 0.0
    %6939 = vmatprep.subr.mxu0 0.0
    %6940 = vmatpush1.msra.mxu0 0.0
    %6941 = vmatprep.subr.mxu0 0.0
    %6942 = vmatpush1.msra.mxu0 0.0
    %6943 = vmatprep.subr.mxu0 0.0
    %6944 = vmatpush1.msra.mxu0 0.0
    %6945 = vmatprep.subr.mxu0 0.0
    %6946 = vmatpush1.msra.mxu0 0.0
    %6947 = vmatprep.subr.mxu0 0.0
    %6948 = vmatpush1.msra.mxu0 0.0
    %6949 = vmatprep.subr.mxu0 0.0
    %6950 = vmatpush1.msra.mxu0 0.0
    %6951 = vmatprep.subr.mxu0 0.0
    %6952 = vmatpush1.msra.mxu0 0.0
    %6953 = vmatprep.subr.mxu0 0.0
    %6954 = vmatpush1.msra.mxu0 0.0
    %6955 = vmatprep.subr.mxu0 0.0
    %6956 = vmatpush1.msra.mxu0 0.0
    %6957 = vmatprep.subr.mxu0 0.0
    %6958 = vmatpush1.msra.mxu0 0.0
    %6959 = vmatprep.subr.mxu0 0.0
    %6960 = vmatpush1.msra.mxu0 0.0
    %6961 = vmatprep.subr.mxu0 0.0
    %6962 = vmatpush1.msra.mxu0 0.0
    %6963 = vmatprep.subr.mxu0 0.0
    %6964 = vmatpush1.msra.mxu0 0.0
    %6965 = vmatprep.subr.mxu0 0.0
    %6966 = vmatpush1.msra.mxu0 0.0
    %6967 = vmatprep.subr.mxu0 0.0
    %6968 = vmatpush1.msra.mxu0 0.0
    %6969 = vmatprep.subr.mxu0 0.0
    %6970 = vmatpush1.msra.mxu0 0.0
    %6971 = vmatprep.subr.mxu0 0.0
    %6972 = vmatpush1.msra.mxu0 0.0
    %6973 = vmatprep.subr.mxu0 0.0
    %6974 = vmatpush1.msra.mxu0 0.0
    %6975 = vmatprep.subr.mxu0 0.0
    %6976 = vmatpush1.msra.mxu0 0.0
    %6977 = vmatprep.subr.mxu0 0.0
    %6978 = vmatpush1.msra.mxu0 0.0
    %6979 = vmatprep.mubr.f32.mxu0 0.0
    %v6980 = vand.u32 %v6686, 4294901760
    %v6981 = vsub.f32 %v6686, %v6980
    %v6982 = vand.u32 %v6981, 4294901760
    %6983 = vmatmul.mubr.f32.gmra.mrb[0].mxu0 %v6982
    %v6984 = vpop.f32.mrb[0].mxu0
    %v6985 = vadd.f32 %v6911, %v6984
    %v6986 = vpop.f32.mrb[0].mxu0
    %6987 = vdwg.mxu0
    %6988 = vmatprep.subr.mxu0 0.0
    %v6989 = vand.u32 %v6683, 4294901760
    %v6990 = vsub.f32 %v6683, %v6989
    %v6991 = vand.u32 %v6990, 4294901760
    %6992 = vmatpush1.msra.mxu0 %v6991
    %6993 = vmatprep.subr.mxu0 0.0
    %6994 = vmatpush1.msra.mxu0 0.0
    %6995 = vmatprep.subr.mxu0 0.0
    %6996 = vmatpush1.msra.mxu0 0.0
    %6997 = vmatprep.subr.mxu0 0.0
    %6998 = vmatpush1.msra.mxu0 0.0
    %6999 = vmatprep.subr.mxu0 0.0
    %7000 = vmatpush1.msra.mxu0 0.0
    %7001 = vmatprep.subr.mxu0 0.0
    %7002 = vmatpush1.msra.mxu0 0.0
    %7003 = vmatprep.subr.mxu0 0.0
    %7004 = vmatpush1.msra.mxu0 0.0
    %7005 = vmatprep.subr.mxu0 0.0
    %7006 = vmatpush1.msra.mxu0 0.0
    %7007 = vmatprep.subr.mxu0 0.0
    %7008 = vmatpush1.msra.mxu0 0.0
    %7009 = vmatprep.subr.mxu0 0.0
    %7010 = vmatpush1.msra.mxu0 0.0
    %7011 = vmatprep.subr.mxu0 0.0
    %7012 = vmatpush1.msra.mxu0 0.0
    %7013 = vmatprep.subr.mxu0 0.0
    %7014 = vmatpush1.msra.mxu0 0.0
    %7015 = vmatprep.subr.mxu0 0.0
    %7016 = vmatpush1.msra.mxu0 0.0
    %7017 = vmatprep.subr.mxu0 0.0
    %7018 = vmatpush1.msra.mxu0 0.0
    %7019 = vmatprep.subr.mxu0 0.0
    %7020 = vmatpush1.msra.mxu0 0.0
    %7021 = vmatprep.subr.mxu0 0.0
    %7022 = vmatpush1.msra.mxu0 0.0
    %7023 = vmatprep.subr.mxu0 0.0
    %7024 = vmatpush1.msra.mxu0 0.0
    %7025 = vmatprep.subr.mxu0 0.0
    %7026 = vmatpush1.msra.mxu0 0.0
    %7027 = vmatprep.subr.mxu0 0.0
    %7028 = vmatpush1.msra.mxu0 0.0
    %7029 = vmatprep.subr.mxu0 0.0
    %7030 = vmatpush1.msra.mxu0 0.0
    %7031 = vmatprep.subr.mxu0 0.0
    %7032 = vmatpush1.msra.mxu0 0.0
    %7033 = vmatprep.subr.mxu0 0.0
    %7034 = vmatpush1.msra.mxu0 0.0
    %7035 = vmatprep.subr.mxu0 0.0
    %7036 = vmatpush1.msra.mxu0 0.0
    %7037 = vmatprep.subr.mxu0 0.0
    %7038 = vmatpush1.msra.mxu0 0.0
    %7039 = vmatprep.subr.mxu0 0.0
    %7040 = vmatpush1.msra.mxu0 0.0
    %7041 = vmatprep.subr.mxu0 0.0
    %7042 = vmatpush1.msra.mxu0 0.0
    %7043 = vmatprep.subr.mxu0 0.0
    %7044 = vmatpush1.msra.mxu0 0.0
    %7045 = vmatprep.subr.mxu0 0.0
    %7046 = vmatpush1.msra.mxu0 0.0
    %7047 = vmatprep.subr.mxu0 0.0
    %7048 = vmatpush1.msra.mxu0 0.0
    %7049 = vmatprep.subr.mxu0 0.0
    %7050 = vmatpush1.msra.mxu0 0.0
    %7051 = vmatprep.subr.mxu0 0.0
    %7052 = vmatpush1.msra.mxu0 0.0
    %7053 = vmatprep.subr.mxu0 0.0
    %7054 = vmatpush1.msra.mxu0 0.0
    %7055 = vmatprep.mubr.f32.mxu0 0.0
    %v7056 = vand.u32 %v6686, 4294901760
    %7057 = vmatmul.mubr.f32.gmra.mrb[0].mxu0 %v7056
    %v7058 = vpop.f32.mrb[0].mxu0
    %v7059 = vadd.f32 %v6985, %v7058
    %v7060 = vpop.f32.mrb[0].mxu0
    %7061 = vdwg.mxu0
    %7062 = vmatprep.subr.mxu0 0.0
    %v7063 = vand.u32 %v6683, 4294901760
    %7064 = vmatpush1.msra.mxu0 %v7063
    %7065 = vmatprep.subr.mxu0 0.0
    %7066 = vmatpush1.msra.mxu0 0.0
    %7067 = vmatprep.subr.mxu0 0.0
    %7068 = vmatpush1.msra.mxu0 0.0
    %7069 = vmatprep.subr.mxu0 0.0
    %7070 = vmatpush1.msra.mxu0 0.0
    %7071 = vmatprep.subr.mxu0 0.0
    %7072 = vmatpush1.msra.mxu0 0.0
    %7073 = vmatprep.subr.mxu0 0.0
    %7074 = vmatpush1.msra.mxu0 0.0
    %7075 = vmatprep.subr.mxu0 0.0
    %7076 = vmatpush1.msra.mxu0 0.0
    %7077 = vmatprep.subr.mxu0 0.0
    %7078 = vmatpush1.msra.mxu0 0.0
    %7079 = vmatprep.subr.mxu0 0.0
    %7080 = vmatpush1.msra.mxu0 0.0
    %7081 = vmatprep.subr.mxu0 0.0
    %7082 = vmatpush1.msra.mxu0 0.0
    %7083 = vmatprep.subr.mxu0 0.0
    %7084 = vmatpush1.msra.mxu0 0.0
    %7085 = vmatprep.subr.mxu0 0.0
    %7086 = vmatpush1.msra.mxu0 0.0
    %7087 = vmatprep.subr.mxu0 0.0
    %7088 = vmatpush1.msra.mxu0 0.0
    %7089 = vmatprep.subr.mxu0 0.0
    %7090 = vmatpush1.msra.mxu0 0.0
    %7091 = vmatprep.subr.mxu0 0.0
    %7092 = vmatpush1.msra.mxu0 0.0
    %7093 = vmatprep.subr.mxu0 0.0
    %7094 = vmatpush1.msra.mxu0 0.0
    %7095 = vmatprep.subr.mxu0 0.0
    %7096 = vmatpush1.msra.mxu0 0.0
    %7097 = vmatprep.subr.mxu0 0.0
    %7098 = vmatpush1.msra.mxu0 0.0
    %7099 = vmatprep.subr.mxu0 0.0
    %7100 = vmatpush1.msra.mxu0 0.0
    %7101 = vmatprep.subr.mxu0 0.0
    %7102 = vmatpush1.msra.mxu0 0.0
    %7103 = vmatprep.subr.mxu0 0.0
    %7104 = vmatpush1.msra.mxu0 0.0
    %7105 = vmatprep.subr.mxu0 0.0
    %7106 = vmatpush1.msra.mxu0 0.0
    %7107 = vmatprep.subr.mxu0 0.0
    %7108 = vmatpush1.msra.mxu0 0.0
    %7109 = vmatprep.subr.mxu0 0.0
    %7110 = vmatpush1.msra.mxu0 0.0
    %7111 = vmatprep.subr.mxu0 0.0
    %7112 = vmatpush1.msra.mxu0 0.0
    %7113 = vmatprep.subr.mxu0 0.0
    %7114 = vmatpush1.msra.mxu0 0.0
    %7115 = vmatprep.subr.mxu0 0.0
    %7116 = vmatpush1.msra.mxu0 0.0
    %7117 = vmatprep.subr.mxu0 0.0
    %7118 = vmatpush1.msra.mxu0 0.0
    %7119 = vmatprep.subr.mxu0 0.0
    %7120 = vmatpush1.msra.mxu0 0.0
    %7121 = vmatprep.subr.mxu0 0.0
    %7122 = vmatpush1.msra.mxu0 0.0
    %7123 = vmatprep.subr.mxu0 0.0
    %7124 = vmatpush1.msra.mxu0 0.0
    %7125 = vmatprep.subr.mxu0 0.0
    %7126 = vmatpush1.msra.mxu0 0.0
    %7127 = vmatprep.mubr.f32.mxu0 0.0
    %v7128 = vand.u32 %v6686, 4294901760
    %7129 = vmatmul.mubr.f32.gmra.mrb[0].mxu0 %v7128
    %v7130 = vpop.f32.mrb[0].mxu0
    %v7131 = vadd.f32 %v7059, %v7130
    %v7132 = vpop.f32.mrb[0].mxu0
    %7133 = vdwg.mxu0
    %v7134 = vrcp.pop %v6681
    %v7135 = vmul.f32 %v6681, %v7134
    %v7136 = vsub.f32 2.0, %v7135
    %v7137 = vmul.f32 %v7134, %v7136
    %v7138 = vmul.f32 %v7131, %v7137
    %7140 = vrot.lane.b32.xlu0 %v7138, 16
    %v7141 = vpop.permute.xlu0 %7140
    %7143 = vst.msk [vmem:[#allocation2 + $0x8] sm:$0xff] %vm3432, %v7141
    %7144 = vrot.lane.b32.xlu0 %v644, 104
    %v7145 = vpop.permute.xlu0 %7144
    %7146 = vrot.lane.b32.xlu0 %v644, 72
    %v7147 = vpop.permute.xlu0 %7146
    %v7148 = vsel %vm652, %v7145, 0
    %v7150 = vsel %vm652, %v7147, 0
    %7152 = vmatprep.subr.mxu0 0.0
    %v7153 = vand.u32 %v7150, 4294901760
    %7154 = vmatpush1.xpose.msra.mxu0 %v7153
    %7155 = vmatprep.subr.mxu0 0.0
    %7156 = vmatpush1.xpose.msra.mxu0 0.0
    %7157 = vmatprep.subr.mxu0 0.0
    %7158 = vmatpush1.xpose.msra.mxu0 0.0
    %7159 = vmatprep.subr.mxu0 0.0
    %7160 = vmatpush1.xpose.msra.mxu0 0.0
    %7161 = vmatprep.subr.mxu0 0.0
    %7162 = vmatpush1.xpose.msra.mxu0 0.0
    %7163 = vmatprep.subr.mxu0 0.0
    %7164 = vmatpush1.xpose.msra.mxu0 0.0
    %7165 = vmatprep.subr.mxu0 0.0
    %7166 = vmatpush1.xpose.msra.mxu0 0.0
    %7167 = vmatprep.subr.mxu0 0.0
    %7168 = vmatpush1.xpose.msra.mxu0 0.0
    %7169 = vmatprep.subr.mxu0 0.0
    %7170 = vmatpush1.xpose.msra.mxu0 0.0
    %7171 = vmatprep.subr.mxu0 0.0
    %7172 = vmatpush1.xpose.msra.mxu0 0.0
    %7173 = vmatprep.subr.mxu0 0.0
    %7174 = vmatpush1.xpose.msra.mxu0 0.0
    %7175 = vmatprep.subr.mxu0 0.0
    %7176 = vmatpush1.xpose.msra.mxu0 0.0
    %7177 = vmatprep.subr.mxu0 0.0
    %7178 = vmatpush1.xpose.msra.mxu0 0.0
    %7179 = vmatprep.subr.mxu0 0.0
    %7180 = vmatpush1.xpose.msra.mxu0 0.0
    %7181 = vmatprep.subr.mxu0 0.0
    %7182 = vmatpush1.xpose.msra.mxu0 0.0
    %7183 = vmatprep.subr.mxu0 0.0
    %7184 = vmatpush1.xpose.msra.mxu0 0.0
    %7185 = vmatprep.subr.mxu0 0.0
    %7186 = vmatpush1.xpose.msra.mxu0 0.0
    %7187 = vmatprep.subr.mxu0 0.0
    %7188 = vmatpush1.xpose.msra.mxu0 0.0
    %7189 = vmatprep.subr.mxu0 0.0
    %7190 = vmatpush1.xpose.msra.mxu0 0.0
    %7191 = vmatprep.subr.mxu0 0.0
    %7192 = vmatpush1.xpose.msra.mxu0 0.0
    %7193 = vmatprep.subr.mxu0 0.0
    %7194 = vmatpush1.xpose.msra.mxu0 0.0
    %7195 = vmatprep.subr.mxu0 0.0
    %7196 = vmatpush1.xpose.msra.mxu0 0.0
    %7197 = vmatprep.subr.mxu0 0.0
    %7198 = vmatpush1.xpose.msra.mxu0 0.0
    %7199 = vmatprep.subr.mxu0 0.0
    %7200 = vmatpush1.xpose.msra.mxu0 0.0
    %7201 = vmatprep.subr.mxu0 0.0
    %7202 = vmatpush1.xpose.msra.mxu0 0.0
    %7203 = vmatprep.subr.mxu0 0.0
    %7204 = vmatpush1.xpose.msra.mxu0 0.0
    %7205 = vmatprep.subr.mxu0 0.0
    %7206 = vmatpush1.xpose.msra.mxu0 0.0
    %7207 = vmatprep.subr.mxu0 0.0
    %7208 = vmatpush1.xpose.msra.mxu0 0.0
    %7209 = vmatprep.subr.mxu0 0.0
    %7210 = vmatpush1.xpose.msra.mxu0 0.0
    %7211 = vmatprep.subr.mxu0 0.0
    %7212 = vmatpush1.xpose.msra.mxu0 0.0
    %7213 = vmatprep.subr.mxu0 0.0
    %7214 = vmatpush1.xpose.msra.mxu0 0.0
    %7215 = vmatprep.subr.mxu0 0.0
    %7216 = vmatpush1.xpose.msra.mxu0 0.0
    %7217 = vmatprep.mubr.f32.mxu0 0.0
    %v7218 = vand.u32 %v7148, 4294901760
    %v7219 = vsub.f32 %v7148, %v7218
    %v7220 = vand.u32 %v7219, 4294901760
    %v7221 = vsub.f32 %v7219, %v7220
    %v7222 = vand.u32 %v7221, 4294901760
    %7223 = vmatmul.mubr.f32.gmra.mrb[0].mxu0 %v7222
    %v7224 = vpop.f32.mrb[0].mxu0
    %v7225 = vadd.f32 0.0, %v7224
    %v7226 = vpop.f32.mrb[0].mxu0
    %7227 = vdwg.mxu0
    %7228 = vmatprep.subr.mxu0 0.0
    %v7229 = vand.u32 %v7150, 4294901760
    %v7230 = vsub.f32 %v7150, %v7229
    %v7231 = vand.u32 %v7230, 4294901760
    %v7232 = vsub.f32 %v7230, %v7231
    %v7233 = vand.u32 %v7232, 4294901760
    %7234 = vmatpush1.xpose.msra.mxu0 %v7233
    %7235 = vmatprep.subr.mxu0 0.0
    %7236 = vmatpush1.xpose.msra.mxu0 0.0
    %7237 = vmatprep.subr.mxu0 0.0
    %7238 = vmatpush1.xpose.msra.mxu0 0.0
    %7239 = vmatprep.subr.mxu0 0.0
    %7240 = vmatpush1.xpose.msra.mxu0 0.0
    %7241 = vmatprep.subr.mxu0 0.0
    %7242 = vmatpush1.xpose.msra.mxu0 0.0
    %7243 = vmatprep.subr.mxu0 0.0
    %7244 = vmatpush1.xpose.msra.mxu0 0.0
    %7245 = vmatprep.subr.mxu0 0.0
    %7246 = vmatpush1.xpose.msra.mxu0 0.0
    %7247 = vmatprep.subr.mxu0 0.0
    %7248 = vmatpush1.xpose.msra.mxu0 0.0
    %7249 = vmatprep.subr.mxu0 0.0
    %7250 = vmatpush1.xpose.msra.mxu0 0.0
    %7251 = vmatprep.subr.mxu0 0.0
    %7252 = vmatpush1.xpose.msra.mxu0 0.0
    %7253 = vmatprep.subr.mxu0 0.0
    %7254 = vmatpush1.xpose.msra.mxu0 0.0
    %7255 = vmatprep.subr.mxu0 0.0
    %7256 = vmatpush1.xpose.msra.mxu0 0.0
    %7257 = vmatprep.subr.mxu0 0.0
    %7258 = vmatpush1.xpose.msra.mxu0 0.0
    %7259 = vmatprep.subr.mxu0 0.0
    %7260 = vmatpush1.xpose.msra.mxu0 0.0
    %7261 = vmatprep.subr.mxu0 0.0
    %7262 = vmatpush1.xpose.msra.mxu0 0.0
    %7263 = vmatprep.subr.mxu0 0.0
    %7264 = vmatpush1.xpose.msra.mxu0 0.0
    %7265 = vmatprep.subr.mxu0 0.0
    %7266 = vmatpush1.xpose.msra.mxu0 0.0
    %7267 = vmatprep.subr.mxu0 0.0
    %7268 = vmatpush1.xpose.msra.mxu0 0.0
    %7269 = vmatprep.subr.mxu0 0.0
    %7270 = vmatpush1.xpose.msra.mxu0 0.0
    %7271 = vmatprep.subr.mxu0 0.0
    %7272 = vmatpush1.xpose.msra.mxu0 0.0
    %7273 = vmatprep.subr.mxu0 0.0
    %7274 = vmatpush1.xpose.msra.mxu0 0.0
    %7275 = vmatprep.subr.mxu0 0.0
    %7276 = vmatpush1.xpose.msra.mxu0 0.0
    %7277 = vmatprep.subr.mxu0 0.0
    %7278 = vmatpush1.xpose.msra.mxu0 0.0
    %7279 = vmatprep.subr.mxu0 0.0
    %7280 = vmatpush1.xpose.msra.mxu0 0.0
    %7281 = vmatprep.subr.mxu0 0.0
    %7282 = vmatpush1.xpose.msra.mxu0 0.0
    %7283 = vmatprep.subr.mxu0 0.0
    %7284 = vmatpush1.xpose.msra.mxu0 0.0
    %7285 = vmatprep.subr.mxu0 0.0
    %7286 = vmatpush1.xpose.msra.mxu0 0.0
    %7287 = vmatprep.subr.mxu0 0.0
    %7288 = vmatpush1.xpose.msra.mxu0 0.0
    %7289 = vmatprep.subr.mxu0 0.0
    %7290 = vmatpush1.xpose.msra.mxu0 0.0
    %7291 = vmatprep.subr.mxu0 0.0
    %7292 = vmatpush1.xpose.msra.mxu0 0.0
    %7293 = vmatprep.subr.mxu0 0.0
    %7294 = vmatpush1.xpose.msra.mxu0 0.0
    %7295 = vmatprep.subr.mxu0 0.0
    %7296 = vmatpush1.xpose.msra.mxu0 0.0
    %7297 = vmatprep.mubr.f32.mxu0 0.0
    %v7298 = vand.u32 %v7148, 4294901760
    %7299 = vmatmul.mubr.f32.gmra.mrb[0].mxu0 %v7298
    %v7300 = vpop.f32.mrb[0].mxu0
    %v7301 = vadd.f32 %v7225, %v7300
    %v7302 = vpop.f32.mrb[0].mxu0
    %7303 = vdwg.mxu0
    %7304 = vmatprep.subr.mxu0 0.0
    %v7305 = vand.u32 %v7150, 4294901760
    %v7306 = vsub.f32 %v7150, %v7305
    %7307 = vmatpush1.xpose.msra.mxu0 %v7306
    %7308 = vmatprep.subr.mxu0 0.0
    %7309 = vmatpush1.xpose.msra.mxu0 0.0
    %7310 = vmatprep.subr.mxu0 0.0
    %7311 = vmatpush1.xpose.msra.mxu0 0.0
    %7312 = vmatprep.subr.mxu0 0.0
    %7313 = vmatpush1.xpose.msra.mxu0 0.0
    %7314 = vmatprep.subr.mxu0 0.0
    %7315 = vmatpush1.xpose.msra.mxu0 0.0
    %7316 = vmatprep.subr.mxu0 0.0
    %7317 = vmatpush1.xpose.msra.mxu0 0.0
    %7318 = vmatprep.subr.mxu0 0.0
    %7319 = vmatpush1.xpose.msra.mxu0 0.0
    %7320 = vmatprep.subr.mxu0 0.0
    %7321 = vmatpush1.xpose.msra.mxu0 0.0
    %7322 = vmatprep.subr.mxu0 0.0
    %7323 = vmatpush1.xpose.msra.mxu0 0.0
    %7324 = vmatprep.subr.mxu0 0.0
    %7325 = vmatpush1.xpose.msra.mxu0 0.0
    %7326 = vmatprep.subr.mxu0 0.0
    %7327 = vmatpush1.xpose.msra.mxu0 0.0
    %7328 = vmatprep.subr.mxu0 0.0
    %7329 = vmatpush1.xpose.msra.mxu0 0.0
    %7330 = vmatprep.subr.mxu0 0.0
    %7331 = vmatpush1.xpose.msra.mxu0 0.0
    %7332 = vmatprep.subr.mxu0 0.0
    %7333 = vmatpush1.xpose.msra.mxu0 0.0
    %7334 = vmatprep.subr.mxu0 0.0
    %7335 = vmatpush1.xpose.msra.mxu0 0.0
    %7336 = vmatprep.subr.mxu0 0.0
    %7337 = vmatpush1.xpose.msra.mxu0 0.0
    %7338 = vmatprep.subr.mxu0 0.0
    %7339 = vmatpush1.xpose.msra.mxu0 0.0
    %7340 = vmatprep.subr.mxu0 0.0
    %7341 = vmatpush1.xpose.msra.mxu0 0.0
    %7342 = vmatprep.subr.mxu0 0.0
    %7343 = vmatpush1.xpose.msra.mxu0 0.0
    %7344 = vmatprep.subr.mxu0 0.0
    %7345 = vmatpush1.xpose.msra.mxu0 0.0
    %7346 = vmatprep.subr.mxu0 0.0
    %7347 = vmatpush1.xpose.msra.mxu0 0.0
    %7348 = vmatprep.subr.mxu0 0.0
    %7349 = vmatpush1.xpose.msra.mxu0 0.0
    %7350 = vmatprep.subr.mxu0 0.0
    %7351 = vmatpush1.xpose.msra.mxu0 0.0
    %7352 = vmatprep.subr.mxu0 0.0
    %7353 = vmatpush1.xpose.msra.mxu0 0.0
    %7354 = vmatprep.subr.mxu0 0.0
    %7355 = vmatpush1.xpose.msra.mxu0 0.0
    %7356 = vmatprep.subr.mxu0 0.0
    %7357 = vmatpush1.xpose.msra.mxu0 0.0
    %7358 = vmatprep.subr.mxu0 0.0
    %7359 = vmatpush1.xpose.msra.mxu0 0.0
    %7360 = vmatprep.subr.mxu0 0.0
    %7361 = vmatpush1.xpose.msra.mxu0 0.0
    %7362 = vmatprep.subr.mxu0 0.0
    %7363 = vmatpush1.xpose.msra.mxu0 0.0
    %7364 = vmatprep.subr.mxu0 0.0
    %7365 = vmatpush1.xpose.msra.mxu0 0.0
    %7366 = vmatprep.subr.mxu0 0.0
    %7367 = vmatpush1.xpose.msra.mxu0 0.0
    %7368 = vmatprep.subr.mxu0 0.0
    %7369 = vmatpush1.xpose.msra.mxu0 0.0
    %7370 = vmatprep.mubr.f32.mxu0 0.0
    %v7371 = vand.u32 %v7148, 4294901760
    %v7372 = vsub.f32 %v7148, %v7371
    %7373 = vmatmul.mubr.f32.gmra.mrb[0].mxu0 %v7372
    %v7374 = vpop.f32.mrb[0].mxu0
    %v7375 = vadd.f32 %v7301, %v7374
    %v7376 = vpop.f32.mrb[0].mxu0
    %7377 = vdwg.mxu0
    %7378 = vmatprep.subr.mxu0 0.0
    %v7379 = vand.u32 %v7150, 4294901760
    %7380 = vmatpush1.xpose.msra.mxu0 %v7379
    %7381 = vmatprep.subr.mxu0 0.0
    %7382 = vmatpush1.xpose.msra.mxu0 0.0
    %7383 = vmatprep.subr.mxu0 0.0
    %7384 = vmatpush1.xpose.msra.mxu0 0.0
    %7385 = vmatprep.subr.mxu0 0.0
    %7386 = vmatpush1.xpose.msra.mxu0 0.0
    %7387 = vmatprep.subr.mxu0 0.0
    %7388 = vmatpush1.xpose.msra.mxu0 0.0
    %7389 = vmatprep.subr.mxu0 0.0
    %7390 = vmatpush1.xpose.msra.mxu0 0.0
    %7391 = vmatprep.subr.mxu0 0.0
    %7392 = vmatpush1.xpose.msra.mxu0 0.0
    %7393 = vmatprep.subr.mxu0 0.0
    %7394 = vmatpush1.xpose.msra.mxu0 0.0
    %7395 = vmatprep.subr.mxu0 0.0
    %7396 = vmatpush1.xpose.msra.mxu0 0.0
    %7397 = vmatprep.subr.mxu0 0.0
    %7398 = vmatpush1.xpose.msra.mxu0 0.0
    %7399 = vmatprep.subr.mxu0 0.0
    %7400 = vmatpush1.xpose.msra.mxu0 0.0
    %7401 = vmatprep.subr.mxu0 0.0
    %7402 = vmatpush1.xpose.msra.mxu0 0.0
    %7403 = vmatprep.subr.mxu0 0.0
    %7404 = vmatpush1.xpose.msra.mxu0 0.0
    %7405 = vmatprep.subr.mxu0 0.0
    %7406 = vmatpush1.xpose.msra.mxu0 0.0
    %7407 = vmatprep.subr.mxu0 0.0
    %7408 = vmatpush1.xpose.msra.mxu0 0.0
    %7409 = vmatprep.subr.mxu0 0.0
    %7410 = vmatpush1.xpose.msra.mxu0 0.0
    %7411 = vmatprep.subr.mxu0 0.0
    %7412 = vmatpush1.xpose.msra.mxu0 0.0
    %7413 = vmatprep.subr.mxu0 0.0
    %7414 = vmatpush1.xpose.msra.mxu0 0.0
    %7415 = vmatprep.subr.mxu0 0.0
    %7416 = vmatpush1.xpose.msra.mxu0 0.0
    %7417 = vmatprep.subr.mxu0 0.0
    %7418 = vmatpush1.xpose.msra.mxu0 0.0
    %7419 = vmatprep.subr.mxu0 0.0
    %7420 = vmatpush1.xpose.msra.mxu0 0.0
    %7421 = vmatprep.subr.mxu0 0.0
    %7422 = vmatpush1.xpose.msra.mxu0 0.0
    %7423 = vmatprep.subr.mxu0 0.0
    %7424 = vmatpush1.xpose.msra.mxu0 0.0
    %7425 = vmatprep.subr.mxu0 0.0
    %7426 = vmatpush1.xpose.msra.mxu0 0.0
    %7427 = vmatprep.subr.mxu0 0.0
    %7428 = vmatpush1.xpose.msra.mxu0 0.0
    %7429 = vmatprep.subr.mxu0 0.0
    %7430 = vmatpush1.xpose.msra.mxu0 0.0
    %7431 = vmatprep.subr.mxu0 0.0
    %7432 = vmatpush1.xpose.msra.mxu0 0.0
    %7433 = vmatprep.subr.mxu0 0.0
    %7434 = vmatpush1.xpose.msra.mxu0 0.0
    %7435 = vmatprep.subr.mxu0 0.0
    %7436 = vmatpush1.xpose.msra.mxu0 0.0
    %7437 = vmatprep.subr.mxu0 0.0
    %7438 = vmatpush1.xpose.msra.mxu0 0.0
    %7439 = vmatprep.subr.mxu0 0.0
    %7440 = vmatpush1.xpose.msra.mxu0 0.0
    %7441 = vmatprep.subr.mxu0 0.0
    %7442 = vmatpush1.xpose.msra.mxu0 0.0
    %7443 = vmatprep.mubr.f32.mxu0 0.0
    %v7444 = vand.u32 %v7148, 4294901760
    %v7445 = vsub.f32 %v7148, %v7444
    %v7446 = vand.u32 %v7445, 4294901760
    %7447 = vmatmul.mubr.f32.gmra.mrb[0].mxu0 %v7446
    %v7448 = vpop.f32.mrb[0].mxu0
    %v7449 = vadd.f32 %v7375, %v7448
    %v7450 = vpop.f32.mrb[0].mxu0
    %7451 = vdwg.mxu0
    %7452 = vmatprep.subr.mxu0 0.0
    %v7453 = vand.u32 %v7150, 4294901760
    %v7454 = vsub.f32 %v7150, %v7453
    %v7455 = vand.u32 %v7454, 4294901760
    %7456 = vmatpush1.xpose.msra.mxu0 %v7455
    %7457 = vmatprep.subr.mxu0 0.0
    %7458 = vmatpush1.xpose.msra.mxu0 0.0
    %7459 = vmatprep.subr.mxu0 0.0
    %7460 = vmatpush1.xpose.msra.mxu0 0.0
    %7461 = vmatprep.subr.mxu0 0.0
    %7462 = vmatpush1.xpose.msra.mxu0 0.0
    %7463 = vmatprep.subr.mxu0 0.0
    %7464 = vmatpush1.xpose.msra.mxu0 0.0
    %7465 = vmatprep.subr.mxu0 0.0
    %7466 = vmatpush1.xpose.msra.mxu0 0.0
    %7467 = vmatprep.subr.mxu0 0.0
    %7468 = vmatpush1.xpose.msra.mxu0 0.0
    %7469 = vmatprep.subr.mxu0 0.0
    %7470 = vmatpush1.xpose.msra.mxu0 0.0
    %7471 = vmatprep.subr.mxu0 0.0
    %7472 = vmatpush1.xpose.msra.mxu0 0.0
    %7473 = vmatprep.subr.mxu0 0.0
    %7474 = vmatpush1.xpose.msra.mxu0 0.0
    %7475 = vmatprep.subr.mxu0 0.0
    %7476 = vmatpush1.xpose.msra.mxu0 0.0
    %7477 = vmatprep.subr.mxu0 0.0
    %7478 = vmatpush1.xpose.msra.mxu0 0.0
    %7479 = vmatprep.subr.mxu0 0.0
    %7480 = vmatpush1.xpose.msra.mxu0 0.0
    %7481 = vmatprep.subr.mxu0 0.0
    %7482 = vmatpush1.xpose.msra.mxu0 0.0
    %7483 = vmatprep.subr.mxu0 0.0
    %7484 = vmatpush1.xpose.msra.mxu0 0.0
    %7485 = vmatprep.subr.mxu0 0.0
    %7486 = vmatpush1.xpose.msra.mxu0 0.0
    %7487 = vmatprep.subr.mxu0 0.0
    %7488 = vmatpush1.xpose.msra.mxu0 0.0
    %7489 = vmatprep.subr.mxu0 0.0
    %7490 = vmatpush1.xpose.msra.mxu0 0.0
    %7491 = vmatprep.subr.mxu0 0.0
    %7492 = vmatpush1.xpose.msra.mxu0 0.0
    %7493 = vmatprep.subr.mxu0 0.0
    %7494 = vmatpush1.xpose.msra.mxu0 0.0
    %7495 = vmatprep.subr.mxu0 0.0
    %7496 = vmatpush1.xpose.msra.mxu0 0.0
    %7497 = vmatprep.subr.mxu0 0.0
    %7498 = vmatpush1.xpose.msra.mxu0 0.0
    %7499 = vmatprep.subr.mxu0 0.0
    %7500 = vmatpush1.xpose.msra.mxu0 0.0
    %7501 = vmatprep.subr.mxu0 0.0
    %7502 = vmatpush1.xpose.msra.mxu0 0.0
    %7503 = vmatprep.subr.mxu0 0.0
    %7504 = vmatpush1.xpose.msra.mxu0 0.0
    %7505 = vmatprep.subr.mxu0 0.0
    %7506 = vmatpush1.xpose.msra.mxu0 0.0
    %7507 = vmatprep.subr.mxu0 0.0
    %7508 = vmatpush1.xpose.msra.mxu0 0.0
    %7509 = vmatprep.subr.mxu0 0.0
    %7510 = vmatpush1.xpose.msra.mxu0 0.0
    %7511 = vmatprep.subr.mxu0 0.0
    %7512 = vmatpush1.xpose.msra.mxu0 0.0
    %7513 = vmatprep.subr.mxu0 0.0
    %7514 = vmatpush1.xpose.msra.mxu0 0.0
    %7515 = vmatprep.subr.mxu0 0.0
    %7516 = vmatpush1.xpose.msra.mxu0 0.0
    %7517 = vmatprep.subr.mxu0 0.0
    %7518 = vmatpush1.xpose.msra.mxu0 0.0
    %7519 = vmatprep.mubr.f32.mxu0 0.0
    %v7520 = vand.u32 %v7148, 4294901760
    %7521 = vmatmul.mubr.f32.gmra.mrb[0].mxu0 %v7520
    %v7522 = vpop.f32.mrb[0].mxu0
    %v7523 = vadd.f32 %v7449, %v7522
    %v7524 = vpop.f32.mrb[0].mxu0
    %7525 = vdwg.mxu0
    %7526 = vmatprep.subr.mxu0 0.0
    %v7527 = vand.u32 %v7150, 4294901760
    %7528 = vmatpush1.xpose.msra.mxu0 %v7527
    %7529 = vmatprep.subr.mxu0 0.0
    %7530 = vmatpush1.xpose.msra.mxu0 0.0
    %7531 = vmatprep.subr.mxu0 0.0
    %7532 = vmatpush1.xpose.msra.mxu0 0.0
    %7533 = vmatprep.subr.mxu0 0.0
    %7534 = vmatpush1.xpose.msra.mxu0 0.0
    %7535 = vmatprep.subr.mxu0 0.0
    %7536 = vmatpush1.xpose.msra.mxu0 0.0
    %7537 = vmatprep.subr.mxu0 0.0
    %7538 = vmatpush1.xpose.msra.mxu0 0.0
    %7539 = vmatprep.subr.mxu0 0.0
    %7540 = vmatpush1.xpose.msra.mxu0 0.0
    %7541 = vmatprep.subr.mxu0 0.0
    %7542 = vmatpush1.xpose.msra.mxu0 0.0
    %7543 = vmatprep.subr.mxu0 0.0
    %7544 = vmatpush1.xpose.msra.mxu0 0.0
    %7545 = vmatprep.subr.mxu0 0.0
    %7546 = vmatpush1.xpose.msra.mxu0 0.0
    %7547 = vmatprep.subr.mxu0 0.0
    %7548 = vmatpush1.xpose.msra.mxu0 0.0
    %7549 = vmatprep.subr.mxu0 0.0
    %7550 = vmatpush1.xpose.msra.mxu0 0.0
    %7551 = vmatprep.subr.mxu0 0.0
    %7552 = vmatpush1.xpose.msra.mxu0 0.0
    %7553 = vmatprep.subr.mxu0 0.0
    %7554 = vmatpush1.xpose.msra.mxu0 0.0
    %7555 = vmatprep.subr.mxu0 0.0
    %7556 = vmatpush1.xpose.msra.mxu0 0.0
    %7557 = vmatprep.subr.mxu0 0.0
    %7558 = vmatpush1.xpose.msra.mxu0 0.0
    %7559 = vmatprep.subr.mxu0 0.0
    %7560 = vmatpush1.xpose.msra.mxu0 0.0
    %7561 = vmatprep.subr.mxu0 0.0
    %7562 = vmatpush1.xpose.msra.mxu0 0.0
    %7563 = vmatprep.subr.mxu0 0.0
    %7564 = vmatpush1.xpose.msra.mxu0 0.0
    %7565 = vmatprep.subr.mxu0 0.0
    %7566 = vmatpush1.xpose.msra.mxu0 0.0
    %7567 = vmatprep.subr.mxu0 0.0
    %7568 = vmatpush1.xpose.msra.mxu0 0.0
    %7569 = vmatprep.subr.mxu0 0.0
    %7570 = vmatpush1.xpose.msra.mxu0 0.0
    %7571 = vmatprep.subr.mxu0 0.0
    %7572 = vmatpush1.xpose.msra.mxu0 0.0
    %7573 = vmatprep.subr.mxu0 0.0
    %7574 = vmatpush1.xpose.msra.mxu0 0.0
    %7575 = vmatprep.subr.mxu0 0.0
    %7576 = vmatpush1.xpose.msra.mxu0 0.0
    %7577 = vmatprep.subr.mxu0 0.0
    %7578 = vmatpush1.xpose.msra.mxu0 0.0
    %7579 = vmatprep.subr.mxu0 0.0
    %7580 = vmatpush1.xpose.msra.mxu0 0.0
    %7581 = vmatprep.subr.mxu0 0.0
    %7582 = vmatpush1.xpose.msra.mxu0 0.0
    %7583 = vmatprep.subr.mxu0 0.0
    %7584 = vmatpush1.xpose.msra.mxu0 0.0
    %7585 = vmatprep.subr.mxu0 0.0
    %7586 = vmatpush1.xpose.msra.mxu0 0.0
    %7587 = vmatprep.subr.mxu0 0.0
    %7588 = vmatpush1.xpose.msra.mxu0 0.0
    %7589 = vmatprep.subr.mxu0 0.0
    %7590 = vmatpush1.xpose.msra.mxu0 0.0
    %7591 = vmatprep.mubr.f32.mxu0 0.0
    %v7592 = vand.u32 %v7148, 4294901760
    %7593 = vmatmul.mubr.f32.gmra.mrb[0].mxu0 %v7592
    %v7594 = vpop.f32.mrb[0].mxu0
    %v7595 = vadd.f32 %v7523, %v7594
    %v7596 = vpop.f32.mrb[0].mxu0
    %7597 = vdwg.mxu0
    %v7598 = vmul.f32 %v7595, 0.35355338
    %v7599 = vadd.f32 %v7598, %v4820
    %v7600 = vsel %vm652, %v7599, -inf
    %7601 = vmax.xlane.f32.xlu0 %v7600
    %v7602 = vpop.xlane.xlu0 %7601
    %v7603 = vsub.f32 %v7599, %v7602
    %v7604 = vmul.f32 %v7603, 1.442695
    %v7605 = vpow.pop %v7604
    %v7606 = vsel %vm652, %v7605, 0.0
    %7607 = vadd.xlane.f32.xlu0 %v7606
    %v7608 = vpop.xlane.xlu0 %7607
    %7609 = vrot.lane.b32.xlu0 %v644, 40
    %v7610 = vpop.permute.xlu0 %7609
    %v7613 = vsel %vm652, %v7605, 0
    %7615 = vmatprep.subr.mxu0 0.0
    %v7616 = vand.u32 %v7610, 4294901760
    %7617 = vmatpush1.msra.mxu0 %v7616
    %7618 = vmatprep.subr.mxu0 0.0
    %7619 = vmatpush1.msra.mxu0 0.0
    %7620 = vmatprep.subr.mxu0 0.0
    %7621 = vmatpush1.msra.mxu0 0.0
    %7622 = vmatprep.subr.mxu0 0.0
    %7623 = vmatpush1.msra.mxu0 0.0
    %7624 = vmatprep.subr.mxu0 0.0
    %7625 = vmatpush1.msra.mxu0 0.0
    %7626 = vmatprep.subr.mxu0 0.0
    %7627 = vmatpush1.msra.mxu0 0.0
    %7628 = vmatprep.subr.mxu0 0.0
    %7629 = vmatpush1.msra.mxu0 0.0
    %7630 = vmatprep.subr.mxu0 0.0
    %7631 = vmatpush1.msra.mxu0 0.0
    %7632 = vmatprep.subr.mxu0 0.0
    %7633 = vmatpush1.msra.mxu0 0.0
    %7634 = vmatprep.subr.mxu0 0.0
    %7635 = vmatpush1.msra.mxu0 0.0
    %7636 = vmatprep.subr.mxu0 0.0
    %7637 = vmatpush1.msra.mxu0 0.0
    %7638 = vmatprep.subr.mxu0 0.0
    %7639 = vmatpush1.msra.mxu0 0.0
    %7640 = vmatprep.subr.mxu0 0.0
    %7641 = vmatpush1.msra.mxu0 0.0
    %7642 = vmatprep.subr.mxu0 0.0
    %7643 = vmatpush1.msra.mxu0 0.0
    %7644 = vmatprep.subr.mxu0 0.0
    %7645 = vmatpush1.msra.mxu0 0.0
    %7646 = vmatprep.subr.mxu0 0.0
    %7647 = vmatpush1.msra.mxu0 0.0
    %7648 = vmatprep.subr.mxu0 0.0
    %7649 = vmatpush1.msra.mxu0 0.0
    %7650 = vmatprep.subr.mxu0 0.0
    %7651 = vmatpush1.msra.mxu0 0.0
    %7652 = vmatprep.subr.mxu0 0.0
    %7653 = vmatpush1.msra.mxu0 0.0
    %7654 = vmatprep.subr.mxu0 0.0
    %7655 = vmatpush1.msra.mxu0 0.0
    %7656 = vmatprep.subr.mxu0 0.0
    %7657 = vmatpush1.msra.mxu0 0.0
    %7658 = vmatprep.subr.mxu0 0.0
    %7659 = vmatpush1.msra.mxu0 0.0
    %7660 = vmatprep.subr.mxu0 0.0
    %7661 = vmatpush1.msra.mxu0 0.0
    %7662 = vmatprep.subr.mxu0 0.0
    %7663 = vmatpush1.msra.mxu0 0.0
    %7664 = vmatprep.subr.mxu0 0.0
    %7665 = vmatpush1.msra.mxu0 0.0
    %7666 = vmatprep.subr.mxu0 0.0
    %7667 = vmatpush1.msra.mxu0 0.0
    %7668 = vmatprep.subr.mxu0 0.0
    %7669 = vmatpush1.msra.mxu0 0.0
    %7670 = vmatprep.subr.mxu0 0.0
    %7671 = vmatpush1.msra.mxu0 0.0
    %7672 = vmatprep.subr.mxu0 0.0
    %7673 = vmatpush1.msra.mxu0 0.0
    %7674 = vmatprep.subr.mxu0 0.0
    %7675 = vmatpush1.msra.mxu0 0.0
    %7676 = vmatprep.subr.mxu0 0.0
    %7677 = vmatpush1.msra.mxu0 0.0
    %7678 = vmatprep.subr.mxu0 0.0
    %7679 = vmatpush1.msra.mxu0 0.0
    %7680 = vmatprep.mubr.f32.mxu0 0.0
    %v7681 = vand.u32 %v7613, 4294901760
    %v7682 = vsub.f32 %v7613, %v7681
    %v7683 = vand.u32 %v7682, 4294901760
    %v7684 = vsub.f32 %v7682, %v7683
    %v7685 = vand.u32 %v7684, 4294901760
    %7686 = vmatmul.mubr.f32.gmra.mrb[0].mxu0 %v7685
    %v7687 = vpop.f32.mrb[0].mxu0
    %v7688 = vadd.f32 0.0, %v7687
    %v7689 = vpop.f32.mrb[0].mxu0
    %7690 = vdwg.mxu0
    %7691 = vmatprep.subr.mxu0 0.0
    %v7692 = vand.u32 %v7610, 4294901760
    %v7693 = vsub.f32 %v7610, %v7692
    %v7694 = vand.u32 %v7693, 4294901760
    %v7695 = vsub.f32 %v7693, %v7694
    %v7696 = vand.u32 %v7695, 4294901760
    %7697 = vmatpush1.msra.mxu0 %v7696
    %7698 = vmatprep.subr.mxu0 0.0
    %7699 = vmatpush1.msra.mxu0 0.0
    %7700 = vmatprep.subr.mxu0 0.0
    %7701 = vmatpush1.msra.mxu0 0.0
    %7702 = vmatprep.subr.mxu0 0.0
    %7703 = vmatpush1.msra.mxu0 0.0
    %7704 = vmatprep.subr.mxu0 0.0
    %7705 = vmatpush1.msra.mxu0 0.0
    %7706 = vmatprep.subr.mxu0 0.0
    %7707 = vmatpush1.msra.mxu0 0.0
    %7708 = vmatprep.subr.mxu0 0.0
    %7709 = vmatpush1.msra.mxu0 0.0
    %7710 = vmatprep.subr.mxu0 0.0
    %7711 = vmatpush1.msra.mxu0 0.0
    %7712 = vmatprep.subr.mxu0 0.0
    %7713 = vmatpush1.msra.mxu0 0.0
    %7714 = vmatprep.subr.mxu0 0.0
    %7715 = vmatpush1.msra.mxu0 0.0
    %7716 = vmatprep.subr.mxu0 0.0
    %7717 = vmatpush1.msra.mxu0 0.0
    %7718 = vmatprep.subr.mxu0 0.0
    %7719 = vmatpush1.msra.mxu0 0.0
    %7720 = vmatprep.subr.mxu0 0.0
    %7721 = vmatpush1.msra.mxu0 0.0
    %7722 = vmatprep.subr.mxu0 0.0
    %7723 = vmatpush1.msra.mxu0 0.0
    %7724 = vmatprep.subr.mxu0 0.0
    %7725 = vmatpush1.msra.mxu0 0.0
    %7726 = vmatprep.subr.mxu0 0.0
    %7727 = vmatpush1.msra.mxu0 0.0
    %7728 = vmatprep.subr.mxu0 0.0
    %7729 = vmatpush1.msra.mxu0 0.0
    %7730 = vmatprep.subr.mxu0 0.0
    %7731 = vmatpush1.msra.mxu0 0.0
    %7732 = vmatprep.subr.mxu0 0.0
    %7733 = vmatpush1.msra.mxu0 0.0
    %7734 = vmatprep.subr.mxu0 0.0
    %7735 = vmatpush1.msra.mxu0 0.0
    %7736 = vmatprep.subr.mxu0 0.0
    %7737 = vmatpush1.msra.mxu0 0.0
    %7738 = vmatprep.subr.mxu0 0.0
    %7739 = vmatpush1.msra.mxu0 0.0
    %7740 = vmatprep.subr.mxu0 0.0
    %7741 = vmatpush1.msra.mxu0 0.0
    %7742 = vmatprep.subr.mxu0 0.0
    %7743 = vmatpush1.msra.mxu0 0.0
    %7744 = vmatprep.subr.mxu0 0.0
    %7745 = vmatpush1.msra.mxu0 0.0
    %7746 = vmatprep.subr.mxu0 0.0
    %7747 = vmatpush1.msra.mxu0 0.0
    %7748 = vmatprep.subr.mxu0 0.0
    %7749 = vmatpush1.msra.mxu0 0.0
    %7750 = vmatprep.subr.mxu0 0.0
    %7751 = vmatpush1.msra.mxu0 0.0
    %7752 = vmatprep.subr.mxu0 0.0
    %7753 = vmatpush1.msra.mxu0 0.0
    %7754 = vmatprep.subr.mxu0 0.0
    %7755 = vmatpush1.msra.mxu0 0.0
    %7756 = vmatprep.subr.mxu0 0.0
    %7757 = vmatpush1.msra.mxu0 0.0
    %7758 = vmatprep.subr.mxu0 0.0
    %7759 = vmatpush1.msra.mxu0 0.0
    %7760 = vmatprep.mubr.f32.mxu0 0.0
    %v7761 = vand.u32 %v7613, 4294901760
    %7762 = vmatmul.mubr.f32.gmra.mrb[0].mxu0 %v7761
    %v7763 = vpop.f32.mrb[0].mxu0
    %v7764 = vadd.f32 %v7688, %v7763
    %v7765 = vpop.f32.mrb[0].mxu0
    %7766 = vdwg.mxu0
    %7767 = vmatprep.subr.mxu0 0.0
    %v7768 = vand.u32 %v7610, 4294901760
    %v7769 = vsub.f32 %v7610, %v7768
    %7770 = vmatpush1.msra.mxu0 %v7769
    %7771 = vmatprep.subr.mxu0 0.0
    %7772 = vmatpush1.msra.mxu0 0.0
    %7773 = vmatprep.subr.mxu0 0.0
    %7774 = vmatpush1.msra.mxu0 0.0
    %7775 = vmatprep.subr.mxu0 0.0
    %7776 = vmatpush1.msra.mxu0 0.0
    %7777 = vmatprep.subr.mxu0 0.0
    %7778 = vmatpush1.msra.mxu0 0.0
    %7779 = vmatprep.subr.mxu0 0.0
    %7780 = vmatpush1.msra.mxu0 0.0
    %7781 = vmatprep.subr.mxu0 0.0
    %7782 = vmatpush1.msra.mxu0 0.0
    %7783 = vmatprep.subr.mxu0 0.0
    %7784 = vmatpush1.msra.mxu0 0.0
    %7785 = vmatprep.subr.mxu0 0.0
    %7786 = vmatpush1.msra.mxu0 0.0
    %7787 = vmatprep.subr.mxu0 0.0
    %7788 = vmatpush1.msra.mxu0 0.0
    %7789 = vmatprep.subr.mxu0 0.0
    %7790 = vmatpush1.msra.mxu0 0.0
    %7791 = vmatprep.subr.mxu0 0.0
    %7792 = vmatpush1.msra.mxu0 0.0
    %7793 = vmatprep.subr.mxu0 0.0
    %7794 = vmatpush1.msra.mxu0 0.0
    %7795 = vmatprep.subr.mxu0 0.0
    %7796 = vmatpush1.msra.mxu0 0.0
    %7797 = vmatprep.subr.mxu0 0.0
    %7798 = vmatpush1.msra.mxu0 0.0
    %7799 = vmatprep.subr.mxu0 0.0
    %7800 = vmatpush1.msra.mxu0 0.0
    %7801 = vmatprep.subr.mxu0 0.0
    %7802 = vmatpush1.msra.mxu0 0.0
    %7803 = vmatprep.subr.mxu0 0.0
    %7804 = vmatpush1.msra.mxu0 0.0
    %7805 = vmatprep.subr.mxu0 0.0
    %7806 = vmatpush1.msra.mxu0 0.0
    %7807 = vmatprep.subr.mxu0 0.0
    %7808 = vmatpush1.msra.mxu0 0.0
    %7809 = vmatprep.subr.mxu0 0.0
    %7810 = vmatpush1.msra.mxu0 0.0
    %7811 = vmatprep.subr.mxu0 0.0
    %7812 = vmatpush1.msra.mxu0 0.0
    %7813 = vmatprep.subr.mxu0 0.0
    %7814 = vmatpush1.msra.mxu0 0.0
    %7815 = vmatprep.subr.mxu0 0.0
    %7816 = vmatpush1.msra.mxu0 0.0
    %7817 = vmatprep.subr.mxu0 0.0
    %7818 = vmatpush1.msra.mxu0 0.0
    %7819 = vmatprep.subr.mxu0 0.0
    %7820 = vmatpush1.msra.mxu0 0.0
    %7821 = vmatprep.subr.mxu0 0.0
    %7822 = vmatpush1.msra.mxu0 0.0
    %7823 = vmatprep.subr.mxu0 0.0
    %7824 = vmatpush1.msra.mxu0 0.0
    %7825 = vmatprep.subr.mxu0 0.0
    %7826 = vmatpush1.msra.mxu0 0.0
    %7827 = vmatprep.subr.mxu0 0.0
    %7828 = vmatpush1.msra.mxu0 0.0
    %7829 = vmatprep.subr.mxu0 0.0
    %7830 = vmatpush1.msra.mxu0 0.0
    %7831 = vmatprep.subr.mxu0 0.0
    %7832 = vmatpush1.msra.mxu0 0.0
    %7833 = vmatprep.mubr.f32.mxu0 0.0
    %v7834 = vand.u32 %v7613, 4294901760
    %v7835 = vsub.f32 %v7613, %v7834
    %7836 = vmatmul.mubr.f32.gmra.mrb[0].mxu0 %v7835
    %v7837 = vpop.f32.mrb[0].mxu0
    %v7838 = vadd.f32 %v7764, %v7837
    %v7839 = vpop.f32.mrb[0].mxu0
    %7840 = vdwg.mxu0
    %7841 = vmatprep.subr.mxu0 0.0
    %v7842 = vand.u32 %v7610, 4294901760
    %7843 = vmatpush1.msra.mxu0 %v7842
    %7844 = vmatprep.subr.mxu0 0.0
    %7845 = vmatpush1.msra.mxu0 0.0
    %7846 = vmatprep.subr.mxu0 0.0
    %7847 = vmatpush1.msra.mxu0 0.0
    %7848 = vmatprep.subr.mxu0 0.0
    %7849 = vmatpush1.msra.mxu0 0.0
    %7850 = vmatprep.subr.mxu0 0.0
    %7851 = vmatpush1.msra.mxu0 0.0
    %7852 = vmatprep.subr.mxu0 0.0
    %7853 = vmatpush1.msra.mxu0 0.0
    %7854 = vmatprep.subr.mxu0 0.0
    %7855 = vmatpush1.msra.mxu0 0.0
    %7856 = vmatprep.subr.mxu0 0.0
    %7857 = vmatpush1.msra.mxu0 0.0
    %7858 = vmatprep.subr.mxu0 0.0
    %7859 = vmatpush1.msra.mxu0 0.0
    %7860 = vmatprep.subr.mxu0 0.0
    %7861 = vmatpush1.msra.mxu0 0.0
    %7862 = vmatprep.subr.mxu0 0.0
    %7863 = vmatpush1.msra.mxu0 0.0
    %7864 = vmatprep.subr.mxu0 0.0
    %7865 = vmatpush1.msra.mxu0 0.0
    %7866 = vmatprep.subr.mxu0 0.0
    %7867 = vmatpush1.msra.mxu0 0.0
    %7868 = vmatprep.subr.mxu0 0.0
    %7869 = vmatpush1.msra.mxu0 0.0
    %7870 = vmatprep.subr.mxu0 0.0
    %7871 = vmatpush1.msra.mxu0 0.0
    %7872 = vmatprep.subr.mxu0 0.0
    %7873 = vmatpush1.msra.mxu0 0.0
    %7874 = vmatprep.subr.mxu0 0.0
    %7875 = vmatpush1.msra.mxu0 0.0
    %7876 = vmatprep.subr.mxu0 0.0
    %7877 = vmatpush1.msra.mxu0 0.0
    %7878 = vmatprep.subr.mxu0 0.0
    %7879 = vmatpush1.msra.mxu0 0.0
    %7880 = vmatprep.subr.mxu0 0.0
    %7881 = vmatpush1.msra.mxu0 0.0
    %7882 = vmatprep.subr.mxu0 0.0
    %7883 = vmatpush1.msra.mxu0 0.0
    %7884 = vmatprep.subr.mxu0 0.0
    %7885 = vmatpush1.msra.mxu0 0.0
    %7886 = vmatprep.subr.mxu0 0.0
    %7887 = vmatpush1.msra.mxu0 0.0
    %7888 = vmatprep.subr.mxu0 0.0
    %7889 = vmatpush1.msra.mxu0 0.0
    %7890 = vmatprep.subr.mxu0 0.0
    %7891 = vmatpush1.msra.mxu0 0.0
    %7892 = vmatprep.subr.mxu0 0.0
    %7893 = vmatpush1.msra.mxu0 0.0
    %7894 = vmatprep.subr.mxu0 0.0
    %7895 = vmatpush1.msra.mxu0 0.0
    %7896 = vmatprep.subr.mxu0 0.0
    %7897 = vmatpush1.msra.mxu0 0.0
    %7898 = vmatprep.subr.mxu0 0.0
    %7899 = vmatpush1.msra.mxu0 0.0
    %7900 = vmatprep.subr.mxu0 0.0
    %7901 = vmatpush1.msra.mxu0 0.0
    %7902 = vmatprep.subr.mxu0 0.0
    %7903 = vmatpush1.msra.mxu0 0.0
    %7904 = vmatprep.subr.mxu0 0.0
    %7905 = vmatpush1.msra.mxu0 0.0
    %7906 = vmatprep.mubr.f32.mxu0 0.0
    %v7907 = vand.u32 %v7613, 4294901760
    %v7908 = vsub.f32 %v7613, %v7907
    %v7909 = vand.u32 %v7908, 4294901760
    %7910 = vmatmul.mubr.f32.gmra.mrb[0].mxu0 %v7909
    %v7911 = vpop.f32.mrb[0].mxu0
    %v7912 = vadd.f32 %v7838, %v7911
    %v7913 = vpop.f32.mrb[0].mxu0
    %7914 = vdwg.mxu0
    %7915 = vmatprep.subr.mxu0 0.0
    %v7916 = vand.u32 %v7610, 4294901760
    %v7917 = vsub.f32 %v7610, %v7916
    %v7918 = vand.u32 %v7917, 4294901760
    %7919 = vmatpush1.msra.mxu0 %v7918
    %7920 = vmatprep.subr.mxu0 0.0
    %7921 = vmatpush1.msra.mxu0 0.0
    %7922 = vmatprep.subr.mxu0 0.0
    %7923 = vmatpush1.msra.mxu0 0.0
    %7924 = vmatprep.subr.mxu0 0.0
    %7925 = vmatpush1.msra.mxu0 0.0
    %7926 = vmatprep.subr.mxu0 0.0
    %7927 = vmatpush1.msra.mxu0 0.0
    %7928 = vmatprep.subr.mxu0 0.0
    %7929 = vmatpush1.msra.mxu0 0.0
    %7930 = vmatprep.subr.mxu0 0.0
    %7931 = vmatpush1.msra.mxu0 0.0
    %7932 = vmatprep.subr.mxu0 0.0
    %7933 = vmatpush1.msra.mxu0 0.0
    %7934 = vmatprep.subr.mxu0 0.0
    %7935 = vmatpush1.msra.mxu0 0.0
    %7936 = vmatprep.subr.mxu0 0.0
    %7937 = vmatpush1.msra.mxu0 0.0
    %7938 = vmatprep.subr.mxu0 0.0
    %7939 = vmatpush1.msra.mxu0 0.0
    %7940 = vmatprep.subr.mxu0 0.0
    %7941 = vmatpush1.msra.mxu0 0.0
    %7942 = vmatprep.subr.mxu0 0.0
    %7943 = vmatpush1.msra.mxu0 0.0
    %7944 = vmatprep.subr.mxu0 0.0
    %7945 = vmatpush1.msra.mxu0 0.0
    %7946 = vmatprep.subr.mxu0 0.0
    %7947 = vmatpush1.msra.mxu0 0.0
    %7948 = vmatprep.subr.mxu0 0.0
    %7949 = vmatpush1.msra.mxu0 0.0
    %7950 = vmatprep.subr.mxu0 0.0
    %7951 = vmatpush1.msra.mxu0 0.0
    %7952 = vmatprep.subr.mxu0 0.0
    %7953 = vmatpush1.msra.mxu0 0.0
    %7954 = vmatprep.subr.mxu0 0.0
    %7955 = vmatpush1.msra.mxu0 0.0
    %7956 = vmatprep.subr.mxu0 0.0
    %7957 = vmatpush1.msra.mxu0 0.0
    %7958 = vmatprep.subr.mxu0 0.0
    %7959 = vmatpush1.msra.mxu0 0.0
    %7960 = vmatprep.subr.mxu0 0.0
    %7961 = vmatpush1.msra.mxu0 0.0
    %7962 = vmatprep.subr.mxu0 0.0
    %7963 = vmatpush1.msra.mxu0 0.0
    %7964 = vmatprep.subr.mxu0 0.0
    %7965 = vmatpush1.msra.mxu0 0.0
    %7966 = vmatprep.subr.mxu0 0.0
    %7967 = vmatpush1.msra.mxu0 0.0
    %7968 = vmatprep.subr.mxu0 0.0
    %7969 = vmatpush1.msra.mxu0 0.0
    %7970 = vmatprep.subr.mxu0 0.0
    %7971 = vmatpush1.msra.mxu0 0.0
    %7972 = vmatprep.subr.mxu0 0.0
    %7973 = vmatpush1.msra.mxu0 0.0
    %7974 = vmatprep.subr.mxu0 0.0
    %7975 = vmatpush1.msra.mxu0 0.0
    %7976 = vmatprep.subr.mxu0 0.0
    %7977 = vmatpush1.msra.mxu0 0.0
    %7978 = vmatprep.subr.mxu0 0.0
    %7979 = vmatpush1.msra.mxu0 0.0
    %7980 = vmatprep.subr.mxu0 0.0
    %7981 = vmatpush1.msra.mxu0 0.0
    %7982 = vmatprep.mubr.f32.mxu0 0.0
    %v7983 = vand.u32 %v7613, 4294901760
    %7984 = vmatmul.mubr.f32.gmra.mrb[0].mxu0 %v7983
    %v7985 = vpop.f32.mrb[0].mxu0
    %v7986 = vadd.f32 %v7912, %v7985
    %v7987 = vpop.f32.mrb[0].mxu0
    %7988 = vdwg.mxu0
    %7989 = vmatprep.subr.mxu0 0.0
    %v7990 = vand.u32 %v7610, 4294901760
    %7991 = vmatpush1.msra.mxu0 %v7990
    %7992 = vmatprep.subr.mxu0 0.0
    %7993 = vmatpush1.msra.mxu0 0.0
    %7994 = vmatprep.subr.mxu0 0.0
    %7995 = vmatpush1.msra.mxu0 0.0
    %7996 = vmatprep.subr.mxu0 0.0
    %7997 = vmatpush1.msra.mxu0 0.0
    %7998 = vmatprep.subr.mxu0 0.0
    %7999 = vmatpush1.msra.mxu0 0.0
    %8000 = vmatprep.subr.mxu0 0.0
    %8001 = vmatpush1.msra.mxu0 0.0
    %8002 = vmatprep.subr.mxu0 0.0
    %8003 = vmatpush1.msra.mxu0 0.0
    %8004 = vmatprep.subr.mxu0 0.0
    %8005 = vmatpush1.msra.mxu0 0.0
    %8006 = vmatprep.subr.mxu0 0.0
    %8007 = vmatpush1.msra.mxu0 0.0
    %8008 = vmatprep.subr.mxu0 0.0
    %8009 = vmatpush1.msra.mxu0 0.0
    %8010 = vmatprep.subr.mxu0 0.0
    %8011 = vmatpush1.msra.mxu0 0.0
    %8012 = vmatprep.subr.mxu0 0.0
    %8013 = vmatpush1.msra.mxu0 0.0
    %8014 = vmatprep.subr.mxu0 0.0
    %8015 = vmatpush1.msra.mxu0 0.0
    %8016 = vmatprep.subr.mxu0 0.0
    %8017 = vmatpush1.msra.mxu0 0.0
    %8018 = vmatprep.subr.mxu0 0.0
    %8019 = vmatpush1.msra.mxu0 0.0
    %8020 = vmatprep.subr.mxu0 0.0
    %8021 = vmatpush1.msra.mxu0 0.0
    %8022 = vmatprep.subr.mxu0 0.0
    %8023 = vmatpush1.msra.mxu0 0.0
    %8024 = vmatprep.subr.mxu0 0.0
    %8025 = vmatpush1.msra.mxu0 0.0
    %8026 = vmatprep.subr.mxu0 0.0
    %8027 = vmatpush1.msra.mxu0 0.0
    %8028 = vmatprep.subr.mxu0 0.0
    %8029 = vmatpush1.msra.mxu0 0.0
    %8030 = vmatprep.subr.mxu0 0.0
    %8031 = vmatpush1.msra.mxu0 0.0
    %8032 = vmatprep.subr.mxu0 0.0
    %8033 = vmatpush1.msra.mxu0 0.0
    %8034 = vmatprep.subr.mxu0 0.0
    %8035 = vmatpush1.msra.mxu0 0.0
    %8036 = vmatprep.subr.mxu0 0.0
    %8037 = vmatpush1.msra.mxu0 0.0
    %8038 = vmatprep.subr.mxu0 0.0
    %8039 = vmatpush1.msra.mxu0 0.0
    %8040 = vmatprep.subr.mxu0 0.0
    %8041 = vmatpush1.msra.mxu0 0.0
    %8042 = vmatprep.subr.mxu0 0.0
    %8043 = vmatpush1.msra.mxu0 0.0
    %8044 = vmatprep.subr.mxu0 0.0
    %8045 = vmatpush1.msra.mxu0 0.0
    %8046 = vmatprep.subr.mxu0 0.0
    %8047 = vmatpush1.msra.mxu0 0.0
    %8048 = vmatprep.subr.mxu0 0.0
    %8049 = vmatpush1.msra.mxu0 0.0
    %8050 = vmatprep.subr.mxu0 0.0
    %8051 = vmatpush1.msra.mxu0 0.0
    %8052 = vmatprep.subr.mxu0 0.0
    %8053 = vmatpush1.msra.mxu0 0.0
    %8054 = vmatprep.mubr.f32.mxu0 0.0
    %v8055 = vand.u32 %v7613, 4294901760
    %8056 = vmatmul.mubr.f32.gmra.mrb[0].mxu0 %v8055
    %v8057 = vpop.f32.mrb[0].mxu0
    %v8058 = vadd.f32 %v7986, %v8057
    %v8059 = vpop.f32.mrb[0].mxu0
    %8060 = vdwg.mxu0
    %v8061 = vrcp.pop %v7608
    %v8062 = vmul.f32 %v7608, %v8061
    %v8063 = vsub.f32 2.0, %v8062
    %v8064 = vmul.f32 %v8061, %v8063
    %v8065 = vmul.f32 %v8058, %v8064
    %8067 = vrot.lane.b32.xlu0 %v8065, 24
    %v8068 = vpop.permute.xlu0 %8067
    %8070 = vst.msk [vmem:[#allocation2 + $0x8] sm:$0xff] %vm4360, %v8068
    %v8071 = vld [vmem:[#allocation2] sm:$0xff]
    %v8072 = vld [vmem:[#allocation2 + $0x8] sm:$0xff]
    %v8073 = vld [vmem:[%s5] sm:$0xff]
    %v8074 = vld [vmem:[%s5 + $0x8] sm:$0xff]
    %v8075 = vld [vmem:[%s5 + $0x10] sm:$0xff]
    %v8076 = vld [vmem:[%s5 + $0x18] sm:$0xff]
    %v8077 = vld [vmem:[#allocation10] sm:$0x1]
    %v8079 = vlaneseq
    %v8080 = vshrl.u32 %v8079, 7
    %v8081 = vsub.s32 0, %v8080
    %v8082 = vrot.slane %v8077, %v8081
    %v8085 = vsel %vm112, %v8071, 0
    %v8088 = vsel %vm112, %v8072, 0
    %8090 = vmatprep.subr.mxu0 0.0
    %v8091 = vand.u32 %v8073, 4294901760
    %8092 = vmatpush1.msra.mxu0 %v8091
    %8093 = vmatprep.subr.mxu0 0.0
    %v8094 = vand.u32 %v8074, 4294901760
    %8095 = vmatpush1.msra.mxu0 %v8094
    %8096 = vmatprep.subr.mxu0 0.0
    %v8097 = vand.u32 %v8075, 4294901760
    %8098 = vmatpush1.msra.mxu0 %v8097
    %8099 = vmatprep.subr.mxu0 0.0
    %v8100 = vand.u32 %v8076, 4294901760
    %8101 = vmatpush1.msra.mxu0 %v8100
    %8102 = vmatprep.subr.mxu0 0.0
    %8103 = vmatpush1.msra.mxu0 0.0
    %8104 = vmatprep.subr.mxu0 0.0
    %8105 = vmatpush1.msra.mxu0 0.0
    %8106 = vmatprep.subr.mxu0 0.0
    %8107 = vmatpush1.msra.mxu0 0.0
    %8108 = vmatprep.subr.mxu0 0.0
    %8109 = vmatpush1.msra.mxu0 0.0
    %8110 = vmatprep.subr.mxu0 0.0
    %8111 = vmatpush1.msra.mxu0 0.0
    %8112 = vmatprep.subr.mxu0 0.0
    %8113 = vmatpush1.msra.mxu0 0.0
    %8114 = vmatprep.subr.mxu0 0.0
    %8115 = vmatpush1.msra.mxu0 0.0
    %8116 = vmatprep.subr.mxu0 0.0
    %8117 = vmatpush1.msra.mxu0 0.0
    %8118 = vmatprep.subr.mxu0 0.0
    %8119 = vmatpush1.msra.mxu0 0.0
    %8120 = vmatprep.subr.mxu0 0.0
    %8121 = vmatpush1.msra.mxu0 0.0
    %8122 = vmatprep.subr.mxu0 0.0
    %8123 = vmatpush1.msra.mxu0 0.0
    %8124 = vmatprep.subr.mxu0 0.0
    %8125 = vmatpush1.msra.mxu0 0.0
    %8126 = vmatprep.subr.mxu0 0.0
    %8127 = vmatpush1.msra.mxu0 0.0
    %8128 = vmatprep.subr.mxu0 0.0
    %8129 = vmatpush1.msra.mxu0 0.0
    %8130 = vmatprep.subr.mxu0 0.0
    %8131 = vmatpush1.msra.mxu0 0.0
    %8132 = vmatprep.subr.mxu0 0.0
    %8133 = vmatpush1.msra.mxu0 0.0
    %8134 = vmatprep.subr.mxu0 0.0
    %8135 = vmatpush1.msra.mxu0 0.0
    %8136 = vmatprep.subr.mxu0 0.0
    %8137 = vmatpush1.msra.mxu0 0.0
    %8138 = vmatprep.subr.mxu0 0.0
    %8139 = vmatpush1.msra.mxu0 0.0
    %8140 = vmatprep.subr.mxu0 0.0
    %8141 = vmatpush1.msra.mxu0 0.0
    %8142 = vmatprep.subr.mxu0 0.0
    %8143 = vmatpush1.msra.mxu0 0.0
    %8144 = vmatprep.subr.mxu0 0.0
    %8145 = vmatpush1.msra.mxu0 0.0
    %8146 = vmatprep.subr.mxu0 0.0
    %8147 = vmatpush1.msra.mxu0 0.0
    %8148 = vmatprep.subr.mxu0 0.0
    %8149 = vmatpush1.msra.mxu0 0.0
    %8150 = vmatprep.subr.mxu0 0.0
    %8151 = vmatpush1.msra.mxu0 0.0
    %8152 = vmatprep.subr.mxu0 0.0
    %8153 = vmatpush1.msra.mxu0 0.0
    %8154 = vmatprep.subr.mxu0 0.0
    %8155 = vmatpush1.msra.mxu0 0.0
    %8156 = vmatprep.subr.mxu0 0.0
    %8157 = vmatpush1.msra.mxu0 0.0
    %8158 = vmatprep.mubr.f32.mxu0 0.0
    %v8159 = vand.u32 %v8085, 4294901760
    %v8160 = vsub.f32 %v8085, %v8159
    %v8161 = vand.u32 %v8160, 4294901760
    %v8162 = vsub.f32 %v8160, %v8161
    %v8163 = vand.u32 %v8162, 4294901760
    %8164 = vmatmul.mubr.f32.gmra.mrb[0].mxu0 %v8163
    %v8165 = vpop.f32.mrb[0].mxu0
    %v8166 = vadd.f32 %v8082, %v8165
    %v8167 = vpop.f32.mrb[0].mxu0
    %8168 = vmatprep.mubr.f32.mxu0 0.0
    %v8169 = vand.u32 %v8088, 4294901760
    %v8170 = vsub.f32 %v8088, %v8169
    %v8171 = vand.u32 %v8170, 4294901760
    %v8172 = vsub.f32 %v8170, %v8171
    %v8173 = vand.u32 %v8172, 4294901760
    %8174 = vmatmul.mubr.f32.gmra.mrb[0].mxu0 %v8173
    %v8175 = vpop.f32.mrb[0].mxu0
    %v8176 = vadd.f32 %v8082, %v8175
    %v8177 = vpop.f32.mrb[0].mxu0
    %8178 = vdwg.mxu0
    %8179 = vmatprep.subr.mxu0 0.0
    %v8180 = vand.u32 %v8073, 4294901760
    %v8181 = vsub.f32 %v8073, %v8180
    %v8182 = vand.u32 %v8181, 4294901760
    %v8183 = vsub.f32 %v8181, %v8182
    %v8184 = vand.u32 %v8183, 4294901760
    %8185 = vmatpush1.msra.mxu0 %v8184
    %8186 = vmatprep.subr.mxu0 0.0
    %v8187 = vand.u32 %v8074, 4294901760
    %v8188 = vsub.f32 %v8074, %v8187
    %v8189 = vand.u32 %v8188, 4294901760
    %v8190 = vsub.f32 %v8188, %v8189
    %v8191 = vand.u32 %v8190, 4294901760
    %8192 = vmatpush1.msra.mxu0 %v8191
    %8193 = vmatprep.subr.mxu0 0.0
    %v8194 = vand.u32 %v8075, 4294901760
    %v8195 = vsub.f32 %v8075, %v8194
    %v8196 = vand.u32 %v8195, 4294901760
    %v8197 = vsub.f32 %v8195, %v8196
    %v8198 = vand.u32 %v8197, 4294901760
    %8199 = vmatpush1.msra.mxu0 %v8198
    %8200 = vmatprep.subr.mxu0 0.0
    %v8201 = vand.u32 %v8076, 4294901760
    %v8202 = vsub.f32 %v8076, %v8201
    %v8203 = vand.u32 %v8202, 4294901760
    %v8204 = vsub.f32 %v8202, %v8203
    %v8205 = vand.u32 %v8204, 4294901760
    %8206 = vmatpush1.msra.mxu0 %v8205
    %8207 = vmatprep.subr.mxu0 0.0
    %8208 = vmatpush1.msra.mxu0 0.0
    %8209 = vmatprep.subr.mxu0 0.0
    %8210 = vmatpush1.msra.mxu0 0.0
    %8211 = vmatprep.subr.mxu0 0.0
    %8212 = vmatpush1.msra.mxu0 0.0
    %8213 = vmatprep.subr.mxu0 0.0
    %8214 = vmatpush1.msra.mxu0 0.0
    %8215 = vmatprep.subr.mxu0 0.0
    %8216 = vmatpush1.msra.mxu0 0.0
    %8217 = vmatprep.subr.mxu0 0.0
    %8218 = vmatpush1.msra.mxu0 0.0
    %8219 = vmatprep.subr.mxu0 0.0
    %8220 = vmatpush1.msra.mxu0 0.0
    %8221 = vmatprep.subr.mxu0 0.0
    %8222 = vmatpush1.msra.mxu0 0.0
    %8223 = vmatprep.subr.mxu0 0.0
    %8224 = vmatpush1.msra.mxu0 0.0
    %8225 = vmatprep.subr.mxu0 0.0
    %8226 = vmatpush1.msra.mxu0 0.0
    %8227 = vmatprep.subr.mxu0 0.0
    %8228 = vmatpush1.msra.mxu0 0.0
    %8229 = vmatprep.subr.mxu0 0.0
    %8230 = vmatpush1.msra.mxu0 0.0
    %8231 = vmatprep.subr.mxu0 0.0
    %8232 = vmatpush1.msra.mxu0 0.0
    %8233 = vmatprep.subr.mxu0 0.0
    %8234 = vmatpush1.msra.mxu0 0.0
    %8235 = vmatprep.subr.mxu0 0.0
    %8236 = vmatpush1.msra.mxu0 0.0
    %8237 = vmatprep.subr.mxu0 0.0
    %8238 = vmatpush1.msra.mxu0 0.0
    %8239 = vmatprep.subr.mxu0 0.0
    %8240 = vmatpush1.msra.mxu0 0.0
    %8241 = vmatprep.subr.mxu0 0.0
    %8242 = vmatpush1.msra.mxu0 0.0
    %8243 = vmatprep.subr.mxu0 0.0
    %8244 = vmatpush1.msra.mxu0 0.0
    %8245 = vmatprep.subr.mxu0 0.0
    %8246 = vmatpush1.msra.mxu0 0.0
    %8247 = vmatprep.subr.mxu0 0.0
    %8248 = vmatpush1.msra.mxu0 0.0
    %8249 = vmatprep.subr.mxu0 0.0
    %8250 = vmatpush1.msra.mxu0 0.0
    %8251 = vmatprep.subr.mxu0 0.0
    %8252 = vmatpush1.msra.mxu0 0.0
    %8253 = vmatprep.subr.mxu0 0.0
    %8254 = vmatpush1.msra.mxu0 0.0
    %8255 = vmatprep.subr.mxu0 0.0
    %8256 = vmatpush1.msra.mxu0 0.0
    %8257 = vmatprep.subr.mxu0 0.0
    %8258 = vmatpush1.msra.mxu0 0.0
    %8259 = vmatprep.subr.mxu0 0.0
    %8260 = vmatpush1.msra.mxu0 0.0
    %8261 = vmatprep.subr.mxu0 0.0
    %8262 = vmatpush1.msra.mxu0 0.0
    %8263 = vmatprep.mubr.f32.mxu0 0.0
    %v8264 = vand.u32 %v8085, 4294901760
    %8265 = vmatmul.mubr.f32.gmra.mrb[0].mxu0 %v8264
    %v8266 = vpop.f32.mrb[0].mxu0
    %v8267 = vadd.f32 %v8166, %v8266
    %v8268 = vpop.f32.mrb[0].mxu0
    %8269 = vmatprep.mubr.f32.mxu0 0.0
    %v8270 = vand.u32 %v8088, 4294901760
    %8271 = vmatmul.mubr.f32.gmra.mrb[0].mxu0 %v8270
    %v8272 = vpop.f32.mrb[0].mxu0
    %v8273 = vadd.f32 %v8176, %v8272
    %v8274 = vpop.f32.mrb[0].mxu0
    %8275 = vdwg.mxu0
    %8276 = vmatprep.subr.mxu0 0.0
    %v8277 = vand.u32 %v8073, 4294901760
    %v8278 = vsub.f32 %v8073, %v8277
    %8279 = vmatpush1.msra.mxu0 %v8278
    %8280 = vmatprep.subr.mxu0 0.0
    %v8281 = vand.u32 %v8074, 4294901760
    %v8282 = vsub.f32 %v8074, %v8281
    %8283 = vmatpush1.msra.mxu0 %v8282
    %8284 = vmatprep.subr.mxu0 0.0
    %v8285 = vand.u32 %v8075, 4294901760
    %v8286 = vsub.f32 %v8075, %v8285
    %8287 = vmatpush1.msra.mxu0 %v8286
    %8288 = vmatprep.subr.mxu0 0.0
    %v8289 = vand.u32 %v8076, 4294901760
    %v8290 = vsub.f32 %v8076, %v8289
    %8291 = vmatpush1.msra.mxu0 %v8290
    %8292 = vmatprep.subr.mxu0 0.0
    %8293 = vmatpush1.msra.mxu0 0.0
    %8294 = vmatprep.subr.mxu0 0.0
    %8295 = vmatpush1.msra.mxu0 0.0
    %8296 = vmatprep.subr.mxu0 0.0
    %8297 = vmatpush1.msra.mxu0 0.0
    %8298 = vmatprep.subr.mxu0 0.0
    %8299 = vmatpush1.msra.mxu0 0.0
    %8300 = vmatprep.subr.mxu0 0.0
    %8301 = vmatpush1.msra.mxu0 0.0
    %8302 = vmatprep.subr.mxu0 0.0
    %8303 = vmatpush1.msra.mxu0 0.0
    %8304 = vmatprep.subr.mxu0 0.0
    %8305 = vmatpush1.msra.mxu0 0.0
    %8306 = vmatprep.subr.mxu0 0.0
    %8307 = vmatpush1.msra.mxu0 0.0
    %8308 = vmatprep.subr.mxu0 0.0
    %8309 = vmatpush1.msra.mxu0 0.0
    %8310 = vmatprep.subr.mxu0 0.0
    %8311 = vmatpush1.msra.mxu0 0.0
    %8312 = vmatprep.subr.mxu0 0.0
    %8313 = vmatpush1.msra.mxu0 0.0
    %8314 = vmatprep.subr.mxu0 0.0
    %8315 = vmatpush1.msra.mxu0 0.0
    %8316 = vmatprep.subr.mxu0 0.0
    %8317 = vmatpush1.msra.mxu0 0.0
    %8318 = vmatprep.subr.mxu0 0.0
    %8319 = vmatpush1.msra.mxu0 0.0
    %8320 = vmatprep.subr.mxu0 0.0
    %8321 = vmatpush1.msra.mxu0 0.0
    %8322 = vmatprep.subr.mxu0 0.0
    %8323 = vmatpush1.msra.mxu0 0.0
    %8324 = vmatprep.subr.mxu0 0.0
    %8325 = vmatpush1.msra.mxu0 0.0
    %8326 = vmatprep.subr.mxu0 0.0
    %8327 = vmatpush1.msra.mxu0 0.0
    %8328 = vmatprep.subr.mxu0 0.0
    %8329 = vmatpush1.msra.mxu0 0.0
    %8330 = vmatprep.subr.mxu0 0.0
    %8331 = vmatpush1.msra.mxu0 0.0
    %8332 = vmatprep.subr.mxu0 0.0
    %8333 = vmatpush1.msra.mxu0 0.0
    %8334 = vmatprep.subr.mxu0 0.0
    %8335 = vmatpush1.msra.mxu0 0.0
    %8336 = vmatprep.subr.mxu0 0.0
    %8337 = vmatpush1.msra.mxu0 0.0
    %8338 = vmatprep.subr.mxu0 0.0
    %8339 = vmatpush1.msra.mxu0 0.0
    %8340 = vmatprep.subr.mxu0 0.0
    %8341 = vmatpush1.msra.mxu0 0.0
    %8342 = vmatprep.subr.mxu0 0.0
    %8343 = vmatpush1.msra.mxu0 0.0
    %8344 = vmatprep.subr.mxu0 0.0
    %8345 = vmatpush1.msra.mxu0 0.0
    %8346 = vmatprep.subr.mxu0 0.0
    %8347 = vmatpush1.msra.mxu0 0.0
    %8348 = vmatprep.mubr.f32.mxu0 0.0
    %v8349 = vand.u32 %v8085, 4294901760
    %v8350 = vsub.f32 %v8085, %v8349
    %8351 = vmatmul.mubr.f32.gmra.mrb[0].mxu0 %v8350
    %v8352 = vpop.f32.mrb[0].mxu0
    %v8353 = vadd.f32 %v8267, %v8352
    %v8354 = vpop.f32.mrb[0].mxu0
    %8355 = vmatprep.mubr.f32.mxu0 0.0
    %v8356 = vand.u32 %v8088, 4294901760
    %v8357 = vsub.f32 %v8088, %v8356
    %8358 = vmatmul.mubr.f32.gmra.mrb[0].mxu0 %v8357
    %v8359 = vpop.f32.mrb[0].mxu0
    %v8360 = vadd.f32 %v8273, %v8359
    %v8361 = vpop.f32.mrb[0].mxu0
    %8362 = vdwg.mxu0
    %8363 = vmatprep.subr.mxu0 0.0
    %v8364 = vand.u32 %v8073, 4294901760
    %8365 = vmatpush1.msra.mxu0 %v8364
    %8366 = vmatprep.subr.mxu0 0.0
    %v8367 = vand.u32 %v8074, 4294901760
    %8368 = vmatpush1.msra.mxu0 %v8367
    %8369 = vmatprep.subr.mxu0 0.0
    %v8370 = vand.u32 %v8075, 4294901760
    %8371 = vmatpush1.msra.mxu0 %v8370
    %8372 = vmatprep.subr.mxu0 0.0
    %v8373 = vand.u32 %v8076, 4294901760
    %8374 = vmatpush1.msra.mxu0 %v8373
    %8375 = vmatprep.subr.mxu0 0.0
    %8376 = vmatpush1.msra.mxu0 0.0
    %8377 = vmatprep.subr.mxu0 0.0
    %8378 = vmatpush1.msra.mxu0 0.0
    %8379 = vmatprep.subr.mxu0 0.0
    %8380 = vmatpush1.msra.mxu0 0.0
    %8381 = vmatprep.subr.mxu0 0.0
    %8382 = vmatpush1.msra.mxu0 0.0
    %8383 = vmatprep.subr.mxu0 0.0
    %8384 = vmatpush1.msra.mxu0 0.0
    %8385 = vmatprep.subr.mxu0 0.0
    %8386 = vmatpush1.msra.mxu0 0.0
    %8387 = vmatprep.subr.mxu0 0.0
    %8388 = vmatpush1.msra.mxu0 0.0
    %8389 = vmatprep.subr.mxu0 0.0
    %8390 = vmatpush1.msra.mxu0 0.0
    %8391 = vmatprep.subr.mxu0 0.0
    %8392 = vmatpush1.msra.mxu0 0.0
    %8393 = vmatprep.subr.mxu0 0.0
    %8394 = vmatpush1.msra.mxu0 0.0
    %8395 = vmatprep.subr.mxu0 0.0
    %8396 = vmatpush1.msra.mxu0 0.0
    %8397 = vmatprep.subr.mxu0 0.0
    %8398 = vmatpush1.msra.mxu0 0.0
    %8399 = vmatprep.subr.mxu0 0.0
    %8400 = vmatpush1.msra.mxu0 0.0
    %8401 = vmatprep.subr.mxu0 0.0
    %8402 = vmatpush1.msra.mxu0 0.0
    %8403 = vmatprep.subr.mxu0 0.0
    %8404 = vmatpush1.msra.mxu0 0.0
    %8405 = vmatprep.subr.mxu0 0.0
    %8406 = vmatpush1.msra.mxu0 0.0
    %8407 = vmatprep.subr.mxu0 0.0
    %8408 = vmatpush1.msra.mxu0 0.0
    %8409 = vmatprep.subr.mxu0 0.0
    %8410 = vmatpush1.msra.mxu0 0.0
    %8411 = vmatprep.subr.mxu0 0.0
    %8412 = vmatpush1.msra.mxu0 0.0
    %8413 = vmatprep.subr.mxu0 0.0
    %8414 = vmatpush1.msra.mxu0 0.0
    %8415 = vmatprep.subr.mxu0 0.0
    %8416 = vmatpush1.msra.mxu0 0.0
    %8417 = vmatprep.subr.mxu0 0.0
    %8418 = vmatpush1.msra.mxu0 0.0
    %8419 = vmatprep.subr.mxu0 0.0
    %8420 = vmatpush1.msra.mxu0 0.0
    %8421 = vmatprep.subr.mxu0 0.0
    %8422 = vmatpush1.msra.mxu0 0.0
    %8423 = vmatprep.subr.mxu0 0.0
    %8424 = vmatpush1.msra.mxu0 0.0
    %8425 = vmatprep.subr.mxu0 0.0
    %8426 = vmatpush1.msra.mxu0 0.0
    %8427 = vmatprep.subr.mxu0 0.0
    %8428 = vmatpush1.msra.mxu0 0.0
    %8429 = vmatprep.subr.mxu0 0.0
    %8430 = vmatpush1.msra.mxu0 0.0
    %8431 = vmatprep.mubr.f32.mxu0 0.0
    %v8432 = vand.u32 %v8085, 4294901760
    %v8433 = vsub.f32 %v8085, %v8432
    %v8434 = vand.u32 %v8433, 4294901760
    %8435 = vmatmul.mubr.f32.gmra.mrb[0].mxu0 %v8434
    %v8436 = vpop.f32.mrb[0].mxu0
    %v8437 = vadd.f32 %v8353, %v8436
    %v8438 = vpop.f32.mrb[0].mxu0
    %8439 = vmatprep.mubr.f32.mxu0 0.0
    %v8440 = vand.u32 %v8088, 4294901760
    %v8441 = vsub.f32 %v8088, %v8440
    %v8442 = vand.u32 %v8441, 4294901760
    %8443 = vmatmul.mubr.f32.gmra.mrb[0].mxu0 %v8442
    %v8444 = vpop.f32.mrb[0].mxu0
    %v8445 = vadd.f32 %v8360, %v8444
    %v8446 = vpop.f32.mrb[0].mxu0
    %8447 = vdwg.mxu0
    %8448 = vmatprep.subr.mxu0 0.0
    %v8449 = vand.u32 %v8073, 4294901760
    %v8450 = vsub.f32 %v8073, %v8449
    %v8451 = vand.u32 %v8450, 4294901760
    %8452 = vmatpush1.msra.mxu0 %v8451
    %8453 = vmatprep.subr.mxu0 0.0
    %v8454 = vand.u32 %v8074, 4294901760
    %v8455 = vsub.f32 %v8074, %v8454
    %v8456 = vand.u32 %v8455, 4294901760
    %8457 = vmatpush1.msra.mxu0 %v8456
    %8458 = vmatprep.subr.mxu0 0.0
    %v8459 = vand.u32 %v8075, 4294901760
    %v8460 = vsub.f32 %v8075, %v8459
    %v8461 = vand.u32 %v8460, 4294901760
    %8462 = vmatpush1.msra.mxu0 %v8461
    %8463 = vmatprep.subr.mxu0 0.0
    %v8464 = vand.u32 %v8076, 4294901760
    %v8465 = vsub.f32 %v8076, %v8464
    %v8466 = vand.u32 %v8465, 4294901760
    %8467 = vmatpush1.msra.mxu0 %v8466
    %8468 = vmatprep.subr.mxu0 0.0
    %8469 = vmatpush1.msra.mxu0 0.0
    %8470 = vmatprep.subr.mxu0 0.0
    %8471 = vmatpush1.msra.mxu0 0.0
    %8472 = vmatprep.subr.mxu0 0.0
    %8473 = vmatpush1.msra.mxu0 0.0
    %8474 = vmatprep.subr.mxu0 0.0
    %8475 = vmatpush1.msra.mxu0 0.0
    %8476 = vmatprep.subr.mxu0 0.0
    %8477 = vmatpush1.msra.mxu0 0.0
    %8478 = vmatprep.subr.mxu0 0.0
    %8479 = vmatpush1.msra.mxu0 0.0
    %8480 = vmatprep.subr.mxu0 0.0
    %8481 = vmatpush1.msra.mxu0 0.0
    %8482 = vmatprep.subr.mxu0 0.0
    %8483 = vmatpush1.msra.mxu0 0.0
    %8484 = vmatprep.subr.mxu0 0.0
    %8485 = vmatpush1.msra.mxu0 0.0
    %8486 = vmatprep.subr.mxu0 0.0
    %8487 = vmatpush1.msra.mxu0 0.0
    %8488 = vmatprep.subr.mxu0 0.0
    %8489 = vmatpush1.msra.mxu0 0.0
    %8490 = vmatprep.subr.mxu0 0.0
    %8491 = vmatpush1.msra.mxu0 0.0
    %8492 = vmatprep.subr.mxu0 0.0
    %8493 = vmatpush1.msra.mxu0 0.0
    %8494 = vmatprep.subr.mxu0 0.0
    %8495 = vmatpush1.msra.mxu0 0.0
    %8496 = vmatprep.subr.mxu0 0.0
    %8497 = vmatpush1.msra.mxu0 0.0
    %8498 = vmatprep.subr.mxu0 0.0
    %8499 = vmatpush1.msra.mxu0 0.0
    %8500 = vmatprep.subr.mxu0 0.0
    %8501 = vmatpush1.msra.mxu0 0.0
    %8502 = vmatprep.subr.mxu0 0.0
    %8503 = vmatpush1.msra.mxu0 0.0
    %8504 = vmatprep.subr.mxu0 0.0
    %8505 = vmatpush1.msra.mxu0 0.0
    %8506 = vmatprep.subr.mxu0 0.0
    %8507 = vmatpush1.msra.mxu0 0.0
    %8508 = vmatprep.subr.mxu0 0.0
    %8509 = vmatpush1.msra.mxu0 0.0
    %8510 = vmatprep.subr.mxu0 0.0
    %8511 = vmatpush1.msra.mxu0 0.0
    %8512 = vmatprep.subr.mxu0 0.0
    %8513 = vmatpush1.msra.mxu0 0.0
    %8514 = vmatprep.subr.mxu0 0.0
    %8515 = vmatpush1.msra.mxu0 0.0
    %8516 = vmatprep.subr.mxu0 0.0
    %8517 = vmatpush1.msra.mxu0 0.0
    %8518 = vmatprep.subr.mxu0 0.0
    %8519 = vmatpush1.msra.mxu0 0.0
    %8520 = vmatprep.subr.mxu0 0.0
    %8521 = vmatpush1.msra.mxu0 0.0
    %8522 = vmatprep.subr.mxu0 0.0
    %8523 = vmatpush1.msra.mxu0 0.0
    %8524 = vmatprep.mubr.f32.mxu0 0.0
    %v8525 = vand.u32 %v8085, 4294901760
    %8526 = vmatmul.mubr.f32.gmra.mrb[0].mxu0 %v8525
    %v8527 = vpop.f32.mrb[0].mxu0
    %v8528 = vadd.f32 %v8437, %v8527
    %v8529 = vpop.f32.mrb[0].mxu0
    %8530 = vmatprep.mubr.f32.mxu0 0.0
    %v8531 = vand.u32 %v8088, 4294901760
    %8532 = vmatmul.mubr.f32.gmra.mrb[0].mxu0 %v8531
    %v8533 = vpop.f32.mrb[0].mxu0
    %v8534 = vadd.f32 %v8445, %v8533
    %v8535 = vpop.f32.mrb[0].mxu0
    %8536 = vdwg.mxu0
    %8537 = vmatprep.subr.mxu0 0.0
    %v8538 = vand.u32 %v8073, 4294901760
    %8539 = vmatpush1.msra.mxu0 %v8538
    %8540 = vmatprep.subr.mxu0 0.0
    %v8541 = vand.u32 %v8074, 4294901760
    %8542 = vmatpush1.msra.mxu0 %v8541
    %8543 = vmatprep.subr.mxu0 0.0
    %v8544 = vand.u32 %v8075, 4294901760
    %8545 = vmatpush1.msra.mxu0 %v8544
    %8546 = vmatprep.subr.mxu0 0.0
    %v8547 = vand.u32 %v8076, 4294901760
    %8548 = vmatpush1.msra.mxu0 %v8547
    %8549 = vmatprep.subr.mxu0 0.0
    %8550 = vmatpush1.msra.mxu0 0.0
    %8551 = vmatprep.subr.mxu0 0.0
    %8552 = vmatpush1.msra.mxu0 0.0
    %8553 = vmatprep.subr.mxu0 0.0
    %8554 = vmatpush1.msra.mxu0 0.0
    %8555 = vmatprep.subr.mxu0 0.0
    %8556 = vmatpush1.msra.mxu0 0.0
    %8557 = vmatprep.subr.mxu0 0.0
    %8558 = vmatpush1.msra.mxu0 0.0
    %8559 = vmatprep.subr.mxu0 0.0
    %8560 = vmatpush1.msra.mxu0 0.0
    %8561 = vmatprep.subr.mxu0 0.0
    %8562 = vmatpush1.msra.mxu0 0.0
    %8563 = vmatprep.subr.mxu0 0.0
    %8564 = vmatpush1.msra.mxu0 0.0
    %8565 = vmatprep.subr.mxu0 0.0
    %8566 = vmatpush1.msra.mxu0 0.0
    %8567 = vmatprep.subr.mxu0 0.0
    %8568 = vmatpush1.msra.mxu0 0.0
    %8569 = vmatprep.subr.mxu0 0.0
    %8570 = vmatpush1.msra.mxu0 0.0
    %8571 = vmatprep.subr.mxu0 0.0
    %8572 = vmatpush1.msra.mxu0 0.0
    %8573 = vmatprep.subr.mxu0 0.0
    %8574 = vmatpush1.msra.mxu0 0.0
    %8575 = vmatprep.subr.mxu0 0.0
    %8576 = vmatpush1.msra.mxu0 0.0
    %8577 = vmatprep.subr.mxu0 0.0
    %8578 = vmatpush1.msra.mxu0 0.0
    %8579 = vmatprep.subr.mxu0 0.0
    %8580 = vmatpush1.msra.mxu0 0.0
    %8581 = vmatprep.subr.mxu0 0.0
    %8582 = vmatpush1.msra.mxu0 0.0
    %8583 = vmatprep.subr.mxu0 0.0
    %8584 = vmatpush1.msra.mxu0 0.0
    %8585 = vmatprep.subr.mxu0 0.0
    %8586 = vmatpush1.msra.mxu0 0.0
    %8587 = vmatprep.subr.mxu0 0.0
    %8588 = vmatpush1.msra.mxu0 0.0
    %8589 = vmatprep.subr.mxu0 0.0
    %8590 = vmatpush1.msra.mxu0 0.0
    %8591 = vmatprep.subr.mxu0 0.0
    %8592 = vmatpush1.msra.mxu0 0.0
    %8593 = vmatprep.subr.mxu0 0.0
    %8594 = vmatpush1.msra.mxu0 0.0
    %8595 = vmatprep.subr.mxu0 0.0
    %8596 = vmatpush1.msra.mxu0 0.0
    %8597 = vmatprep.subr.mxu0 0.0
    %8598 = vmatpush1.msra.mxu0 0.0
    %8599 = vmatprep.subr.mxu0 0.0
    %8600 = vmatpush1.msra.mxu0 0.0
    %8601 = vmatprep.subr.mxu0 0.0
    %8602 = vmatpush1.msra.mxu0 0.0
    %8603 = vmatprep.subr.mxu0 0.0
    %8604 = vmatpush1.msra.mxu0 0.0
    %8605 = vmatprep.mubr.f32.mxu0 0.0
    %v8606 = vand.u32 %v8085, 4294901760
    %8607 = vmatmul.mubr.f32.gmra.mrb[0].mxu0 %v8606
    %v8608 = vpop.f32.mrb[0].mxu0
    %v8609 = vadd.f32 %v8528, %v8608
    %v8610 = vpop.f32.mrb[0].mxu0
    %8611 = vmatprep.mubr.f32.mxu0 0.0
    %v8612 = vand.u32 %v8088, 4294901760
    %8613 = vmatmul.mubr.f32.gmra.mrb[0].mxu0 %v8612
    %v8614 = vpop.f32.mrb[0].mxu0
    %v8615 = vadd.f32 %v8534, %v8614
    %v8616 = vpop.f32.mrb[0].mxu0
    %8617 = vdwg.mxu0
    %s8618 = sld [smem:[#allocation7]]
    %s8619 = sld [smem:[#allocation7 + $0x1]]
    %s8620 = sld [smem:[#allocation7 + $0x2]]
    %s8621 = sld [smem:[#allocation7 + $0x3]]
    %v8622 = vsel %vm112, %v8609, 0.0
    %8623 = vadd.xlane.f32.xlu0 %v8622
    %v8624 = vpop.xlane.xlu0 %8623
    %v8625 = vsel %vm112, %v8615, 0.0
    %8626 = vadd.xlane.f32.xlu0 %v8625
    %v8627 = vpop.xlane.xlu0 %8626
    %v8628 = vrcp.pop 32.0
    %v8629 = vmul.f32 %v8624, %v8628
    %v8630 = vmul.f32 %v8627, %v8628
    %v8631 = vsub.f32 %v8609, %v8629
    %v8632 = vsub.f32 %v8615, %v8630
    %v8633 = vmul.f32 %v8631, %v8631
    %v8634 = vmul.f32 %v8632, %v8632
    %v8635 = vsel %vm112, %v8633, 0.0
    %8636 = vadd.xlane.f32.xlu0 %v8635
    %v8637 = vpop.xlane.xlu0 %8636
    %v8638 = vsel %vm112, %v8634, 0.0
    %8639 = vadd.xlane.f32.xlu0 %v8638
    %v8640 = vpop.xlane.xlu0 %8639
    %v8641 = vmul.f32 %v8637, 0.032258064
    %v8642 = vmul.f32 %v8640, 0.032258064
    %v8643 = vrsqrt.pop %v8641
    %v8644 = vmul.f32 %v8641, %v8643
    %vm8645 = vcmp.eq.f32.partialorder %v8641, inf
    %v8646 = vsel %vm8645, %v8641, %v8644
    %vm8647 = vcmp.eq.f32.partialorder %v8641, 0.0
    %v8648 = vand.u32 %v8641, 2147483648
    %v8649 = vsel %vm8647, %v8648, %v8646
    %v8650 = vrsqrt.pop %v8642
    %v8651 = vmul.f32 %v8642, %v8650
    %vm8652 = vcmp.eq.f32.partialorder %v8642, inf
    %v8653 = vsel %vm8652, %v8642, %v8651
    %vm8654 = vcmp.eq.f32.partialorder %v8642, 0.0
    %v8655 = vand.u32 %v8642, 2147483648
    %v8656 = vsel %vm8654, %v8655, %v8653
    %v8657 = vstv %s8618
    %v8658 = vmul.f32 %v8657, %v8631
    %v8659 = vmul.f32 %v8657, %v8632
    %v8660 = vadd.f32 %v8649, 1e-06
    %v8661 = vadd.f32 %v8656, 1e-06
    %v8662 = vrcp.pop %v8660
    %v8663 = vrcp.pop %v8661
    %v8664 = vmul.f32 %v8660, %v8662
    %v8665 = vmul.f32 %v8661, %v8663
    %v8666 = vsub.f32 2.0, %v8664
    %v8667 = vsub.f32 2.0, %v8665
    %v8668 = vmul.f32 %v8662, %v8666
    %v8669 = vmul.f32 %v8663, %v8667
    %v8670 = vmul.f32 %v8658, %v8668
    %v8671 = vmul.f32 %v8659, %v8669
    %v8672 = vstv %s8619
    %v8673 = vadd.f32 %v8670, %v8672
    %v8674 = vadd.f32 %v8671, %v8672
    %v8675 = vadd.f32 %v99, %v8673
    %v8676 = vadd.f32 %v100, %v8674
    %v8677 = vld [vmem:[%s7] sm:$0xff]
    %v8678 = vld [vmem:[%s7 + $0x8] sm:$0xff]
    %v8679 = vld [vmem:[%s7 + $0x10] sm:$0xff]
    %v8680 = vld [vmem:[%s7 + $0x18] sm:$0xff]
    %v8681 = vld [vmem:[#allocation11] sm:$0x1]
    %v8683 = vlaneseq
    %v8684 = vshrl.u32 %v8683, 7
    %v8685 = vsub.s32 0, %v8684
    %v8686 = vrot.slane %v8681, %v8685
    %v8689 = vsel %vm112, %v8675, 0
    %v8692 = vsel %vm112, %v8676, 0
    %8694 = vmatprep.subr.mxu0 0.0
    %v8695 = vand.u32 %v8677, 4294901760
    %8696 = vmatpush1.msra.mxu0 %v8695
    %8697 = vmatprep.subr.mxu0 0.0
    %v8698 = vand.u32 %v8678, 4294901760
    %8699 = vmatpush1.msra.mxu0 %v8698
    %8700 = vmatprep.subr.mxu0 0.0
    %v8701 = vand.u32 %v8679, 4294901760
    %8702 = vmatpush1.msra.mxu0 %v8701
    %8703 = vmatprep.subr.mxu0 0.0
    %v8704 = vand.u32 %v8680, 4294901760
    %8705 = vmatpush1.msra.mxu0 %v8704
    %8706 = vmatprep.subr.mxu0 0.0
    %8707 = vmatpush1.msra.mxu0 0.0
    %8708 = vmatprep.subr.mxu0 0.0
    %8709 = vmatpush1.msra.mxu0 0.0
    %8710 = vmatprep.subr.mxu0 0.0
    %8711 = vmatpush1.msra.mxu0 0.0
    %8712 = vmatprep.subr.mxu0 0.0
    %8713 = vmatpush1.msra.mxu0 0.0
    %8714 = vmatprep.subr.mxu0 0.0
    %8715 = vmatpush1.msra.mxu0 0.0
    %8716 = vmatprep.subr.mxu0 0.0
    %8717 = vmatpush1.msra.mxu0 0.0
    %8718 = vmatprep.subr.mxu0 0.0
    %8719 = vmatpush1.msra.mxu0 0.0
    %8720 = vmatprep.subr.mxu0 0.0
    %8721 = vmatpush1.msra.mxu0 0.0
    %8722 = vmatprep.subr.mxu0 0.0
    %8723 = vmatpush1.msra.mxu0 0.0
    %8724 = vmatprep.subr.mxu0 0.0
    %8725 = vmatpush1.msra.mxu0 0.0
    %8726 = vmatprep.subr.mxu0 0.0
    %8727 = vmatpush1.msra.mxu0 0.0
    %8728 = vmatprep.subr.mxu0 0.0
    %8729 = vmatpush1.msra.mxu0 0.0
    %8730 = vmatprep.subr.mxu0 0.0
    %8731 = vmatpush1.msra.mxu0 0.0
    %8732 = vmatprep.subr.mxu0 0.0
    %8733 = vmatpush1.msra.mxu0 0.0
    %8734 = vmatprep.subr.mxu0 0.0
    %8735 = vmatpush1.msra.mxu0 0.0
    %8736 = vmatprep.subr.mxu0 0.0
    %8737 = vmatpush1.msra.mxu0 0.0
    %8738 = vmatprep.subr.mxu0 0.0
    %8739 = vmatpush1.msra.mxu0 0.0
    %8740 = vmatprep.subr.mxu0 0.0
    %8741 = vmatpush1.msra.mxu0 0.0
    %8742 = vmatprep.subr.mxu0 0.0
    %8743 = vmatpush1.msra.mxu0 0.0
    %8744 = vmatprep.subr.mxu0 0.0
    %8745 = vmatpush1.msra.mxu0 0.0
    %8746 = vmatprep.subr.mxu0 0.0
    %8747 = vmatpush1.msra.mxu0 0.0
    %8748 = vmatprep.subr.mxu0 0.0
    %8749 = vmatpush1.msra.mxu0 0.0
    %8750 = vmatprep.subr.mxu0 0.0
    %8751 = vmatpush1.msra.mxu0 0.0
    %8752 = vmatprep.subr.mxu0 0.0
    %8753 = vmatpush1.msra.mxu0 0.0
    %8754 = vmatprep.subr.mxu0 0.0
    %8755 = vmatpush1.msra.mxu0 0.0
    %8756 = vmatprep.subr.mxu0 0.0
    %8757 = vmatpush1.msra.mxu0 0.0
    %8758 = vmatprep.subr.mxu0 0.0
    %8759 = vmatpush1.msra.mxu0 0.0
    %8760 = vmatprep.subr.mxu0 0.0
    %8761 = vmatpush1.msra.mxu0 0.0
    %8762 = vmatprep.mubr.f32.mxu0 0.0
    %v8763 = vand.u32 %v8689, 4294901760
    %v8764 = vsub.f32 %v8689, %v8763
    %v8765 = vand.u32 %v8764, 4294901760
    %v8766 = vsub.f32 %v8764, %v8765
    %v8767 = vand.u32 %v8766, 4294901760
    %8768 = vmatmul.mubr.f32.gmra.mrb[0].mxu0 %v8767
    %v8769 = vpop.f32.mrb[0].mxu0
    %v8770 = vadd.f32 %v8686, %v8769
    %v8771 = vpop.f32.mrb[0].mxu0
    %8772 = vmatprep.mubr.f32.mxu0 0.0
    %v8773 = vand.u32 %v8692, 4294901760
    %v8774 = vsub.f32 %v8692, %v8773
    %v8775 = vand.u32 %v8774, 4294901760
    %v8776 = vsub.f32 %v8774, %v8775
    %v8777 = vand.u32 %v8776, 4294901760
    %8778 = vmatmul.mubr.f32.gmra.mrb[0].mxu0 %v8777
    %v8779 = vpop.f32.mrb[0].mxu0
    %v8780 = vadd.f32 %v8686, %v8779
    %v8781 = vpop.f32.mrb[0].mxu0
    %8782 = vdwg.mxu0
    %8783 = vmatprep.subr.mxu0 0.0
    %v8784 = vand.u32 %v8677, 4294901760
    %v8785 = vsub.f32 %v8677, %v8784
    %v8786 = vand.u32 %v8785, 4294901760
    %v8787 = vsub.f32 %v8785, %v8786
    %v8788 = vand.u32 %v8787, 4294901760
    %8789 = vmatpush1.msra.mxu0 %v8788
    %8790 = vmatprep.subr.mxu0 0.0
    %v8791 = vand.u32 %v8678, 4294901760
    %v8792 = vsub.f32 %v8678, %v8791
    %v8793 = vand.u32 %v8792, 4294901760
    %v8794 = vsub.f32 %v8792, %v8793
    %v8795 = vand.u32 %v8794, 4294901760
    %8796 = vmatpush1.msra.mxu0 %v8795
    %8797 = vmatprep.subr.mxu0 0.0
    %v8798 = vand.u32 %v8679, 4294901760
    %v8799 = vsub.f32 %v8679, %v8798
    %v8800 = vand.u32 %v8799, 4294901760
    %v8801 = vsub.f32 %v8799, %v8800
    %v8802 = vand.u32 %v8801, 4294901760
    %8803 = vmatpush1.msra.mxu0 %v8802
    %8804 = vmatprep.subr.mxu0 0.0
    %v8805 = vand.u32 %v8680, 4294901760
    %v8806 = vsub.f32 %v8680, %v8805
    %v8807 = vand.u32 %v8806, 4294901760
    %v8808 = vsub.f32 %v8806, %v8807
    %v8809 = vand.u32 %v8808, 4294901760
    %8810 = vmatpush1.msra.mxu0 %v8809
    %8811 = vmatprep.subr.mxu0 0.0
    %8812 = vmatpush1.msra.mxu0 0.0
    %8813 = vmatprep.subr.mxu0 0.0
    %8814 = vmatpush1.msra.mxu0 0.0
    %8815 = vmatprep.subr.mxu0 0.0
    %8816 = vmatpush1.msra.mxu0 0.0
    %8817 = vmatprep.subr.mxu0 0.0
    %8818 = vmatpush1.msra.mxu0 0.0
    %8819 = vmatprep.subr.mxu0 0.0
    %8820 = vmatpush1.msra.mxu0 0.0
    %8821 = vmatprep.subr.mxu0 0.0
    %8822 = vmatpush1.msra.mxu0 0.0
    %8823 = vmatprep.subr.mxu0 0.0
    %8824 = vmatpush1.msra.mxu0 0.0
    %8825 = vmatprep.subr.mxu0 0.0
    %8826 = vmatpush1.msra.mxu0 0.0
    %8827 = vmatprep.subr.mxu0 0.0
    %8828 = vmatpush1.msra.mxu0 0.0
    %8829 = vmatprep.subr.mxu0 0.0
    %8830 = vmatpush1.msra.mxu0 0.0
    %8831 = vmatprep.subr.mxu0 0.0
    %8832 = vmatpush1.msra.mxu0 0.0
    %8833 = vmatprep.subr.mxu0 0.0
    %8834 = vmatpush1.msra.mxu0 0.0
    %8835 = vmatprep.subr.mxu0 0.0
    %8836 = vmatpush1.msra.mxu0 0.0
    %8837 = vmatprep.subr.mxu0 0.0
    %8838 = vmatpush1.msra.mxu0 0.0
    %8839 = vmatprep.subr.mxu0 0.0
    %8840 = vmatpush1.msra.mxu0 0.0
    %8841 = vmatprep.subr.mxu0 0.0
    %8842 = vmatpush1.msra.mxu0 0.0
    %8843 = vmatprep.subr.mxu0 0.0
    %8844 = vmatpush1.msra.mxu0 0.0
    %8845 = vmatprep.subr.mxu0 0.0
    %8846 = vmatpush1.msra.mxu0 0.0
    %8847 = vmatprep.subr.mxu0 0.0
    %8848 = vmatpush1.msra.mxu0 0.0
    %8849 = vmatprep.subr.mxu0 0.0
    %8850 = vmatpush1.msra.mxu0 0.0
    %8851 = vmatprep.subr.mxu0 0.0
    %8852 = vmatpush1.msra.mxu0 0.0
    %8853 = vmatprep.subr.mxu0 0.0
    %8854 = vmatpush1.msra.mxu0 0.0
    %8855 = vmatprep.subr.mxu0 0.0
    %8856 = vmatpush1.msra.mxu0 0.0
    %8857 = vmatprep.subr.mxu0 0.0
    %8858 = vmatpush1.msra.mxu0 0.0
    %8859 = vmatprep.subr.mxu0 0.0
    %8860 = vmatpush1.msra.mxu0 0.0
    %8861 = vmatprep.subr.mxu0 0.0
    %8862 = vmatpush1.msra.mxu0 0.0
    %8863 = vmatprep.subr.mxu0 0.0
    %8864 = vmatpush1.msra.mxu0 0.0
    %8865 = vmatprep.subr.mxu0 0.0
    %8866 = vmatpush1.msra.mxu0 0.0
    %8867 = vmatprep.mubr.f32.mxu0 0.0
    %v8868 = vand.u32 %v8689, 4294901760
    %8869 = vmatmul.mubr.f32.gmra.mrb[0].mxu0 %v8868
    %v8870 = vpop.f32.mrb[0].mxu0
    %v8871 = vadd.f32 %v8770, %v8870
    %v8872 = vpop.f32.mrb[0].mxu0
    %8873 = vmatprep.mubr.f32.mxu0 0.0
    %v8874 = vand.u32 %v8692, 4294901760
    %8875 = vmatmul.mubr.f32.gmra.mrb[0].mxu0 %v8874
    %v8876 = vpop.f32.mrb[0].mxu0
    %v8877 = vadd.f32 %v8780, %v8876
    %v8878 = vpop.f32.mrb[0].mxu0
    %8879 = vdwg.mxu0
    %8880 = vmatprep.subr.mxu0 0.0
    %v8881 = vand.u32 %v8677, 4294901760
    %v8882 = vsub.f32 %v8677, %v8881
    %8883 = vmatpush1.msra.mxu0 %v8882
    %8884 = vmatprep.subr.mxu0 0.0
    %v8885 = vand.u32 %v8678, 4294901760
    %v8886 = vsub.f32 %v8678, %v8885
    %8887 = vmatpush1.msra.mxu0 %v8886
    %8888 = vmatprep.subr.mxu0 0.0
    %v8889 = vand.u32 %v8679, 4294901760
    %v8890 = vsub.f32 %v8679, %v8889
    %8891 = vmatpush1.msra.mxu0 %v8890
    %8892 = vmatprep.subr.mxu0 0.0
    %v8893 = vand.u32 %v8680, 4294901760
    %v8894 = vsub.f32 %v8680, %v8893
    %8895 = vmatpush1.msra.mxu0 %v8894
    %8896 = vmatprep.subr.mxu0 0.0
    %8897 = vmatpush1.msra.mxu0 0.0
    %8898 = vmatprep.subr.mxu0 0.0
    %8899 = vmatpush1.msra.mxu0 0.0
    %8900 = vmatprep.subr.mxu0 0.0
    %8901 = vmatpush1.msra.mxu0 0.0
    %8902 = vmatprep.subr.mxu0 0.0
    %8903 = vmatpush1.msra.mxu0 0.0
    %8904 = vmatprep.subr.mxu0 0.0
    %8905 = vmatpush1.msra.mxu0 0.0
    %8906 = vmatprep.subr.mxu0 0.0
    %8907 = vmatpush1.msra.mxu0 0.0
    %8908 = vmatprep.subr.mxu0 0.0
    %8909 = vmatpush1.msra.mxu0 0.0
    %8910 = vmatprep.subr.mxu0 0.0
    %8911 = vmatpush1.msra.mxu0 0.0
    %8912 = vmatprep.subr.mxu0 0.0
    %8913 = vmatpush1.msra.mxu0 0.0
    %8914 = vmatprep.subr.mxu0 0.0
    %8915 = vmatpush1.msra.mxu0 0.0
    %8916 = vmatprep.subr.mxu0 0.0
    %8917 = vmatpush1.msra.mxu0 0.0
    %8918 = vmatprep.subr.mxu0 0.0
    %8919 = vmatpush1.msra.mxu0 0.0
    %8920 = vmatprep.subr.mxu0 0.0
    %8921 = vmatpush1.msra.mxu0 0.0
    %8922 = vmatprep.subr.mxu0 0.0
    %8923 = vmatpush1.msra.mxu0 0.0
    %8924 = vmatprep.subr.mxu0 0.0
    %8925 = vmatpush1.msra.mxu0 0.0
    %8926 = vmatprep.subr.mxu0 0.0
    %8927 = vmatpush1.msra.mxu0 0.0
    %8928 = vmatprep.subr.mxu0 0.0
    %8929 = vmatpush1.msra.mxu0 0.0
    %8930 = vmatprep.subr.mxu0 0.0
    %8931 = vmatpush1.msra.mxu0 0.0
    %8932 = vmatprep.subr.mxu0 0.0
    %8933 = vmatpush1.msra.mxu0 0.0
    %8934 = vmatprep.subr.mxu0 0.0
    %8935 = vmatpush1.msra.mxu0 0.0
    %8936 = vmatprep.subr.mxu0 0.0
    %8937 = vmatpush1.msra.mxu0 0.0
    %8938 = vmatprep.subr.mxu0 0.0
    %8939 = vmatpush1.msra.mxu0 0.0
    %8940 = vmatprep.subr.mxu0 0.0
    %8941 = vmatpush1.msra.mxu0 0.0
    %8942 = vmatprep.subr.mxu0 0.0
    %8943 = vmatpush1.msra.mxu0 0.0
    %8944 = vmatprep.subr.mxu0 0.0
    %8945 = vmatpush1.msra.mxu0 0.0
    %8946 = vmatprep.subr.mxu0 0.0
    %8947 = vmatpush1.msra.mxu0 0.0
    %8948 = vmatprep.subr.mxu0 0.0
    %8949 = vmatpush1.msra.mxu0 0.0
    %8950 = vmatprep.subr.mxu0 0.0
    %8951 = vmatpush1.msra.mxu0 0.0
    %8952 = vmatprep.mubr.f32.mxu0 0.0
    %v8953 = vand.u32 %v8689, 4294901760
    %v8954 = vsub.f32 %v8689, %v8953
    %8955 = vmatmul.mubr.f32.gmra.mrb[0].mxu0 %v8954
    %v8956 = vpop.f32.mrb[0].mxu0
    %v8957 = vadd.f32 %v8871, %v8956
    %v8958 = vpop.f32.mrb[0].mxu0
    %8959 = vmatprep.mubr.f32.mxu0 0.0
    %v8960 = vand.u32 %v8692, 4294901760
    %v8961 = vsub.f32 %v8692, %v8960
    %8962 = vmatmul.mubr.f32.gmra.mrb[0].mxu0 %v8961
    %v8963 = vpop.f32.mrb[0].mxu0
    %v8964 = vadd.f32 %v8877, %v8963
    %v8965 = vpop.f32.mrb[0].mxu0
    %8966 = vdwg.mxu0
    %8967 = vmatprep.subr.mxu0 0.0
    %v8968 = vand.u32 %v8677, 4294901760
    %8969 = vmatpush1.msra.mxu0 %v8968
    %8970 = vmatprep.subr.mxu0 0.0
    %v8971 = vand.u32 %v8678, 4294901760
    %8972 = vmatpush1.msra.mxu0 %v8971
    %8973 = vmatprep.subr.mxu0 0.0
    %v8974 = vand.u32 %v8679, 4294901760
    %8975 = vmatpush1.msra.mxu0 %v8974
    %8976 = vmatprep.subr.mxu0 0.0
    %v8977 = vand.u32 %v8680, 4294901760
    %8978 = vmatpush1.msra.mxu0 %v8977
    %8979 = vmatprep.subr.mxu0 0.0
    %8980 = vmatpush1.msra.mxu0 0.0
    %8981 = vmatprep.subr.mxu0 0.0
    %8982 = vmatpush1.msra.mxu0 0.0
    %8983 = vmatprep.subr.mxu0 0.0
    %8984 = vmatpush1.msra.mxu0 0.0
    %8985 = vmatprep.subr.mxu0 0.0
    %8986 = vmatpush1.msra.mxu0 0.0
    %8987 = vmatprep.subr.mxu0 0.0
    %8988 = vmatpush1.msra.mxu0 0.0
    %8989 = vmatprep.subr.mxu0 0.0
    %8990 = vmatpush1.msra.mxu0 0.0
    %8991 = vmatprep.subr.mxu0 0.0
    %8992 = vmatpush1.msra.mxu0 0.0
    %8993 = vmatprep.subr.mxu0 0.0
    %8994 = vmatpush1.msra.mxu0 0.0
    %8995 = vmatprep.subr.mxu0 0.0
    %8996 = vmatpush1.msra.mxu0 0.0
    %8997 = vmatprep.subr.mxu0 0.0
    %8998 = vmatpush1.msra.mxu0 0.0
    %8999 = vmatprep.subr.mxu0 0.0
    %9000 = vmatpush1.msra.mxu0 0.0
    %9001 = vmatprep.subr.mxu0 0.0
    %9002 = vmatpush1.msra.mxu0 0.0
    %9003 = vmatprep.subr.mxu0 0.0
    %9004 = vmatpush1.msra.mxu0 0.0
    %9005 = vmatprep.subr.mxu0 0.0
    %9006 = vmatpush1.msra.mxu0 0.0
    %9007 = vmatprep.subr.mxu0 0.0
    %9008 = vmatpush1.msra.mxu0 0.0
    %9009 = vmatprep.subr.mxu0 0.0
    %9010 = vmatpush1.msra.mxu0 0.0
    %9011 = vmatprep.subr.mxu0 0.0
    %9012 = vmatpush1.msra.mxu0 0.0
    %9013 = vmatprep.subr.mxu0 0.0
    %9014 = vmatpush1.msra.mxu0 0.0
    %9015 = vmatprep.subr.mxu0 0.0
    %9016 = vmatpush1.msra.mxu0 0.0
    %9017 = vmatprep.subr.mxu0 0.0
    %9018 = vmatpush1.msra.mxu0 0.0
    %9019 = vmatprep.subr.mxu0 0.0
    %9020 = vmatpush1.msra.mxu0 0.0
    %9021 = vmatprep.subr.mxu0 0.0
    %9022 = vmatpush1.msra.mxu0 0.0
    %9023 = vmatprep.subr.mxu0 0.0
    %9024 = vmatpush1.msra.mxu0 0.0
    %9025 = vmatprep.subr.mxu0 0.0
    %9026 = vmatpush1.msra.mxu0 0.0
    %9027 = vmatprep.subr.mxu0 0.0
    %9028 = vmatpush1.msra.mxu0 0.0
    %9029 = vmatprep.subr.mxu0 0.0
    %9030 = vmatpush1.msra.mxu0 0.0
    %9031 = vmatprep.subr.mxu0 0.0
    %9032 = vmatpush1.msra.mxu0 0.0
    %9033 = vmatprep.subr.mxu0 0.0
    %9034 = vmatpush1.msra.mxu0 0.0
    %9035 = vmatprep.mubr.f32.mxu0 0.0
    %v9036 = vand.u32 %v8689, 4294901760
    %v9037 = vsub.f32 %v8689, %v9036
    %v9038 = vand.u32 %v9037, 4294901760
    %9039 = vmatmul.mubr.f32.gmra.mrb[0].mxu0 %v9038
    %v9040 = vpop.f32.mrb[0].mxu0
    %v9041 = vadd.f32 %v8957, %v9040
    %v9042 = vpop.f32.mrb[0].mxu0
    %9043 = vmatprep.mubr.f32.mxu0 0.0
    %v9044 = vand.u32 %v8692, 4294901760
    %v9045 = vsub.f32 %v8692, %v9044
    %v9046 = vand.u32 %v9045, 4294901760
    %9047 = vmatmul.mubr.f32.gmra.mrb[0].mxu0 %v9046
    %v9048 = vpop.f32.mrb[0].mxu0
    %v9049 = vadd.f32 %v8964, %v9048
    %v9050 = vpop.f32.mrb[0].mxu0
    %9051 = vdwg.mxu0
    %9052 = vmatprep.subr.mxu0 0.0
    %v9053 = vand.u32 %v8677, 4294901760
    %v9054 = vsub.f32 %v8677, %v9053
    %v9055 = vand.u32 %v9054, 4294901760
    %9056 = vmatpush1.msra.mxu0 %v9055
    %9057 = vmatprep.subr.mxu0 0.0
    %v9058 = vand.u32 %v8678, 4294901760
    %v9059 = vsub.f32 %v8678, %v9058
    %v9060 = vand.u32 %v9059, 4294901760
    %9061 = vmatpush1.msra.mxu0 %v9060
    %9062 = vmatprep.subr.mxu0 0.0
    %v9063 = vand.u32 %v8679, 4294901760
    %v9064 = vsub.f32 %v8679, %v9063
    %v9065 = vand.u32 %v9064, 4294901760
    %9066 = vmatpush1.msra.mxu0 %v9065
    %9067 = vmatprep.subr.mxu0 0.0
    %v9068 = vand.u32 %v8680, 4294901760
    %v9069 = vsub.f32 %v8680, %v9068
    %v9070 = vand.u32 %v9069, 4294901760
    %9071 = vmatpush1.msra.mxu0 %v9070
    %9072 = vmatprep.subr.mxu0 0.0
    %9073 = vmatpush1.msra.mxu0 0.0
    %9074 = vmatprep.subr.mxu0 0.0
    %9075 = vmatpush1.msra.mxu0 0.0
    %9076 = vmatprep.subr.mxu0 0.0
    %9077 = vmatpush1.msra.mxu0 0.0
    %9078 = vmatprep.subr.mxu0 0.0
    %9079 = vmatpush1.msra.mxu0 0.0
    %9080 = vmatprep.subr.mxu0 0.0
    %9081 = vmatpush1.msra.mxu0 0.0
    %9082 = vmatprep.subr.mxu0 0.0
    %9083 = vmatpush1.msra.mxu0 0.0
    %9084 = vmatprep.subr.mxu0 0.0
    %9085 = vmatpush1.msra.mxu0 0.0
    %9086 = vmatprep.subr.mxu0 0.0
    %9087 = vmatpush1.msra.mxu0 0.0
    %9088 = vmatprep.subr.mxu0 0.0
    %9089 = vmatpush1.msra.mxu0 0.0
    %9090 = vmatprep.subr.mxu0 0.0
    %9091 = vmatpush1.msra.mxu0 0.0
    %9092 = vmatprep.subr.mxu0 0.0
    %9093 = vmatpush1.msra.mxu0 0.0
    %9094 = vmatprep.subr.mxu0 0.0
    %9095 = vmatpush1.msra.mxu0 0.0
    %9096 = vmatprep.subr.mxu0 0.0
    %9097 = vmatpush1.msra.mxu0 0.0
    %9098 = vmatprep.subr.mxu0 0.0
    %9099 = vmatpush1.msra.mxu0 0.0
    %9100 = vmatprep.subr.mxu0 0.0
    %9101 = vmatpush1.msra.mxu0 0.0
    %9102 = vmatprep.subr.mxu0 0.0
    %9103 = vmatpush1.msra.mxu0 0.0
    %9104 = vmatprep.subr.mxu0 0.0
    %9105 = vmatpush1.msra.mxu0 0.0
    %9106 = vmatprep.subr.mxu0 0.0
    %9107 = vmatpush1.msra.mxu0 0.0
    %9108 = vmatprep.subr.mxu0 0.0
    %9109 = vmatpush1.msra.mxu0 0.0
    %9110 = vmatprep.subr.mxu0 0.0
    %9111 = vmatpush1.msra.mxu0 0.0
    %9112 = vmatprep.subr.mxu0 0.0
    %9113 = vmatpush1.msra.mxu0 0.0
    %9114 = vmatprep.subr.mxu0 0.0
    %9115 = vmatpush1.msra.mxu0 0.0
    %9116 = vmatprep.subr.mxu0 0.0
    %9117 = vmatpush1.msra.mxu0 0.0
    %9118 = vmatprep.subr.mxu0 0.0
    %9119 = vmatpush1.msra.mxu0 0.0
    %9120 = vmatprep.subr.mxu0 0.0
    %9121 = vmatpush1.msra.mxu0 0.0
    %9122 = vmatprep.subr.mxu0 0.0
    %9123 = vmatpush1.msra.mxu0 0.0
    %9124 = vmatprep.subr.mxu0 0.0
    %9125 = vmatpush1.msra.mxu0 0.0
    %9126 = vmatprep.subr.mxu0 0.0
    %9127 = vmatpush1.msra.mxu0 0.0
    %9128 = vmatprep.mubr.f32.mxu0 0.0
    %v9129 = vand.u32 %v8689, 4294901760
    %9130 = vmatmul.mubr.f32.gmra.mrb[0].mxu0 %v9129
    %v9131 = vpop.f32.mrb[0].mxu0
    %v9132 = vadd.f32 %v9041, %v9131
    %v9133 = vpop.f32.mrb[0].mxu0
    %9134 = vmatprep.mubr.f32.mxu0 0.0
    %v9135 = vand.u32 %v8692, 4294901760
    %9136 = vmatmul.mubr.f32.gmra.mrb[0].mxu0 %v9135
    %v9137 = vpop.f32.mrb[0].mxu0
    %v9138 = vadd.f32 %v9049, %v9137
    %v9139 = vpop.f32.mrb[0].mxu0
    %9140 = vdwg.mxu0
    %9141 = vmatprep.subr.mxu0 0.0
    %v9142 = vand.u32 %v8677, 4294901760
    %9143 = vmatpush1.msra.mxu0 %v9142
    %9144 = vmatprep.subr.mxu0 0.0
    %v9145 = vand.u32 %v8678, 4294901760
    %9146 = vmatpush1.msra.mxu0 %v9145
    %9147 = vmatprep.subr.mxu0 0.0
    %v9148 = vand.u32 %v8679, 4294901760
    %9149 = vmatpush1.msra.mxu0 %v9148
    %9150 = vmatprep.subr.mxu0 0.0
    %v9151 = vand.u32 %v8680, 4294901760
    %9152 = vmatpush1.msra.mxu0 %v9151
    %9153 = vmatprep.subr.mxu0 0.0
    %9154 = vmatpush1.msra.mxu0 0.0
    %9155 = vmatprep.subr.mxu0 0.0
    %9156 = vmatpush1.msra.mxu0 0.0
    %9157 = vmatprep.subr.mxu0 0.0
    %9158 = vmatpush1.msra.mxu0 0.0
    %9159 = vmatprep.subr.mxu0 0.0
    %9160 = vmatpush1.msra.mxu0 0.0
    %9161 = vmatprep.subr.mxu0 0.0
    %9162 = vmatpush1.msra.mxu0 0.0
    %9163 = vmatprep.subr.mxu0 0.0
    %9164 = vmatpush1.msra.mxu0 0.0
    %9165 = vmatprep.subr.mxu0 0.0
    %9166 = vmatpush1.msra.mxu0 0.0
    %9167 = vmatprep.subr.mxu0 0.0
    %9168 = vmatpush1.msra.mxu0 0.0
    %9169 = vmatprep.subr.mxu0 0.0
    %9170 = vmatpush1.msra.mxu0 0.0
    %9171 = vmatprep.subr.mxu0 0.0
    %9172 = vmatpush1.msra.mxu0 0.0
    %9173 = vmatprep.subr.mxu0 0.0
    %9174 = vmatpush1.msra.mxu0 0.0
    %9175 = vmatprep.subr.mxu0 0.0
    %9176 = vmatpush1.msra.mxu0 0.0
    %9177 = vmatprep.subr.mxu0 0.0
    %9178 = vmatpush1.msra.mxu0 0.0
    %9179 = vmatprep.subr.mxu0 0.0
    %9180 = vmatpush1.msra.mxu0 0.0
    %9181 = vmatprep.subr.mxu0 0.0
    %9182 = vmatpush1.msra.mxu0 0.0
    %9183 = vmatprep.subr.mxu0 0.0
    %9184 = vmatpush1.msra.mxu0 0.0
    %9185 = vmatprep.subr.mxu0 0.0
    %9186 = vmatpush1.msra.mxu0 0.0
    %9187 = vmatprep.subr.mxu0 0.0
    %9188 = vmatpush1.msra.mxu0 0.0
    %9189 = vmatprep.subr.mxu0 0.0
    %9190 = vmatpush1.msra.mxu0 0.0
    %9191 = vmatprep.subr.mxu0 0.0
    %9192 = vmatpush1.msra.mxu0 0.0
    %9193 = vmatprep.subr.mxu0 0.0
    %9194 = vmatpush1.msra.mxu0 0.0
    %9195 = vmatprep.subr.mxu0 0.0
    %9196 = vmatpush1.msra.mxu0 0.0
    %9197 = vmatprep.subr.mxu0 0.0
    %9198 = vmatpush1.msra.mxu0 0.0
    %9199 = vmatprep.subr.mxu0 0.0
    %9200 = vmatpush1.msra.mxu0 0.0
    %9201 = vmatprep.subr.mxu0 0.0
    %9202 = vmatpush1.msra.mxu0 0.0
    %9203 = vmatprep.subr.mxu0 0.0
    %9204 = vmatpush1.msra.mxu0 0.0
    %9205 = vmatprep.subr.mxu0 0.0
    %9206 = vmatpush1.msra.mxu0 0.0
    %9207 = vmatprep.subr.mxu0 0.0
    %9208 = vmatpush1.msra.mxu0 0.0
    %9209 = vmatprep.mubr.f32.mxu0 0.0
    %v9210 = vand.u32 %v8689, 4294901760
    %9211 = vmatmul.mubr.f32.gmra.mrb[0].mxu0 %v9210
    %v9212 = vpop.f32.mrb[0].mxu0
    %v9213 = vadd.f32 %v9132, %v9212
    %v9214 = vpop.f32.mrb[0].mxu0
    %9215 = vmatprep.mubr.f32.mxu0 0.0
    %v9216 = vand.u32 %v8692, 4294901760
    %9217 = vmatmul.mubr.f32.gmra.mrb[0].mxu0 %v9216
    %v9218 = vpop.f32.mrb[0].mxu0
    %v9219 = vadd.f32 %v9138, %v9218
    %v9220 = vpop.f32.mrb[0].mxu0
    %9221 = vdwg.mxu0
    %v9222 = vmax.f32 %v9213, 0.0
    %v9223 = vmax.f32 %v9219, 0.0
    %v9224 = vld [vmem:[%s9] sm:$0xff]
    %v9225 = vld [vmem:[%s9 + $0x8] sm:$0xff]
    %v9226 = vld [vmem:[%s9 + $0x10] sm:$0xff]
    %v9227 = vld [vmem:[%s9 + $0x18] sm:$0xff]
    %v9228 = vld [vmem:[%s9 + $0x20] sm:$0xff]
    %v9229 = vld [vmem:[%s9 + $0x28] sm:$0xff]
    %v9230 = vld [vmem:[%s9 + $0x30] sm:$0xff]
    %v9231 = vld [vmem:[%s9 + $0x38] sm:$0xff]
    %v9232 = vld [vmem:[%s10] sm:$0x1]
    %v9234 = vlaneseq
    %v9235 = vshrl.u32 %v9234, 7
    %v9236 = vsub.s32 0, %v9235
    %v9237 = vrot.slane %v9232, %v9236
    %vm9239 = vcmask 523264
    %v9241 = vsel %vm9239, %v9222, 0
    %v9244 = vsel %vm9239, %v9223, 0
    %9246 = vmatprep.subr.mxu0 0.0
    %v9247 = vand.u32 %v9224, 4294901760
    %9248 = vmatpush1.msra.mxu0 %v9247
    %9249 = vmatprep.subr.mxu0 0.0
    %v9250 = vand.u32 %v9225, 4294901760
    %9251 = vmatpush1.msra.mxu0 %v9250
    %9252 = vmatprep.subr.mxu0 0.0
    %v9253 = vand.u32 %v9226, 4294901760
    %9254 = vmatpush1.msra.mxu0 %v9253
    %9255 = vmatprep.subr.mxu0 0.0
    %v9256 = vand.u32 %v9227, 4294901760
    %9257 = vmatpush1.msra.mxu0 %v9256
    %9258 = vmatprep.subr.mxu0 0.0
    %v9259 = vand.u32 %v9228, 4294901760
    %9260 = vmatpush1.msra.mxu0 %v9259
    %9261 = vmatprep.subr.mxu0 0.0
    %v9262 = vand.u32 %v9229, 4294901760
    %9263 = vmatpush1.msra.mxu0 %v9262
    %9264 = vmatprep.subr.mxu0 0.0
    %v9265 = vand.u32 %v9230, 4294901760
    %9266 = vmatpush1.msra.mxu0 %v9265
    %9267 = vmatprep.subr.mxu0 0.0
    %v9268 = vand.u32 %v9231, 4294901760
    %9269 = vmatpush1.msra.mxu0 %v9268
    %9270 = vmatprep.subr.mxu0 0.0
    %9271 = vmatpush1.msra.mxu0 0.0
    %9272 = vmatprep.subr.mxu0 0.0
    %9273 = vmatpush1.msra.mxu0 0.0
    %9274 = vmatprep.subr.mxu0 0.0
    %9275 = vmatpush1.msra.mxu0 0.0
    %9276 = vmatprep.subr.mxu0 0.0
    %9277 = vmatpush1.msra.mxu0 0.0
    %9278 = vmatprep.subr.mxu0 0.0
    %9279 = vmatpush1.msra.mxu0 0.0
    %9280 = vmatprep.subr.mxu0 0.0
    %9281 = vmatpush1.msra.mxu0 0.0
    %9282 = vmatprep.subr.mxu0 0.0
    %9283 = vmatpush1.msra.mxu0 0.0
    %9284 = vmatprep.subr.mxu0 0.0
    %9285 = vmatpush1.msra.mxu0 0.0
    %9286 = vmatprep.subr.mxu0 0.0
    %9287 = vmatpush1.msra.mxu0 0.0
    %9288 = vmatprep.subr.mxu0 0.0
    %9289 = vmatpush1.msra.mxu0 0.0
    %9290 = vmatprep.subr.mxu0 0.0
    %9291 = vmatpush1.msra.mxu0 0.0
    %9292 = vmatprep.subr.mxu0 0.0
    %9293 = vmatpush1.msra.mxu0 0.0
    %9294 = vmatprep.subr.mxu0 0.0
    %9295 = vmatpush1.msra.mxu0 0.0
    %9296 = vmatprep.subr.mxu0 0.0
    %9297 = vmatpush1.msra.mxu0 0.0
    %9298 = vmatprep.subr.mxu0 0.0
    %9299 = vmatpush1.msra.mxu0 0.0
    %9300 = vmatprep.subr.mxu0 0.0
    %9301 = vmatpush1.msra.mxu0 0.0
    %9302 = vmatprep.subr.mxu0 0.0
    %9303 = vmatpush1.msra.mxu0 0.0
    %9304 = vmatprep.subr.mxu0 0.0
    %9305 = vmatpush1.msra.mxu0 0.0
    %9306 = vmatprep.subr.mxu0 0.0
    %9307 = vmatpush1.msra.mxu0 0.0
    %9308 = vmatprep.subr.mxu0 0.0
    %9309 = vmatpush1.msra.mxu0 0.0
    %9310 = vmatprep.subr.mxu0 0.0
    %9311 = vmatpush1.msra.mxu0 0.0
    %9312 = vmatprep.subr.mxu0 0.0
    %9313 = vmatpush1.msra.mxu0 0.0
    %9314 = vmatprep.subr.mxu0 0.0
    %9315 = vmatpush1.msra.mxu0 0.0
    %9316 = vmatprep.subr.mxu0 0.0
    %9317 = vmatpush1.msra.mxu0 0.0
    %9318 = vmatprep.mubr.f32.mxu0 0.0
    %v9319 = vand.u32 %v9241, 4294901760
    %v9320 = vsub.f32 %v9241, %v9319
    %v9321 = vand.u32 %v9320, 4294901760
    %v9322 = vsub.f32 %v9320, %v9321
    %v9323 = vand.u32 %v9322, 4294901760
    %9324 = vmatmul.mubr.f32.gmra.mrb[0].mxu0 %v9323
    %v9325 = vpop.f32.mrb[0].mxu0
    %v9326 = vadd.f32 %v9237, %v9325
    %v9327 = vpop.f32.mrb[0].mxu0
    %9328 = vmatprep.mubr.f32.mxu0 0.0
    %v9329 = vand.u32 %v9244, 4294901760
    %v9330 = vsub.f32 %v9244, %v9329
    %v9331 = vand.u32 %v9330, 4294901760
    %v9332 = vsub.f32 %v9330, %v9331
    %v9333 = vand.u32 %v9332, 4294901760
    %9334 = vmatmul.mubr.f32.gmra.mrb[0].mxu0 %v9333
    %v9335 = vpop.f32.mrb[0].mxu0
    %v9336 = vadd.f32 %v9237, %v9335
    %v9337 = vpop.f32.mrb[0].mxu0
    %9338 = vdwg.mxu0
    %9339 = vmatprep.subr.mxu0 0.0
    %v9340 = vand.u32 %v9224, 4294901760
    %v9341 = vsub.f32 %v9224, %v9340
    %v9342 = vand.u32 %v9341, 4294901760
    %v9343 = vsub.f32 %v9341, %v9342
    %v9344 = vand.u32 %v9343, 4294901760
    %9345 = vmatpush1.msra.mxu0 %v9344
    %9346 = vmatprep.subr.mxu0 0.0
    %v9347 = vand.u32 %v9225, 4294901760
    %v9348 = vsub.f32 %v9225, %v9347
    %v9349 = vand.u32 %v9348, 4294901760
    %v9350 = vsub.f32 %v9348, %v9349
    %v9351 = vand.u32 %v9350, 4294901760
    %9352 = vmatpush1.msra.mxu0 %v9351
    %9353 = vmatprep.subr.mxu0 0.0
    %v9354 = vand.u32 %v9226, 4294901760
    %v9355 = vsub.f32 %v9226, %v9354
    %v9356 = vand.u32 %v9355, 4294901760
    %v9357 = vsub.f32 %v9355, %v9356
    %v9358 = vand.u32 %v9357, 4294901760
    %9359 = vmatpush1.msra.mxu0 %v9358
    %9360 = vmatprep.subr.mxu0 0.0
    %v9361 = vand.u32 %v9227, 4294901760
    %v9362 = vsub.f32 %v9227, %v9361
    %v9363 = vand.u32 %v9362, 4294901760
    %v9364 = vsub.f32 %v9362, %v9363
    %v9365 = vand.u32 %v9364, 4294901760
    %9366 = vmatpush1.msra.mxu0 %v9365
    %9367 = vmatprep.subr.mxu0 0.0
    %v9368 = vand.u32 %v9228, 4294901760
    %v9369 = vsub.f32 %v9228, %v9368
    %v9370 = vand.u32 %v9369, 4294901760
    %v9371 = vsub.f32 %v9369, %v9370
    %v9372 = vand.u32 %v9371, 4294901760
    %9373 = vmatpush1.msra.mxu0 %v9372
    %9374 = vmatprep.subr.mxu0 0.0
    %v9375 = vand.u32 %v9229, 4294901760
    %v9376 = vsub.f32 %v9229, %v9375
    %v9377 = vand.u32 %v9376, 4294901760
    %v9378 = vsub.f32 %v9376, %v9377
    %v9379 = vand.u32 %v9378, 4294901760
    %9380 = vmatpush1.msra.mxu0 %v9379
    %9381 = vmatprep.subr.mxu0 0.0
    %v9382 = vand.u32 %v9230, 4294901760
    %v9383 = vsub.f32 %v9230, %v9382
    %v9384 = vand.u32 %v9383, 4294901760
    %v9385 = vsub.f32 %v9383, %v9384
    %v9386 = vand.u32 %v9385, 4294901760
    %9387 = vmatpush1.msra.mxu0 %v9386
    %9388 = vmatprep.subr.mxu0 0.0
    %v9389 = vand.u32 %v9231, 4294901760
    %v9390 = vsub.f32 %v9231, %v9389
    %v9391 = vand.u32 %v9390, 4294901760
    %v9392 = vsub.f32 %v9390, %v9391
    %v9393 = vand.u32 %v9392, 4294901760
    %9394 = vmatpush1.msra.mxu0 %v9393
    %9395 = vmatprep.subr.mxu0 0.0
    %9396 = vmatpush1.msra.mxu0 0.0
    %9397 = vmatprep.subr.mxu0 0.0
    %9398 = vmatpush1.msra.mxu0 0.0
    %9399 = vmatprep.subr.mxu0 0.0
    %9400 = vmatpush1.msra.mxu0 0.0
    %9401 = vmatprep.subr.mxu0 0.0
    %9402 = vmatpush1.msra.mxu0 0.0
    %9403 = vmatprep.subr.mxu0 0.0
    %9404 = vmatpush1.msra.mxu0 0.0
    %9405 = vmatprep.subr.mxu0 0.0
    %9406 = vmatpush1.msra.mxu0 0.0
    %9407 = vmatprep.subr.mxu0 0.0
    %9408 = vmatpush1.msra.mxu0 0.0
    %9409 = vmatprep.subr.mxu0 0.0
    %9410 = vmatpush1.msra.mxu0 0.0
    %9411 = vmatprep.subr.mxu0 0.0
    %9412 = vmatpush1.msra.mxu0 0.0
    %9413 = vmatprep.subr.mxu0 0.0
    %9414 = vmatpush1.msra.mxu0 0.0
    %9415 = vmatprep.subr.mxu0 0.0
    %9416 = vmatpush1.msra.mxu0 0.0
    %9417 = vmatprep.subr.mxu0 0.0
    %9418 = vmatpush1.msra.mxu0 0.0
    %9419 = vmatprep.subr.mxu0 0.0
    %9420 = vmatpush1.msra.mxu0 0.0
    %9421 = vmatprep.subr.mxu0 0.0
    %9422 = vmatpush1.msra.mxu0 0.0
    %9423 = vmatprep.subr.mxu0 0.0
    %9424 = vmatpush1.msra.mxu0 0.0
    %9425 = vmatprep.subr.mxu0 0.0
    %9426 = vmatpush1.msra.mxu0 0.0
    %9427 = vmatprep.subr.mxu0 0.0
    %9428 = vmatpush1.msra.mxu0 0.0
    %9429 = vmatprep.subr.mxu0 0.0
    %9430 = vmatpush1.msra.mxu0 0.0
    %9431 = vmatprep.subr.mxu0 0.0
    %9432 = vmatpush1.msra.mxu0 0.0
    %9433 = vmatprep.subr.mxu0 0.0
    %9434 = vmatpush1.msra.mxu0 0.0
    %9435 = vmatprep.subr.mxu0 0.0
    %9436 = vmatpush1.msra.mxu0 0.0
    %9437 = vmatprep.subr.mxu0 0.0
    %9438 = vmatpush1.msra.mxu0 0.0
    %9439 = vmatprep.subr.mxu0 0.0
    %9440 = vmatpush1.msra.mxu0 0.0
    %9441 = vmatprep.subr.mxu0 0.0
    %9442 = vmatpush1.msra.mxu0 0.0
    %9443 = vmatprep.mubr.f32.mxu0 0.0
    %v9444 = vand.u32 %v9241, 4294901760
    %9445 = vmatmul.mubr.f32.gmra.mrb[0].mxu0 %v9444
    %v9446 = vpop.f32.mrb[0].mxu0
    %v9447 = vadd.f32 %v9326, %v9446
    %v9448 = vpop.f32.mrb[0].mxu0
    %9449 = vmatprep.mubr.f32.mxu0 0.0
    %v9450 = vand.u32 %v9244, 4294901760
    %9451 = vmatmul.mubr.f32.gmra.mrb[0].mxu0 %v9450
    %v9452 = vpop.f32.mrb[0].mxu0
    %v9453 = vadd.f32 %v9336, %v9452
    %v9454 = vpop.f32.mrb[0].mxu0
    %9455 = vdwg.mxu0
    %9456 = vmatprep.subr.mxu0 0.0
    %v9457 = vand.u32 %v9224, 4294901760
    %v9458 = vsub.f32 %v9224, %v9457
    %9459 = vmatpush1.msra.mxu0 %v9458
    %9460 = vmatprep.subr.mxu0 0.0
    %v9461 = vand.u32 %v9225, 4294901760
    %v9462 = vsub.f32 %v9225, %v9461
    %9463 = vmatpush1.msra.mxu0 %v9462
    %9464 = vmatprep.subr.mxu0 0.0
    %v9465 = vand.u32 %v9226, 4294901760
    %v9466 = vsub.f32 %v9226, %v9465
    %9467 = vmatpush1.msra.mxu0 %v9466
    %9468 = vmatprep.subr.mxu0 0.0
    %v9469 = vand.u32 %v9227, 4294901760
    %v9470 = vsub.f32 %v9227, %v9469
    %9471 = vmatpush1.msra.mxu0 %v9470
    %9472 = vmatprep.subr.mxu0 0.0
    %v9473 = vand.u32 %v9228, 4294901760
    %v9474 = vsub.f32 %v9228, %v9473
    %9475 = vmatpush1.msra.mxu0 %v9474
    %9476 = vmatprep.subr.mxu0 0.0
    %v9477 = vand.u32 %v9229, 4294901760
    %v9478 = vsub.f32 %v9229, %v9477
    %9479 = vmatpush1.msra.mxu0 %v9478
    %9480 = vmatprep.subr.mxu0 0.0
    %v9481 = vand.u32 %v9230, 4294901760
    %v9482 = vsub.f32 %v9230, %v9481
    %9483 = vmatpush1.msra.mxu0 %v9482
    %9484 = vmatprep.subr.mxu0 0.0
    %v9485 = vand.u32 %v9231, 4294901760
    %v9486 = vsub.f32 %v9231, %v9485
    %9487 = vmatpush1.msra.mxu0 %v9486
    %9488 = vmatprep.subr.mxu0 0.0
    %9489 = vmatpush1.msra.mxu0 0.0
    %9490 = vmatprep.subr.mxu0 0.0
    %9491 = vmatpush1.msra.mxu0 0.0
    %9492 = vmatprep.subr.mxu0 0.0
    %9493 = vmatpush1.msra.mxu0 0.0
    %9494 = vmatprep.subr.mxu0 0.0
    %9495 = vmatpush1.msra.mxu0 0.0
    %9496 = vmatprep.subr.mxu0 0.0
    %9497 = vmatpush1.msra.mxu0 0.0
    %9498 = vmatprep.subr.mxu0 0.0
    %9499 = vmatpush1.msra.mxu0 0.0
    %9500 = vmatprep.subr.mxu0 0.0
    %9501 = vmatpush1.msra.mxu0 0.0
    %9502 = vmatprep.subr.mxu0 0.0
    %9503 = vmatpush1.msra.mxu0 0.0
    %9504 = vmatprep.subr.mxu0 0.0
    %9505 = vmatpush1.msra.mxu0 0.0
    %9506 = vmatprep.subr.mxu0 0.0
    %9507 = vmatpush1.msra.mxu0 0.0
    %9508 = vmatprep.subr.mxu0 0.0
    %9509 = vmatpush1.msra.mxu0 0.0
    %9510 = vmatprep.subr.mxu0 0.0
    %9511 = vmatpush1.msra.mxu0 0.0
    %9512 = vmatprep.subr.mxu0 0.0
    %9513 = vmatpush1.msra.mxu0 0.0
    %9514 = vmatprep.subr.mxu0 0.0
    %9515 = vmatpush1.msra.mxu0 0.0
    %9516 = vmatprep.subr.mxu0 0.0
    %9517 = vmatpush1.msra.mxu0 0.0
    %9518 = vmatprep.subr.mxu0 0.0
    %9519 = vmatpush1.msra.mxu0 0.0
    %9520 = vmatprep.subr.mxu0 0.0
    %9521 = vmatpush1.msra.mxu0 0.0
    %9522 = vmatprep.subr.mxu0 0.0
    %9523 = vmatpush1.msra.mxu0 0.0
    %9524 = vmatprep.subr.mxu0 0.0
    %9525 = vmatpush1.msra.mxu0 0.0
    %9526 = vmatprep.subr.mxu0 0.0
    %9527 = vmatpush1.msra.mxu0 0.0
    %9528 = vmatprep.subr.mxu0 0.0
    %9529 = vmatpush1.msra.mxu0 0.0
    %9530 = vmatprep.subr.mxu0 0.0
    %9531 = vmatpush1.msra.mxu0 0.0
    %9532 = vmatprep.subr.mxu0 0.0
    %9533 = vmatpush1.msra.mxu0 0.0
    %9534 = vmatprep.subr.mxu0 0.0
    %9535 = vmatpush1.msra.mxu0 0.0
    %9536 = vmatprep.mubr.f32.mxu0 0.0
    %v9537 = vand.u32 %v9241, 4294901760
    %v9538 = vsub.f32 %v9241, %v9537
    %9539 = vmatmul.mubr.f32.gmra.mrb[0].mxu0 %v9538
    %v9540 = vpop.f32.mrb[0].mxu0
    %v9541 = vadd.f32 %v9447, %v9540
    %v9542 = vpop.f32.mrb[0].mxu0
    %9543 = vmatprep.mubr.f32.mxu0 0.0
    %v9544 = vand.u32 %v9244, 4294901760
    %v9545 = vsub.f32 %v9244, %v9544
    %9546 = vmatmul.mubr.f32.gmra.mrb[0].mxu0 %v9545
    %v9547 = vpop.f32.mrb[0].mxu0
    %v9548 = vadd.f32 %v9453, %v9547
    %v9549 = vpop.f32.mrb[0].mxu0
    %9550 = vdwg.mxu0
    %9551 = vmatprep.subr.mxu0 0.0
    %v9552 = vand.u32 %v9224, 4294901760
    %9553 = vmatpush1.msra.mxu0 %v9552
    %9554 = vmatprep.subr.mxu0 0.0
    %v9555 = vand.u32 %v9225, 4294901760
    %9556 = vmatpush1.msra.mxu0 %v9555
    %9557 = vmatprep.subr.mxu0 0.0
    %v9558 = vand.u32 %v9226, 4294901760
    %9559 = vmatpush1.msra.mxu0 %v9558
    %9560 = vmatprep.subr.mxu0 0.0
    %v9561 = vand.u32 %v9227, 4294901760
    %9562 = vmatpush1.msra.mxu0 %v9561
    %9563 = vmatprep.subr.mxu0 0.0
    %v9564 = vand.u32 %v9228, 4294901760
    %9565 = vmatpush1.msra.mxu0 %v9564
    %9566 = vmatprep.subr.mxu0 0.0
    %v9567 = vand.u32 %v9229, 4294901760
    %9568 = vmatpush1.msra.mxu0 %v9567
    %9569 = vmatprep.subr.mxu0 0.0
    %v9570 = vand.u32 %v9230, 4294901760
    %9571 = vmatpush1.msra.mxu0 %v9570
    %9572 = vmatprep.subr.mxu0 0.0
    %v9573 = vand.u32 %v9231, 4294901760
    %9574 = vmatpush1.msra.mxu0 %v9573
    %9575 = vmatprep.subr.mxu0 0.0
    %9576 = vmatpush1.msra.mxu0 0.0
    %9577 = vmatprep.subr.mxu0 0.0
    %9578 = vmatpush1.msra.mxu0 0.0
    %9579 = vmatprep.subr.mxu0 0.0
    %9580 = vmatpush1.msra.mxu0 0.0
    %9581 = vmatprep.subr.mxu0 0.0
    %9582 = vmatpush1.msra.mxu0 0.0
    %9583 = vmatprep.subr.mxu0 0.0
    %9584 = vmatpush1.msra.mxu0 0.0
    %9585 = vmatprep.subr.mxu0 0.0
    %9586 = vmatpush1.msra.mxu0 0.0
    %9587 = vmatprep.subr.mxu0 0.0
    %9588 = vmatpush1.msra.mxu0 0.0
    %9589 = vmatprep.subr.mxu0 0.0
    %9590 = vmatpush1.msra.mxu0 0.0
    %9591 = vmatprep.subr.mxu0 0.0
    %9592 = vmatpush1.msra.mxu0 0.0
    %9593 = vmatprep.subr.mxu0 0.0
    %9594 = vmatpush1.msra.mxu0 0.0
    %9595 = vmatprep.subr.mxu0 0.0
    %9596 = vmatpush1.msra.mxu0 0.0
    %9597 = vmatprep.subr.mxu0 0.0
    %9598 = vmatpush1.msra.mxu0 0.0
    %9599 = vmatprep.subr.mxu0 0.0
    %9600 = vmatpush1.msra.mxu0 0.0
    %9601 = vmatprep.subr.mxu0 0.0
    %9602 = vmatpush1.msra.mxu0 0.0
    %9603 = vmatprep.subr.mxu0 0.0
    %9604 = vmatpush1.msra.mxu0 0.0
    %9605 = vmatprep.subr.mxu0 0.0
    %9606 = vmatpush1.msra.mxu0 0.0
    %9607 = vmatprep.subr.mxu0 0.0
    %9608 = vmatpush1.msra.mxu0 0.0
    %9609 = vmatprep.subr.mxu0 0.0
    %9610 = vmatpush1.msra.mxu0 0.0
    %9611 = vmatprep.subr.mxu0 0.0
    %9612 = vmatpush1.msra.mxu0 0.0
    %9613 = vmatprep.subr.mxu0 0.0
    %9614 = vmatpush1.msra.mxu0 0.0
    %9615 = vmatprep.subr.mxu0 0.0
    %9616 = vmatpush1.msra.mxu0 0.0
    %9617 = vmatprep.subr.mxu0 0.0
    %9618 = vmatpush1.msra.mxu0 0.0
    %9619 = vmatprep.subr.mxu0 0.0
    %9620 = vmatpush1.msra.mxu0 0.0
    %9621 = vmatprep.subr.mxu0 0.0
    %9622 = vmatpush1.msra.mxu0 0.0
    %9623 = vmatprep.mubr.f32.mxu0 0.0
    %v9624 = vand.u32 %v9241, 4294901760
    %v9625 = vsub.f32 %v9241, %v9624
    %v9626 = vand.u32 %v9625, 4294901760
    %9627 = vmatmul.mubr.f32.gmra.mrb[0].mxu0 %v9626
    %v9628 = vpop.f32.mrb[0].mxu0
    %v9629 = vadd.f32 %v9541, %v9628
    %v9630 = vpop.f32.mrb[0].mxu0
    %9631 = vmatprep.mubr.f32.mxu0 0.0
    %v9632 = vand.u32 %v9244, 4294901760
    %v9633 = vsub.f32 %v9244, %v9632
    %v9634 = vand.u32 %v9633, 4294901760
    %9635 = vmatmul.mubr.f32.gmra.mrb[0].mxu0 %v9634
    %v9636 = vpop.f32.mrb[0].mxu0
    %v9637 = vadd.f32 %v9548, %v9636
    %v9638 = vpop.f32.mrb[0].mxu0
    %9639 = vdwg.mxu0
    %9640 = vmatprep.subr.mxu0 0.0
    %v9641 = vand.u32 %v9224, 4294901760
    %v9642 = vsub.f32 %v9224, %v9641
    %v9643 = vand.u32 %v9642, 4294901760
    %9644 = vmatpush1.msra.mxu0 %v9643
    %9645 = vmatprep.subr.mxu0 0.0
    %v9646 = vand.u32 %v9225, 4294901760
    %v9647 = vsub.f32 %v9225, %v9646
    %v9648 = vand.u32 %v9647, 4294901760
    %9649 = vmatpush1.msra.mxu0 %v9648
    %9650 = vmatprep.subr.mxu0 0.0
    %v9651 = vand.u32 %v9226, 4294901760
    %v9652 = vsub.f32 %v9226, %v9651
    %v9653 = vand.u32 %v9652, 4294901760
    %9654 = vmatpush1.msra.mxu0 %v9653
    %9655 = vmatprep.subr.mxu0 0.0
    %v9656 = vand.u32 %v9227, 4294901760
    %v9657 = vsub.f32 %v9227, %v9656
    %v9658 = vand.u32 %v9657, 4294901760
    %9659 = vmatpush1.msra.mxu0 %v9658
    %9660 = vmatprep.subr.mxu0 0.0
    %v9661 = vand.u32 %v9228, 4294901760
    %v9662 = vsub.f32 %v9228, %v9661
    %v9663 = vand.u32 %v9662, 4294901760
    %9664 = vmatpush1.msra.mxu0 %v9663
    %9665 = vmatprep.subr.mxu0 0.0
    %v9666 = vand.u32 %v9229, 4294901760
    %v9667 = vsub.f32 %v9229, %v9666
    %v9668 = vand.u32 %v9667, 4294901760
    %9669 = vmatpush1.msra.mxu0 %v9668
    %9670 = vmatprep.subr.mxu0 0.0
    %v9671 = vand.u32 %v9230, 4294901760
    %v9672 = vsub.f32 %v9230, %v9671
    %v9673 = vand.u32 %v9672, 4294901760
    %9674 = vmatpush1.msra.mxu0 %v9673
    %9675 = vmatprep.subr.mxu0 0.0
    %v9676 = vand.u32 %v9231, 4294901760
    %v9677 = vsub.f32 %v9231, %v9676
    %v9678 = vand.u32 %v9677, 4294901760
    %9679 = vmatpush1.msra.mxu0 %v9678
    %9680 = vmatprep.subr.mxu0 0.0
    %9681 = vmatpush1.msra.mxu0 0.0
    %9682 = vmatprep.subr.mxu0 0.0
    %9683 = vmatpush1.msra.mxu0 0.0
    %9684 = vmatprep.subr.mxu0 0.0
    %9685 = vmatpush1.msra.mxu0 0.0
    %9686 = vmatprep.subr.mxu0 0.0
    %9687 = vmatpush1.msra.mxu0 0.0
    %9688 = vmatprep.subr.mxu0 0.0
    %9689 = vmatpush1.msra.mxu0 0.0
    %9690 = vmatprep.subr.mxu0 0.0
    %9691 = vmatpush1.msra.mxu0 0.0
    %9692 = vmatprep.subr.mxu0 0.0
    %9693 = vmatpush1.msra.mxu0 0.0
    %9694 = vmatprep.subr.mxu0 0.0
    %9695 = vmatpush1.msra.mxu0 0.0
    %9696 = vmatprep.subr.mxu0 0.0
    %9697 = vmatpush1.msra.mxu0 0.0
    %9698 = vmatprep.subr.mxu0 0.0
    %9699 = vmatpush1.msra.mxu0 0.0
    %9700 = vmatprep.subr.mxu0 0.0
    %9701 = vmatpush1.msra.mxu0 0.0
    %9702 = vmatprep.subr.mxu0 0.0
    %9703 = vmatpush1.msra.mxu0 0.0
    %9704 = vmatprep.subr.mxu0 0.0
    %9705 = vmatpush1.msra.mxu0 0.0
    %9706 = vmatprep.subr.mxu0 0.0
    %9707 = vmatpush1.msra.mxu0 0.0
    %9708 = vmatprep.subr.mxu0 0.0
    %9709 = vmatpush1.msra.mxu0 0.0
    %9710 = vmatprep.subr.mxu0 0.0
    %9711 = vmatpush1.msra.mxu0 0.0
    %9712 = vmatprep.subr.mxu0 0.0
    %9713 = vmatpush1.msra.mxu0 0.0
    %9714 = vmatprep.subr.mxu0 0.0
    %9715 = vmatpush1.msra.mxu0 0.0
    %9716 = vmatprep.subr.mxu0 0.0
    %9717 = vmatpush1.msra.mxu0 0.0
    %9718 = vmatprep.subr.mxu0 0.0
    %9719 = vmatpush1.msra.mxu0 0.0
    %9720 = vmatprep.subr.mxu0 0.0
    %9721 = vmatpush1.msra.mxu0 0.0
    %9722 = vmatprep.subr.mxu0 0.0
    %9723 = vmatpush1.msra.mxu0 0.0
    %9724 = vmatprep.subr.mxu0 0.0
    %9725 = vmatpush1.msra.mxu0 0.0
    %9726 = vmatprep.subr.mxu0 0.0
    %9727 = vmatpush1.msra.mxu0 0.0
    %9728 = vmatprep.mubr.f32.mxu0 0.0
    %v9729 = vand.u32 %v9241, 4294901760
    %9730 = vmatmul.mubr.f32.gmra.mrb[0].mxu0 %v9729
    %v9731 = vpop.f32.mrb[0].mxu0
    %v9732 = vadd.f32 %v9629, %v9731
    %v9733 = vpop.f32.mrb[0].mxu0
    %9734 = vmatprep.mubr.f32.mxu0 0.0
    %v9735 = vand.u32 %v9244, 4294901760
    %9736 = vmatmul.mubr.f32.gmra.mrb[0].mxu0 %v9735
    %v9737 = vpop.f32.mrb[0].mxu0
    %v9738 = vadd.f32 %v9637, %v9737
    %v9739 = vpop.f32.mrb[0].mxu0
    %9740 = vdwg.mxu0
    %9741 = vmatprep.subr.mxu0 0.0
    %v9742 = vand.u32 %v9224, 4294901760
    %9743 = vmatpush1.msra.mxu0 %v9742
    %9744 = vmatprep.subr.mxu0 0.0
    %v9745 = vand.u32 %v9225, 4294901760
    %9746 = vmatpush1.msra.mxu0 %v9745
    %9747 = vmatprep.subr.mxu0 0.0
    %v9748 = vand.u32 %v9226, 4294901760
    %9749 = vmatpush1.msra.mxu0 %v9748
    %9750 = vmatprep.subr.mxu0 0.0
    %v9751 = vand.u32 %v9227, 4294901760
    %9752 = vmatpush1.msra.mxu0 %v9751
    %9753 = vmatprep.subr.mxu0 0.0
    %v9754 = vand.u32 %v9228, 4294901760
    %9755 = vmatpush1.msra.mxu0 %v9754
    %9756 = vmatprep.subr.mxu0 0.0
    %v9757 = vand.u32 %v9229, 4294901760
    %9758 = vmatpush1.msra.mxu0 %v9757
    %9759 = vmatprep.subr.mxu0 0.0
    %v9760 = vand.u32 %v9230, 4294901760
    %9761 = vmatpush1.msra.mxu0 %v9760
    %9762 = vmatprep.subr.mxu0 0.0
    %v9763 = vand.u32 %v9231, 4294901760
    %9764 = vmatpush1.msra.mxu0 %v9763
    %9765 = vmatprep.subr.mxu0 0.0
    %9766 = vmatpush1.msra.mxu0 0.0
    %9767 = vmatprep.subr.mxu0 0.0
    %9768 = vmatpush1.msra.mxu0 0.0
    %9769 = vmatprep.subr.mxu0 0.0
    %9770 = vmatpush1.msra.mxu0 0.0
    %9771 = vmatprep.subr.mxu0 0.0
    %9772 = vmatpush1.msra.mxu0 0.0
    %9773 = vmatprep.subr.mxu0 0.0
    %9774 = vmatpush1.msra.mxu0 0.0
    %9775 = vmatprep.subr.mxu0 0.0
    %9776 = vmatpush1.msra.mxu0 0.0
    %9777 = vmatprep.subr.mxu0 0.0
    %9778 = vmatpush1.msra.mxu0 0.0
    %9779 = vmatprep.subr.mxu0 0.0
    %9780 = vmatpush1.msra.mxu0 0.0
    %9781 = vmatprep.subr.mxu0 0.0
    %9782 = vmatpush1.msra.mxu0 0.0
    %9783 = vmatprep.subr.mxu0 0.0
    %9784 = vmatpush1.msra.mxu0 0.0
    %9785 = vmatprep.subr.mxu0 0.0
    %9786 = vmatpush1.msra.mxu0 0.0
    %9787 = vmatprep.subr.mxu0 0.0
    %9788 = vmatpush1.msra.mxu0 0.0
    %9789 = vmatprep.subr.mxu0 0.0
    %9790 = vmatpush1.msra.mxu0 0.0
    %9791 = vmatprep.subr.mxu0 0.0
    %9792 = vmatpush1.msra.mxu0 0.0
    %9793 = vmatprep.subr.mxu0 0.0
    %9794 = vmatpush1.msra.mxu0 0.0
    %9795 = vmatprep.subr.mxu0 0.0
    %9796 = vmatpush1.msra.mxu0 0.0
    %9797 = vmatprep.subr.mxu0 0.0
    %9798 = vmatpush1.msra.mxu0 0.0
    %9799 = vmatprep.subr.mxu0 0.0
    %9800 = vmatpush1.msra.mxu0 0.0
    %9801 = vmatprep.subr.mxu0 0.0
    %9802 = vmatpush1.msra.mxu0 0.0
    %9803 = vmatprep.subr.mxu0 0.0
    %9804 = vmatpush1.msra.mxu0 0.0
    %9805 = vmatprep.subr.mxu0 0.0
    %9806 = vmatpush1.msra.mxu0 0.0
    %9807 = vmatprep.subr.mxu0 0.0
    %9808 = vmatpush1.msra.mxu0 0.0
    %9809 = vmatprep.subr.mxu0 0.0
    %9810 = vmatpush1.msra.mxu0 0.0
    %9811 = vmatprep.subr.mxu0 0.0
    %9812 = vmatpush1.msra.mxu0 0.0
    %9813 = vmatprep.mubr.f32.mxu0 0.0
    %v9814 = vand.u32 %v9241, 4294901760
    %9815 = vmatmul.mubr.f32.gmra.mrb[0].mxu0 %v9814
    %v9816 = vpop.f32.mrb[0].mxu0
    %v9817 = vadd.f32 %v9732, %v9816
    %v9818 = vpop.f32.mrb[0].mxu0
    %9819 = vmatprep.mubr.f32.mxu0 0.0
    %v9820 = vand.u32 %v9244, 4294901760
    %9821 = vmatmul.mubr.f32.gmra.mrb[0].mxu0 %v9820
    %v9822 = vpop.f32.mrb[0].mxu0
    %v9823 = vadd.f32 %v9738, %v9822
    %v9824 = vpop.f32.mrb[0].mxu0
    %9825 = vdwg.mxu0
    %v9826 = vsel %vm112, %v9817, 0.0
    %9827 = vadd.xlane.f32.xlu0 %v9826
    %v9828 = vpop.xlane.xlu0 %9827
    %v9829 = vsel %vm112, %v9823, 0.0
    %9830 = vadd.xlane.f32.xlu0 %v9829
    %v9831 = vpop.xlane.xlu0 %9830
    %v9832 = vmul.f32 %v9828, %v8628
    %v9833 = vmul.f32 %v9831, %v8628
    %v9834 = vsub.f32 %v9817, %v9832
    %v9835 = vsub.f32 %v9823, %v9833
    %v9836 = vmul.f32 %v9834, %v9834
    %v9837 = vmul.f32 %v9835, %v9835
    %v9838 = vsel %vm112, %v9836, 0.0
    %9839 = vadd.xlane.f32.xlu0 %v9838
    %v9840 = vpop.xlane.xlu0 %9839
    %v9841 = vsel %vm112, %v9837, 0.0
    %9842 = vadd.xlane.f32.xlu0 %v9841
    %v9843 = vpop.xlane.xlu0 %9842
    %v9844 = vmul.f32 %v9840, 0.032258064
    %v9845 = vmul.f32 %v9843, 0.032258064
    %v9846 = vrsqrt.pop %v9844
    %v9847 = vmul.f32 %v9844, %v9846
    %vm9848 = vcmp.eq.f32.partialorder %v9844, inf
    %v9849 = vsel %vm9848, %v9844, %v9847
    %vm9850 = vcmp.eq.f32.partialorder %v9844, 0.0
    %v9851 = vand.u32 %v9844, 2147483648
    %v9852 = vsel %vm9850, %v9851, %v9849
    %v9853 = vrsqrt.pop %v9845
    %v9854 = vmul.f32 %v9845, %v9853
    %vm9855 = vcmp.eq.f32.partialorder %v9845, inf
    %v9856 = vsel %vm9855, %v9845, %v9854
    %vm9857 = vcmp.eq.f32.partialorder %v9845, 0.0
    %v9858 = vand.u32 %v9845, 2147483648
    %v9859 = vsel %vm9857, %v9858, %v9856
    %v9860 = vstv %s8620
    %v9861 = vmul.f32 %v9860, %v9834
    %v9862 = vmul.f32 %v9860, %v9835
    %v9863 = vadd.f32 %v9852, 1e-06
    %v9864 = vadd.f32 %v9859, 1e-06
    %v9865 = vrcp.pop %v9863
    %v9866 = vrcp.pop %v9864
    %v9867 = vmul.f32 %v9863, %v9865
    %v9868 = vmul.f32 %v9864, %v9866
    %v9869 = vsub.f32 2.0, %v9867
    %v9870 = vsub.f32 2.0, %v9868
    %v9871 = vmul.f32 %v9865, %v9869
    %v9872 = vmul.f32 %v9866, %v9870
    %v9873 = vmul.f32 %v9861, %v9871
    %v9874 = vmul.f32 %v9862, %v9872
    %v9875 = vstv %s8621
    %v9876 = vadd.f32 %v9873, %v9875
    %v9877 = vadd.f32 %v9874, %v9875
    %v9878 = vadd.f32 %v8675, %v9876
    %v9879 = vadd.f32 %v8676, %v9877
    %9880 = vst.msk [vmem:[#allocation13] sm:$0xff] %vm112, %v9878
    %9881 = vst.msk [vmem:[#allocation13 + $0x8] sm:$0xff] %vm112, %v9879
    // Predicated region
    $region66: #{tpu_custom_call.1} parent=1 // pred_check
      _
    $region67: #{tpu_custom_call.1} parent=1 // pred_check_branch
      %9883 = sbr.rel (0) target = $region69
    $region68: #{tpu_custom_call.1} parent=1 // pred_region
      %s9885 = ssub.s32 256, 256
      %9886 = vsyncadd [#allocation5], %s9885
      %s9887 = sshll.u32 [#allocation13], 4
      %s9888 = int_to_ptr.vmem [resolvable:$true] %s9887
      %9893 = dma.vmem_to_hbm [thread:$0]  %s9888, 256, %s11, [#allocation5], 128, 128, 8
    $region69: #{tpu_custom_call.1} parent=1 // pred_fallthru
      _
    // Predicated region
    $region70: #{tpu_custom_call.1} parent=1 // pred_check
      _
    $region71: #{tpu_custom_call.1} parent=1 // pred_check_branch
      %9895 = sbr.rel (0) target = $region73
    $region72: #{tpu_custom_call.1} parent=1 // pred_region
      %9896 = dma.done [#allocation5], 256
    $region73: #{tpu_custom_call.1} parent=1 // pred_fallthru
      _
    %9897 = vsyncpa [#allocation4], 1
    %9898 = vsyncpa [#allocation9], 1
    %9899 = vsyncpa [#allocation12], 1
    %9900 = vsyncpa [#allocation5], 1
    %9901 = vsyncpa [#allocation6], 1

</llo_original>
